<compile_context>
chip_gen: v5e
topology: v5e:2x2
jax: 0.10.0
libtpu: 0.0.40
codegen_flags: <defaults>
</compile_context>

<pallas_src>
import functools

import jax
import jax.numpy as jnp
from jax.experimental import pallas as pl
from jax.experimental.pallas import tpu as pltpu


# --------------------------------------------------------------------------- #
# Kernel
# --------------------------------------------------------------------------- #
def mhrsa_kernel(head0_rev, head1_rev,
                 xa_ref, xb_ref,
                 w1a_ref, b1a_ref, w1b_ref, b1b_ref,        # layer-1 (shared by heads)
                 w2a0_ref, b2a0_ref, w2a1_ref, b2a1_ref,    # ffn1 layer-2, per head
                 w2b0_ref, b2b0_ref, w2b1_ref, b2b1_ref,    # ffn2 layer-2, per head
                 ya_ref, yb_ref,
                 ha_ref, hb_ref):
    ti = pl.program_id(1)                                   # time-block index

    @pl.when(ti == 0)                                       # h = None -> zeros
    def _():
        ha_ref[...] = jnp.zeros_like(ha_ref)
        hb_ref[...] = jnp.zeros_like(hb_ref)

    Tb, Pt, C = xa_ref.shape
    N = Tb * Pt
    cdt = xa_ref.dtype                                      # MXU operand dtype

    # ---- time-blocked MLPs (MXU) -------------------------------------------
    xa = xa_ref[...].reshape(N, C)
    xb = xb_ref[...].reshape(N, C)

    def mlp_head(x2, w1_ref, b1_ref, w2_ref, b2_ref):
        g = jnp.tanh(jnp.dot(x2, w1_ref[...],
                             preferred_element_type=jnp.float32) + b1_ref[...])
        return (jnp.dot(g.astype(cdt), w2_ref[...],
                        preferred_element_type=jnp.float32) + b2_ref[...])

    za = jnp.tanh(mlp_head(xa, w1a_ref, b1a_ref, w2a0_ref, b2a0_ref))        # (N, Ch)
    fa = jax.nn.sigmoid(mlp_head(xa, w1b_ref, b1b_ref, w2b0_ref, b2b0_ref))  # (N, Ch)
    zb = jnp.tanh(mlp_head(xb, w1a_ref, b1a_ref, w2a1_ref, b2a1_ref))        # (N, Ch)
    fb = jax.nn.sigmoid(mlp_head(xb, w1b_ref, b1b_ref, w2b1_ref, b2b1_ref))  # (N, Ch)

    # ---- per-timestep recurrence (VPU only), unrolled over Tb ---------------
    # la/lb: local block index of scan step tt for each head (forward or
    # time-reversed order, matching that head's BlockSpec index map).
    ha = ha_ref[...]
    hb = hb_ref[...]
    for tt in range(Tb):
        la = (Tb - 1 - tt) if head0_rev else tt
        lb = (Tb - 1 - tt) if head1_rev else tt
        z0 = za[la * Pt:(la + 1) * Pt]
        f0 = fa[la * Pt:(la + 1) * Pt]
        z1 = zb[lb * Pt:(lb + 1) * Pt]
        f1 = fb[lb * Pt:(lb + 1) * Pt]
        ha = f0 * ha + (1.0 - f0) * z0
        hb = f1 * hb + (1.0 - f1) * z1
        ya_ref[la] = ha                                      # half-width outputs
        yb_ref[lb] = hb
    ha_ref[...] = ha
    hb_ref[...] = hb


# --------------------------------------------------------------------------- #
# Wrappers
# --------------------------------------------------------------------------- #
def _largest_divisor_leq(n, cap):
    for d in range(max(1, min(cap, n)), 0, -1):
        if n % d == 0:
            return d
    return n


def _pick_pixel_tile(p, target):
    if p <= target:
        return p
    for d in range(target - target % 8, 7, -8):              # multiple of 8
        if p % d == 0:
            return d
    return p                                                 # fallback: whole axis


def mhrsa_pallas_tpc(x_tpc, params, reverse=False, *,
                     tb_target=8, pt_target=256, mxu_dtype=jnp.bfloat16):
    """Channels-last core.  x_tpc: (T, P, C) f32.  Returns (T, P, C) f32.

    params = (w1a, b1a, w2a, b2a, w1b, b1b, w2b, b2b) with weights in
    (Cin, Cout) layout (transpose + squeeze PyTorch conv3d 1x1x1 weights).
    """
    T, P, C = x_tpc.shape
    assert C % 2 == 0, "multi_head MHRSA needs an even channel count"
    Ch = C // 2
    w1a, b1a, w2a, b2a, w1b, b1b, w2b, b2b = params

    tb = _largest_divisor_leq(T, tb_target)                  # time block
    pt = _pick_pixel_tile(P, pt_target)                      # pixel tile
    nt, n_p = T // tb, P // pt

    xq = x_tpc.astype(mxu_dtype)
    w1a_q, w1b_q = w1a.astype(mxu_dtype), w1b.astype(mxu_dtype)
    # layer-2 weights pre-split per head (avoids in-kernel lane slicing)
    w2a0, w2a1 = w2a[:, :Ch].astype(mxu_dtype), w2a[:, Ch:].astype(mxu_dtype)
    w2b0, w2b1 = w2b[:, :Ch].astype(mxu_dtype), w2b[:, Ch:].astype(mxu_dtype)
    b1a2 = b1a.reshape(1, C).astype(jnp.float32)
    b1b2 = b1b.reshape(1, C).astype(jnp.float32)
    b2a0, b2a1 = (b2a[:Ch].reshape(1, Ch).astype(jnp.float32),
                  b2a[Ch:].reshape(1, Ch).astype(jnp.float32))
    b2b0, b2b1 = (b2b[:Ch].reshape(1, Ch).astype(jnp.float32),
                  b2b[Ch:].reshape(1, Ch).astype(jnp.float32))

    fwd = lambda pi, ti: (ti, pi, 0)
    rev = lambda pi, ti: (nt - 1 - ti, pi, 0)
    if reverse:
        map_a, map_b = rev, fwd
        head0_rev, head1_rev = True, False
    else:
        map_a, map_b = fwd, rev
        head0_rev, head1_rev = False, True

    x_spec = lambda m: pl.BlockSpec((tb, pt, C), m)
    y_spec = lambda m: pl.BlockSpec((tb, pt, Ch), m)
    wmap = lambda pi, ti: (0, 0)
    w_full = pl.BlockSpec((C, C), wmap)
    b_full = pl.BlockSpec((1, C), wmap)
    w_half = pl.BlockSpec((C, Ch), wmap)
    b_half = pl.BlockSpec((1, Ch), wmap)

    ya, yb = pl.pallas_call(
        functools.partial(mhrsa_kernel, head0_rev, head1_rev),
        out_shape=(jax.ShapeDtypeStruct((T, P, Ch), jnp.float32),
                   jax.ShapeDtypeStruct((T, P, Ch), jnp.float32)),
        grid_spec=pltpu.PrefetchScalarGridSpec(
            num_scalar_prefetch=0,
            grid=(n_p, nt),                                  # (parallel, arbitrary)
            in_specs=[x_spec(map_a), x_spec(map_b),
                      w_full, b_full, w_full, b_full,
                      w_half, b_half, w_half, b_half,
                      w_half, b_half, w_half, b_half],
            out_specs=[y_spec(map_a), y_spec(map_b)],
            scratch_shapes=[pltpu.VMEM((pt, Ch), jnp.float32),   # h, head 0
                            pltpu.VMEM((pt, Ch), jnp.float32)]),  # h, head 1
        compiler_params=pltpu.CompilerParams(
            dimension_semantics=("parallel", "arbitrary")),
    )(xq, xq,
      w1a_q, b1a2, w1b_q, b1b2,
      w2a0, b2a0, w2a1, b2a1,
      w2b0, b2b0, w2b1, b2b1)

    # first Ch channels from head 0, last Ch from head 1
    return jnp.concatenate([ya, yb], axis=-1)


def mhrsa_pallas(x, params, reverse=False, **kw):
    """x: (B, C, T, H, W) f32 -> (B, C, T, H, W) f32 (PyTorch layout)."""
    B, C, T, H, W = x.shape
    x_tpc = jnp.transpose(x, (2, 0, 3, 4, 1)).reshape(T, B * H * W, C)
    y = mhrsa_pallas_tpc(x_tpc.astype(jnp.float32), params, reverse=reverse, **kw)
    y = y.reshape(T, B, H, W, C)
    return jnp.transpose(y, (1, 4, 0, 2, 3))


# --------------------------------------------------------------------------- #
# Pure-JAX reference (mirrors the PyTorch forward).
# mxu_dtype=None      -> plain f32 reference.
# mxu_dtype=bfloat16  -> rounds matmul operands to bf16 (mirrors the kernel's
#                        bf16-MXU fast path; accumulation stays f32).
# --------------------------------------------------------------------------- #
def mhrsa_ref(x, params, reverse=False, mxu_dtype=None):
    B, C, T, H, W = x.shape
    Ch = C // 2
    w1a, b1a, w2a, b2a, w1b, b1b, w2b, b2b = params
    q = (lambda a: a) if mxu_dtype is None else (
        lambda a: a.astype(mxu_dtype).astype(jnp.float32))

    def conv1(t, w, b):                                      # 1x1x1 conv3d, w: (Cin, Cout)
        return (jnp.einsum('bcthw,cd->bdthw', q(t), q(w),
                           precision=jax.lax.Precision.HIGHEST)
                + b[None, :, None, None, None])

    def mlp(t, w1, b1, w2, b2):
        return conv1(jnp.tanh(conv1(t, w1, b1)), w2, b2)

    Z = jnp.tanh(mlp(x, w1a, b1a, w2a, b2a))
    F = jax.nn.sigmoid(mlp(x, w1b, b1b, w2b, b2b))
    Z = jnp.concatenate([Z[:, :Ch], jnp.flip(Z[:, Ch:], axis=2)], axis=1)
    F = jnp.concatenate([F[:, :Ch], jnp.flip(F[:, Ch:], axis=2)], axis=1)

    h, hs = None, []
    ts = range(T) if not reverse else reversed(range(T))
    for t in ts:
        z, f = Z[:, :, t], F[:, :, t]
        h = (1 - f) * z if h is None else f * h + (1 - f) * z
        hs.append(h) if not reverse else hs.insert(0, h)
    y = jnp.stack(hs, axis=2)
    return jnp.concatenate([y[:, :Ch], jnp.flip(y[:, Ch:], axis=2)], axis=1)


# --------------------------------------------------------------------------- #
if __name__ == "__main__":
    B, C, T, H, W = 2, 8, 16, 8, 8            # channels must be even (multi_head)
    key = jax.random.PRNGKey(0)
    keys = jax.random.split(key, 9)

    x = jax.random.normal(keys[0], (B, C, T, H, W), dtype=jnp.float32)

    def init_w(k):
        return 0.5 * jax.random.normal(k, (C, C), dtype=jnp.float32)  # (Cin, Cout)

    def init_b(k):
        return 0.1 * jax.random.normal(k, (C,), dtype=jnp.float32)

    params = (init_w(keys[1]), init_b(keys[2]), init_w(keys[3]), init_b(keys[4]),
              init_w(keys[5]), init_b(keys[6]), init_w(keys[7]), init_b(keys[8]))

    # small tiles so the demo exercises multiple time blocks (state carry) and
    # multiple pixel tiles (parallel axis + per-tile state re-init)
    tile_kw = dict(tb_target=8, pt_target=64)

    for reverse in (False, True):
        y_ref = mhrsa_ref(x, params, reverse=reverse)

        # f32-MXU path vs f32 reference (expected ~1e-5; tolerance leaves
        # headroom for matmul pass decomposition while still catching any
        # logic / flip / state-carry error, which would be O(0.1+))
        y32 = jax.block_until_ready(
            mhrsa_pallas(x, params, reverse=reverse, mxu_dtype=jnp.float32, **tile_kw))
        assert y32.shape == (B, C, T, H, W)
        assert jnp.allclose(y32, y_ref, rtol=1e-2, atol=1e-2), \
            float(jnp.max(jnp.abs(y32 - y_ref)))

        # fast bf16-MXU path vs a reference with bf16-rounded matmul operands
        ybf = jax.block_until_ready(
            mhrsa_pallas(x, params, reverse=reverse, **tile_kw))
        y_ref_bf = mhrsa_ref(x, params, reverse=reverse, mxu_dtype=jnp.bfloat16)
        assert ybf.shape == (B, C, T, H, W)
        assert jnp.allclose(ybf, y_ref_bf, rtol=2.5e-2, atol=2.5e-2), \
            float(jnp.max(jnp.abs(ybf - y_ref_bf)))

    print("KERNEL_OK")
</pallas_src>

<mosaic_0001>
module attributes {stable_mosaic.version = 11 : i64} {
  func.func @mhrsa_kernel(%arg0: i32, %arg1: i32, %arg2: memref<8x64x8xf32, #tpu.memory_space<vmem>>, %arg3: memref<8x64x8xf32, #tpu.memory_space<vmem>>, %arg4: memref<8x8xf32, #tpu.memory_space<vmem>>, %arg5: memref<1x8xf32, #tpu.memory_space<vmem>>, %arg6: memref<8x8xf32, #tpu.memory_space<vmem>>, %arg7: memref<1x8xf32, #tpu.memory_space<vmem>>, %arg8: memref<8x4xf32, #tpu.memory_space<vmem>>, %arg9: memref<1x4xf32, #tpu.memory_space<vmem>>, %arg10: memref<8x4xf32, #tpu.memory_space<vmem>>, %arg11: memref<1x4xf32, #tpu.memory_space<vmem>>, %arg12: memref<8x4xf32, #tpu.memory_space<vmem>>, %arg13: memref<1x4xf32, #tpu.memory_space<vmem>>, %arg14: memref<8x4xf32, #tpu.memory_space<vmem>>, %arg15: memref<1x4xf32, #tpu.memory_space<vmem>>, %arg16: memref<8x64x4xf32, #tpu.memory_space<vmem>>, %arg17: memref<8x64x4xf32, #tpu.memory_space<vmem>>, %arg18: memref<64x4xf32, #tpu.memory_space<vmem>>, %arg19: memref<64x4xf32, #tpu.memory_space<vmem>>) attributes {dimension_semantics = [#tpu.dimension_semantics<parallel>, #tpu.dimension_semantics<arbitrary>], iteration_bounds = array<i64: 2, 2>, scalar_prefetch = 0 : i64, scratch_operands = 2 : i64, tpu.core_type = #tpu.core_type<tc>, window_params = [{transform_indices = @transform_0, window_bounds = array<i64: 8, 64, 8>}, {transform_indices = @transform_1, window_bounds = array<i64: 8, 64, 8>}, {pipeline_mode = #tpu.pipeline_mode<synchronous>, transform_indices = @transform_2, window_bounds = array<i64: 8, 8>}, {pipeline_mode = #tpu.pipeline_mode<synchronous>, transform_indices = @transform_3, window_bounds = array<i64: 1, 8>}, {pipeline_mode = #tpu.pipeline_mode<synchronous>, transform_indices = @transform_4, window_bounds = array<i64: 8, 8>}, {pipeline_mode = #tpu.pipeline_mode<synchronous>, transform_indices = @transform_5, window_bounds = array<i64: 1, 8>}, {pipeline_mode = #tpu.pipeline_mode<synchronous>, transform_indices = @transform_6, window_bounds = array<i64: 8, 4>}, {pipeline_mode = #tpu.pipeline_mode<synchronous>, transform_indices = @transform_7, window_bounds = array<i64: 1, 4>}, {pipeline_mode = #tpu.pipeline_mode<synchronous>, transform_indices = @transform_8, window_bounds = array<i64: 8, 4>}, {pipeline_mode = #tpu.pipeline_mode<synchronous>, transform_indices = @transform_9, window_bounds = array<i64: 1, 4>}, {pipeline_mode = #tpu.pipeline_mode<synchronous>, transform_indices = @transform_10, window_bounds = array<i64: 8, 4>}, {pipeline_mode = #tpu.pipeline_mode<synchronous>, transform_indices = @transform_11, window_bounds = array<i64: 1, 4>}, {pipeline_mode = #tpu.pipeline_mode<synchronous>, transform_indices = @transform_12, window_bounds = array<i64: 8, 4>}, {pipeline_mode = #tpu.pipeline_mode<synchronous>, transform_indices = @transform_13, window_bounds = array<i64: 1, 4>}, {transform_indices = @transform_14, window_bounds = array<i64: 8, 64, 4>}, {transform_indices = @transform_15, window_bounds = array<i64: 8, 64, 4>}]} {
    %c0_i32 = arith.constant 0 : i32
    %0 = arith.cmpi eq, %arg1, %c0_i32 : i32
    %1 = arith.extui %0 : i1 to i32
    %c0_i32_0 = arith.constant 0 : i32
    %2 = arith.cmpi ne, %1, %c0_i32_0 : i32
    scf.if %2 {
      %cst_112 = arith.constant 0.000000e+00 : f32
      %227 = vector.broadcast %cst_112 : f32 to vector<64x4xf32>
      %c0_113 = arith.constant 0 : index
      %c0_114 = arith.constant 0 : index
      %228 = vector.load %arg18[%c0_113, %c0_114] : memref<64x4xf32, #tpu.memory_space<vmem>>, vector<64x4xf32>
      tpu.vector_store %arg18[%c0_113, %c0_114], %227 {strides = array<i32>} : memref<64x4xf32, #tpu.memory_space<vmem>>, vector<64x4xf32>,
      %cst_115 = arith.constant 0.000000e+00 : f32
      %229 = vector.broadcast %cst_115 : f32 to vector<64x4xf32>
      %c0_116 = arith.constant 0 : index
      %c0_117 = arith.constant 0 : index
      %230 = vector.load %arg19[%c0_116, %c0_117] : memref<64x4xf32, #tpu.memory_space<vmem>>, vector<64x4xf32>
      tpu.vector_store %arg19[%c0_116, %c0_117], %229 {strides = array<i32>} : memref<64x4xf32, #tpu.memory_space<vmem>>, vector<64x4xf32>,
    } else {
    }
    %c0 = arith.constant 0 : index
    %c0_1 = arith.constant 0 : index
    %c0_2 = arith.constant 0 : index
    %3 = vector.load %arg2[%c0, %c0_1, %c0_2] : memref<8x64x8xf32, #tpu.memory_space<vmem>>, vector<8x64x8xf32>
    %4 = vector.shape_cast %3 : vector<8x64x8xf32> to vector<512x8xf32>
    %c0_3 = arith.constant 0 : index
    %c0_4 = arith.constant 0 : index
    %c0_5 = arith.constant 0 : index
    %5 = vector.load %arg3[%c0_3, %c0_4, %c0_5] : memref<8x64x8xf32, #tpu.memory_space<vmem>>, vector<8x64x8xf32>
    %6 = vector.shape_cast %5 : vector<8x64x8xf32> to vector<512x8xf32>
    %c0_6 = arith.constant 0 : index
    %c0_7 = arith.constant 0 : index
    %7 = vector.load %arg4[%c0_6, %c0_7] : memref<8x8xf32, #tpu.memory_space<vmem>>, vector<8x8xf32>
    %cst = arith.constant dense<0.000000e+00> : vector<512x8xf32>
    %8 = tpu.matmul %4, %7, %cst {dimension_numbers = #tpu.dot_dimension_numbers<[1], [0], [0], [1], [0, 0, 1, 1], [], []>} : vector<512x8xf32>, vector<8x8xf32>, vector<512x8xf32> -> vector<512x8xf32>
    %c0_8 = arith.constant 0 : index
    %c0_9 = arith.constant 0 : index
    %9 = vector.load %arg5[%c0_8, %c0_9] : memref<1x8xf32, #tpu.memory_space<vmem>>, vector<1x8xf32>
    %10 = vector.broadcast %9 : vector<1x8xf32> to vector<512x8xf32>
    %11 = arith.addf %8, %10 : vector<512x8xf32>
    %12 = math.tanh %11 : vector<512x8xf32>
    %c0_10 = arith.constant 0 : index
    %c0_11 = arith.constant 0 : index
    %13 = vector.load %arg8[%c0_10, %c0_11] : memref<8x4xf32, #tpu.memory_space<vmem>>, vector<8x4xf32>
    %cst_12 = arith.constant dense<0.000000e+00> : vector<512x4xf32>
    %14 = tpu.matmul %12, %13, %cst_12 {dimension_numbers = #tpu.dot_dimension_numbers<[1], [0], [0], [1], [0, 0, 1, 1], [], []>} : vector<512x8xf32>, vector<8x4xf32>, vector<512x4xf32> -> vector<512x4xf32>
    %c0_13 = arith.constant 0 : index
    %c0_14 = arith.constant 0 : index
    %15 = vector.load %arg9[%c0_13, %c0_14] : memref<1x4xf32, #tpu.memory_space<vmem>>, vector<1x4xf32>
    %16 = vector.broadcast %15 : vector<1x4xf32> to vector<512x4xf32>
    %17 = arith.addf %14, %16 : vector<512x4xf32>
    %18 = math.tanh %17 : vector<512x4xf32>
    %c0_15 = arith.constant 0 : index
    %c0_16 = arith.constant 0 : index
    %19 = vector.load %arg6[%c0_15, %c0_16] : memref<8x8xf32, #tpu.memory_space<vmem>>, vector<8x8xf32>
    %cst_17 = arith.constant dense<0.000000e+00> : vector<512x8xf32>
    %20 = tpu.matmul %4, %19, %cst_17 {dimension_numbers = #tpu.dot_dimension_numbers<[1], [0], [0], [1], [0, 0, 1, 1], [], []>} : vector<512x8xf32>, vector<8x8xf32>, vector<512x8xf32> -> vector<512x8xf32>
    %c0_18 = arith.constant 0 : index
    %c0_19 = arith.constant 0 : index
    %21 = vector.load %arg7[%c0_18, %c0_19] : memref<1x8xf32, #tpu.memory_space<vmem>>, vector<1x8xf32>
    %22 = vector.broadcast %21 : vector<1x8xf32> to vector<512x8xf32>
    %23 = arith.addf %20, %22 : vector<512x8xf32>
    %24 = math.tanh %23 : vector<512x8xf32>
    %c0_20 = arith.constant 0 : index
    %c0_21 = arith.constant 0 : index
    %25 = vector.load %arg12[%c0_20, %c0_21] : memref<8x4xf32, #tpu.memory_space<vmem>>, vector<8x4xf32>
    %cst_22 = arith.constant dense<0.000000e+00> : vector<512x4xf32>
    %26 = tpu.matmul %24, %25, %cst_22 {dimension_numbers = #tpu.dot_dimension_numbers<[1], [0], [0], [1], [0, 0, 1, 1], [], []>} : vector<512x8xf32>, vector<8x4xf32>, vector<512x4xf32> -> vector<512x4xf32>
    %c0_23 = arith.constant 0 : index
    %c0_24 = arith.constant 0 : index
    %27 = vector.load %arg13[%c0_23, %c0_24] : memref<1x4xf32, #tpu.memory_space<vmem>>, vector<1x4xf32>
    %28 = vector.broadcast %27 : vector<1x4xf32> to vector<512x4xf32>
    %29 = arith.addf %26, %28 : vector<512x4xf32>
    %30 = arith.negf %29 : vector<512x4xf32>
    %31 = math.exp %30 : vector<512x4xf32>
    %cst_25 = arith.constant 1.000000e+00 : f32
    %32 = vector.broadcast %cst_25 : f32 to vector<512x4xf32>
    %33 = arith.addf %32, %31 : vector<512x4xf32>
    %34 = arith.divf %32, %33 : vector<512x4xf32>
    %c0_26 = arith.constant 0 : index
    %c0_27 = arith.constant 0 : index
    %35 = vector.load %arg4[%c0_26, %c0_27] : memref<8x8xf32, #tpu.memory_space<vmem>>, vector<8x8xf32>
    %cst_28 = arith.constant dense<0.000000e+00> : vector<512x8xf32>
    %36 = tpu.matmul %6, %35, %cst_28 {dimension_numbers = #tpu.dot_dimension_numbers<[1], [0], [0], [1], [0, 0, 1, 1], [], []>} : vector<512x8xf32>, vector<8x8xf32>, vector<512x8xf32> -> vector<512x8xf32>
    %c0_29 = arith.constant 0 : index
    %c0_30 = arith.constant 0 : index
    %37 = vector.load %arg5[%c0_29, %c0_30] : memref<1x8xf32, #tpu.memory_space<vmem>>, vector<1x8xf32>
    %38 = vector.broadcast %37 : vector<1x8xf32> to vector<512x8xf32>
    %39 = arith.addf %36, %38 : vector<512x8xf32>
    %40 = math.tanh %39 : vector<512x8xf32>
    %c0_31 = arith.constant 0 : index
    %c0_32 = arith.constant 0 : index
    %41 = vector.load %arg10[%c0_31, %c0_32] : memref<8x4xf32, #tpu.memory_space<vmem>>, vector<8x4xf32>
    %cst_33 = arith.constant dense<0.000000e+00> : vector<512x4xf32>
    %42 = tpu.matmul %40, %41, %cst_33 {dimension_numbers = #tpu.dot_dimension_numbers<[1], [0], [0], [1], [0, 0, 1, 1], [], []>} : vector<512x8xf32>, vector<8x4xf32>, vector<512x4xf32> -> vector<512x4xf32>
    %c0_34 = arith.constant 0 : index
    %c0_35 = arith.constant 0 : index
    %43 = vector.load %arg11[%c0_34, %c0_35] : memref<1x4xf32, #tpu.memory_space<vmem>>, vector<1x4xf32>
    %44 = vector.broadcast %43 : vector<1x4xf32> to vector<512x4xf32>
    %45 = arith.addf %42, %44 : vector<512x4xf32>
    %46 = math.tanh %45 : vector<512x4xf32>
    %c0_36 = arith.constant 0 : index
    %c0_37 = arith.constant 0 : index
    %47 = vector.load %arg6[%c0_36, %c0_37] : memref<8x8xf32, #tpu.memory_space<vmem>>, vector<8x8xf32>
    %cst_38 = arith.constant dense<0.000000e+00> : vector<512x8xf32>
    %48 = tpu.matmul %6, %47, %cst_38 {dimension_numbers = #tpu.dot_dimension_numbers<[1], [0], [0], [1], [0, 0, 1, 1], [], []>} : vector<512x8xf32>, vector<8x8xf32>, vector<512x8xf32> -> vector<512x8xf32>
    %c0_39 = arith.constant 0 : index
    %c0_40 = arith.constant 0 : index
    %49 = vector.load %arg7[%c0_39, %c0_40] : memref<1x8xf32, #tpu.memory_space<vmem>>, vector<1x8xf32>
    %50 = vector.broadcast %49 : vector<1x8xf32> to vector<512x8xf32>
    %51 = arith.addf %48, %50 : vector<512x8xf32>
    %52 = math.tanh %51 : vector<512x8xf32>
    %c0_41 = arith.constant 0 : index
    %c0_42 = arith.constant 0 : index
    %53 = vector.load %arg14[%c0_41, %c0_42] : memref<8x4xf32, #tpu.memory_space<vmem>>, vector<8x4xf32>
    %cst_43 = arith.constant dense<0.000000e+00> : vector<512x4xf32>
    %54 = tpu.matmul %52, %53, %cst_43 {dimension_numbers = #tpu.dot_dimension_numbers<[1], [0], [0], [1], [0, 0, 1, 1], [], []>} : vector<512x8xf32>, vector<8x4xf32>, vector<512x4xf32> -> vector<512x4xf32>
    %c0_44 = arith.constant 0 : index
    %c0_45 = arith.constant 0 : index
    %55 = vector.load %arg15[%c0_44, %c0_45] : memref<1x4xf32, #tpu.memory_space<vmem>>, vector<1x4xf32>
    %56 = vector.broadcast %55 : vector<1x4xf32> to vector<512x4xf32>
    %57 = arith.addf %54, %56 : vector<512x4xf32>
    %58 = arith.negf %57 : vector<512x4xf32>
    %59 = math.exp %58 : vector<512x4xf32>
    %cst_46 = arith.constant 1.000000e+00 : f32
    %60 = vector.broadcast %cst_46 : f32 to vector<512x4xf32>
    %61 = arith.addf %60, %59 : vector<512x4xf32>
    %62 = arith.divf %60, %61 : vector<512x4xf32>
    %c0_47 = arith.constant 0 : index
    %c0_48 = arith.constant 0 : index
    %63 = vector.load %arg18[%c0_47, %c0_48] : memref<64x4xf32, #tpu.memory_space<vmem>>, vector<64x4xf32>
    %c0_49 = arith.constant 0 : index
    %c0_50 = arith.constant 0 : index
    %64 = vector.load %arg19[%c0_49, %c0_50] : memref<64x4xf32, #tpu.memory_space<vmem>>, vector<64x4xf32>
    %65 = vector.extract_strided_slice %18 {offsets = [0, 0], sizes = [64, 4], strides = [1, 1]} : vector<512x4xf32> to vector<64x4xf32>
    %66 = vector.extract_strided_slice %34 {offsets = [0, 0], sizes = [64, 4], strides = [1, 1]} : vector<512x4xf32> to vector<64x4xf32>
    %67 = vector.extract_strided_slice %46 {offsets = [448, 0], sizes = [64, 4], strides = [1, 1]} : vector<512x4xf32> to vector<64x4xf32>
    %68 = vector.extract_strided_slice %62 {offsets = [448, 0], sizes = [64, 4], strides = [1, 1]} : vector<512x4xf32> to vector<64x4xf32>
    %69 = arith.mulf %66, %63 : vector<64x4xf32>
    %cst_51 = arith.constant 1.000000e+00 : f32
    %70 = vector.broadcast %cst_51 : f32 to vector<64x4xf32>
    %71 = arith.subf %70, %66 : vector<64x4xf32>
    %72 = arith.mulf %71, %65 : vector<64x4xf32>
    %73 = arith.addf %69, %72 : vector<64x4xf32>
    %74 = arith.mulf %68, %64 : vector<64x4xf32>
    %cst_52 = arith.constant 1.000000e+00 : f32
    %75 = vector.broadcast %cst_52 : f32 to vector<64x4xf32>
    %76 = arith.subf %75, %68 : vector<64x4xf32>
    %77 = arith.mulf %76, %67 : vector<64x4xf32>
    %78 = arith.addf %74, %77 : vector<64x4xf32>
    %c0_53 = arith.constant 0 : index
    %c0_54 = arith.constant 0 : index
    %c0_55 = arith.constant 0 : index
    %79 = vector.load %arg16[%c0_53, %c0_54, %c0_55] : memref<8x64x4xf32, #tpu.memory_space<vmem>>, vector<1x64x4xf32>
    %80 = vector.shape_cast %79 : vector<1x64x4xf32> to vector<64x4xf32>
    %81 = vector.shape_cast %73 : vector<64x4xf32> to vector<1x64x4xf32>
    tpu.vector_store %arg16[%c0_53, %c0_54, %c0_55], %81 {strides = array<i32>} : memref<8x64x4xf32, #tpu.memory_space<vmem>>, vector<1x64x4xf32>,
    %c7 = arith.constant 7 : index
    %c0_56 = arith.constant 0 : index
    %c0_57 = arith.constant 0 : index
    %82 = vector.load %arg17[%c7, %c0_56, %c0_57] : memref<8x64x4xf32, #tpu.memory_space<vmem>>, vector<1x64x4xf32>
    %83 = vector.shape_cast %82 : vector<1x64x4xf32> to vector<64x4xf32>
    %84 = vector.shape_cast %78 : vector<64x4xf32> to vector<1x64x4xf32>
    tpu.vector_store %arg17[%c7, %c0_56, %c0_57], %84 {strides = array<i32>} : memref<8x64x4xf32, #tpu.memory_space<vmem>>, vector<1x64x4xf32>,
    %85 = vector.extract_strided_slice %18 {offsets = [64, 0], sizes = [64, 4], strides = [1, 1]} : vector<512x4xf32> to vector<64x4xf32>
    %86 = vector.extract_strided_slice %34 {offsets = [64, 0], sizes = [64, 4], strides = [1, 1]} : vector<512x4xf32> to vector<64x4xf32>
    %87 = vector.extract_strided_slice %46 {offsets = [384, 0], sizes = [64, 4], strides = [1, 1]} : vector<512x4xf32> to vector<64x4xf32>
    %88 = vector.extract_strided_slice %62 {offsets = [384, 0], sizes = [64, 4], strides = [1, 1]} : vector<512x4xf32> to vector<64x4xf32>
    %89 = arith.mulf %86, %73 : vector<64x4xf32>
    %cst_58 = arith.constant 1.000000e+00 : f32
    %90 = vector.broadcast %cst_58 : f32 to vector<64x4xf32>
    %91 = arith.subf %90, %86 : vector<64x4xf32>
    %92 = arith.mulf %91, %85 : vector<64x4xf32>
    %93 = arith.addf %89, %92 : vector<64x4xf32>
    %94 = arith.mulf %88, %78 : vector<64x4xf32>
    %cst_59 = arith.constant 1.000000e+00 : f32
    %95 = vector.broadcast %cst_59 : f32 to vector<64x4xf32>
    %96 = arith.subf %95, %88 : vector<64x4xf32>
    %97 = arith.mulf %96, %87 : vector<64x4xf32>
    %98 = arith.addf %94, %97 : vector<64x4xf32>
    %c1 = arith.constant 1 : index
    %c0_60 = arith.constant 0 : index
    %c0_61 = arith.constant 0 : index
    %99 = vector.load %arg16[%c1, %c0_60, %c0_61] : memref<8x64x4xf32, #tpu.memory_space<vmem>>, vector<1x64x4xf32>
    %100 = vector.shape_cast %99 : vector<1x64x4xf32> to vector<64x4xf32>
    %101 = vector.shape_cast %93 : vector<64x4xf32> to vector<1x64x4xf32>
    tpu.vector_store %arg16[%c1, %c0_60, %c0_61], %101 {strides = array<i32>} : memref<8x64x4xf32, #tpu.memory_space<vmem>>, vector<1x64x4xf32>,
    %c6 = arith.constant 6 : index
    %c0_62 = arith.constant 0 : index
    %c0_63 = arith.constant 0 : index
    %102 = vector.load %arg17[%c6, %c0_62, %c0_63] : memref<8x64x4xf32, #tpu.memory_space<vmem>>, vector<1x64x4xf32>
    %103 = vector.shape_cast %102 : vector<1x64x4xf32> to vector<64x4xf32>
    %104 = vector.shape_cast %98 : vector<64x4xf32> to vector<1x64x4xf32>
    tpu.vector_store %arg17[%c6, %c0_62, %c0_63], %104 {strides = array<i32>} : memref<8x64x4xf32, #tpu.memory_space<vmem>>, vector<1x64x4xf32>,
    %105 = vector.extract_strided_slice %18 {offsets = [128, 0], sizes = [64, 4], strides = [1, 1]} : vector<512x4xf32> to vector<64x4xf32>
    %106 = vector.extract_strided_slice %34 {offsets = [128, 0], sizes = [64, 4], strides = [1, 1]} : vector<512x4xf32> to vector<64x4xf32>
    %107 = vector.extract_strided_slice %46 {offsets = [320, 0], sizes = [64, 4], strides = [1, 1]} : vector<512x4xf32> to vector<64x4xf32>
    %108 = vector.extract_strided_slice %62 {offsets = [320, 0], sizes = [64, 4], strides = [1, 1]} : vector<512x4xf32> to vector<64x4xf32>
    %109 = arith.mulf %106, %93 : vector<64x4xf32>
    %cst_64 = arith.constant 1.000000e+00 : f32
    %110 = vector.broadcast %cst_64 : f32 to vector<64x4xf32>
    %111 = arith.subf %110, %106 : vector<64x4xf32>
    %112 = arith.mulf %111, %105 : vector<64x4xf32>
    %113 = arith.addf %109, %112 : vector<64x4xf32>
    %114 = arith.mulf %108, %98 : vector<64x4xf32>
    %cst_65 = arith.constant 1.000000e+00 : f32
    %115 = vector.broadcast %cst_65 : f32 to vector<64x4xf32>
    %116 = arith.subf %115, %108 : vector<64x4xf32>
    %117 = arith.mulf %116, %107 : vector<64x4xf32>
    %118 = arith.addf %114, %117 : vector<64x4xf32>
    %c2 = arith.constant 2 : index
    %c0_66 = arith.constant 0 : index
    %c0_67 = arith.constant 0 : index
    %119 = vector.load %arg16[%c2, %c0_66, %c0_67] : memref<8x64x4xf32, #tpu.memory_space<vmem>>, vector<1x64x4xf32>
    %120 = vector.shape_cast %119 : vector<1x64x4xf32> to vector<64x4xf32>
    %121 = vector.shape_cast %113 : vector<64x4xf32> to vector<1x64x4xf32>
    tpu.vector_store %arg16[%c2, %c0_66, %c0_67], %121 {strides = array<i32>} : memref<8x64x4xf32, #tpu.memory_space<vmem>>, vector<1x64x4xf32>,
    %c5 = arith.constant 5 : index
    %c0_68 = arith.constant 0 : index
    %c0_69 = arith.constant 0 : index
    %122 = vector.load %arg17[%c5, %c0_68, %c0_69] : memref<8x64x4xf32, #tpu.memory_space<vmem>>, vector<1x64x4xf32>
    %123 = vector.shape_cast %122 : vector<1x64x4xf32> to vector<64x4xf32>
    %124 = vector.shape_cast %118 : vector<64x4xf32> to vector<1x64x4xf32>
    tpu.vector_store %arg17[%c5, %c0_68, %c0_69], %124 {strides = array<i32>} : memref<8x64x4xf32, #tpu.memory_space<vmem>>, vector<1x64x4xf32>,
    %125 = vector.extract_strided_slice %18 {offsets = [192, 0], sizes = [64, 4], strides = [1, 1]} : vector<512x4xf32> to vector<64x4xf32>
    %126 = vector.extract_strided_slice %34 {offsets = [192, 0], sizes = [64, 4], strides = [1, 1]} : vector<512x4xf32> to vector<64x4xf32>
    %127 = vector.extract_strided_slice %46 {offsets = [256, 0], sizes = [64, 4], strides = [1, 1]} : vector<512x4xf32> to vector<64x4xf32>
    %128 = vector.extract_strided_slice %62 {offsets = [256, 0], sizes = [64, 4], strides = [1, 1]} : vector<512x4xf32> to vector<64x4xf32>
    %129 = arith.mulf %126, %113 : vector<64x4xf32>
    %cst_70 = arith.constant 1.000000e+00 : f32
    %130 = vector.broadcast %cst_70 : f32 to vector<64x4xf32>
    %131 = arith.subf %130, %126 : vector<64x4xf32>
    %132 = arith.mulf %131, %125 : vector<64x4xf32>
    %133 = arith.addf %129, %132 : vector<64x4xf32>
    %134 = arith.mulf %128, %118 : vector<64x4xf32>
    %cst_71 = arith.constant 1.000000e+00 : f32
    %135 = vector.broadcast %cst_71 : f32 to vector<64x4xf32>
    %136 = arith.subf %135, %128 : vector<64x4xf32>
    %137 = arith.mulf %136, %127 : vector<64x4xf32>
    %138 = arith.addf %134, %137 : vector<64x4xf32>
    %c3 = arith.constant 3 : index
    %c0_72 = arith.constant 0 : index
    %c0_73 = arith.constant 0 : index
    %139 = vector.load %arg16[%c3, %c0_72, %c0_73] : memref<8x64x4xf32, #tpu.memory_space<vmem>>, vector<1x64x4xf32>
    %140 = vector.shape_cast %139 : vector<1x64x4xf32> to vector<64x4xf32>
    %141 = vector.shape_cast %133 : vector<64x4xf32> to vector<1x64x4xf32>
    tpu.vector_store %arg16[%c3, %c0_72, %c0_73], %141 {strides = array<i32>} : memref<8x64x4xf32, #tpu.memory_space<vmem>>, vector<1x64x4xf32>,
    %c4 = arith.constant 4 : index
    %c0_74 = arith.constant 0 : index
    %c0_75 = arith.constant 0 : index
    %142 = vector.load %arg17[%c4, %c0_74, %c0_75] : memref<8x64x4xf32, #tpu.memory_space<vmem>>, vector<1x64x4xf32>
    %143 = vector.shape_cast %142 : vector<1x64x4xf32> to vector<64x4xf32>
    %144 = vector.shape_cast %138 : vector<64x4xf32> to vector<1x64x4xf32>
    tpu.vector_store %arg17[%c4, %c0_74, %c0_75], %144 {strides = array<i32>} : memref<8x64x4xf32, #tpu.memory_space<vmem>>, vector<1x64x4xf32>,
    %145 = vector.extract_strided_slice %18 {offsets = [256, 0], sizes = [64, 4], strides = [1, 1]} : vector<512x4xf32> to vector<64x4xf32>
    %146 = vector.extract_strided_slice %34 {offsets = [256, 0], sizes = [64, 4], strides = [1, 1]} : vector<512x4xf32> to vector<64x4xf32>
    %147 = vector.extract_strided_slice %46 {offsets = [192, 0], sizes = [64, 4], strides = [1, 1]} : vector<512x4xf32> to vector<64x4xf32>
    %148 = vector.extract_strided_slice %62 {offsets = [192, 0], sizes = [64, 4], strides = [1, 1]} : vector<512x4xf32> to vector<64x4xf32>
    %149 = arith.mulf %146, %133 : vector<64x4xf32>
    %cst_76 = arith.constant 1.000000e+00 : f32
    %150 = vector.broadcast %cst_76 : f32 to vector<64x4xf32>
    %151 = arith.subf %150, %146 : vector<64x4xf32>
    %152 = arith.mulf %151, %145 : vector<64x4xf32>
    %153 = arith.addf %149, %152 : vector<64x4xf32>
    %154 = arith.mulf %148, %138 : vector<64x4xf32>
    %cst_77 = arith.constant 1.000000e+00 : f32
    %155 = vector.broadcast %cst_77 : f32 to vector<64x4xf32>
    %156 = arith.subf %155, %148 : vector<64x4xf32>
    %157 = arith.mulf %156, %147 : vector<64x4xf32>
    %158 = arith.addf %154, %157 : vector<64x4xf32>
    %c4_78 = arith.constant 4 : index
    %c0_79 = arith.constant 0 : index
    %c0_80 = arith.constant 0 : index
    %159 = vector.load %arg16[%c4_78, %c0_79, %c0_80] : memref<8x64x4xf32, #tpu.memory_space<vmem>>, vector<1x64x4xf32>
    %160 = vector.shape_cast %159 : vector<1x64x4xf32> to vector<64x4xf32>
    %161 = vector.shape_cast %153 : vector<64x4xf32> to vector<1x64x4xf32>
    tpu.vector_store %arg16[%c4_78, %c0_79, %c0_80], %161 {strides = array<i32>} : memref<8x64x4xf32, #tpu.memory_space<vmem>>, vector<1x64x4xf32>,
    %c3_81 = arith.constant 3 : index
    %c0_82 = arith.constant 0 : index
    %c0_83 = arith.constant 0 : index
    %162 = vector.load %arg17[%c3_81, %c0_82, %c0_83] : memref<8x64x4xf32, #tpu.memory_space<vmem>>, vector<1x64x4xf32>
    %163 = vector.shape_cast %162 : vector<1x64x4xf32> to vector<64x4xf32>
    %164 = vector.shape_cast %158 : vector<64x4xf32> to vector<1x64x4xf32>
    tpu.vector_store %arg17[%c3_81, %c0_82, %c0_83], %164 {strides = array<i32>} : memref<8x64x4xf32, #tpu.memory_space<vmem>>, vector<1x64x4xf32>,
    %165 = vector.extract_strided_slice %18 {offsets = [320, 0], sizes = [64, 4], strides = [1, 1]} : vector<512x4xf32> to vector<64x4xf32>
    %166 = vector.extract_strided_slice %34 {offsets = [320, 0], sizes = [64, 4], strides = [1, 1]} : vector<512x4xf32> to vector<64x4xf32>
    %167 = vector.extract_strided_slice %46 {offsets = [128, 0], sizes = [64, 4], strides = [1, 1]} : vector<512x4xf32> to vector<64x4xf32>
    %168 = vector.extract_strided_slice %62 {offsets = [128, 0], sizes = [64, 4], strides = [1, 1]} : vector<512x4xf32> to vector<64x4xf32>
    %169 = arith.mulf %166, %153 : vector<64x4xf32>
    %cst_84 = arith.constant 1.000000e+00 : f32
    %170 = vector.broadcast %cst_84 : f32 to vector<64x4xf32>
    %171 = arith.subf %170, %166 : vector<64x4xf32>
    %172 = arith.mulf %171, %165 : vector<64x4xf32>
    %173 = arith.addf %169, %172 : vector<64x4xf32>
    %174 = arith.mulf %168, %158 : vector<64x4xf32>
    %cst_85 = arith.constant 1.000000e+00 : f32
    %175 = vector.broadcast %cst_85 : f32 to vector<64x4xf32>
    %176 = arith.subf %175, %168 : vector<64x4xf32>
    %177 = arith.mulf %176, %167 : vector<64x4xf32>
    %178 = arith.addf %174, %177 : vector<64x4xf32>
    %c5_86 = arith.constant 5 : index
    %c0_87 = arith.constant 0 : index
    %c0_88 = arith.constant 0 : index
    %179 = vector.load %arg16[%c5_86, %c0_87, %c0_88] : memref<8x64x4xf32, #tpu.memory_space<vmem>>, vector<1x64x4xf32>
    %180 = vector.shape_cast %179 : vector<1x64x4xf32> to vector<64x4xf32>
    %181 = vector.shape_cast %173 : vector<64x4xf32> to vector<1x64x4xf32>
    tpu.vector_store %arg16[%c5_86, %c0_87, %c0_88], %181 {strides = array<i32>} : memref<8x64x4xf32, #tpu.memory_space<vmem>>, vector<1x64x4xf32>,
    %c2_89 = arith.constant 2 : index
    %c0_90 = arith.constant 0 : index
    %c0_91 = arith.constant 0 : index
    %182 = vector.load %arg17[%c2_89, %c0_90, %c0_91] : memref<8x64x4xf32, #tpu.memory_space<vmem>>, vector<1x64x4xf32>
    %183 = vector.shape_cast %182 : vector<1x64x4xf32> to vector<64x4xf32>
    %184 = vector.shape_cast %178 : vector<64x4xf32> to vector<1x64x4xf32>
    tpu.vector_store %arg17[%c2_89, %c0_90, %c0_91], %184 {strides = array<i32>} : memref<8x64x4xf32, #tpu.memory_space<vmem>>, vector<1x64x4xf32>,
    %185 = vector.extract_strided_slice %18 {offsets = [384, 0], sizes = [64, 4], strides = [1, 1]} : vector<512x4xf32> to vector<64x4xf32>
    %186 = vector.extract_strided_slice %34 {offsets = [384, 0], sizes = [64, 4], strides = [1, 1]} : vector<512x4xf32> to vector<64x4xf32>
    %187 = vector.extract_strided_slice %46 {offsets = [64, 0], sizes = [64, 4], strides = [1, 1]} : vector<512x4xf32> to vector<64x4xf32>
    %188 = vector.extract_strided_slice %62 {offsets = [64, 0], sizes = [64, 4], strides = [1, 1]} : vector<512x4xf32> to vector<64x4xf32>
    %189 = arith.mulf %186, %173 : vector<64x4xf32>
    %cst_92 = arith.constant 1.000000e+00 : f32
    %190 = vector.broadcast %cst_92 : f32 to vector<64x4xf32>
    %191 = arith.subf %190, %186 : vector<64x4xf32>
    %192 = arith.mulf %191, %185 : vector<64x4xf32>
    %193 = arith.addf %189, %192 : vector<64x4xf32>
    %194 = arith.mulf %188, %178 : vector<64x4xf32>
    %cst_93 = arith.constant 1.000000e+00 : f32
    %195 = vector.broadcast %cst_93 : f32 to vector<64x4xf32>
    %196 = arith.subf %195, %188 : vector<64x4xf32>
    %197 = arith.mulf %196, %187 : vector<64x4xf32>
    %198 = arith.addf %194, %197 : vector<64x4xf32>
    %c6_94 = arith.constant 6 : index
    %c0_95 = arith.constant 0 : index
    %c0_96 = arith.constant 0 : index
    %199 = vector.load %arg16[%c6_94, %c0_95, %c0_96] : memref<8x64x4xf32, #tpu.memory_space<vmem>>, vector<1x64x4xf32>
    %200 = vector.shape_cast %199 : vector<1x64x4xf32> to vector<64x4xf32>
    %201 = vector.shape_cast %193 : vector<64x4xf32> to vector<1x64x4xf32>
    tpu.vector_store %arg16[%c6_94, %c0_95, %c0_96], %201 {strides = array<i32>} : memref<8x64x4xf32, #tpu.memory_space<vmem>>, vector<1x64x4xf32>,
    %c1_97 = arith.constant 1 : index
    %c0_98 = arith.constant 0 : index
    %c0_99 = arith.constant 0 : index
    %202 = vector.load %arg17[%c1_97, %c0_98, %c0_99] : memref<8x64x4xf32, #tpu.memory_space<vmem>>, vector<1x64x4xf32>
    %203 = vector.shape_cast %202 : vector<1x64x4xf32> to vector<64x4xf32>
    %204 = vector.shape_cast %198 : vector<64x4xf32> to vector<1x64x4xf32>
    tpu.vector_store %arg17[%c1_97, %c0_98, %c0_99], %204 {strides = array<i32>} : memref<8x64x4xf32, #tpu.memory_space<vmem>>, vector<1x64x4xf32>,
    %205 = vector.extract_strided_slice %18 {offsets = [448, 0], sizes = [64, 4], strides = [1, 1]} : vector<512x4xf32> to vector<64x4xf32>
    %206 = vector.extract_strided_slice %34 {offsets = [448, 0], sizes = [64, 4], strides = [1, 1]} : vector<512x4xf32> to vector<64x4xf32>
    %207 = vector.extract_strided_slice %46 {offsets = [0, 0], sizes = [64, 4], strides = [1, 1]} : vector<512x4xf32> to vector<64x4xf32>
    %208 = vector.extract_strided_slice %62 {offsets = [0, 0], sizes = [64, 4], strides = [1, 1]} : vector<512x4xf32> to vector<64x4xf32>
    %209 = arith.mulf %206, %193 : vector<64x4xf32>
    %cst_100 = arith.constant 1.000000e+00 : f32
    %210 = vector.broadcast %cst_100 : f32 to vector<64x4xf32>
    %211 = arith.subf %210, %206 : vector<64x4xf32>
    %212 = arith.mulf %211, %205 : vector<64x4xf32>
    %213 = arith.addf %209, %212 : vector<64x4xf32>
    %214 = arith.mulf %208, %198 : vector<64x4xf32>
    %cst_101 = arith.constant 1.000000e+00 : f32
    %215 = vector.broadcast %cst_101 : f32 to vector<64x4xf32>
    %216 = arith.subf %215, %208 : vector<64x4xf32>
    %217 = arith.mulf %216, %207 : vector<64x4xf32>
    %218 = arith.addf %214, %217 : vector<64x4xf32>
    %c7_102 = arith.constant 7 : index
    %c0_103 = arith.constant 0 : index
    %c0_104 = arith.constant 0 : index
    %219 = vector.load %arg16[%c7_102, %c0_103, %c0_104] : memref<8x64x4xf32, #tpu.memory_space<vmem>>, vector<1x64x4xf32>
    %220 = vector.shape_cast %219 : vector<1x64x4xf32> to vector<64x4xf32>
    %221 = vector.shape_cast %213 : vector<64x4xf32> to vector<1x64x4xf32>
    tpu.vector_store %arg16[%c7_102, %c0_103, %c0_104], %221 {strides = array<i32>} : memref<8x64x4xf32, #tpu.memory_space<vmem>>, vector<1x64x4xf32>,
    %c0_105 = arith.constant 0 : index
    %c0_106 = arith.constant 0 : index
    %c0_107 = arith.constant 0 : index
    %222 = vector.load %arg17[%c0_105, %c0_106, %c0_107] : memref<8x64x4xf32, #tpu.memory_space<vmem>>, vector<1x64x4xf32>
    %223 = vector.shape_cast %222 : vector<1x64x4xf32> to vector<64x4xf32>
    %224 = vector.shape_cast %218 : vector<64x4xf32> to vector<1x64x4xf32>
    tpu.vector_store %arg17[%c0_105, %c0_106, %c0_107], %224 {strides = array<i32>} : memref<8x64x4xf32, #tpu.memory_space<vmem>>, vector<1x64x4xf32>,
    %c0_108 = arith.constant 0 : index
    %c0_109 = arith.constant 0 : index
    %225 = vector.load %arg18[%c0_108, %c0_109] : memref<64x4xf32, #tpu.memory_space<vmem>>, vector<64x4xf32>
    tpu.vector_store %arg18[%c0_108, %c0_109], %213 {strides = array<i32>} : memref<64x4xf32, #tpu.memory_space<vmem>>, vector<64x4xf32>,
    %c0_110 = arith.constant 0 : index
    %c0_111 = arith.constant 0 : index
    %226 = vector.load %arg19[%c0_110, %c0_111] : memref<64x4xf32, #tpu.memory_space<vmem>>, vector<64x4xf32>
    tpu.vector_store %arg19[%c0_110, %c0_111], %218 {strides = array<i32>} : memref<64x4xf32, #tpu.memory_space<vmem>>, vector<64x4xf32>,
    return
  }
  func.func @transform_0(%arg0: i32, %arg1: i32) -> (i32, i32, i32) {
    %c0_i32 = arith.constant 0 : i32
    %c0_i32_0 = arith.constant 0 : i32
    return %arg1, %arg0, %c0_i32 : i32, i32, i32
  }
  func.func @transform_1(%arg0: i32, %arg1: i32) -> (i32, i32, i32) {
    %c1_i32 = arith.constant 1 : i32
    %0 = arith.subi %c1_i32, %arg1 : i32
    %c0_i32 = arith.constant 0 : i32
    %c0_i32_0 = arith.constant 0 : i32
    return %0, %arg0, %c0_i32 : i32, i32, i32
  }
  func.func @transform_2(%arg0: i32, %arg1: i32) -> (i32, i32) {
    %c0_i32 = arith.constant 0 : i32
    %c0_i32_0 = arith.constant 0 : i32
    %c0_i32_1 = arith.constant 0 : i32
    return %c0_i32, %c0_i32_0 : i32, i32
  }
  func.func @transform_3(%arg0: i32, %arg1: i32) -> (i32, i32) {
    %c0_i32 = arith.constant 0 : i32
    %c0_i32_0 = arith.constant 0 : i32
    %c0_i32_1 = arith.constant 0 : i32
    return %c0_i32, %c0_i32_0 : i32, i32
  }
  func.func @transform_4(%arg0: i32, %arg1: i32) -> (i32, i32) {
    %c0_i32 = arith.constant 0 : i32
    %c0_i32_0 = arith.constant 0 : i32
    %c0_i32_1 = arith.constant 0 : i32
    return %c0_i32, %c0_i32_0 : i32, i32
  }
  func.func @transform_5(%arg0: i32, %arg1: i32) -> (i32, i32) {
    %c0_i32 = arith.constant 0 : i32
    %c0_i32_0 = arith.constant 0 : i32
    %c0_i32_1 = arith.constant 0 : i32
    return %c0_i32, %c0_i32_0 : i32, i32
  }
  func.func @transform_6(%arg0: i32, %arg1: i32) -> (i32, i32) {
    %c0_i32 = arith.constant 0 : i32
    %c0_i32_0 = arith.constant 0 : i32
    %c0_i32_1 = arith.constant 0 : i32
    return %c0_i32, %c0_i32_0 : i32, i32
  }
  func.func @transform_7(%arg0: i32, %arg1: i32) -> (i32, i32) {
    %c0_i32 = arith.constant 0 : i32
    %c0_i32_0 = arith.constant 0 : i32
    %c0_i32_1 = arith.constant 0 : i32
    return %c0_i32, %c0_i32_0 : i32, i32
  }
  func.func @transform_8(%arg0: i32, %arg1: i32) -> (i32, i32) {
    %c0_i32 = arith.constant 0 : i32
    %c0_i32_0 = arith.constant 0 : i32
    %c0_i32_1 = arith.constant 0 : i32
    return %c0_i32, %c0_i32_0 : i32, i32
  }
  func.func @transform_9(%arg0: i32, %arg1: i32) -> (i32, i32) {
    %c0_i32 = arith.constant 0 : i32
    %c0_i32_0 = arith.constant 0 : i32
    %c0_i32_1 = arith.constant 0 : i32
    return %c0_i32, %c0_i32_0 : i32, i32
  }
  func.func @transform_10(%arg0: i32, %arg1: i32) -> (i32, i32) {
    %c0_i32 = arith.constant 0 : i32
    %c0_i32_0 = arith.constant 0 : i32
    %c0_i32_1 = arith.constant 0 : i32
    return %c0_i32, %c0_i32_0 : i32, i32
  }
  func.func @transform_11(%arg0: i32, %arg1: i32) -> (i32, i32) {
    %c0_i32 = arith.constant 0 : i32
    %c0_i32_0 = arith.constant 0 : i32
    %c0_i32_1 = arith.constant 0 : i32
    return %c0_i32, %c0_i32_0 : i32, i32
  }
  func.func @transform_12(%arg0: i32, %arg1: i32) -> (i32, i32) {
    %c0_i32 = arith.constant 0 : i32
    %c0_i32_0 = arith.constant 0 : i32
    %c0_i32_1 = arith.constant 0 : i32
    return %c0_i32, %c0_i32_0 : i32, i32
  }
  func.func @transform_13(%arg0: i32, %arg1: i32) -> (i32, i32) {
    %c0_i32 = arith.constant 0 : i32
    %c0_i32_0 = arith.constant 0 : i32
    %c0_i32_1 = arith.constant 0 : i32
    return %c0_i32, %c0_i32_0 : i32, i32
  }
  func.func @transform_14(%arg0: i32, %arg1: i32) -> (i32, i32, i32) {
    %c0_i32 = arith.constant 0 : i32
    %c0_i32_0 = arith.constant 0 : i32
    return %arg1, %arg0, %c0_i32 : i32, i32, i32
  }
  func.func @transform_15(%arg0: i32, %arg1: i32) -> (i32, i32, i32) {
    %c1_i32 = arith.constant 1 : i32
    %0 = arith.subi %c1_i32, %arg1 : i32
    %c0_i32 = arith.constant 0 : i32
    %c0_i32_0 = arith.constant 0 : i32
    return %0, %arg0, %c0_i32 : i32, i32, i32
  }
}

</mosaic_0001>

<llo_original>
// kernel: tpu_custom_call.1
$region0: #{tpu_custom_call.1}
  #allocation0 [shape = 'u32[]', space=smem, size = 0x4, offset = 0x4, fixed_abs, tag = 'smem constant byte address 0x4 - core index']
  #allocation1 [shape = 'u32[72,128]{1,0:T(1,128)}', space=vmem, size = 0x9000, scoped, tag = 'internal scratch']
  #allocation2 [shape = 'f32[64,4]{1,0:T(8,128)}', space=vmem, size = 0x8000, scoped, tag = 'scratch operand']
  #allocation3 [shape = 'f32[64,4]{1,0:T(8,128)}', space=vmem, size = 0x8000, scoped, tag = 'scratch operand']
  %s0 = inlined_call_operand.vmem [shape: f32[16,128,8], index: 0, kind: input, shape index: {}]
  %s1 = inlined_call_operand.vmem [shape: f32[16,128,8], index: 1, kind: input, shape index: {}]
  %s2 = inlined_call_operand.vmem [shape: f32[8,8], index: 2, kind: input, shape index: {}]
  %s3 = inlined_call_operand.vmem [shape: f32[1,8], index: 3, kind: input, shape index: {}]
  %s4 = inlined_call_operand.vmem [shape: f32[8,8], index: 4, kind: input, shape index: {}]
  %s5 = inlined_call_operand.vmem [shape: f32[1,8], index: 5, kind: input, shape index: {}]
  %s6 = inlined_call_operand.vmem [shape: f32[8,4], index: 6, kind: input, shape index: {}]
  %s7 = inlined_call_operand.vmem [shape: f32[1,4], index: 7, kind: input, shape index: {}]
  %s8 = inlined_call_operand.vmem [shape: f32[8,4], index: 8, kind: input, shape index: {}]
  %s9 = inlined_call_operand.vmem [shape: f32[1,4], index: 9, kind: input, shape index: {}]
  %s10 = inlined_call_operand.vmem [shape: f32[8,4], index: 10, kind: input, shape index: {}]
  %s11 = inlined_call_operand.vmem [shape: f32[1,4], index: 11, kind: input, shape index: {}]
  %s12 = inlined_call_operand.vmem [shape: f32[8,4], index: 12, kind: input, shape index: {}]
  %s13 = inlined_call_operand.vmem [shape: f32[1,4], index: 13, kind: input, shape index: {}]
  %s14 = inlined_call_operand.vmem [shape: f32[16,128,4], index: 14, kind: output, shape index: {0}]
  %s15 = inlined_call_operand.vmem [shape: f32[16,128,4], index: 15, kind: output, shape index: {1}]
  %16 = xla_tuple %s14, %s15
  %s17 = sld [smem:[#allocation0]]
  $region245: #{tpu_custom_call.1} parent=0
    _
  %s19 = ssub.s32 1, %s17
  %s20 = scalar_select 0, %s19, %s17
  $region1: #{tpu_custom_call.1} parent=0
    #allocation4 [shape = 'u8[524288]{0}', space=vmem, size = 0x80000, scoped, tag = 'input window, operand 0']
    #allocation5 [shape = 'u8[524288]{0}', space=vmem, size = 0x80000, scoped, tag = 'input window, operand 1']
    #allocation6 [shape = 'u8[524288]{0}', space=vmem, size = 0x80000, scoped, tag = 'output window, operand 0']
    #allocation7 [shape = 'u8[524288]{0}', space=vmem, size = 0x80000, scoped, tag = 'output window, operand 1']
    loop: start=0, step=1, limit=6
    $region2: #{tpu_custom_call.1} parent=1 // loop_pre_header
      _
    $region3: #{tpu_custom_call.1} parent=1 // loop_header
      %s22 = sphi 0, %s26
      %p23 = scmp.ge.s32.totalorder %s22, 6
      %s29 = sphi 0, %s41
      %s30 = sphi 0, %s37
      %s31 = sphi 0, %s29
      %s32 = sphi 0, %s30
      %s33 = sphi 0, %s31
      %s34 = sphi 0, %s32
      %s46 = sphi 0, %s48
      %s49 = sphi 0, %s46
      %s50 = sphi 0, %s49
      %s66 = sphi 0, %s50
      %s76 = sphi 0, %s78
      %s79 = sphi 0, %s76
      %s80 = sphi 0, %s79
      %s96 = sphi 0, %s80
      %s100 = sphi 0, %s100
      %s102 = sphi 0, %s100
      %s103 = sphi 0, %s102
      %s117 = sphi 0, %s103
      %s121 = sphi 0, %s121
      %s123 = sphi 0, %s121
      %s124 = sphi 0, %s123
      %s138 = sphi 0, %s124
      %s142 = sphi 0, %s142
      %s144 = sphi 0, %s142
      %s145 = sphi 0, %s144
      %s159 = sphi 0, %s145
      %s163 = sphi 0, %s163
      %s165 = sphi 0, %s163
      %s166 = sphi 0, %s165
      %s180 = sphi 0, %s166
      %s184 = sphi 0, %s184
      %s186 = sphi 0, %s184
      %s187 = sphi 0, %s186
      %s201 = sphi 0, %s187
      %s205 = sphi 0, %s205
      %s207 = sphi 0, %s205
      %s208 = sphi 0, %s207
      %s222 = sphi 0, %s208
      %s226 = sphi 0, %s226
      %s228 = sphi 0, %s226
      %s229 = sphi 0, %s228
      %s243 = sphi 0, %s229
      %s247 = sphi 0, %s247
      %s249 = sphi 0, %s247
      %s250 = sphi 0, %s249
      %s264 = sphi 0, %s250
      %s268 = sphi 0, %s268
      %s270 = sphi 0, %s268
      %s271 = sphi 0, %s270
      %s285 = sphi 0, %s271
      %s289 = sphi 0, %s289
      %s291 = sphi 0, %s289
      %s292 = sphi 0, %s291
      %s306 = sphi 0, %s292
      %s310 = sphi 0, %s310
      %s312 = sphi 0, %s310
      %s313 = sphi 0, %s312
      %s327 = sphi 0, %s313
      %s331 = sphi 0, %s331
      %s333 = sphi 0, %s331
      %s334 = sphi 0, %s333
      %s348 = sphi 0, %s334
      %s356 = sphi 0, %s358
      %s359 = sphi 0, %s356
      %s360 = sphi 0, %s359
      %s376 = sphi 0, %s360
      %s386 = sphi 0, %s388
      %s389 = sphi 0, %s386
      %s390 = sphi 0, %s389
      %s406 = sphi 0, %s390
    $region4: #{tpu_custom_call.1} parent=1 // loop_header_branch
      %25 = sbr.rel (%p23) target = $region8
    $region5: #{tpu_custom_call.1} parent=1 // loop_body
      %s27 = ssub.s32 %s22, 1
      %s28 = ssub.s32 %s22, 2
      %s35 = sadd.s32 1, %s30
      %p36 = scmp.ge.s32.totalorder %s35, 2
      %s37 = scalar_select %p36, 0, %s35
      %s38 = sadd.s32 1, %s29
      %s39 = scalar_select %p36, %s38, %s29
      %p40 = scmp.ge.s32.totalorder %s39, 2
      %s41 = scalar_select %p40, 0, %s39
      %s42 = ssub.s32 %s30, %s37
      %s43 = ssub.s32 %s29, %s41
      %s44 = sor.u32 %s42, %s43
      %p45 = scmp.eq.s32.totalorder %s44, 0
      %s47 = sadd.s32 %s46, 1
      %s48 = scalar_select %p45, %s46, %s47
      %p51 = pneg %p45
      %p52 = scmp.eq.s32.totalorder %s22, 3
      %p53 = por %p51, %p52
      %p54 = scmp.ne.s32.totalorder %s46, %s49
      %p55 = scmp.eq.s32.totalorder %s22, 0
      %p56 = por %p54, %p55
      %p57 = scmp.ne.s32.totalorder %s46, %s49
      %p58 = scmp.eq.s32.totalorder %s27, 3
      %p59 = por %p57, %p58
      %p60 = scmp.ne.s32.totalorder %s49, %s50
      %p61 = scmp.eq.s32.totalorder %s27, 0
      %p62 = por %p60, %p61
      %p63 = scmp.ne.s32.totalorder %s49, %s50
      %p64 = scmp.eq.s32.totalorder %s28, 3
      %p65 = por %p63, %p64
      %p67 = scmp.ne.s32.totalorder %s50, %s66
      %p68 = scmp.eq.s32.totalorder %s28, 0
      %p69 = por %p67, %p68
      %s70 = ssub.s32 1, %s30
      %s71 = ssub.s32 1, %s37
      %s72 = ssub.s32 %s70, %s71
      %s73 = ssub.s32 %s29, %s41
      %s74 = sor.u32 %s72, %s73
      %p75 = scmp.eq.s32.totalorder %s74, 0
      %s77 = sadd.s32 %s76, 1
      %s78 = scalar_select %p75, %s76, %s77
      %p81 = pneg %p75
      %p82 = scmp.eq.s32.totalorder %s22, 3
      %p83 = por %p81, %p82
      %p84 = scmp.ne.s32.totalorder %s76, %s79
      %p85 = scmp.eq.s32.totalorder %s22, 0
      %p86 = por %p84, %p85
      %p87 = scmp.ne.s32.totalorder %s76, %s79
      %p88 = scmp.eq.s32.totalorder %s27, 3
      %p89 = por %p87, %p88
      %p90 = scmp.ne.s32.totalorder %s79, %s80
      %p91 = scmp.eq.s32.totalorder %s27, 0
      %p92 = por %p90, %p91
      %p93 = scmp.ne.s32.totalorder %s79, %s80
      %p94 = scmp.eq.s32.totalorder %s28, 3
      %p95 = por %p93, %p94
      %p97 = scmp.ne.s32.totalorder %s80, %s96
      %p98 = scmp.eq.s32.totalorder %s28, 0
      %p99 = por %p97, %p98
      %s101 = sadd.s32 %s100, 1
      %p104 = scmp.eq.s32.totalorder %s22, 3
      %p105 = scmp.ne.s32.totalorder %s100, %s102
      %p106 = scmp.eq.s32.totalorder %s22, 0
      %p107 = por %p105, %p106
      %p108 = scmp.ne.s32.totalorder %s100, %s102
      %p109 = scmp.eq.s32.totalorder %s27, 3
      %p110 = por %p108, %p109
      %p111 = scmp.ne.s32.totalorder %s102, %s103
      %p112 = scmp.eq.s32.totalorder %s27, 0
      %p113 = por %p111, %p112
      %p114 = scmp.ne.s32.totalorder %s102, %s103
      %p115 = scmp.eq.s32.totalorder %s28, 3
      %p116 = por %p114, %p115
      %p118 = scmp.ne.s32.totalorder %s103, %s117
      %p119 = scmp.eq.s32.totalorder %s28, 0
      %p120 = por %p118, %p119
      %s122 = sadd.s32 %s121, 1
      %p125 = scmp.eq.s32.totalorder %s22, 3
      %p126 = scmp.ne.s32.totalorder %s121, %s123
      %p127 = scmp.eq.s32.totalorder %s22, 0
      %p128 = por %p126, %p127
      %p129 = scmp.ne.s32.totalorder %s121, %s123
      %p130 = scmp.eq.s32.totalorder %s27, 3
      %p131 = por %p129, %p130
      %p132 = scmp.ne.s32.totalorder %s123, %s124
      %p133 = scmp.eq.s32.totalorder %s27, 0
      %p134 = por %p132, %p133
      %p135 = scmp.ne.s32.totalorder %s123, %s124
      %p136 = scmp.eq.s32.totalorder %s28, 3
      %p137 = por %p135, %p136
      %p139 = scmp.ne.s32.totalorder %s124, %s138
      %p140 = scmp.eq.s32.totalorder %s28, 0
      %p141 = por %p139, %p140
      %s143 = sadd.s32 %s142, 1
      %p146 = scmp.eq.s32.totalorder %s22, 3
      %p147 = scmp.ne.s32.totalorder %s142, %s144
      %p148 = scmp.eq.s32.totalorder %s22, 0
      %p149 = por %p147, %p148
      %p150 = scmp.ne.s32.totalorder %s142, %s144
      %p151 = scmp.eq.s32.totalorder %s27, 3
      %p152 = por %p150, %p151
      %p153 = scmp.ne.s32.totalorder %s144, %s145
      %p154 = scmp.eq.s32.totalorder %s27, 0
      %p155 = por %p153, %p154
      %p156 = scmp.ne.s32.totalorder %s144, %s145
      %p157 = scmp.eq.s32.totalorder %s28, 3
      %p158 = por %p156, %p157
      %p160 = scmp.ne.s32.totalorder %s145, %s159
      %p161 = scmp.eq.s32.totalorder %s28, 0
      %p162 = por %p160, %p161
      %s164 = sadd.s32 %s163, 1
      %p167 = scmp.eq.s32.totalorder %s22, 3
      %p168 = scmp.ne.s32.totalorder %s163, %s165
      %p169 = scmp.eq.s32.totalorder %s22, 0
      %p170 = por %p168, %p169
      %p171 = scmp.ne.s32.totalorder %s163, %s165
      %p172 = scmp.eq.s32.totalorder %s27, 3
      %p173 = por %p171, %p172
      %p174 = scmp.ne.s32.totalorder %s165, %s166
      %p175 = scmp.eq.s32.totalorder %s27, 0
      %p176 = por %p174, %p175
      %p177 = scmp.ne.s32.totalorder %s165, %s166
      %p178 = scmp.eq.s32.totalorder %s28, 3
      %p179 = por %p177, %p178
      %p181 = scmp.ne.s32.totalorder %s166, %s180
      %p182 = scmp.eq.s32.totalorder %s28, 0
      %p183 = por %p181, %p182
      %s185 = sadd.s32 %s184, 1
      %p188 = scmp.eq.s32.totalorder %s22, 3
      %p189 = scmp.ne.s32.totalorder %s184, %s186
      %p190 = scmp.eq.s32.totalorder %s22, 0
      %p191 = por %p189, %p190
      %p192 = scmp.ne.s32.totalorder %s184, %s186
      %p193 = scmp.eq.s32.totalorder %s27, 3
      %p194 = por %p192, %p193
      %p195 = scmp.ne.s32.totalorder %s186, %s187
      %p196 = scmp.eq.s32.totalorder %s27, 0
      %p197 = por %p195, %p196
      %p198 = scmp.ne.s32.totalorder %s186, %s187
      %p199 = scmp.eq.s32.totalorder %s28, 3
      %p200 = por %p198, %p199
      %p202 = scmp.ne.s32.totalorder %s187, %s201
      %p203 = scmp.eq.s32.totalorder %s28, 0
      %p204 = por %p202, %p203
      %s206 = sadd.s32 %s205, 1
      %p209 = scmp.eq.s32.totalorder %s22, 3
      %p210 = scmp.ne.s32.totalorder %s205, %s207
      %p211 = scmp.eq.s32.totalorder %s22, 0
      %p212 = por %p210, %p211
      %p213 = scmp.ne.s32.totalorder %s205, %s207
      %p214 = scmp.eq.s32.totalorder %s27, 3
      %p215 = por %p213, %p214
      %p216 = scmp.ne.s32.totalorder %s207, %s208
      %p217 = scmp.eq.s32.totalorder %s27, 0
      %p218 = por %p216, %p217
      %p219 = scmp.ne.s32.totalorder %s207, %s208
      %p220 = scmp.eq.s32.totalorder %s28, 3
      %p221 = por %p219, %p220
      %p223 = scmp.ne.s32.totalorder %s208, %s222
      %p224 = scmp.eq.s32.totalorder %s28, 0
      %p225 = por %p223, %p224
      %s227 = sadd.s32 %s226, 1
      %p230 = scmp.eq.s32.totalorder %s22, 3
      %p231 = scmp.ne.s32.totalorder %s226, %s228
      %p232 = scmp.eq.s32.totalorder %s22, 0
      %p233 = por %p231, %p232
      %p234 = scmp.ne.s32.totalorder %s226, %s228
      %p235 = scmp.eq.s32.totalorder %s27, 3
      %p236 = por %p234, %p235
      %p237 = scmp.ne.s32.totalorder %s228, %s229
      %p238 = scmp.eq.s32.totalorder %s27, 0
      %p239 = por %p237, %p238
      %p240 = scmp.ne.s32.totalorder %s228, %s229
      %p241 = scmp.eq.s32.totalorder %s28, 3
      %p242 = por %p240, %p241
      %p244 = scmp.ne.s32.totalorder %s229, %s243
      %p245 = scmp.eq.s32.totalorder %s28, 0
      %p246 = por %p244, %p245
      %s248 = sadd.s32 %s247, 1
      %p251 = scmp.eq.s32.totalorder %s22, 3
      %p252 = scmp.ne.s32.totalorder %s247, %s249
      %p253 = scmp.eq.s32.totalorder %s22, 0
      %p254 = por %p252, %p253
      %p255 = scmp.ne.s32.totalorder %s247, %s249
      %p256 = scmp.eq.s32.totalorder %s27, 3
      %p257 = por %p255, %p256
      %p258 = scmp.ne.s32.totalorder %s249, %s250
      %p259 = scmp.eq.s32.totalorder %s27, 0
      %p260 = por %p258, %p259
      %p261 = scmp.ne.s32.totalorder %s249, %s250
      %p262 = scmp.eq.s32.totalorder %s28, 3
      %p263 = por %p261, %p262
      %p265 = scmp.ne.s32.totalorder %s250, %s264
      %p266 = scmp.eq.s32.totalorder %s28, 0
      %p267 = por %p265, %p266
      %s269 = sadd.s32 %s268, 1
      %p272 = scmp.eq.s32.totalorder %s22, 3
      %p273 = scmp.ne.s32.totalorder %s268, %s270
      %p274 = scmp.eq.s32.totalorder %s22, 0
      %p275 = por %p273, %p274
      %p276 = scmp.ne.s32.totalorder %s268, %s270
      %p277 = scmp.eq.s32.totalorder %s27, 3
      %p278 = por %p276, %p277
      %p279 = scmp.ne.s32.totalorder %s270, %s271
      %p280 = scmp.eq.s32.totalorder %s27, 0
      %p281 = por %p279, %p280
      %p282 = scmp.ne.s32.totalorder %s270, %s271
      %p283 = scmp.eq.s32.totalorder %s28, 3
      %p284 = por %p282, %p283
      %p286 = scmp.ne.s32.totalorder %s271, %s285
      %p287 = scmp.eq.s32.totalorder %s28, 0
      %p288 = por %p286, %p287
      %s290 = sadd.s32 %s289, 1
      %p293 = scmp.eq.s32.totalorder %s22, 3
      %p294 = scmp.ne.s32.totalorder %s289, %s291
      %p295 = scmp.eq.s32.totalorder %s22, 0
      %p296 = por %p294, %p295
      %p297 = scmp.ne.s32.totalorder %s289, %s291
      %p298 = scmp.eq.s32.totalorder %s27, 3
      %p299 = por %p297, %p298
      %p300 = scmp.ne.s32.totalorder %s291, %s292
      %p301 = scmp.eq.s32.totalorder %s27, 0
      %p302 = por %p300, %p301
      %p303 = scmp.ne.s32.totalorder %s291, %s292
      %p304 = scmp.eq.s32.totalorder %s28, 3
      %p305 = por %p303, %p304
      %p307 = scmp.ne.s32.totalorder %s292, %s306
      %p308 = scmp.eq.s32.totalorder %s28, 0
      %p309 = por %p307, %p308
      %s311 = sadd.s32 %s310, 1
      %p314 = scmp.eq.s32.totalorder %s22, 3
      %p315 = scmp.ne.s32.totalorder %s310, %s312
      %p316 = scmp.eq.s32.totalorder %s22, 0
      %p317 = por %p315, %p316
      %p318 = scmp.ne.s32.totalorder %s310, %s312
      %p319 = scmp.eq.s32.totalorder %s27, 3
      %p320 = por %p318, %p319
      %p321 = scmp.ne.s32.totalorder %s312, %s313
      %p322 = scmp.eq.s32.totalorder %s27, 0
      %p323 = por %p321, %p322
      %p324 = scmp.ne.s32.totalorder %s312, %s313
      %p325 = scmp.eq.s32.totalorder %s28, 3
      %p326 = por %p324, %p325
      %p328 = scmp.ne.s32.totalorder %s313, %s327
      %p329 = scmp.eq.s32.totalorder %s28, 0
      %p330 = por %p328, %p329
      %s332 = sadd.s32 %s331, 1
      %p335 = scmp.eq.s32.totalorder %s22, 3
      %p336 = scmp.ne.s32.totalorder %s331, %s333
      %p337 = scmp.eq.s32.totalorder %s22, 0
      %p338 = por %p336, %p337
      %p339 = scmp.ne.s32.totalorder %s331, %s333
      %p340 = scmp.eq.s32.totalorder %s27, 3
      %p341 = por %p339, %p340
      %p342 = scmp.ne.s32.totalorder %s333, %s334
      %p343 = scmp.eq.s32.totalorder %s27, 0
      %p344 = por %p342, %p343
      %p345 = scmp.ne.s32.totalorder %s333, %s334
      %p346 = scmp.eq.s32.totalorder %s28, 3
      %p347 = por %p345, %p346
      %p349 = scmp.ne.s32.totalorder %s334, %s348
      %p350 = scmp.eq.s32.totalorder %s28, 0
      %p351 = por %p349, %p350
      %s352 = ssub.s32 %s30, %s37
      %s353 = ssub.s32 %s29, %s41
      %s354 = sor.u32 %s352, %s353
      %p355 = scmp.eq.s32.totalorder %s354, 0
      %s357 = sadd.s32 %s356, 1
      %s358 = scalar_select %p355, %s356, %s357
      %p361 = pneg %p355
      %p362 = scmp.eq.s32.totalorder %s22, 3
      %p363 = por %p361, %p362
      %p364 = scmp.ne.s32.totalorder %s356, %s359
      %p365 = scmp.eq.s32.totalorder %s22, 0
      %p366 = por %p364, %p365
      %p367 = scmp.ne.s32.totalorder %s356, %s359
      %p368 = scmp.eq.s32.totalorder %s27, 3
      %p369 = por %p367, %p368
      %p370 = scmp.ne.s32.totalorder %s359, %s360
      %p371 = scmp.eq.s32.totalorder %s27, 0
      %p372 = por %p370, %p371
      %p373 = scmp.ne.s32.totalorder %s359, %s360
      %p374 = scmp.eq.s32.totalorder %s28, 3
      %p375 = por %p373, %p374
      %p377 = scmp.ne.s32.totalorder %s360, %s376
      %p378 = scmp.eq.s32.totalorder %s28, 0
      %p379 = por %p377, %p378
      %s380 = ssub.s32 1, %s30
      %s381 = ssub.s32 1, %s37
      %s382 = ssub.s32 %s380, %s381
      %s383 = ssub.s32 %s29, %s41
      %s384 = sor.u32 %s382, %s383
      %p385 = scmp.eq.s32.totalorder %s384, 0
      %s387 = sadd.s32 %s386, 1
      %s388 = scalar_select %p385, %s386, %s387
      %p391 = pneg %p385
      %p392 = scmp.eq.s32.totalorder %s22, 3
      %p393 = por %p391, %p392
      %p394 = scmp.ne.s32.totalorder %s386, %s389
      %p395 = scmp.eq.s32.totalorder %s22, 0
      %p396 = por %p394, %p395
      %p397 = scmp.ne.s32.totalorder %s386, %s389
      %p398 = scmp.eq.s32.totalorder %s27, 3
      %p399 = por %p397, %p398
      %p400 = scmp.ne.s32.totalorder %s389, %s390
      %p401 = scmp.eq.s32.totalorder %s27, 0
      %p402 = por %p400, %p401
      %p403 = scmp.ne.s32.totalorder %s389, %s390
      %p404 = scmp.eq.s32.totalorder %s28, 3
      %p405 = por %p403, %p404
      %p407 = scmp.ne.s32.totalorder %s390, %s406
      %p408 = scmp.eq.s32.totalorder %s28, 0
      %p409 = por %p407, %p408
      %p410 = scmp.le.s32.totalorder 1, %s22
      %p411 = scmp.lt.s32.totalorder %s22, 5
      %p412 = pnand %p410, %p411
      %p413 = pneg %p412
      // Predicated region
      $region9: #{tpu_custom_call.1} parent=5 // pred_check
        _
      $region10: #{tpu_custom_call.1} parent=5 // pred_check_branch
        %415 = sbr.rel (%p412) target = $region12
      $region11: #{tpu_custom_call.1} parent=5 // pred_region
        %s416 = ssub.s32 %s22, 1
        // Predicated region
        $region13: #{tpu_custom_call.1} parent=11 // pred_check
          %p417 = pneg %p113
        $region14: #{tpu_custom_call.1} parent=11 // pred_check_branch
          %419 = sbr.rel (%p417) target = $region16
        $region15: #{tpu_custom_call.1} parent=11 // pred_region
          _
        $region16: #{tpu_custom_call.1} parent=11 // pred_fallthru
          _
        // Predicated region
        $region17: #{tpu_custom_call.1} parent=11 // pred_check
          %p420 = pneg %p134
        $region18: #{tpu_custom_call.1} parent=11 // pred_check_branch
          %422 = sbr.rel (%p420) target = $region20
        $region19: #{tpu_custom_call.1} parent=11 // pred_region
          _
        $region20: #{tpu_custom_call.1} parent=11 // pred_fallthru
          _
        // Predicated region
        $region21: #{tpu_custom_call.1} parent=11 // pred_check
          %p423 = pneg %p155
        $region22: #{tpu_custom_call.1} parent=11 // pred_check_branch
          %425 = sbr.rel (%p423) target = $region24
        $region23: #{tpu_custom_call.1} parent=11 // pred_region
          _
        $region24: #{tpu_custom_call.1} parent=11 // pred_fallthru
          _
        // Predicated region
        $region25: #{tpu_custom_call.1} parent=11 // pred_check
          %p426 = pneg %p176
        $region26: #{tpu_custom_call.1} parent=11 // pred_check_branch
          %428 = sbr.rel (%p426) target = $region28
        $region27: #{tpu_custom_call.1} parent=11 // pred_region
          _
        $region28: #{tpu_custom_call.1} parent=11 // pred_fallthru
          _
        // Predicated region
        $region29: #{tpu_custom_call.1} parent=11 // pred_check
          %p429 = pneg %p197
        $region30: #{tpu_custom_call.1} parent=11 // pred_check_branch
          %431 = sbr.rel (%p429) target = $region32
        $region31: #{tpu_custom_call.1} parent=11 // pred_region
          _
        $region32: #{tpu_custom_call.1} parent=11 // pred_fallthru
          _
        // Predicated region
        $region33: #{tpu_custom_call.1} parent=11 // pred_check
          %p432 = pneg %p218
        $region34: #{tpu_custom_call.1} parent=11 // pred_check_branch
          %434 = sbr.rel (%p432) target = $region36
        $region35: #{tpu_custom_call.1} parent=11 // pred_region
          _
        $region36: #{tpu_custom_call.1} parent=11 // pred_fallthru
          _
        // Predicated region
        $region37: #{tpu_custom_call.1} parent=11 // pred_check
          %p435 = pneg %p239
        $region38: #{tpu_custom_call.1} parent=11 // pred_check_branch
          %437 = sbr.rel (%p435) target = $region40
        $region39: #{tpu_custom_call.1} parent=11 // pred_region
          _
        $region40: #{tpu_custom_call.1} parent=11 // pred_fallthru
          _
        // Predicated region
        $region41: #{tpu_custom_call.1} parent=11 // pred_check
          %p438 = pneg %p260
        $region42: #{tpu_custom_call.1} parent=11 // pred_check_branch
          %440 = sbr.rel (%p438) target = $region44
        $region43: #{tpu_custom_call.1} parent=11 // pred_region
          _
        $region44: #{tpu_custom_call.1} parent=11 // pred_fallthru
          _
        // Predicated region
        $region45: #{tpu_custom_call.1} parent=11 // pred_check
          %p441 = pneg %p281
        $region46: #{tpu_custom_call.1} parent=11 // pred_check_branch
          %443 = sbr.rel (%p441) target = $region48
        $region47: #{tpu_custom_call.1} parent=11 // pred_region
          _
        $region48: #{tpu_custom_call.1} parent=11 // pred_fallthru
          _
        // Predicated region
        $region49: #{tpu_custom_call.1} parent=11 // pred_check
          %p444 = pneg %p302
        $region50: #{tpu_custom_call.1} parent=11 // pred_check_branch
          %446 = sbr.rel (%p444) target = $region52
        $region51: #{tpu_custom_call.1} parent=11 // pred_region
          _
        $region52: #{tpu_custom_call.1} parent=11 // pred_fallthru
          _
        // Predicated region
        $region53: #{tpu_custom_call.1} parent=11 // pred_check
          %p447 = pneg %p323
        $region54: #{tpu_custom_call.1} parent=11 // pred_check_branch
          %449 = sbr.rel (%p447) target = $region56
        $region55: #{tpu_custom_call.1} parent=11 // pred_region
          _
        $region56: #{tpu_custom_call.1} parent=11 // pred_fallthru
          _
        // Predicated region
        $region57: #{tpu_custom_call.1} parent=11 // pred_check
          %p450 = pneg %p344
        $region58: #{tpu_custom_call.1} parent=11 // pred_check_branch
          %452 = sbr.rel (%p450) target = $region60
        $region59: #{tpu_custom_call.1} parent=11 // pred_region
          _
        $region60: #{tpu_custom_call.1} parent=11 // pred_fallthru
          _
      $region12: #{tpu_custom_call.1} parent=5 // pred_fallthru
        _
      %p453 = scmp.lt.s32.totalorder %s22, 4
      // Predicated region
      $region61: #{tpu_custom_call.1} parent=5 // pred_check
        %p454 = pneg %p453
      $region62: #{tpu_custom_call.1} parent=5 // pred_check_branch
        %456 = sbr.rel (%p454) target = $region64
      $region63: #{tpu_custom_call.1} parent=5 // pred_region
        // Predicated region
        $region65: #{tpu_custom_call.1} parent=63 // pred_check
          %p457 = pneg %p56
        $region66: #{tpu_custom_call.1} parent=63 // pred_check_branch
          %459 = sbr.rel (%p457) target = $region68
        $region67: #{tpu_custom_call.1} parent=63 // pred_region
          %s460 = sand.u32 %s46, 1
          %s461 = sand.u32 %s46, 1
          %s462 = smul.addr %s461, 512
          %s463 = scalar_lea.vmem [#allocation4], %s462
          %s464 = smul.u32 8, %s30
          %s465 = smul.u32 8, %s29
          %s466 = smul.addr %s464, 16
          %s467 = sadd.s32 %s465, %s466
          %s468 = smul.addr %s467, 8
          %s469 = scalar_lea.vmem %s0, %s468
          // Predicated region
          $region69: #{tpu_custom_call.1} parent=67 // pred_check
            _
          $region70: #{tpu_custom_call.1} parent=67 // pred_check_branch
            %471 = sbr.rel (0) target = $region72
          $region71: #{tpu_custom_call.1} parent=67 // pred_region
            // Predicated region
            $region73: #{tpu_custom_call.1} parent=71 // pred_check
              _
            $region74: #{tpu_custom_call.1} parent=71 // pred_check_branch
              %473 = sbr.rel (0) target = $region76
            $region75: #{tpu_custom_call.1} parent=71 // pred_region
              // Predicated region
              $region88: #{tpu_custom_call.1} parent=75 // pred_check
                _
              $region89: #{tpu_custom_call.1} parent=75 // pred_check_branch
                %615 = sbr.rel (0) target = $region91
              $region90: #{tpu_custom_call.1} parent=75 // pred_region
                loop: start=0, step=1, limit=1
                $region92: #{tpu_custom_call.1} parent=90 // loop_pre_header
                  _
                $region93: #{tpu_custom_call.1} parent=90 // loop_header
                  %s617 = sphi 0, %s621
                  %p618 = scmp.ge.s32.totalorder %s617, 1
                  %s622 = sphi %s469, %s469
                  %s623 = sphi %s463, %s463
                $region94: #{tpu_custom_call.1} parent=90 // loop_header_branch
                  %620 = sbr.rel (%p618) target = $region98
                $region95: #{tpu_custom_call.1} parent=90 // loop_body
                  %v624 = vld [vmem:[%s622] sm:$0xff]
                  %625 = vst [vmem:[%s623] sm:$0xff] %v624
                  %v626 = vld [vmem:[%s622 + $0x8] sm:$0xff]
                  %627 = vst [vmem:[%s623 + $0x8] sm:$0xff] %v626
                  %v628 = vld [vmem:[%s622 + $0x10] sm:$0xff]
                  %629 = vst [vmem:[%s623 + $0x10] sm:$0xff] %v628
                  %v630 = vld [vmem:[%s622 + $0x18] sm:$0xff]
                  %631 = vst [vmem:[%s623 + $0x18] sm:$0xff] %v630
                  %v632 = vld [vmem:[%s622 + $0x20] sm:$0xff]
                  %633 = vst [vmem:[%s623 + $0x20] sm:$0xff] %v632
                  %v634 = vld [vmem:[%s622 + $0x28] sm:$0xff]
                  %635 = vst [vmem:[%s623 + $0x28] sm:$0xff] %v634
                  %v636 = vld [vmem:[%s622 + $0x30] sm:$0xff]
                  %637 = vst [vmem:[%s623 + $0x30] sm:$0xff] %v636
                  %v638 = vld [vmem:[%s622 + $0x38] sm:$0xff]
                  %639 = vst [vmem:[%s623 + $0x38] sm:$0xff] %v638
                  %v640 = vld [vmem:[%s622 + $0x80] sm:$0xff]
                  %641 = vst [vmem:[%s623 + $0x40] sm:$0xff] %v640
                  %v642 = vld [vmem:[%s622 + $0x88] sm:$0xff]
                  %643 = vst [vmem:[%s623 + $0x48] sm:$0xff] %v642
                  %v644 = vld [vmem:[%s622 + $0x90] sm:$0xff]
                  %645 = vst [vmem:[%s623 + $0x50] sm:$0xff] %v644
                  %v646 = vld [vmem:[%s622 + $0x98] sm:$0xff]
                  %647 = vst [vmem:[%s623 + $0x58] sm:$0xff] %v646
                  %v648 = vld [vmem:[%s622 + $0xa0] sm:$0xff]
                  %649 = vst [vmem:[%s623 + $0x60] sm:$0xff] %v648
                  %v650 = vld [vmem:[%s622 + $0xa8] sm:$0xff]
                  %651 = vst [vmem:[%s623 + $0x68] sm:$0xff] %v650
                  %v652 = vld [vmem:[%s622 + $0xb0] sm:$0xff]
                  %653 = vst [vmem:[%s623 + $0x70] sm:$0xff] %v652
                  %v654 = vld [vmem:[%s622 + $0xb8] sm:$0xff]
                  %655 = vst [vmem:[%s623 + $0x78] sm:$0xff] %v654
                  %v656 = vld [vmem:[%s622 + $0x100] sm:$0xff]
                  %657 = vst [vmem:[%s623 + $0x80] sm:$0xff] %v656
                  %v658 = vld [vmem:[%s622 + $0x108] sm:$0xff]
                  %659 = vst [vmem:[%s623 + $0x88] sm:$0xff] %v658
                  %v660 = vld [vmem:[%s622 + $0x110] sm:$0xff]
                  %661 = vst [vmem:[%s623 + $0x90] sm:$0xff] %v660
                  %v662 = vld [vmem:[%s622 + $0x118] sm:$0xff]
                  %663 = vst [vmem:[%s623 + $0x98] sm:$0xff] %v662
                  %v664 = vld [vmem:[%s622 + $0x120] sm:$0xff]
                  %665 = vst [vmem:[%s623 + $0xa0] sm:$0xff] %v664
                  %v666 = vld [vmem:[%s622 + $0x128] sm:$0xff]
                  %667 = vst [vmem:[%s623 + $0xa8] sm:$0xff] %v666
                  %v668 = vld [vmem:[%s622 + $0x130] sm:$0xff]
                  %669 = vst [vmem:[%s623 + $0xb0] sm:$0xff] %v668
                  %v670 = vld [vmem:[%s622 + $0x138] sm:$0xff]
                  %671 = vst [vmem:[%s623 + $0xb8] sm:$0xff] %v670
                  %v672 = vld [vmem:[%s622 + $0x180] sm:$0xff]
                  %673 = vst [vmem:[%s623 + $0xc0] sm:$0xff] %v672
                  %v674 = vld [vmem:[%s622 + $0x188] sm:$0xff]
                  %675 = vst [vmem:[%s623 + $0xc8] sm:$0xff] %v674
                  %v676 = vld [vmem:[%s622 + $0x190] sm:$0xff]
                  %677 = vst [vmem:[%s623 + $0xd0] sm:$0xff] %v676
                  %v678 = vld [vmem:[%s622 + $0x198] sm:$0xff]
                  %679 = vst [vmem:[%s623 + $0xd8] sm:$0xff] %v678
                  %v680 = vld [vmem:[%s622 + $0x1a0] sm:$0xff]
                  %681 = vst [vmem:[%s623 + $0xe0] sm:$0xff] %v680
                  %v682 = vld [vmem:[%s622 + $0x1a8] sm:$0xff]
                  %683 = vst [vmem:[%s623 + $0xe8] sm:$0xff] %v682
                  %v684 = vld [vmem:[%s622 + $0x1b0] sm:$0xff]
                  %685 = vst [vmem:[%s623 + $0xf0] sm:$0xff] %v684
                  %v686 = vld [vmem:[%s622 + $0x1b8] sm:$0xff]
                  %687 = vst [vmem:[%s623 + $0xf8] sm:$0xff] %v686
                  %v688 = vld [vmem:[%s622 + $0x200] sm:$0xff]
                  %689 = vst [vmem:[%s623 + $0x100] sm:$0xff] %v688
                  %v690 = vld [vmem:[%s622 + $0x208] sm:$0xff]
                  %691 = vst [vmem:[%s623 + $0x108] sm:$0xff] %v690
                  %v692 = vld [vmem:[%s622 + $0x210] sm:$0xff]
                  %693 = vst [vmem:[%s623 + $0x110] sm:$0xff] %v692
                  %v694 = vld [vmem:[%s622 + $0x218] sm:$0xff]
                  %695 = vst [vmem:[%s623 + $0x118] sm:$0xff] %v694
                  %v696 = vld [vmem:[%s622 + $0x220] sm:$0xff]
                  %697 = vst [vmem:[%s623 + $0x120] sm:$0xff] %v696
                  %v698 = vld [vmem:[%s622 + $0x228] sm:$0xff]
                  %699 = vst [vmem:[%s623 + $0x128] sm:$0xff] %v698
                  %v700 = vld [vmem:[%s622 + $0x230] sm:$0xff]
                  %701 = vst [vmem:[%s623 + $0x130] sm:$0xff] %v700
                  %v702 = vld [vmem:[%s622 + $0x238] sm:$0xff]
                  %703 = vst [vmem:[%s623 + $0x138] sm:$0xff] %v702
                  %v704 = vld [vmem:[%s622 + $0x280] sm:$0xff]
                  %705 = vst [vmem:[%s623 + $0x140] sm:$0xff] %v704
                  %v706 = vld [vmem:[%s622 + $0x288] sm:$0xff]
                  %707 = vst [vmem:[%s623 + $0x148] sm:$0xff] %v706
                  %v708 = vld [vmem:[%s622 + $0x290] sm:$0xff]
                  %709 = vst [vmem:[%s623 + $0x150] sm:$0xff] %v708
                  %v710 = vld [vmem:[%s622 + $0x298] sm:$0xff]
                  %711 = vst [vmem:[%s623 + $0x158] sm:$0xff] %v710
                  %v712 = vld [vmem:[%s622 + $0x2a0] sm:$0xff]
                  %713 = vst [vmem:[%s623 + $0x160] sm:$0xff] %v712
                  %v714 = vld [vmem:[%s622 + $0x2a8] sm:$0xff]
                  %715 = vst [vmem:[%s623 + $0x168] sm:$0xff] %v714
                  %v716 = vld [vmem:[%s622 + $0x2b0] sm:$0xff]
                  %717 = vst [vmem:[%s623 + $0x170] sm:$0xff] %v716
                  %v718 = vld [vmem:[%s622 + $0x2b8] sm:$0xff]
                  %719 = vst [vmem:[%s623 + $0x178] sm:$0xff] %v718
                  %v720 = vld [vmem:[%s622 + $0x300] sm:$0xff]
                  %721 = vst [vmem:[%s623 + $0x180] sm:$0xff] %v720
                  %v722 = vld [vmem:[%s622 + $0x308] sm:$0xff]
                  %723 = vst [vmem:[%s623 + $0x188] sm:$0xff] %v722
                  %v724 = vld [vmem:[%s622 + $0x310] sm:$0xff]
                  %725 = vst [vmem:[%s623 + $0x190] sm:$0xff] %v724
                  %v726 = vld [vmem:[%s622 + $0x318] sm:$0xff]
                  %727 = vst [vmem:[%s623 + $0x198] sm:$0xff] %v726
                  %v728 = vld [vmem:[%s622 + $0x320] sm:$0xff]
                  %729 = vst [vmem:[%s623 + $0x1a0] sm:$0xff] %v728
                  %v730 = vld [vmem:[%s622 + $0x328] sm:$0xff]
                  %731 = vst [vmem:[%s623 + $0x1a8] sm:$0xff] %v730
                  %v732 = vld [vmem:[%s622 + $0x330] sm:$0xff]
                  %733 = vst [vmem:[%s623 + $0x1b0] sm:$0xff] %v732
                  %v734 = vld [vmem:[%s622 + $0x338] sm:$0xff]
                  %735 = vst [vmem:[%s623 + $0x1b8] sm:$0xff] %v734
                  %v736 = vld [vmem:[%s622 + $0x380] sm:$0xff]
                  %737 = vst [vmem:[%s623 + $0x1c0] sm:$0xff] %v736
                  %v738 = vld [vmem:[%s622 + $0x388] sm:$0xff]
                  %739 = vst [vmem:[%s623 + $0x1c8] sm:$0xff] %v738
                  %v740 = vld [vmem:[%s622 + $0x390] sm:$0xff]
                  %741 = vst [vmem:[%s623 + $0x1d0] sm:$0xff] %v740
                  %v742 = vld [vmem:[%s622 + $0x398] sm:$0xff]
                  %743 = vst [vmem:[%s623 + $0x1d8] sm:$0xff] %v742
                  %v744 = vld [vmem:[%s622 + $0x3a0] sm:$0xff]
                  %745 = vst [vmem:[%s623 + $0x1e0] sm:$0xff] %v744
                  %v746 = vld [vmem:[%s622 + $0x3a8] sm:$0xff]
                  %747 = vst [vmem:[%s623 + $0x1e8] sm:$0xff] %v746
                  %v748 = vld [vmem:[%s622 + $0x3b0] sm:$0xff]
                  %749 = vst [vmem:[%s623 + $0x1f0] sm:$0xff] %v748
                  %v750 = vld [vmem:[%s622 + $0x3b8] sm:$0xff]
                  %751 = vst [vmem:[%s623 + $0x1f8] sm:$0xff] %v750
                $region96: #{tpu_custom_call.1} parent=90 // loop_footer
                  %s621 = sadd.s32 1, %s617
                $region97: #{tpu_custom_call.1} parent=90 // loop_footer_branch
                  %616 = sbr.rel target = $region93
                $region98: #{tpu_custom_call.1} parent=90 // loop_exit
                  _
              $region91: #{tpu_custom_call.1} parent=75 // pred_fallthru
                _
              // Predicated region
              $region99: #{tpu_custom_call.1} parent=75 // pred_check
                _
              $region100: #{tpu_custom_call.1} parent=75 // pred_check_branch
                %753 = sbr.rel target = $region102
              $region101: #{tpu_custom_call.1} parent=75 // pred_region
                _
              $region102: #{tpu_custom_call.1} parent=75 // pred_fallthru
                _
            $region76: #{tpu_custom_call.1} parent=71 // pred_fallthru
              _
            // Predicated region
            $region77: #{tpu_custom_call.1} parent=71 // pred_check
              _
            $region78: #{tpu_custom_call.1} parent=71 // pred_check_branch
              %475 = sbr.rel target = $region80
            $region79: #{tpu_custom_call.1} parent=71 // pred_region
              %s477 = ssub.s32 256, 1
              loop: start=0, step=1, limit=1
              $region81: #{tpu_custom_call.1} parent=79 // loop_pre_header
                _
              $region82: #{tpu_custom_call.1} parent=79 // loop_header
                %s479 = sphi 0, %s483
                %p480 = scmp.ge.s32.totalorder %s479, 1
                %s484 = sphi %s469, %s469
                %s485 = sphi %s463, %s463
              $region83: #{tpu_custom_call.1} parent=79 // loop_header_branch
                %482 = sbr.rel (%p480) target = $region87
              $region84: #{tpu_custom_call.1} parent=79 // loop_body
                %v486 = vld [vmem:[%s484] sm:%s477]
                %487 = vst [vmem:[%s485] sm:%s477] %v486
                %v488 = vld [vmem:[%s484 + $0x8] sm:%s477]
                %489 = vst [vmem:[%s485 + $0x8] sm:%s477] %v488
                %v490 = vld [vmem:[%s484 + $0x10] sm:%s477]
                %491 = vst [vmem:[%s485 + $0x10] sm:%s477] %v490
                %v492 = vld [vmem:[%s484 + $0x18] sm:%s477]
                %493 = vst [vmem:[%s485 + $0x18] sm:%s477] %v492
                %v494 = vld [vmem:[%s484 + $0x20] sm:%s477]
                %495 = vst [vmem:[%s485 + $0x20] sm:%s477] %v494
                %v496 = vld [vmem:[%s484 + $0x28] sm:%s477]
                %497 = vst [vmem:[%s485 + $0x28] sm:%s477] %v496
                %v498 = vld [vmem:[%s484 + $0x30] sm:%s477]
                %499 = vst [vmem:[%s485 + $0x30] sm:%s477] %v498
                %v500 = vld [vmem:[%s484 + $0x38] sm:%s477]
                %501 = vst [vmem:[%s485 + $0x38] sm:%s477] %v500
                %v502 = vld [vmem:[%s484 + $0x80] sm:%s477]
                %503 = vst [vmem:[%s485 + $0x40] sm:%s477] %v502
                %v504 = vld [vmem:[%s484 + $0x88] sm:%s477]
                %505 = vst [vmem:[%s485 + $0x48] sm:%s477] %v504
                %v506 = vld [vmem:[%s484 + $0x90] sm:%s477]
                %507 = vst [vmem:[%s485 + $0x50] sm:%s477] %v506
                %v508 = vld [vmem:[%s484 + $0x98] sm:%s477]
                %509 = vst [vmem:[%s485 + $0x58] sm:%s477] %v508
                %v510 = vld [vmem:[%s484 + $0xa0] sm:%s477]
                %511 = vst [vmem:[%s485 + $0x60] sm:%s477] %v510
                %v512 = vld [vmem:[%s484 + $0xa8] sm:%s477]
                %513 = vst [vmem:[%s485 + $0x68] sm:%s477] %v512
                %v514 = vld [vmem:[%s484 + $0xb0] sm:%s477]
                %515 = vst [vmem:[%s485 + $0x70] sm:%s477] %v514
                %v516 = vld [vmem:[%s484 + $0xb8] sm:%s477]
                %517 = vst [vmem:[%s485 + $0x78] sm:%s477] %v516
                %v518 = vld [vmem:[%s484 + $0x100] sm:%s477]
                %519 = vst [vmem:[%s485 + $0x80] sm:%s477] %v518
                %v520 = vld [vmem:[%s484 + $0x108] sm:%s477]
                %521 = vst [vmem:[%s485 + $0x88] sm:%s477] %v520
                %v522 = vld [vmem:[%s484 + $0x110] sm:%s477]
                %523 = vst [vmem:[%s485 + $0x90] sm:%s477] %v522
                %v524 = vld [vmem:[%s484 + $0x118] sm:%s477]
                %525 = vst [vmem:[%s485 + $0x98] sm:%s477] %v524
                %v526 = vld [vmem:[%s484 + $0x120] sm:%s477]
                %527 = vst [vmem:[%s485 + $0xa0] sm:%s477] %v526
                %v528 = vld [vmem:[%s484 + $0x128] sm:%s477]
                %529 = vst [vmem:[%s485 + $0xa8] sm:%s477] %v528
                %v530 = vld [vmem:[%s484 + $0x130] sm:%s477]
                %531 = vst [vmem:[%s485 + $0xb0] sm:%s477] %v530
                %v532 = vld [vmem:[%s484 + $0x138] sm:%s477]
                %533 = vst [vmem:[%s485 + $0xb8] sm:%s477] %v532
                %v534 = vld [vmem:[%s484 + $0x180] sm:%s477]
                %535 = vst [vmem:[%s485 + $0xc0] sm:%s477] %v534
                %v536 = vld [vmem:[%s484 + $0x188] sm:%s477]
                %537 = vst [vmem:[%s485 + $0xc8] sm:%s477] %v536
                %v538 = vld [vmem:[%s484 + $0x190] sm:%s477]
                %539 = vst [vmem:[%s485 + $0xd0] sm:%s477] %v538
                %v540 = vld [vmem:[%s484 + $0x198] sm:%s477]
                %541 = vst [vmem:[%s485 + $0xd8] sm:%s477] %v540
                %v542 = vld [vmem:[%s484 + $0x1a0] sm:%s477]
                %543 = vst [vmem:[%s485 + $0xe0] sm:%s477] %v542
                %v544 = vld [vmem:[%s484 + $0x1a8] sm:%s477]
                %545 = vst [vmem:[%s485 + $0xe8] sm:%s477] %v544
                %v546 = vld [vmem:[%s484 + $0x1b0] sm:%s477]
                %547 = vst [vmem:[%s485 + $0xf0] sm:%s477] %v546
                %v548 = vld [vmem:[%s484 + $0x1b8] sm:%s477]
                %549 = vst [vmem:[%s485 + $0xf8] sm:%s477] %v548
                %v550 = vld [vmem:[%s484 + $0x200] sm:%s477]
                %551 = vst [vmem:[%s485 + $0x100] sm:%s477] %v550
                %v552 = vld [vmem:[%s484 + $0x208] sm:%s477]
                %553 = vst [vmem:[%s485 + $0x108] sm:%s477] %v552
                %v554 = vld [vmem:[%s484 + $0x210] sm:%s477]
                %555 = vst [vmem:[%s485 + $0x110] sm:%s477] %v554
                %v556 = vld [vmem:[%s484 + $0x218] sm:%s477]
                %557 = vst [vmem:[%s485 + $0x118] sm:%s477] %v556
                %v558 = vld [vmem:[%s484 + $0x220] sm:%s477]
                %559 = vst [vmem:[%s485 + $0x120] sm:%s477] %v558
                %v560 = vld [vmem:[%s484 + $0x228] sm:%s477]
                %561 = vst [vmem:[%s485 + $0x128] sm:%s477] %v560
                %v562 = vld [vmem:[%s484 + $0x230] sm:%s477]
                %563 = vst [vmem:[%s485 + $0x130] sm:%s477] %v562
                %v564 = vld [vmem:[%s484 + $0x238] sm:%s477]
                %565 = vst [vmem:[%s485 + $0x138] sm:%s477] %v564
                %v566 = vld [vmem:[%s484 + $0x280] sm:%s477]
                %567 = vst [vmem:[%s485 + $0x140] sm:%s477] %v566
                %v568 = vld [vmem:[%s484 + $0x288] sm:%s477]
                %569 = vst [vmem:[%s485 + $0x148] sm:%s477] %v568
                %v570 = vld [vmem:[%s484 + $0x290] sm:%s477]
                %571 = vst [vmem:[%s485 + $0x150] sm:%s477] %v570
                %v572 = vld [vmem:[%s484 + $0x298] sm:%s477]
                %573 = vst [vmem:[%s485 + $0x158] sm:%s477] %v572
                %v574 = vld [vmem:[%s484 + $0x2a0] sm:%s477]
                %575 = vst [vmem:[%s485 + $0x160] sm:%s477] %v574
                %v576 = vld [vmem:[%s484 + $0x2a8] sm:%s477]
                %577 = vst [vmem:[%s485 + $0x168] sm:%s477] %v576
                %v578 = vld [vmem:[%s484 + $0x2b0] sm:%s477]
                %579 = vst [vmem:[%s485 + $0x170] sm:%s477] %v578
                %v580 = vld [vmem:[%s484 + $0x2b8] sm:%s477]
                %581 = vst [vmem:[%s485 + $0x178] sm:%s477] %v580
                %v582 = vld [vmem:[%s484 + $0x300] sm:%s477]
                %583 = vst [vmem:[%s485 + $0x180] sm:%s477] %v582
                %v584 = vld [vmem:[%s484 + $0x308] sm:%s477]
                %585 = vst [vmem:[%s485 + $0x188] sm:%s477] %v584
                %v586 = vld [vmem:[%s484 + $0x310] sm:%s477]
                %587 = vst [vmem:[%s485 + $0x190] sm:%s477] %v586
                %v588 = vld [vmem:[%s484 + $0x318] sm:%s477]
                %589 = vst [vmem:[%s485 + $0x198] sm:%s477] %v588
                %v590 = vld [vmem:[%s484 + $0x320] sm:%s477]
                %591 = vst [vmem:[%s485 + $0x1a0] sm:%s477] %v590
                %v592 = vld [vmem:[%s484 + $0x328] sm:%s477]
                %593 = vst [vmem:[%s485 + $0x1a8] sm:%s477] %v592
                %v594 = vld [vmem:[%s484 + $0x330] sm:%s477]
                %595 = vst [vmem:[%s485 + $0x1b0] sm:%s477] %v594
                %v596 = vld [vmem:[%s484 + $0x338] sm:%s477]
                %597 = vst [vmem:[%s485 + $0x1b8] sm:%s477] %v596
                %v598 = vld [vmem:[%s484 + $0x380] sm:%s477]
                %599 = vst [vmem:[%s485 + $0x1c0] sm:%s477] %v598
                %v600 = vld [vmem:[%s484 + $0x388] sm:%s477]
                %601 = vst [vmem:[%s485 + $0x1c8] sm:%s477] %v600
                %v602 = vld [vmem:[%s484 + $0x390] sm:%s477]
                %603 = vst [vmem:[%s485 + $0x1d0] sm:%s477] %v602
                %v604 = vld [vmem:[%s484 + $0x398] sm:%s477]
                %605 = vst [vmem:[%s485 + $0x1d8] sm:%s477] %v604
                %v606 = vld [vmem:[%s484 + $0x3a0] sm:%s477]
                %607 = vst [vmem:[%s485 + $0x1e0] sm:%s477] %v606
                %v608 = vld [vmem:[%s484 + $0x3a8] sm:%s477]
                %609 = vst [vmem:[%s485 + $0x1e8] sm:%s477] %v608
                %v610 = vld [vmem:[%s484 + $0x3b0] sm:%s477]
                %611 = vst [vmem:[%s485 + $0x1f0] sm:%s477] %v610
                %v612 = vld [vmem:[%s484 + $0x3b8] sm:%s477]
                %613 = vst [vmem:[%s485 + $0x1f8] sm:%s477] %v612
              $region85: #{tpu_custom_call.1} parent=79 // loop_footer
                %s483 = sadd.s32 1, %s479
              $region86: #{tpu_custom_call.1} parent=79 // loop_footer_branch
                %478 = sbr.rel target = $region82
              $region87: #{tpu_custom_call.1} parent=79 // loop_exit
                _
            $region80: #{tpu_custom_call.1} parent=71 // pred_fallthru
              _
          $region72: #{tpu_custom_call.1} parent=67 // pred_fallthru
            _
          %754 = vnop
        $region68: #{tpu_custom_call.1} parent=63 // pred_fallthru
          _
        // Predicated region
        $region103: #{tpu_custom_call.1} parent=63 // pred_check
          %p755 = pneg %p86
        $region104: #{tpu_custom_call.1} parent=63 // pred_check_branch
          %757 = sbr.rel (%p755) target = $region106
        $region105: #{tpu_custom_call.1} parent=63 // pred_region
          %s758 = sand.u32 %s76, 1
          %s759 = sand.u32 %s76, 1
          %s760 = smul.addr %s759, 512
          %s761 = scalar_lea.vmem [#allocation5], %s760
          %s762 = ssub.s32 1, %s30
          %s763 = smul.u32 8, %s762
          %s764 = smul.u32 8, %s29
          %s765 = smul.addr %s763, 16
          %s766 = sadd.s32 %s764, %s765
          %s767 = smul.addr %s766, 8
          %s768 = scalar_lea.vmem %s1, %s767
          // Predicated region
          $region107: #{tpu_custom_call.1} parent=105 // pred_check
            _
          $region108: #{tpu_custom_call.1} parent=105 // pred_check_branch
            %770 = sbr.rel (0) target = $region110
          $region109: #{tpu_custom_call.1} parent=105 // pred_region
            // Predicated region
            $region111: #{tpu_custom_call.1} parent=109 // pred_check
              _
            $region112: #{tpu_custom_call.1} parent=109 // pred_check_branch
              %772 = sbr.rel (0) target = $region114
            $region113: #{tpu_custom_call.1} parent=109 // pred_region
              // Predicated region
              $region126: #{tpu_custom_call.1} parent=113 // pred_check
                _
              $region127: #{tpu_custom_call.1} parent=113 // pred_check_branch
                %914 = sbr.rel (0) target = $region129
              $region128: #{tpu_custom_call.1} parent=113 // pred_region
                loop: start=0, step=1, limit=1
                $region130: #{tpu_custom_call.1} parent=128 // loop_pre_header
                  _
                $region131: #{tpu_custom_call.1} parent=128 // loop_header
                  %s916 = sphi 0, %s920
                  %p917 = scmp.ge.s32.totalorder %s916, 1
                  %s921 = sphi %s768, %s768
                  %s922 = sphi %s761, %s761
                $region132: #{tpu_custom_call.1} parent=128 // loop_header_branch
                  %919 = sbr.rel (%p917) target = $region136
                $region133: #{tpu_custom_call.1} parent=128 // loop_body
                  %v923 = vld [vmem:[%s921] sm:$0xff]
                  %924 = vst [vmem:[%s922] sm:$0xff] %v923
                  %v925 = vld [vmem:[%s921 + $0x8] sm:$0xff]
                  %926 = vst [vmem:[%s922 + $0x8] sm:$0xff] %v925
                  %v927 = vld [vmem:[%s921 + $0x10] sm:$0xff]
                  %928 = vst [vmem:[%s922 + $0x10] sm:$0xff] %v927
                  %v929 = vld [vmem:[%s921 + $0x18] sm:$0xff]
                  %930 = vst [vmem:[%s922 + $0x18] sm:$0xff] %v929
                  %v931 = vld [vmem:[%s921 + $0x20] sm:$0xff]
                  %932 = vst [vmem:[%s922 + $0x20] sm:$0xff] %v931
                  %v933 = vld [vmem:[%s921 + $0x28] sm:$0xff]
                  %934 = vst [vmem:[%s922 + $0x28] sm:$0xff] %v933
                  %v935 = vld [vmem:[%s921 + $0x30] sm:$0xff]
                  %936 = vst [vmem:[%s922 + $0x30] sm:$0xff] %v935
                  %v937 = vld [vmem:[%s921 + $0x38] sm:$0xff]
                  %938 = vst [vmem:[%s922 + $0x38] sm:$0xff] %v937
                  %v939 = vld [vmem:[%s921 + $0x80] sm:$0xff]
                  %940 = vst [vmem:[%s922 + $0x40] sm:$0xff] %v939
                  %v941 = vld [vmem:[%s921 + $0x88] sm:$0xff]
                  %942 = vst [vmem:[%s922 + $0x48] sm:$0xff] %v941
                  %v943 = vld [vmem:[%s921 + $0x90] sm:$0xff]
                  %944 = vst [vmem:[%s922 + $0x50] sm:$0xff] %v943
                  %v945 = vld [vmem:[%s921 + $0x98] sm:$0xff]
                  %946 = vst [vmem:[%s922 + $0x58] sm:$0xff] %v945
                  %v947 = vld [vmem:[%s921 + $0xa0] sm:$0xff]
                  %948 = vst [vmem:[%s922 + $0x60] sm:$0xff] %v947
                  %v949 = vld [vmem:[%s921 + $0xa8] sm:$0xff]
                  %950 = vst [vmem:[%s922 + $0x68] sm:$0xff] %v949
                  %v951 = vld [vmem:[%s921 + $0xb0] sm:$0xff]
                  %952 = vst [vmem:[%s922 + $0x70] sm:$0xff] %v951
                  %v953 = vld [vmem:[%s921 + $0xb8] sm:$0xff]
                  %954 = vst [vmem:[%s922 + $0x78] sm:$0xff] %v953
                  %v955 = vld [vmem:[%s921 + $0x100] sm:$0xff]
                  %956 = vst [vmem:[%s922 + $0x80] sm:$0xff] %v955
                  %v957 = vld [vmem:[%s921 + $0x108] sm:$0xff]
                  %958 = vst [vmem:[%s922 + $0x88] sm:$0xff] %v957
                  %v959 = vld [vmem:[%s921 + $0x110] sm:$0xff]
                  %960 = vst [vmem:[%s922 + $0x90] sm:$0xff] %v959
                  %v961 = vld [vmem:[%s921 + $0x118] sm:$0xff]
                  %962 = vst [vmem:[%s922 + $0x98] sm:$0xff] %v961
                  %v963 = vld [vmem:[%s921 + $0x120] sm:$0xff]
                  %964 = vst [vmem:[%s922 + $0xa0] sm:$0xff] %v963
                  %v965 = vld [vmem:[%s921 + $0x128] sm:$0xff]
                  %966 = vst [vmem:[%s922 + $0xa8] sm:$0xff] %v965
                  %v967 = vld [vmem:[%s921 + $0x130] sm:$0xff]
                  %968 = vst [vmem:[%s922 + $0xb0] sm:$0xff] %v967
                  %v969 = vld [vmem:[%s921 + $0x138] sm:$0xff]
                  %970 = vst [vmem:[%s922 + $0xb8] sm:$0xff] %v969
                  %v971 = vld [vmem:[%s921 + $0x180] sm:$0xff]
                  %972 = vst [vmem:[%s922 + $0xc0] sm:$0xff] %v971
                  %v973 = vld [vmem:[%s921 + $0x188] sm:$0xff]
                  %974 = vst [vmem:[%s922 + $0xc8] sm:$0xff] %v973
                  %v975 = vld [vmem:[%s921 + $0x190] sm:$0xff]
                  %976 = vst [vmem:[%s922 + $0xd0] sm:$0xff] %v975
                  %v977 = vld [vmem:[%s921 + $0x198] sm:$0xff]
                  %978 = vst [vmem:[%s922 + $0xd8] sm:$0xff] %v977
                  %v979 = vld [vmem:[%s921 + $0x1a0] sm:$0xff]
                  %980 = vst [vmem:[%s922 + $0xe0] sm:$0xff] %v979
                  %v981 = vld [vmem:[%s921 + $0x1a8] sm:$0xff]
                  %982 = vst [vmem:[%s922 + $0xe8] sm:$0xff] %v981
                  %v983 = vld [vmem:[%s921 + $0x1b0] sm:$0xff]
                  %984 = vst [vmem:[%s922 + $0xf0] sm:$0xff] %v983
                  %v985 = vld [vmem:[%s921 + $0x1b8] sm:$0xff]
                  %986 = vst [vmem:[%s922 + $0xf8] sm:$0xff] %v985
                  %v987 = vld [vmem:[%s921 + $0x200] sm:$0xff]
                  %988 = vst [vmem:[%s922 + $0x100] sm:$0xff] %v987
                  %v989 = vld [vmem:[%s921 + $0x208] sm:$0xff]
                  %990 = vst [vmem:[%s922 + $0x108] sm:$0xff] %v989
                  %v991 = vld [vmem:[%s921 + $0x210] sm:$0xff]
                  %992 = vst [vmem:[%s922 + $0x110] sm:$0xff] %v991
                  %v993 = vld [vmem:[%s921 + $0x218] sm:$0xff]
                  %994 = vst [vmem:[%s922 + $0x118] sm:$0xff] %v993
                  %v995 = vld [vmem:[%s921 + $0x220] sm:$0xff]
                  %996 = vst [vmem:[%s922 + $0x120] sm:$0xff] %v995
                  %v997 = vld [vmem:[%s921 + $0x228] sm:$0xff]
                  %998 = vst [vmem:[%s922 + $0x128] sm:$0xff] %v997
                  %v999 = vld [vmem:[%s921 + $0x230] sm:$0xff]
                  %1000 = vst [vmem:[%s922 + $0x130] sm:$0xff] %v999
                  %v1001 = vld [vmem:[%s921 + $0x238] sm:$0xff]
                  %1002 = vst [vmem:[%s922 + $0x138] sm:$0xff] %v1001
                  %v1003 = vld [vmem:[%s921 + $0x280] sm:$0xff]
                  %1004 = vst [vmem:[%s922 + $0x140] sm:$0xff] %v1003
                  %v1005 = vld [vmem:[%s921 + $0x288] sm:$0xff]
                  %1006 = vst [vmem:[%s922 + $0x148] sm:$0xff] %v1005
                  %v1007 = vld [vmem:[%s921 + $0x290] sm:$0xff]
                  %1008 = vst [vmem:[%s922 + $0x150] sm:$0xff] %v1007
                  %v1009 = vld [vmem:[%s921 + $0x298] sm:$0xff]
                  %1010 = vst [vmem:[%s922 + $0x158] sm:$0xff] %v1009
                  %v1011 = vld [vmem:[%s921 + $0x2a0] sm:$0xff]
                  %1012 = vst [vmem:[%s922 + $0x160] sm:$0xff] %v1011
                  %v1013 = vld [vmem:[%s921 + $0x2a8] sm:$0xff]
                  %1014 = vst [vmem:[%s922 + $0x168] sm:$0xff] %v1013
                  %v1015 = vld [vmem:[%s921 + $0x2b0] sm:$0xff]
                  %1016 = vst [vmem:[%s922 + $0x170] sm:$0xff] %v1015
                  %v1017 = vld [vmem:[%s921 + $0x2b8] sm:$0xff]
                  %1018 = vst [vmem:[%s922 + $0x178] sm:$0xff] %v1017
                  %v1019 = vld [vmem:[%s921 + $0x300] sm:$0xff]
                  %1020 = vst [vmem:[%s922 + $0x180] sm:$0xff] %v1019
                  %v1021 = vld [vmem:[%s921 + $0x308] sm:$0xff]
                  %1022 = vst [vmem:[%s922 + $0x188] sm:$0xff] %v1021
                  %v1023 = vld [vmem:[%s921 + $0x310] sm:$0xff]
                  %1024 = vst [vmem:[%s922 + $0x190] sm:$0xff] %v1023
                  %v1025 = vld [vmem:[%s921 + $0x318] sm:$0xff]
                  %1026 = vst [vmem:[%s922 + $0x198] sm:$0xff] %v1025
                  %v1027 = vld [vmem:[%s921 + $0x320] sm:$0xff]
                  %1028 = vst [vmem:[%s922 + $0x1a0] sm:$0xff] %v1027
                  %v1029 = vld [vmem:[%s921 + $0x328] sm:$0xff]
                  %1030 = vst [vmem:[%s922 + $0x1a8] sm:$0xff] %v1029
                  %v1031 = vld [vmem:[%s921 + $0x330] sm:$0xff]
                  %1032 = vst [vmem:[%s922 + $0x1b0] sm:$0xff] %v1031
                  %v1033 = vld [vmem:[%s921 + $0x338] sm:$0xff]
                  %1034 = vst [vmem:[%s922 + $0x1b8] sm:$0xff] %v1033
                  %v1035 = vld [vmem:[%s921 + $0x380] sm:$0xff]
                  %1036 = vst [vmem:[%s922 + $0x1c0] sm:$0xff] %v1035
                  %v1037 = vld [vmem:[%s921 + $0x388] sm:$0xff]
                  %1038 = vst [vmem:[%s922 + $0x1c8] sm:$0xff] %v1037
                  %v1039 = vld [vmem:[%s921 + $0x390] sm:$0xff]
                  %1040 = vst [vmem:[%s922 + $0x1d0] sm:$0xff] %v1039
                  %v1041 = vld [vmem:[%s921 + $0x398] sm:$0xff]
                  %1042 = vst [vmem:[%s922 + $0x1d8] sm:$0xff] %v1041
                  %v1043 = vld [vmem:[%s921 + $0x3a0] sm:$0xff]
                  %1044 = vst [vmem:[%s922 + $0x1e0] sm:$0xff] %v1043
                  %v1045 = vld [vmem:[%s921 + $0x3a8] sm:$0xff]
                  %1046 = vst [vmem:[%s922 + $0x1e8] sm:$0xff] %v1045
                  %v1047 = vld [vmem:[%s921 + $0x3b0] sm:$0xff]
                  %1048 = vst [vmem:[%s922 + $0x1f0] sm:$0xff] %v1047
                  %v1049 = vld [vmem:[%s921 + $0x3b8] sm:$0xff]
                  %1050 = vst [vmem:[%s922 + $0x1f8] sm:$0xff] %v1049
                $region134: #{tpu_custom_call.1} parent=128 // loop_footer
                  %s920 = sadd.s32 1, %s916
                $region135: #{tpu_custom_call.1} parent=128 // loop_footer_branch
                  %915 = sbr.rel target = $region131
                $region136: #{tpu_custom_call.1} parent=128 // loop_exit
                  _
              $region129: #{tpu_custom_call.1} parent=113 // pred_fallthru
                _
              // Predicated region
              $region137: #{tpu_custom_call.1} parent=113 // pred_check
                _
              $region138: #{tpu_custom_call.1} parent=113 // pred_check_branch
                %1052 = sbr.rel target = $region140
              $region139: #{tpu_custom_call.1} parent=113 // pred_region
                _
              $region140: #{tpu_custom_call.1} parent=113 // pred_fallthru
                _
            $region114: #{tpu_custom_call.1} parent=109 // pred_fallthru
              _
            // Predicated region
            $region115: #{tpu_custom_call.1} parent=109 // pred_check
              _
            $region116: #{tpu_custom_call.1} parent=109 // pred_check_branch
              %774 = sbr.rel target = $region118
            $region117: #{tpu_custom_call.1} parent=109 // pred_region
              %s776 = ssub.s32 256, 1
              loop: start=0, step=1, limit=1
              $region119: #{tpu_custom_call.1} parent=117 // loop_pre_header
                _
              $region120: #{tpu_custom_call.1} parent=117 // loop_header
                %s778 = sphi 0, %s782
                %p779 = scmp.ge.s32.totalorder %s778, 1
                %s783 = sphi %s768, %s768
                %s784 = sphi %s761, %s761
              $region121: #{tpu_custom_call.1} parent=117 // loop_header_branch
                %781 = sbr.rel (%p779) target = $region125
              $region122: #{tpu_custom_call.1} parent=117 // loop_body
                %v785 = vld [vmem:[%s783] sm:%s776]
                %786 = vst [vmem:[%s784] sm:%s776] %v785
                %v787 = vld [vmem:[%s783 + $0x8] sm:%s776]
                %788 = vst [vmem:[%s784 + $0x8] sm:%s776] %v787
                %v789 = vld [vmem:[%s783 + $0x10] sm:%s776]
                %790 = vst [vmem:[%s784 + $0x10] sm:%s776] %v789
                %v791 = vld [vmem:[%s783 + $0x18] sm:%s776]
                %792 = vst [vmem:[%s784 + $0x18] sm:%s776] %v791
                %v793 = vld [vmem:[%s783 + $0x20] sm:%s776]
                %794 = vst [vmem:[%s784 + $0x20] sm:%s776] %v793
                %v795 = vld [vmem:[%s783 + $0x28] sm:%s776]
                %796 = vst [vmem:[%s784 + $0x28] sm:%s776] %v795
                %v797 = vld [vmem:[%s783 + $0x30] sm:%s776]
                %798 = vst [vmem:[%s784 + $0x30] sm:%s776] %v797
                %v799 = vld [vmem:[%s783 + $0x38] sm:%s776]
                %800 = vst [vmem:[%s784 + $0x38] sm:%s776] %v799
                %v801 = vld [vmem:[%s783 + $0x80] sm:%s776]
                %802 = vst [vmem:[%s784 + $0x40] sm:%s776] %v801
                %v803 = vld [vmem:[%s783 + $0x88] sm:%s776]
                %804 = vst [vmem:[%s784 + $0x48] sm:%s776] %v803
                %v805 = vld [vmem:[%s783 + $0x90] sm:%s776]
                %806 = vst [vmem:[%s784 + $0x50] sm:%s776] %v805
                %v807 = vld [vmem:[%s783 + $0x98] sm:%s776]
                %808 = vst [vmem:[%s784 + $0x58] sm:%s776] %v807
                %v809 = vld [vmem:[%s783 + $0xa0] sm:%s776]
                %810 = vst [vmem:[%s784 + $0x60] sm:%s776] %v809
                %v811 = vld [vmem:[%s783 + $0xa8] sm:%s776]
                %812 = vst [vmem:[%s784 + $0x68] sm:%s776] %v811
                %v813 = vld [vmem:[%s783 + $0xb0] sm:%s776]
                %814 = vst [vmem:[%s784 + $0x70] sm:%s776] %v813
                %v815 = vld [vmem:[%s783 + $0xb8] sm:%s776]
                %816 = vst [vmem:[%s784 + $0x78] sm:%s776] %v815
                %v817 = vld [vmem:[%s783 + $0x100] sm:%s776]
                %818 = vst [vmem:[%s784 + $0x80] sm:%s776] %v817
                %v819 = vld [vmem:[%s783 + $0x108] sm:%s776]
                %820 = vst [vmem:[%s784 + $0x88] sm:%s776] %v819
                %v821 = vld [vmem:[%s783 + $0x110] sm:%s776]
                %822 = vst [vmem:[%s784 + $0x90] sm:%s776] %v821
                %v823 = vld [vmem:[%s783 + $0x118] sm:%s776]
                %824 = vst [vmem:[%s784 + $0x98] sm:%s776] %v823
                %v825 = vld [vmem:[%s783 + $0x120] sm:%s776]
                %826 = vst [vmem:[%s784 + $0xa0] sm:%s776] %v825
                %v827 = vld [vmem:[%s783 + $0x128] sm:%s776]
                %828 = vst [vmem:[%s784 + $0xa8] sm:%s776] %v827
                %v829 = vld [vmem:[%s783 + $0x130] sm:%s776]
                %830 = vst [vmem:[%s784 + $0xb0] sm:%s776] %v829
                %v831 = vld [vmem:[%s783 + $0x138] sm:%s776]
                %832 = vst [vmem:[%s784 + $0xb8] sm:%s776] %v831
                %v833 = vld [vmem:[%s783 + $0x180] sm:%s776]
                %834 = vst [vmem:[%s784 + $0xc0] sm:%s776] %v833
                %v835 = vld [vmem:[%s783 + $0x188] sm:%s776]
                %836 = vst [vmem:[%s784 + $0xc8] sm:%s776] %v835
                %v837 = vld [vmem:[%s783 + $0x190] sm:%s776]
                %838 = vst [vmem:[%s784 + $0xd0] sm:%s776] %v837
                %v839 = vld [vmem:[%s783 + $0x198] sm:%s776]
                %840 = vst [vmem:[%s784 + $0xd8] sm:%s776] %v839
                %v841 = vld [vmem:[%s783 + $0x1a0] sm:%s776]
                %842 = vst [vmem:[%s784 + $0xe0] sm:%s776] %v841
                %v843 = vld [vmem:[%s783 + $0x1a8] sm:%s776]
                %844 = vst [vmem:[%s784 + $0xe8] sm:%s776] %v843
                %v845 = vld [vmem:[%s783 + $0x1b0] sm:%s776]
                %846 = vst [vmem:[%s784 + $0xf0] sm:%s776] %v845
                %v847 = vld [vmem:[%s783 + $0x1b8] sm:%s776]
                %848 = vst [vmem:[%s784 + $0xf8] sm:%s776] %v847
                %v849 = vld [vmem:[%s783 + $0x200] sm:%s776]
                %850 = vst [vmem:[%s784 + $0x100] sm:%s776] %v849
                %v851 = vld [vmem:[%s783 + $0x208] sm:%s776]
                %852 = vst [vmem:[%s784 + $0x108] sm:%s776] %v851
                %v853 = vld [vmem:[%s783 + $0x210] sm:%s776]
                %854 = vst [vmem:[%s784 + $0x110] sm:%s776] %v853
                %v855 = vld [vmem:[%s783 + $0x218] sm:%s776]
                %856 = vst [vmem:[%s784 + $0x118] sm:%s776] %v855
                %v857 = vld [vmem:[%s783 + $0x220] sm:%s776]
                %858 = vst [vmem:[%s784 + $0x120] sm:%s776] %v857
                %v859 = vld [vmem:[%s783 + $0x228] sm:%s776]
                %860 = vst [vmem:[%s784 + $0x128] sm:%s776] %v859
                %v861 = vld [vmem:[%s783 + $0x230] sm:%s776]
                %862 = vst [vmem:[%s784 + $0x130] sm:%s776] %v861
                %v863 = vld [vmem:[%s783 + $0x238] sm:%s776]
                %864 = vst [vmem:[%s784 + $0x138] sm:%s776] %v863
                %v865 = vld [vmem:[%s783 + $0x280] sm:%s776]
                %866 = vst [vmem:[%s784 + $0x140] sm:%s776] %v865
                %v867 = vld [vmem:[%s783 + $0x288] sm:%s776]
                %868 = vst [vmem:[%s784 + $0x148] sm:%s776] %v867
                %v869 = vld [vmem:[%s783 + $0x290] sm:%s776]
                %870 = vst [vmem:[%s784 + $0x150] sm:%s776] %v869
                %v871 = vld [vmem:[%s783 + $0x298] sm:%s776]
                %872 = vst [vmem:[%s784 + $0x158] sm:%s776] %v871
                %v873 = vld [vmem:[%s783 + $0x2a0] sm:%s776]
                %874 = vst [vmem:[%s784 + $0x160] sm:%s776] %v873
                %v875 = vld [vmem:[%s783 + $0x2a8] sm:%s776]
                %876 = vst [vmem:[%s784 + $0x168] sm:%s776] %v875
                %v877 = vld [vmem:[%s783 + $0x2b0] sm:%s776]
                %878 = vst [vmem:[%s784 + $0x170] sm:%s776] %v877
                %v879 = vld [vmem:[%s783 + $0x2b8] sm:%s776]
                %880 = vst [vmem:[%s784 + $0x178] sm:%s776] %v879
                %v881 = vld [vmem:[%s783 + $0x300] sm:%s776]
                %882 = vst [vmem:[%s784 + $0x180] sm:%s776] %v881
                %v883 = vld [vmem:[%s783 + $0x308] sm:%s776]
                %884 = vst [vmem:[%s784 + $0x188] sm:%s776] %v883
                %v885 = vld [vmem:[%s783 + $0x310] sm:%s776]
                %886 = vst [vmem:[%s784 + $0x190] sm:%s776] %v885
                %v887 = vld [vmem:[%s783 + $0x318] sm:%s776]
                %888 = vst [vmem:[%s784 + $0x198] sm:%s776] %v887
                %v889 = vld [vmem:[%s783 + $0x320] sm:%s776]
                %890 = vst [vmem:[%s784 + $0x1a0] sm:%s776] %v889
                %v891 = vld [vmem:[%s783 + $0x328] sm:%s776]
                %892 = vst [vmem:[%s784 + $0x1a8] sm:%s776] %v891
                %v893 = vld [vmem:[%s783 + $0x330] sm:%s776]
                %894 = vst [vmem:[%s784 + $0x1b0] sm:%s776] %v893
                %v895 = vld [vmem:[%s783 + $0x338] sm:%s776]
                %896 = vst [vmem:[%s784 + $0x1b8] sm:%s776] %v895
                %v897 = vld [vmem:[%s783 + $0x380] sm:%s776]
                %898 = vst [vmem:[%s784 + $0x1c0] sm:%s776] %v897
                %v899 = vld [vmem:[%s783 + $0x388] sm:%s776]
                %900 = vst [vmem:[%s784 + $0x1c8] sm:%s776] %v899
                %v901 = vld [vmem:[%s783 + $0x390] sm:%s776]
                %902 = vst [vmem:[%s784 + $0x1d0] sm:%s776] %v901
                %v903 = vld [vmem:[%s783 + $0x398] sm:%s776]
                %904 = vst [vmem:[%s784 + $0x1d8] sm:%s776] %v903
                %v905 = vld [vmem:[%s783 + $0x3a0] sm:%s776]
                %906 = vst [vmem:[%s784 + $0x1e0] sm:%s776] %v905
                %v907 = vld [vmem:[%s783 + $0x3a8] sm:%s776]
                %908 = vst [vmem:[%s784 + $0x1e8] sm:%s776] %v907
                %v909 = vld [vmem:[%s783 + $0x3b0] sm:%s776]
                %910 = vst [vmem:[%s784 + $0x1f0] sm:%s776] %v909
                %v911 = vld [vmem:[%s783 + $0x3b8] sm:%s776]
                %912 = vst [vmem:[%s784 + $0x1f8] sm:%s776] %v911
              $region123: #{tpu_custom_call.1} parent=117 // loop_footer
                %s782 = sadd.s32 1, %s778
              $region124: #{tpu_custom_call.1} parent=117 // loop_footer_branch
                %777 = sbr.rel target = $region120
              $region125: #{tpu_custom_call.1} parent=117 // loop_exit
                _
            $region118: #{tpu_custom_call.1} parent=109 // pred_fallthru
              _
          $region110: #{tpu_custom_call.1} parent=105 // pred_fallthru
            _
          %1053 = vnop
        $region106: #{tpu_custom_call.1} parent=63 // pred_fallthru
          _
      $region64: #{tpu_custom_call.1} parent=5 // pred_fallthru
        _
      %p1054 = scmp.le.s32.totalorder 1, %s22
      %p1055 = scmp.lt.s32.totalorder %s22, 5
      %p1056 = pnand %p1054, %p1055
      %p1057 = pneg %p1056
      // Predicated region
      $region141: #{tpu_custom_call.1} parent=5 // pred_check
        _
      $region142: #{tpu_custom_call.1} parent=5 // pred_check_branch
        %1059 = sbr.rel (%p1056) target = $region144
      $region143: #{tpu_custom_call.1} parent=5 // pred_region
        %s1060 = ssub.s32 %s22, 1
        %s1061 = sand.u32 %s49, 1
        %s1062 = sand.u32 %s49, 1
        %s1063 = smul.addr %s1062, 512
        %s1064 = scalar_lea.vmem [#allocation4], %s1063
        // Predicated region
        $region145: #{tpu_custom_call.1} parent=143 // pred_check
          %p1065 = pneg %p62
        $region146: #{tpu_custom_call.1} parent=143 // pred_check_branch
          %1067 = sbr.rel (%p1065) target = $region148
        $region147: #{tpu_custom_call.1} parent=143 // pred_region
          _
        $region148: #{tpu_custom_call.1} parent=143 // pred_fallthru
          _
        %s1068 = sand.u32 %s79, 1
        %s1069 = sand.u32 %s79, 1
        %s1070 = smul.addr %s1069, 512
        %s1071 = scalar_lea.vmem [#allocation5], %s1070
        // Predicated region
        $region149: #{tpu_custom_call.1} parent=143 // pred_check
          %p1072 = pneg %p92
        $region150: #{tpu_custom_call.1} parent=143 // pred_check_branch
          %1074 = sbr.rel (%p1072) target = $region152
        $region151: #{tpu_custom_call.1} parent=143 // pred_region
          _
        $region152: #{tpu_custom_call.1} parent=143 // pred_fallthru
          _
        %s1075 = sand.u32 %s49, 1
        %s1076 = sand.u32 %s49, 1
        %s1077 = smul.addr %s1076, 512
        %s1078 = scalar_lea.vmem [#allocation4], %s1077
        %p1079 = pneg %p62
        %p1080 = pneg %p59
        %s1081 = sand.u32 %s79, 1
        %s1082 = sand.u32 %s79, 1
        %s1083 = smul.addr %s1082, 512
        %s1084 = scalar_lea.vmem [#allocation5], %s1083
        %p1085 = pneg %p92
        %p1086 = pneg %p89
        %p1087 = pneg %p113
        %p1088 = pneg %p110
        %p1089 = pneg %p134
        %p1090 = pneg %p131
        %p1091 = pneg %p155
        %p1092 = pneg %p152
        %p1093 = pneg %p176
        %p1094 = pneg %p173
        %p1095 = pneg %p197
        %p1096 = pneg %p194
        %p1097 = pneg %p218
        %p1098 = pneg %p215
        %p1099 = pneg %p239
        %p1100 = pneg %p236
        %p1101 = pneg %p260
        %p1102 = pneg %p257
        %p1103 = pneg %p281
        %p1104 = pneg %p278
        %p1105 = pneg %p302
        %p1106 = pneg %p299
        %p1107 = pneg %p323
        %p1108 = pneg %p320
        %p1109 = pneg %p344
        %p1110 = pneg %p341
        %p1111 = pneg %p372
        %p1112 = pneg %p369
        %s1113 = sand.u32 %s359, 1
        %s1114 = sand.u32 %s359, 1
        %s1115 = smul.addr %s1114, 512
        %s1116 = scalar_lea.vmem [#allocation6], %s1115
        %p1117 = pneg %p402
        %p1118 = pneg %p399
        %s1119 = sand.u32 %s389, 1
        %s1120 = sand.u32 %s389, 1
        %s1121 = smul.addr %s1120, 512
        %s1122 = scalar_lea.vmem [#allocation7], %s1121
        %s1123 = smul.u32 8, %s32
        %s1124 = smul.u32 8, %s31
        %s1125 = ssub.s32 1, %s32
        %s1126 = smul.u32 8, %s1125
        %s1127 = smul.u32 8, %s31
        %s1128 = smul.u32 8, %s32
        %s1129 = smul.u32 8, %s31
        %s1130 = ssub.s32 1, %s32
        %s1131 = smul.u32 8, %s1130
        %s1132 = smul.u32 8, %s31
        %p1133 = scmp.eq.s32.totalorder %s32, 0
        // Predicated region
        $region153: #{tpu_custom_call.1} parent=143 // pred_check
          %p1134 = pneg %p1133
        $region154: #{tpu_custom_call.1} parent=143 // pred_check_branch
          %1136 = sbr.rel (%p1134) target = $region156
        $region155: #{tpu_custom_call.1} parent=143 // pred_region
          %vm1137 = vcmask 31744
          %1138 = vst.msk [vmem:[#allocation2] sm:$0xff] %vm1137, 0.0
          %1139 = vst.msk [vmem:[#allocation2 + $0x8] sm:$0xff] %vm1137, 0.0
          %1140 = vst.msk [vmem:[#allocation2 + $0x10] sm:$0xff] %vm1137, 0.0
          %1141 = vst.msk [vmem:[#allocation2 + $0x18] sm:$0xff] %vm1137, 0.0
          %1142 = vst.msk [vmem:[#allocation2 + $0x20] sm:$0xff] %vm1137, 0.0
          %1143 = vst.msk [vmem:[#allocation2 + $0x28] sm:$0xff] %vm1137, 0.0
          %1144 = vst.msk [vmem:[#allocation2 + $0x30] sm:$0xff] %vm1137, 0.0
          %1145 = vst.msk [vmem:[#allocation2 + $0x38] sm:$0xff] %vm1137, 0.0
          %1146 = vst.msk [vmem:[#allocation3] sm:$0xff] %vm1137, 0.0
          %1147 = vst.msk [vmem:[#allocation3 + $0x8] sm:$0xff] %vm1137, 0.0
          %1148 = vst.msk [vmem:[#allocation3 + $0x10] sm:$0xff] %vm1137, 0.0
          %1149 = vst.msk [vmem:[#allocation3 + $0x18] sm:$0xff] %vm1137, 0.0
          %1150 = vst.msk [vmem:[#allocation3 + $0x20] sm:$0xff] %vm1137, 0.0
          %1151 = vst.msk [vmem:[#allocation3 + $0x28] sm:$0xff] %vm1137, 0.0
          %1152 = vst.msk [vmem:[#allocation3 + $0x30] sm:$0xff] %vm1137, 0.0
          %1153 = vst.msk [vmem:[#allocation3 + $0x38] sm:$0xff] %vm1137, 0.0
        $region156: #{tpu_custom_call.1} parent=143 // pred_fallthru
          _
        %v1154 = vld [vmem:[%s1064] sm:$0xff]
        %v1155 = vld [vmem:[%s1064 + $0x8] sm:$0xff]
        %v1156 = vld [vmem:[%s1064 + $0x10] sm:$0xff]
        %v1157 = vld [vmem:[%s1064 + $0x18] sm:$0xff]
        %v1158 = vld [vmem:[%s1064 + $0x20] sm:$0xff]
        %v1159 = vld [vmem:[%s1064 + $0x28] sm:$0xff]
        %v1160 = vld [vmem:[%s1064 + $0x30] sm:$0xff]
        %v1161 = vld [vmem:[%s1064 + $0x38] sm:$0xff]
        %v1162 = vld [vmem:[%s1064 + $0x40] sm:$0xff]
        %v1163 = vld [vmem:[%s1064 + $0x48] sm:$0xff]
        %v1164 = vld [vmem:[%s1064 + $0x50] sm:$0xff]
        %v1165 = vld [vmem:[%s1064 + $0x58] sm:$0xff]
        %v1166 = vld [vmem:[%s1064 + $0x60] sm:$0xff]
        %v1167 = vld [vmem:[%s1064 + $0x68] sm:$0xff]
        %v1168 = vld [vmem:[%s1064 + $0x70] sm:$0xff]
        %v1169 = vld [vmem:[%s1064 + $0x78] sm:$0xff]
        %v1170 = vld [vmem:[%s1064 + $0x80] sm:$0xff]
        %v1171 = vld [vmem:[%s1064 + $0x88] sm:$0xff]
        %v1172 = vld [vmem:[%s1064 + $0x90] sm:$0xff]
        %v1173 = vld [vmem:[%s1064 + $0x98] sm:$0xff]
        %v1174 = vld [vmem:[%s1064 + $0xa0] sm:$0xff]
        %v1175 = vld [vmem:[%s1064 + $0xa8] sm:$0xff]
        %v1176 = vld [vmem:[%s1064 + $0xb0] sm:$0xff]
        %v1177 = vld [vmem:[%s1064 + $0xb8] sm:$0xff]
        %v1178 = vld [vmem:[%s1064 + $0xc0] sm:$0xff]
        %v1179 = vld [vmem:[%s1064 + $0xc8] sm:$0xff]
        %v1180 = vld [vmem:[%s1064 + $0xd0] sm:$0xff]
        %v1181 = vld [vmem:[%s1064 + $0xd8] sm:$0xff]
        %v1182 = vld [vmem:[%s1064 + $0xe0] sm:$0xff]
        %v1183 = vld [vmem:[%s1064 + $0xe8] sm:$0xff]
        %v1184 = vld [vmem:[%s1064 + $0xf0] sm:$0xff]
        %v1185 = vld [vmem:[%s1064 + $0xf8] sm:$0xff]
        %v1186 = vld [vmem:[%s1064 + $0x100] sm:$0xff]
        %v1187 = vld [vmem:[%s1064 + $0x108] sm:$0xff]
        %v1188 = vld [vmem:[%s1064 + $0x110] sm:$0xff]
        %v1189 = vld [vmem:[%s1064 + $0x118] sm:$0xff]
        %v1190 = vld [vmem:[%s1064 + $0x120] sm:$0xff]
        %v1191 = vld [vmem:[%s1064 + $0x128] sm:$0xff]
        %v1192 = vld [vmem:[%s1064 + $0x130] sm:$0xff]
        %v1193 = vld [vmem:[%s1064 + $0x138] sm:$0xff]
        %v1194 = vld [vmem:[%s1064 + $0x140] sm:$0xff]
        %v1195 = vld [vmem:[%s1064 + $0x148] sm:$0xff]
        %v1196 = vld [vmem:[%s1064 + $0x150] sm:$0xff]
        %v1197 = vld [vmem:[%s1064 + $0x158] sm:$0xff]
        %v1198 = vld [vmem:[%s1064 + $0x160] sm:$0xff]
        %v1199 = vld [vmem:[%s1064 + $0x168] sm:$0xff]
        %v1200 = vld [vmem:[%s1064 + $0x170] sm:$0xff]
        %v1201 = vld [vmem:[%s1064 + $0x178] sm:$0xff]
        %v1202 = vld [vmem:[%s1064 + $0x180] sm:$0xff]
        %v1203 = vld [vmem:[%s1064 + $0x188] sm:$0xff]
        %v1204 = vld [vmem:[%s1064 + $0x190] sm:$0xff]
        %v1205 = vld [vmem:[%s1064 + $0x198] sm:$0xff]
        %v1206 = vld [vmem:[%s1064 + $0x1a0] sm:$0xff]
        %v1207 = vld [vmem:[%s1064 + $0x1a8] sm:$0xff]
        %v1208 = vld [vmem:[%s1064 + $0x1b0] sm:$0xff]
        %v1209 = vld [vmem:[%s1064 + $0x1b8] sm:$0xff]
        %v1210 = vld [vmem:[%s1064 + $0x1c0] sm:$0xff]
        %v1211 = vld [vmem:[%s1064 + $0x1c8] sm:$0xff]
        %v1212 = vld [vmem:[%s1064 + $0x1d0] sm:$0xff]
        %v1213 = vld [vmem:[%s1064 + $0x1d8] sm:$0xff]
        %v1214 = vld [vmem:[%s1064 + $0x1e0] sm:$0xff]
        %v1215 = vld [vmem:[%s1064 + $0x1e8] sm:$0xff]
        %v1216 = vld [vmem:[%s1064 + $0x1f0] sm:$0xff]
        %v1217 = vld [vmem:[%s1064 + $0x1f8] sm:$0xff]
        %v1218 = vld [vmem:[%s1071] sm:$0xff]
        %v1219 = vld [vmem:[%s1071 + $0x8] sm:$0xff]
        %v1220 = vld [vmem:[%s1071 + $0x10] sm:$0xff]
        %v1221 = vld [vmem:[%s1071 + $0x18] sm:$0xff]
        %v1222 = vld [vmem:[%s1071 + $0x20] sm:$0xff]
        %v1223 = vld [vmem:[%s1071 + $0x28] sm:$0xff]
        %v1224 = vld [vmem:[%s1071 + $0x30] sm:$0xff]
        %v1225 = vld [vmem:[%s1071 + $0x38] sm:$0xff]
        %v1226 = vld [vmem:[%s1071 + $0x40] sm:$0xff]
        %v1227 = vld [vmem:[%s1071 + $0x48] sm:$0xff]
        %v1228 = vld [vmem:[%s1071 + $0x50] sm:$0xff]
        %v1229 = vld [vmem:[%s1071 + $0x58] sm:$0xff]
        %v1230 = vld [vmem:[%s1071 + $0x60] sm:$0xff]
        %v1231 = vld [vmem:[%s1071 + $0x68] sm:$0xff]
        %v1232 = vld [vmem:[%s1071 + $0x70] sm:$0xff]
        %v1233 = vld [vmem:[%s1071 + $0x78] sm:$0xff]
        %v1234 = vld [vmem:[%s1071 + $0x80] sm:$0xff]
        %v1235 = vld [vmem:[%s1071 + $0x88] sm:$0xff]
        %v1236 = vld [vmem:[%s1071 + $0x90] sm:$0xff]
        %v1237 = vld [vmem:[%s1071 + $0x98] sm:$0xff]
        %v1238 = vld [vmem:[%s1071 + $0xa0] sm:$0xff]
        %v1239 = vld [vmem:[%s1071 + $0xa8] sm:$0xff]
        %v1240 = vld [vmem:[%s1071 + $0xb0] sm:$0xff]
        %v1241 = vld [vmem:[%s1071 + $0xb8] sm:$0xff]
        %v1242 = vld [vmem:[%s1071 + $0xc0] sm:$0xff]
        %v1243 = vld [vmem:[%s1071 + $0xc8] sm:$0xff]
        %v1244 = vld [vmem:[%s1071 + $0xd0] sm:$0xff]
        %v1245 = vld [vmem:[%s1071 + $0xd8] sm:$0xff]
        %v1246 = vld [vmem:[%s1071 + $0xe0] sm:$0xff]
        %v1247 = vld [vmem:[%s1071 + $0xe8] sm:$0xff]
        %v1248 = vld [vmem:[%s1071 + $0xf0] sm:$0xff]
        %v1249 = vld [vmem:[%s1071 + $0xf8] sm:$0xff]
        %v1250 = vld [vmem:[%s1071 + $0x100] sm:$0xff]
        %v1251 = vld [vmem:[%s1071 + $0x108] sm:$0xff]
        %v1252 = vld [vmem:[%s1071 + $0x110] sm:$0xff]
        %v1253 = vld [vmem:[%s1071 + $0x118] sm:$0xff]
        %v1254 = vld [vmem:[%s1071 + $0x120] sm:$0xff]
        %v1255 = vld [vmem:[%s1071 + $0x128] sm:$0xff]
        %v1256 = vld [vmem:[%s1071 + $0x130] sm:$0xff]
        %v1257 = vld [vmem:[%s1071 + $0x138] sm:$0xff]
        %v1258 = vld [vmem:[%s1071 + $0x140] sm:$0xff]
        %v1259 = vld [vmem:[%s1071 + $0x148] sm:$0xff]
        %v1260 = vld [vmem:[%s1071 + $0x150] sm:$0xff]
        %v1261 = vld [vmem:[%s1071 + $0x158] sm:$0xff]
        %v1262 = vld [vmem:[%s1071 + $0x160] sm:$0xff]
        %v1263 = vld [vmem:[%s1071 + $0x168] sm:$0xff]
        %v1264 = vld [vmem:[%s1071 + $0x170] sm:$0xff]
        %v1265 = vld [vmem:[%s1071 + $0x178] sm:$0xff]
        %v1266 = vld [vmem:[%s1071 + $0x180] sm:$0xff]
        %v1267 = vld [vmem:[%s1071 + $0x188] sm:$0xff]
        %v1268 = vld [vmem:[%s1071 + $0x190] sm:$0xff]
        %v1269 = vld [vmem:[%s1071 + $0x198] sm:$0xff]
        %v1270 = vld [vmem:[%s1071 + $0x1a0] sm:$0xff]
        %v1271 = vld [vmem:[%s1071 + $0x1a8] sm:$0xff]
        %v1272 = vld [vmem:[%s1071 + $0x1b0] sm:$0xff]
        %v1273 = vld [vmem:[%s1071 + $0x1b8] sm:$0xff]
        %v1274 = vld [vmem:[%s1071 + $0x1c0] sm:$0xff]
        %v1275 = vld [vmem:[%s1071 + $0x1c8] sm:$0xff]
        %v1276 = vld [vmem:[%s1071 + $0x1d0] sm:$0xff]
        %v1277 = vld [vmem:[%s1071 + $0x1d8] sm:$0xff]
        %v1278 = vld [vmem:[%s1071 + $0x1e0] sm:$0xff]
        %v1279 = vld [vmem:[%s1071 + $0x1e8] sm:$0xff]
        %v1280 = vld [vmem:[%s1071 + $0x1f0] sm:$0xff]
        %v1281 = vld [vmem:[%s1071 + $0x1f8] sm:$0xff]
        %v1282 = vld [vmem:[%s2] sm:$0xff]
        %v1283 = vld [vmem:[%s3] sm:$0x1]
        %v1285 = vperm.slane %v1283, 0
        %vm1287 = vcmask 64512
        %v1289 = vsel %vm1287, %v1154, 0
        %v1292 = vsel %vm1287, %v1155, 0
        %v1295 = vsel %vm1287, %v1156, 0
        %v1298 = vsel %vm1287, %v1157, 0
        %v1301 = vsel %vm1287, %v1158, 0
        %v1304 = vsel %vm1287, %v1159, 0
        %v1307 = vsel %vm1287, %v1160, 0
        %v1310 = vsel %vm1287, %v1161, 0
        %v1313 = vsel %vm1287, %v1162, 0
        %v1316 = vsel %vm1287, %v1163, 0
        %v1319 = vsel %vm1287, %v1164, 0
        %v1322 = vsel %vm1287, %v1165, 0
        %v1325 = vsel %vm1287, %v1166, 0
        %v1328 = vsel %vm1287, %v1167, 0
        %v1331 = vsel %vm1287, %v1168, 0
        %v1334 = vsel %vm1287, %v1169, 0
        %v1337 = vsel %vm1287, %v1170, 0
        %v1340 = vsel %vm1287, %v1171, 0
        %v1343 = vsel %vm1287, %v1172, 0
        %v1346 = vsel %vm1287, %v1173, 0
        %v1349 = vsel %vm1287, %v1174, 0
        %v1352 = vsel %vm1287, %v1175, 0
        %v1355 = vsel %vm1287, %v1176, 0
        %v1358 = vsel %vm1287, %v1177, 0
        %v1361 = vsel %vm1287, %v1178, 0
        %v1364 = vsel %vm1287, %v1179, 0
        %v1367 = vsel %vm1287, %v1180, 0
        %v1370 = vsel %vm1287, %v1181, 0
        %v1373 = vsel %vm1287, %v1182, 0
        %v1376 = vsel %vm1287, %v1183, 0
        %v1379 = vsel %vm1287, %v1184, 0
        %v1382 = vsel %vm1287, %v1185, 0
        %v1385 = vsel %vm1287, %v1186, 0
        %v1388 = vsel %vm1287, %v1187, 0
        %v1391 = vsel %vm1287, %v1188, 0
        %v1394 = vsel %vm1287, %v1189, 0
        %v1397 = vsel %vm1287, %v1190, 0
        %v1400 = vsel %vm1287, %v1191, 0
        %v1403 = vsel %vm1287, %v1192, 0
        %v1406 = vsel %vm1287, %v1193, 0
        %v1409 = vsel %vm1287, %v1194, 0
        %v1412 = vsel %vm1287, %v1195, 0
        %v1415 = vsel %vm1287, %v1196, 0
        %v1418 = vsel %vm1287, %v1197, 0
        %v1421 = vsel %vm1287, %v1198, 0
        %v1424 = vsel %vm1287, %v1199, 0
        %v1427 = vsel %vm1287, %v1200, 0
        %v1430 = vsel %vm1287, %v1201, 0
        %v1433 = vsel %vm1287, %v1202, 0
        %v1436 = vsel %vm1287, %v1203, 0
        %v1439 = vsel %vm1287, %v1204, 0
        %v1442 = vsel %vm1287, %v1205, 0
        %v1445 = vsel %vm1287, %v1206, 0
        %v1448 = vsel %vm1287, %v1207, 0
        %v1451 = vsel %vm1287, %v1208, 0
        %v1454 = vsel %vm1287, %v1209, 0
        %v1457 = vsel %vm1287, %v1210, 0
        %v1460 = vsel %vm1287, %v1211, 0
        %v1463 = vsel %vm1287, %v1212, 0
        %v1466 = vsel %vm1287, %v1213, 0
        %v1469 = vsel %vm1287, %v1214, 0
        %v1472 = vsel %vm1287, %v1215, 0
        %v1475 = vsel %vm1287, %v1216, 0
        %v1478 = vsel %vm1287, %v1217, 0
        %1480 = vmatpush.msra.mxu0 0.0
        %1481 = vmatpush.msra.mxu0 0.0
        %1482 = vmatpush.msra.mxu0 0.0
        %1483 = vmatpush.msra.mxu0 0.0
        %1484 = vmatpush.msra.mxu0 0.0
        %1485 = vmatpush.msra.mxu0 0.0
        %1486 = vmatpush.msra.mxu0 0.0
        %1487 = vmatpush.msra.mxu0 0.0
        %1488 = vmatpush.msra.mxu0 0.0
        %1489 = vmatpush.msra.mxu0 0.0
        %1490 = vmatpush.msra.mxu0 0.0
        %1491 = vmatpush.msra.mxu0 0.0
        %1492 = vmatpush.msra.mxu0 0.0
        %1493 = vmatpush.msra.mxu0 0.0
        %1494 = vmatpush.msra.mxu0 0.0
        %1495 = vmatpush.msra.mxu0 %v1282
        %1496 = vmatmul.f32.gmra.mxu0 %v1289
        %v1497 = vpop.f32.mrf.mxu0
        %v1498 = vadd.f32 %v1285, %v1497
        %1499 = vmatmul.f32.gmra.mxu0 %v1292
        %v1500 = vpop.f32.mrf.mxu0
        %v1501 = vadd.f32 %v1285, %v1500
        %1502 = vmatmul.f32.gmra.mxu0 %v1295
        %v1503 = vpop.f32.mrf.mxu0
        %v1504 = vadd.f32 %v1285, %v1503
        %1505 = vmatmul.f32.gmra.mxu0 %v1298
        %v1506 = vpop.f32.mrf.mxu0
        %v1507 = vadd.f32 %v1285, %v1506
        %1508 = vmatmul.f32.gmra.mxu0 %v1301
        %v1509 = vpop.f32.mrf.mxu0
        %v1510 = vadd.f32 %v1285, %v1509
        %1511 = vmatmul.f32.gmra.mxu0 %v1304
        %v1512 = vpop.f32.mrf.mxu0
        %v1513 = vadd.f32 %v1285, %v1512
        %1514 = vmatmul.f32.gmra.mxu0 %v1307
        %v1515 = vpop.f32.mrf.mxu0
        %v1516 = vadd.f32 %v1285, %v1515
        %1517 = vmatmul.f32.gmra.mxu0 %v1310
        %v1518 = vpop.f32.mrf.mxu0
        %v1519 = vadd.f32 %v1285, %v1518
        %1520 = vmatmul.f32.gmra.mxu0 %v1313
        %v1521 = vpop.f32.mrf.mxu0
        %v1522 = vadd.f32 %v1285, %v1521
        %1523 = vmatmul.f32.gmra.mxu0 %v1316
        %v1524 = vpop.f32.mrf.mxu0
        %v1525 = vadd.f32 %v1285, %v1524
        %1526 = vmatmul.f32.gmra.mxu0 %v1319
        %v1527 = vpop.f32.mrf.mxu0
        %v1528 = vadd.f32 %v1285, %v1527
        %1529 = vmatmul.f32.gmra.mxu0 %v1322
        %v1530 = vpop.f32.mrf.mxu0
        %v1531 = vadd.f32 %v1285, %v1530
        %1532 = vmatmul.f32.gmra.mxu0 %v1325
        %v1533 = vpop.f32.mrf.mxu0
        %v1534 = vadd.f32 %v1285, %v1533
        %1535 = vmatmul.f32.gmra.mxu0 %v1328
        %v1536 = vpop.f32.mrf.mxu0
        %v1537 = vadd.f32 %v1285, %v1536
        %1538 = vmatmul.f32.gmra.mxu0 %v1331
        %v1539 = vpop.f32.mrf.mxu0
        %v1540 = vadd.f32 %v1285, %v1539
        %1541 = vmatmul.f32.gmra.mxu0 %v1334
        %v1542 = vpop.f32.mrf.mxu0
        %v1543 = vadd.f32 %v1285, %v1542
        %1544 = vmatmul.f32.gmra.mxu0 %v1337
        %v1545 = vpop.f32.mrf.mxu0
        %v1546 = vadd.f32 %v1285, %v1545
        %1547 = vmatmul.f32.gmra.mxu0 %v1340
        %v1548 = vpop.f32.mrf.mxu0
        %v1549 = vadd.f32 %v1285, %v1548
        %1550 = vmatmul.f32.gmra.mxu0 %v1343
        %v1551 = vpop.f32.mrf.mxu0
        %v1552 = vadd.f32 %v1285, %v1551
        %1553 = vmatmul.f32.gmra.mxu0 %v1346
        %v1554 = vpop.f32.mrf.mxu0
        %v1555 = vadd.f32 %v1285, %v1554
        %1556 = vmatmul.f32.gmra.mxu0 %v1349
        %v1557 = vpop.f32.mrf.mxu0
        %v1558 = vadd.f32 %v1285, %v1557
        %1559 = vmatmul.f32.gmra.mxu0 %v1352
        %v1560 = vpop.f32.mrf.mxu0
        %v1561 = vadd.f32 %v1285, %v1560
        %1562 = vmatmul.f32.gmra.mxu0 %v1355
        %v1563 = vpop.f32.mrf.mxu0
        %v1564 = vadd.f32 %v1285, %v1563
        %1565 = vmatmul.f32.gmra.mxu0 %v1358
        %v1566 = vpop.f32.mrf.mxu0
        %v1567 = vadd.f32 %v1285, %v1566
        %1568 = vmatmul.f32.gmra.mxu0 %v1361
        %v1569 = vpop.f32.mrf.mxu0
        %v1570 = vadd.f32 %v1285, %v1569
        %1571 = vmatmul.f32.gmra.mxu0 %v1364
        %v1572 = vpop.f32.mrf.mxu0
        %v1573 = vadd.f32 %v1285, %v1572
        %1574 = vmatmul.f32.gmra.mxu0 %v1367
        %v1575 = vpop.f32.mrf.mxu0
        %v1576 = vadd.f32 %v1285, %v1575
        %1577 = vmatmul.f32.gmra.mxu0 %v1370
        %v1578 = vpop.f32.mrf.mxu0
        %v1579 = vadd.f32 %v1285, %v1578
        %1580 = vmatmul.f32.gmra.mxu0 %v1373
        %v1581 = vpop.f32.mrf.mxu0
        %v1582 = vadd.f32 %v1285, %v1581
        %1583 = vmatmul.f32.gmra.mxu0 %v1376
        %v1584 = vpop.f32.mrf.mxu0
        %v1585 = vadd.f32 %v1285, %v1584
        %1586 = vmatmul.f32.gmra.mxu0 %v1379
        %v1587 = vpop.f32.mrf.mxu0
        %v1588 = vadd.f32 %v1285, %v1587
        %1589 = vmatmul.f32.gmra.mxu0 %v1382
        %v1590 = vpop.f32.mrf.mxu0
        %v1591 = vadd.f32 %v1285, %v1590
        %1592 = vmatmul.f32.gmra.mxu0 %v1385
        %v1593 = vpop.f32.mrf.mxu0
        %v1594 = vadd.f32 %v1285, %v1593
        %1595 = vmatmul.f32.gmra.mxu0 %v1388
        %v1596 = vpop.f32.mrf.mxu0
        %v1597 = vadd.f32 %v1285, %v1596
        %1598 = vmatmul.f32.gmra.mxu0 %v1391
        %v1599 = vpop.f32.mrf.mxu0
        %v1600 = vadd.f32 %v1285, %v1599
        %1601 = vmatmul.f32.gmra.mxu0 %v1394
        %v1602 = vpop.f32.mrf.mxu0
        %v1603 = vadd.f32 %v1285, %v1602
        %1604 = vmatmul.f32.gmra.mxu0 %v1397
        %v1605 = vpop.f32.mrf.mxu0
        %v1606 = vadd.f32 %v1285, %v1605
        %1607 = vmatmul.f32.gmra.mxu0 %v1400
        %v1608 = vpop.f32.mrf.mxu0
        %v1609 = vadd.f32 %v1285, %v1608
        %1610 = vmatmul.f32.gmra.mxu0 %v1403
        %v1611 = vpop.f32.mrf.mxu0
        %v1612 = vadd.f32 %v1285, %v1611
        %1613 = vmatmul.f32.gmra.mxu0 %v1406
        %v1614 = vpop.f32.mrf.mxu0
        %v1615 = vadd.f32 %v1285, %v1614
        %1616 = vmatmul.f32.gmra.mxu0 %v1409
        %v1617 = vpop.f32.mrf.mxu0
        %v1618 = vadd.f32 %v1285, %v1617
        %1619 = vmatmul.f32.gmra.mxu0 %v1412
        %v1620 = vpop.f32.mrf.mxu0
        %v1621 = vadd.f32 %v1285, %v1620
        %1622 = vmatmul.f32.gmra.mxu0 %v1415
        %v1623 = vpop.f32.mrf.mxu0
        %v1624 = vadd.f32 %v1285, %v1623
        %1625 = vmatmul.f32.gmra.mxu0 %v1418
        %v1626 = vpop.f32.mrf.mxu0
        %v1627 = vadd.f32 %v1285, %v1626
        %1628 = vmatmul.f32.gmra.mxu0 %v1421
        %v1629 = vpop.f32.mrf.mxu0
        %v1630 = vadd.f32 %v1285, %v1629
        %1631 = vmatmul.f32.gmra.mxu0 %v1424
        %v1632 = vpop.f32.mrf.mxu0
        %v1633 = vadd.f32 %v1285, %v1632
        %1634 = vmatmul.f32.gmra.mxu0 %v1427
        %v1635 = vpop.f32.mrf.mxu0
        %v1636 = vadd.f32 %v1285, %v1635
        %1637 = vmatmul.f32.gmra.mxu0 %v1430
        %v1638 = vpop.f32.mrf.mxu0
        %v1639 = vadd.f32 %v1285, %v1638
        %1640 = vmatmul.f32.gmra.mxu0 %v1433
        %v1641 = vpop.f32.mrf.mxu0
        %v1642 = vadd.f32 %v1285, %v1641
        %1643 = vmatmul.f32.gmra.mxu0 %v1436
        %v1644 = vpop.f32.mrf.mxu0
        %v1645 = vadd.f32 %v1285, %v1644
        %1646 = vmatmul.f32.gmra.mxu0 %v1439
        %v1647 = vpop.f32.mrf.mxu0
        %v1648 = vadd.f32 %v1285, %v1647
        %1649 = vmatmul.f32.gmra.mxu0 %v1442
        %v1650 = vpop.f32.mrf.mxu0
        %v1651 = vadd.f32 %v1285, %v1650
        %1652 = vmatmul.f32.gmra.mxu0 %v1445
        %v1653 = vpop.f32.mrf.mxu0
        %v1654 = vadd.f32 %v1285, %v1653
        %1655 = vmatmul.f32.gmra.mxu0 %v1448
        %v1656 = vpop.f32.mrf.mxu0
        %v1657 = vadd.f32 %v1285, %v1656
        %1658 = vmatmul.f32.gmra.mxu0 %v1451
        %v1659 = vpop.f32.mrf.mxu0
        %v1660 = vadd.f32 %v1285, %v1659
        %1661 = vmatmul.f32.gmra.mxu0 %v1454
        %v1662 = vpop.f32.mrf.mxu0
        %v1663 = vadd.f32 %v1285, %v1662
        %1664 = vmatmul.f32.gmra.mxu0 %v1457
        %v1665 = vpop.f32.mrf.mxu0
        %v1666 = vadd.f32 %v1285, %v1665
        %1667 = vmatmul.f32.gmra.mxu0 %v1460
        %v1668 = vpop.f32.mrf.mxu0
        %v1669 = vadd.f32 %v1285, %v1668
        %1670 = vmatmul.f32.gmra.mxu0 %v1463
        %v1671 = vpop.f32.mrf.mxu0
        %v1672 = vadd.f32 %v1285, %v1671
        %1673 = vmatmul.f32.gmra.mxu0 %v1466
        %v1674 = vpop.f32.mrf.mxu0
        %v1675 = vadd.f32 %v1285, %v1674
        %1676 = vmatmul.f32.gmra.mxu0 %v1469
        %v1677 = vpop.f32.mrf.mxu0
        %v1678 = vadd.f32 %v1285, %v1677
        %1679 = vmatmul.f32.gmra.mxu0 %v1472
        %v1680 = vpop.f32.mrf.mxu0
        %v1681 = vadd.f32 %v1285, %v1680
        %1682 = vmatmul.f32.gmra.mxu0 %v1475
        %v1683 = vpop.f32.mrf.mxu0
        %v1684 = vadd.f32 %v1285, %v1683
        %1685 = vmatmul.f32.gmra.mxu0 %v1478
        %v1686 = vpop.f32.mrf.mxu0
        %v1687 = vadd.f32 %v1285, %v1686
        %1688 = vdwg.mxu0
        %v1689 = vtanh.pop %v1498
        %v1690 = vtanh.pop %v1501
        %v1691 = vtanh.pop %v1504
        %v1692 = vtanh.pop %v1507
        %v1693 = vtanh.pop %v1510
        %v1694 = vtanh.pop %v1513
        %v1695 = vtanh.pop %v1516
        %v1696 = vtanh.pop %v1519
        %v1697 = vtanh.pop %v1522
        %v1698 = vtanh.pop %v1525
        %v1699 = vtanh.pop %v1528
        %v1700 = vtanh.pop %v1531
        %v1701 = vtanh.pop %v1534
        %v1702 = vtanh.pop %v1537
        %v1703 = vtanh.pop %v1540
        %v1704 = vtanh.pop %v1543
        %v1705 = vtanh.pop %v1546
        %v1706 = vtanh.pop %v1549
        %v1707 = vtanh.pop %v1552
        %v1708 = vtanh.pop %v1555
        %v1709 = vtanh.pop %v1558
        %v1710 = vtanh.pop %v1561
        %v1711 = vtanh.pop %v1564
        %v1712 = vtanh.pop %v1567
        %v1713 = vtanh.pop %v1570
        %v1714 = vtanh.pop %v1573
        %v1715 = vtanh.pop %v1576
        %v1716 = vtanh.pop %v1579
        %v1717 = vtanh.pop %v1582
        %v1718 = vtanh.pop %v1585
        %v1719 = vtanh.pop %v1588
        %v1720 = vtanh.pop %v1591
        %v1721 = vtanh.pop %v1594
        %v1722 = vtanh.pop %v1597
        %v1723 = vtanh.pop %v1600
        %v1724 = vtanh.pop %v1603
        %v1725 = vtanh.pop %v1606
        %v1726 = vtanh.pop %v1609
        %v1727 = vtanh.pop %v1612
        %v1728 = vtanh.pop %v1615
        %v1729 = vtanh.pop %v1618
        %v1730 = vtanh.pop %v1621
        %v1731 = vtanh.pop %v1624
        %v1732 = vtanh.pop %v1627
        %v1733 = vtanh.pop %v1630
        %v1734 = vtanh.pop %v1633
        %v1735 = vtanh.pop %v1636
        %v1736 = vtanh.pop %v1639
        %v1737 = vtanh.pop %v1642
        %v1738 = vtanh.pop %v1645
        %v1739 = vtanh.pop %v1648
        %v1740 = vtanh.pop %v1651
        %v1741 = vtanh.pop %v1654
        %v1742 = vtanh.pop %v1657
        %v1743 = vtanh.pop %v1660
        %v1744 = vtanh.pop %v1663
        %v1745 = vtanh.pop %v1666
        %v1746 = vtanh.pop %v1669
        %v1747 = vtanh.pop %v1672
        %v1748 = vtanh.pop %v1675
        %v1749 = vtanh.pop %v1678
        %v1750 = vtanh.pop %v1681
        %v1751 = vtanh.pop %v1684
        %v1752 = vtanh.pop %v1687
        %v1753 = vld [vmem:[%s6] sm:$0xff]
        %v1754 = vld [vmem:[%s7] sm:$0x1]
        %v1756 = vperm.slane %v1754, 0
        %v1759 = vsel %vm1287, %v1689, 0
        %v1762 = vsel %vm1287, %v1690, 0
        %v1765 = vsel %vm1287, %v1691, 0
        %v1768 = vsel %vm1287, %v1692, 0
        %v1771 = vsel %vm1287, %v1693, 0
        %v1774 = vsel %vm1287, %v1694, 0
        %v1777 = vsel %vm1287, %v1695, 0
        %v1780 = vsel %vm1287, %v1696, 0
        %v1783 = vsel %vm1287, %v1697, 0
        %v1786 = vsel %vm1287, %v1698, 0
        %v1789 = vsel %vm1287, %v1699, 0
        %v1792 = vsel %vm1287, %v1700, 0
        %v1795 = vsel %vm1287, %v1701, 0
        %v1798 = vsel %vm1287, %v1702, 0
        %v1801 = vsel %vm1287, %v1703, 0
        %v1804 = vsel %vm1287, %v1704, 0
        %v1807 = vsel %vm1287, %v1705, 0
        %v1810 = vsel %vm1287, %v1706, 0
        %v1813 = vsel %vm1287, %v1707, 0
        %v1816 = vsel %vm1287, %v1708, 0
        %v1819 = vsel %vm1287, %v1709, 0
        %v1822 = vsel %vm1287, %v1710, 0
        %v1825 = vsel %vm1287, %v1711, 0
        %v1828 = vsel %vm1287, %v1712, 0
        %v1831 = vsel %vm1287, %v1713, 0
        %v1834 = vsel %vm1287, %v1714, 0
        %v1837 = vsel %vm1287, %v1715, 0
        %v1840 = vsel %vm1287, %v1716, 0
        %v1843 = vsel %vm1287, %v1717, 0
        %v1846 = vsel %vm1287, %v1718, 0
        %v1849 = vsel %vm1287, %v1719, 0
        %v1852 = vsel %vm1287, %v1720, 0
        %v1855 = vsel %vm1287, %v1721, 0
        %v1858 = vsel %vm1287, %v1722, 0
        %v1861 = vsel %vm1287, %v1723, 0
        %v1864 = vsel %vm1287, %v1724, 0
        %v1867 = vsel %vm1287, %v1725, 0
        %v1870 = vsel %vm1287, %v1726, 0
        %v1873 = vsel %vm1287, %v1727, 0
        %v1876 = vsel %vm1287, %v1728, 0
        %v1879 = vsel %vm1287, %v1729, 0
        %v1882 = vsel %vm1287, %v1730, 0
        %v1885 = vsel %vm1287, %v1731, 0
        %v1888 = vsel %vm1287, %v1732, 0
        %v1891 = vsel %vm1287, %v1733, 0
        %v1894 = vsel %vm1287, %v1734, 0
        %v1897 = vsel %vm1287, %v1735, 0
        %v1900 = vsel %vm1287, %v1736, 0
        %v1903 = vsel %vm1287, %v1737, 0
        %v1906 = vsel %vm1287, %v1738, 0
        %v1909 = vsel %vm1287, %v1739, 0
        %v1912 = vsel %vm1287, %v1740, 0
        %v1915 = vsel %vm1287, %v1741, 0
        %v1918 = vsel %vm1287, %v1742, 0
        %v1921 = vsel %vm1287, %v1743, 0
        %v1924 = vsel %vm1287, %v1744, 0
        %v1927 = vsel %vm1287, %v1745, 0
        %v1930 = vsel %vm1287, %v1746, 0
        %v1933 = vsel %vm1287, %v1747, 0
        %v1936 = vsel %vm1287, %v1748, 0
        %v1939 = vsel %vm1287, %v1749, 0
        %v1942 = vsel %vm1287, %v1750, 0
        %v1945 = vsel %vm1287, %v1751, 0
        %v1948 = vsel %vm1287, %v1752, 0
        %1950 = vmatpush.msra.mxu0 0.0
        %1951 = vmatpush.msra.mxu0 0.0
        %1952 = vmatpush.msra.mxu0 0.0
        %1953 = vmatpush.msra.mxu0 0.0
        %1954 = vmatpush.msra.mxu0 0.0
        %1955 = vmatpush.msra.mxu0 0.0
        %1956 = vmatpush.msra.mxu0 0.0
        %1957 = vmatpush.msra.mxu0 0.0
        %1958 = vmatpush.msra.mxu0 0.0
        %1959 = vmatpush.msra.mxu0 0.0
        %1960 = vmatpush.msra.mxu0 0.0
        %1961 = vmatpush.msra.mxu0 0.0
        %1962 = vmatpush.msra.mxu0 0.0
        %1963 = vmatpush.msra.mxu0 0.0
        %1964 = vmatpush.msra.mxu0 0.0
        %1965 = vmatpush.msra.mxu0 %v1753
        %1966 = vmatmul.f32.gmra.mxu0 %v1759
        %v1967 = vpop.f32.mrf.mxu0
        %v1968 = vadd.f32 %v1756, %v1967
        %1969 = vmatmul.f32.gmra.mxu0 %v1762
        %v1970 = vpop.f32.mrf.mxu0
        %v1971 = vadd.f32 %v1756, %v1970
        %1972 = vmatmul.f32.gmra.mxu0 %v1765
        %v1973 = vpop.f32.mrf.mxu0
        %v1974 = vadd.f32 %v1756, %v1973
        %1975 = vmatmul.f32.gmra.mxu0 %v1768
        %v1976 = vpop.f32.mrf.mxu0
        %v1977 = vadd.f32 %v1756, %v1976
        %1978 = vmatmul.f32.gmra.mxu0 %v1771
        %v1979 = vpop.f32.mrf.mxu0
        %v1980 = vadd.f32 %v1756, %v1979
        %1981 = vmatmul.f32.gmra.mxu0 %v1774
        %v1982 = vpop.f32.mrf.mxu0
        %v1983 = vadd.f32 %v1756, %v1982
        %1984 = vmatmul.f32.gmra.mxu0 %v1777
        %v1985 = vpop.f32.mrf.mxu0
        %v1986 = vadd.f32 %v1756, %v1985
        %1987 = vmatmul.f32.gmra.mxu0 %v1780
        %v1988 = vpop.f32.mrf.mxu0
        %v1989 = vadd.f32 %v1756, %v1988
        %1990 = vmatmul.f32.gmra.mxu0 %v1783
        %v1991 = vpop.f32.mrf.mxu0
        %v1992 = vadd.f32 %v1756, %v1991
        %1993 = vmatmul.f32.gmra.mxu0 %v1786
        %v1994 = vpop.f32.mrf.mxu0
        %v1995 = vadd.f32 %v1756, %v1994
        %1996 = vmatmul.f32.gmra.mxu0 %v1789
        %v1997 = vpop.f32.mrf.mxu0
        %v1998 = vadd.f32 %v1756, %v1997
        %1999 = vmatmul.f32.gmra.mxu0 %v1792
        %v2000 = vpop.f32.mrf.mxu0
        %v2001 = vadd.f32 %v1756, %v2000
        %2002 = vmatmul.f32.gmra.mxu0 %v1795
        %v2003 = vpop.f32.mrf.mxu0
        %v2004 = vadd.f32 %v1756, %v2003
        %2005 = vmatmul.f32.gmra.mxu0 %v1798
        %v2006 = vpop.f32.mrf.mxu0
        %v2007 = vadd.f32 %v1756, %v2006
        %2008 = vmatmul.f32.gmra.mxu0 %v1801
        %v2009 = vpop.f32.mrf.mxu0
        %v2010 = vadd.f32 %v1756, %v2009
        %2011 = vmatmul.f32.gmra.mxu0 %v1804
        %v2012 = vpop.f32.mrf.mxu0
        %v2013 = vadd.f32 %v1756, %v2012
        %2014 = vmatmul.f32.gmra.mxu0 %v1807
        %v2015 = vpop.f32.mrf.mxu0
        %v2016 = vadd.f32 %v1756, %v2015
        %2017 = vmatmul.f32.gmra.mxu0 %v1810
        %v2018 = vpop.f32.mrf.mxu0
        %v2019 = vadd.f32 %v1756, %v2018
        %2020 = vmatmul.f32.gmra.mxu0 %v1813
        %v2021 = vpop.f32.mrf.mxu0
        %v2022 = vadd.f32 %v1756, %v2021
        %2023 = vmatmul.f32.gmra.mxu0 %v1816
        %v2024 = vpop.f32.mrf.mxu0
        %v2025 = vadd.f32 %v1756, %v2024
        %2026 = vmatmul.f32.gmra.mxu0 %v1819
        %v2027 = vpop.f32.mrf.mxu0
        %v2028 = vadd.f32 %v1756, %v2027
        %2029 = vmatmul.f32.gmra.mxu0 %v1822
        %v2030 = vpop.f32.mrf.mxu0
        %v2031 = vadd.f32 %v1756, %v2030
        %2032 = vmatmul.f32.gmra.mxu0 %v1825
        %v2033 = vpop.f32.mrf.mxu0
        %v2034 = vadd.f32 %v1756, %v2033
        %2035 = vmatmul.f32.gmra.mxu0 %v1828
        %v2036 = vpop.f32.mrf.mxu0
        %v2037 = vadd.f32 %v1756, %v2036
        %2038 = vmatmul.f32.gmra.mxu0 %v1831
        %v2039 = vpop.f32.mrf.mxu0
        %v2040 = vadd.f32 %v1756, %v2039
        %2041 = vmatmul.f32.gmra.mxu0 %v1834
        %v2042 = vpop.f32.mrf.mxu0
        %v2043 = vadd.f32 %v1756, %v2042
        %2044 = vmatmul.f32.gmra.mxu0 %v1837
        %v2045 = vpop.f32.mrf.mxu0
        %v2046 = vadd.f32 %v1756, %v2045
        %2047 = vmatmul.f32.gmra.mxu0 %v1840
        %v2048 = vpop.f32.mrf.mxu0
        %v2049 = vadd.f32 %v1756, %v2048
        %2050 = vmatmul.f32.gmra.mxu0 %v1843
        %v2051 = vpop.f32.mrf.mxu0
        %v2052 = vadd.f32 %v1756, %v2051
        %2053 = vmatmul.f32.gmra.mxu0 %v1846
        %v2054 = vpop.f32.mrf.mxu0
        %v2055 = vadd.f32 %v1756, %v2054
        %2056 = vmatmul.f32.gmra.mxu0 %v1849
        %v2057 = vpop.f32.mrf.mxu0
        %v2058 = vadd.f32 %v1756, %v2057
        %2059 = vmatmul.f32.gmra.mxu0 %v1852
        %v2060 = vpop.f32.mrf.mxu0
        %v2061 = vadd.f32 %v1756, %v2060
        %2062 = vmatmul.f32.gmra.mxu0 %v1855
        %v2063 = vpop.f32.mrf.mxu0
        %v2064 = vadd.f32 %v1756, %v2063
        %2065 = vmatmul.f32.gmra.mxu0 %v1858
        %v2066 = vpop.f32.mrf.mxu0
        %v2067 = vadd.f32 %v1756, %v2066
        %2068 = vmatmul.f32.gmra.mxu0 %v1861
        %v2069 = vpop.f32.mrf.mxu0
        %v2070 = vadd.f32 %v1756, %v2069
        %2071 = vmatmul.f32.gmra.mxu0 %v1864
        %v2072 = vpop.f32.mrf.mxu0
        %v2073 = vadd.f32 %v1756, %v2072
        %2074 = vmatmul.f32.gmra.mxu0 %v1867
        %v2075 = vpop.f32.mrf.mxu0
        %v2076 = vadd.f32 %v1756, %v2075
        %2077 = vmatmul.f32.gmra.mxu0 %v1870
        %v2078 = vpop.f32.mrf.mxu0
        %v2079 = vadd.f32 %v1756, %v2078
        %2080 = vmatmul.f32.gmra.mxu0 %v1873
        %v2081 = vpop.f32.mrf.mxu0
        %v2082 = vadd.f32 %v1756, %v2081
        %2083 = vmatmul.f32.gmra.mxu0 %v1876
        %v2084 = vpop.f32.mrf.mxu0
        %v2085 = vadd.f32 %v1756, %v2084
        %2086 = vmatmul.f32.gmra.mxu0 %v1879
        %v2087 = vpop.f32.mrf.mxu0
        %v2088 = vadd.f32 %v1756, %v2087
        %2089 = vmatmul.f32.gmra.mxu0 %v1882
        %v2090 = vpop.f32.mrf.mxu0
        %v2091 = vadd.f32 %v1756, %v2090
        %2092 = vmatmul.f32.gmra.mxu0 %v1885
        %v2093 = vpop.f32.mrf.mxu0
        %v2094 = vadd.f32 %v1756, %v2093
        %2095 = vmatmul.f32.gmra.mxu0 %v1888
        %v2096 = vpop.f32.mrf.mxu0
        %v2097 = vadd.f32 %v1756, %v2096
        %2098 = vmatmul.f32.gmra.mxu0 %v1891
        %v2099 = vpop.f32.mrf.mxu0
        %v2100 = vadd.f32 %v1756, %v2099
        %2101 = vmatmul.f32.gmra.mxu0 %v1894
        %v2102 = vpop.f32.mrf.mxu0
        %v2103 = vadd.f32 %v1756, %v2102
        %2104 = vmatmul.f32.gmra.mxu0 %v1897
        %v2105 = vpop.f32.mrf.mxu0
        %v2106 = vadd.f32 %v1756, %v2105
        %2107 = vmatmul.f32.gmra.mxu0 %v1900
        %v2108 = vpop.f32.mrf.mxu0
        %v2109 = vadd.f32 %v1756, %v2108
        %2110 = vmatmul.f32.gmra.mxu0 %v1903
        %v2111 = vpop.f32.mrf.mxu0
        %v2112 = vadd.f32 %v1756, %v2111
        %2113 = vmatmul.f32.gmra.mxu0 %v1906
        %v2114 = vpop.f32.mrf.mxu0
        %v2115 = vadd.f32 %v1756, %v2114
        %2116 = vmatmul.f32.gmra.mxu0 %v1909
        %v2117 = vpop.f32.mrf.mxu0
        %v2118 = vadd.f32 %v1756, %v2117
        %2119 = vmatmul.f32.gmra.mxu0 %v1912
        %v2120 = vpop.f32.mrf.mxu0
        %v2121 = vadd.f32 %v1756, %v2120
        %2122 = vmatmul.f32.gmra.mxu0 %v1915
        %v2123 = vpop.f32.mrf.mxu0
        %v2124 = vadd.f32 %v1756, %v2123
        %2125 = vmatmul.f32.gmra.mxu0 %v1918
        %v2126 = vpop.f32.mrf.mxu0
        %v2127 = vadd.f32 %v1756, %v2126
        %2128 = vmatmul.f32.gmra.mxu0 %v1921
        %v2129 = vpop.f32.mrf.mxu0
        %v2130 = vadd.f32 %v1756, %v2129
        %2131 = vmatmul.f32.gmra.mxu0 %v1924
        %v2132 = vpop.f32.mrf.mxu0
        %v2133 = vadd.f32 %v1756, %v2132
        %2134 = vmatmul.f32.gmra.mxu0 %v1927
        %v2135 = vpop.f32.mrf.mxu0
        %v2136 = vadd.f32 %v1756, %v2135
        %2137 = vmatmul.f32.gmra.mxu0 %v1930
        %v2138 = vpop.f32.mrf.mxu0
        %v2139 = vadd.f32 %v1756, %v2138
        %2140 = vmatmul.f32.gmra.mxu0 %v1933
        %v2141 = vpop.f32.mrf.mxu0
        %v2142 = vadd.f32 %v1756, %v2141
        %2143 = vmatmul.f32.gmra.mxu0 %v1936
        %v2144 = vpop.f32.mrf.mxu0
        %v2145 = vadd.f32 %v1756, %v2144
        %2146 = vmatmul.f32.gmra.mxu0 %v1939
        %v2147 = vpop.f32.mrf.mxu0
        %v2148 = vadd.f32 %v1756, %v2147
        %2149 = vmatmul.f32.gmra.mxu0 %v1942
        %v2150 = vpop.f32.mrf.mxu0
        %v2151 = vadd.f32 %v1756, %v2150
        %2152 = vmatmul.f32.gmra.mxu0 %v1945
        %v2153 = vpop.f32.mrf.mxu0
        %v2154 = vadd.f32 %v1756, %v2153
        %2155 = vmatmul.f32.gmra.mxu0 %v1948
        %v2156 = vpop.f32.mrf.mxu0
        %v2157 = vadd.f32 %v1756, %v2156
        %2158 = vdwg.mxu0
        %v2159 = vtanh.pop %v1968
        %v2160 = vtanh.pop %v1971
        %v2161 = vtanh.pop %v1974
        %v2162 = vtanh.pop %v1977
        %v2163 = vtanh.pop %v1980
        %v2164 = vtanh.pop %v1983
        %v2165 = vtanh.pop %v1986
        %v2166 = vtanh.pop %v1989
        %v2167 = vtanh.pop %v1992
        %v2168 = vtanh.pop %v1995
        %v2169 = vtanh.pop %v1998
        %v2170 = vtanh.pop %v2001
        %v2171 = vtanh.pop %v2004
        %v2172 = vtanh.pop %v2007
        %v2173 = vtanh.pop %v2010
        %v2174 = vtanh.pop %v2013
        %v2175 = vtanh.pop %v2016
        %v2176 = vtanh.pop %v2019
        %v2177 = vtanh.pop %v2022
        %v2178 = vtanh.pop %v2025
        %v2179 = vtanh.pop %v2028
        %v2180 = vtanh.pop %v2031
        %v2181 = vtanh.pop %v2034
        %v2182 = vtanh.pop %v2037
        %v2183 = vtanh.pop %v2040
        %v2184 = vtanh.pop %v2043
        %v2185 = vtanh.pop %v2046
        %v2186 = vtanh.pop %v2049
        %v2187 = vtanh.pop %v2052
        %v2188 = vtanh.pop %v2055
        %v2189 = vtanh.pop %v2058
        %v2190 = vtanh.pop %v2061
        %v2191 = vtanh.pop %v2064
        %v2192 = vtanh.pop %v2067
        %v2193 = vtanh.pop %v2070
        %v2194 = vtanh.pop %v2073
        %v2195 = vtanh.pop %v2076
        %v2196 = vtanh.pop %v2079
        %v2197 = vtanh.pop %v2082
        %v2198 = vtanh.pop %v2085
        %v2199 = vtanh.pop %v2088
        %v2200 = vtanh.pop %v2091
        %v2201 = vtanh.pop %v2094
        %v2202 = vtanh.pop %v2097
        %v2203 = vtanh.pop %v2100
        %v2204 = vtanh.pop %v2103
        %v2205 = vtanh.pop %v2106
        %v2206 = vtanh.pop %v2109
        %v2207 = vtanh.pop %v2112
        %v2208 = vtanh.pop %v2115
        %v2209 = vtanh.pop %v2118
        %v2210 = vtanh.pop %v2121
        %v2211 = vtanh.pop %v2124
        %v2212 = vtanh.pop %v2127
        %v2213 = vtanh.pop %v2130
        %v2214 = vtanh.pop %v2133
        %v2215 = vtanh.pop %v2136
        %v2216 = vtanh.pop %v2139
        %v2217 = vtanh.pop %v2142
        %v2218 = vtanh.pop %v2145
        %v2219 = vtanh.pop %v2148
        %v2220 = vtanh.pop %v2151
        %v2221 = vtanh.pop %v2154
        %v2222 = vtanh.pop %v2157
        %v2223 = vld [vmem:[%s4] sm:$0xff]
        %v2224 = vld [vmem:[%s5] sm:$0x1]
        %v2226 = vperm.slane %v2224, 0
        %2228 = vmatpush.msra.mxu0 0.0
        %2229 = vmatpush.msra.mxu0 0.0
        %2230 = vmatpush.msra.mxu0 0.0
        %2231 = vmatpush.msra.mxu0 0.0
        %2232 = vmatpush.msra.mxu0 0.0
        %2233 = vmatpush.msra.mxu0 0.0
        %2234 = vmatpush.msra.mxu0 0.0
        %2235 = vmatpush.msra.mxu0 0.0
        %2236 = vmatpush.msra.mxu0 0.0
        %2237 = vmatpush.msra.mxu0 0.0
        %2238 = vmatpush.msra.mxu0 0.0
        %2239 = vmatpush.msra.mxu0 0.0
        %2240 = vmatpush.msra.mxu0 0.0
        %2241 = vmatpush.msra.mxu0 0.0
        %2242 = vmatpush.msra.mxu0 0.0
        %2243 = vmatpush.msra.mxu0 %v2223
        %2244 = vmatmul.f32.gmra.mxu0 %v1289
        %v2245 = vpop.f32.mrf.mxu0
        %v2246 = vadd.f32 %v2226, %v2245
        %2247 = vmatmul.f32.gmra.mxu0 %v1292
        %v2248 = vpop.f32.mrf.mxu0
        %v2249 = vadd.f32 %v2226, %v2248
        %2250 = vmatmul.f32.gmra.mxu0 %v1295
        %v2251 = vpop.f32.mrf.mxu0
        %v2252 = vadd.f32 %v2226, %v2251
        %2253 = vmatmul.f32.gmra.mxu0 %v1298
        %v2254 = vpop.f32.mrf.mxu0
        %v2255 = vadd.f32 %v2226, %v2254
        %2256 = vmatmul.f32.gmra.mxu0 %v1301
        %v2257 = vpop.f32.mrf.mxu0
        %v2258 = vadd.f32 %v2226, %v2257
        %2259 = vmatmul.f32.gmra.mxu0 %v1304
        %v2260 = vpop.f32.mrf.mxu0
        %v2261 = vadd.f32 %v2226, %v2260
        %2262 = vmatmul.f32.gmra.mxu0 %v1307
        %v2263 = vpop.f32.mrf.mxu0
        %v2264 = vadd.f32 %v2226, %v2263
        %2265 = vmatmul.f32.gmra.mxu0 %v1310
        %v2266 = vpop.f32.mrf.mxu0
        %v2267 = vadd.f32 %v2226, %v2266
        %2268 = vmatmul.f32.gmra.mxu0 %v1313
        %v2269 = vpop.f32.mrf.mxu0
        %v2270 = vadd.f32 %v2226, %v2269
        %2271 = vmatmul.f32.gmra.mxu0 %v1316
        %v2272 = vpop.f32.mrf.mxu0
        %v2273 = vadd.f32 %v2226, %v2272
        %2274 = vmatmul.f32.gmra.mxu0 %v1319
        %v2275 = vpop.f32.mrf.mxu0
        %v2276 = vadd.f32 %v2226, %v2275
        %2277 = vmatmul.f32.gmra.mxu0 %v1322
        %v2278 = vpop.f32.mrf.mxu0
        %v2279 = vadd.f32 %v2226, %v2278
        %2280 = vmatmul.f32.gmra.mxu0 %v1325
        %v2281 = vpop.f32.mrf.mxu0
        %v2282 = vadd.f32 %v2226, %v2281
        %2283 = vmatmul.f32.gmra.mxu0 %v1328
        %v2284 = vpop.f32.mrf.mxu0
        %v2285 = vadd.f32 %v2226, %v2284
        %2286 = vmatmul.f32.gmra.mxu0 %v1331
        %v2287 = vpop.f32.mrf.mxu0
        %v2288 = vadd.f32 %v2226, %v2287
        %2289 = vmatmul.f32.gmra.mxu0 %v1334
        %v2290 = vpop.f32.mrf.mxu0
        %v2291 = vadd.f32 %v2226, %v2290
        %2292 = vmatmul.f32.gmra.mxu0 %v1337
        %v2293 = vpop.f32.mrf.mxu0
        %v2294 = vadd.f32 %v2226, %v2293
        %2295 = vmatmul.f32.gmra.mxu0 %v1340
        %v2296 = vpop.f32.mrf.mxu0
        %v2297 = vadd.f32 %v2226, %v2296
        %2298 = vmatmul.f32.gmra.mxu0 %v1343
        %v2299 = vpop.f32.mrf.mxu0
        %v2300 = vadd.f32 %v2226, %v2299
        %2301 = vmatmul.f32.gmra.mxu0 %v1346
        %v2302 = vpop.f32.mrf.mxu0
        %v2303 = vadd.f32 %v2226, %v2302
        %2304 = vmatmul.f32.gmra.mxu0 %v1349
        %v2305 = vpop.f32.mrf.mxu0
        %v2306 = vadd.f32 %v2226, %v2305
        %2307 = vmatmul.f32.gmra.mxu0 %v1352
        %v2308 = vpop.f32.mrf.mxu0
        %v2309 = vadd.f32 %v2226, %v2308
        %2310 = vmatmul.f32.gmra.mxu0 %v1355
        %v2311 = vpop.f32.mrf.mxu0
        %v2312 = vadd.f32 %v2226, %v2311
        %2313 = vmatmul.f32.gmra.mxu0 %v1358
        %v2314 = vpop.f32.mrf.mxu0
        %v2315 = vadd.f32 %v2226, %v2314
        %2316 = vmatmul.f32.gmra.mxu0 %v1361
        %v2317 = vpop.f32.mrf.mxu0
        %v2318 = vadd.f32 %v2226, %v2317
        %2319 = vmatmul.f32.gmra.mxu0 %v1364
        %v2320 = vpop.f32.mrf.mxu0
        %v2321 = vadd.f32 %v2226, %v2320
        %2322 = vmatmul.f32.gmra.mxu0 %v1367
        %v2323 = vpop.f32.mrf.mxu0
        %v2324 = vadd.f32 %v2226, %v2323
        %2325 = vmatmul.f32.gmra.mxu0 %v1370
        %v2326 = vpop.f32.mrf.mxu0
        %v2327 = vadd.f32 %v2226, %v2326
        %2328 = vmatmul.f32.gmra.mxu0 %v1373
        %v2329 = vpop.f32.mrf.mxu0
        %v2330 = vadd.f32 %v2226, %v2329
        %2331 = vmatmul.f32.gmra.mxu0 %v1376
        %v2332 = vpop.f32.mrf.mxu0
        %v2333 = vadd.f32 %v2226, %v2332
        %2334 = vmatmul.f32.gmra.mxu0 %v1379
        %v2335 = vpop.f32.mrf.mxu0
        %v2336 = vadd.f32 %v2226, %v2335
        %2337 = vmatmul.f32.gmra.mxu0 %v1382
        %v2338 = vpop.f32.mrf.mxu0
        %v2339 = vadd.f32 %v2226, %v2338
        %2340 = vmatmul.f32.gmra.mxu0 %v1385
        %v2341 = vpop.f32.mrf.mxu0
        %v2342 = vadd.f32 %v2226, %v2341
        %2343 = vmatmul.f32.gmra.mxu0 %v1388
        %v2344 = vpop.f32.mrf.mxu0
        %v2345 = vadd.f32 %v2226, %v2344
        %2346 = vmatmul.f32.gmra.mxu0 %v1391
        %v2347 = vpop.f32.mrf.mxu0
        %v2348 = vadd.f32 %v2226, %v2347
        %2349 = vmatmul.f32.gmra.mxu0 %v1394
        %v2350 = vpop.f32.mrf.mxu0
        %v2351 = vadd.f32 %v2226, %v2350
        %2352 = vmatmul.f32.gmra.mxu0 %v1397
        %v2353 = vpop.f32.mrf.mxu0
        %v2354 = vadd.f32 %v2226, %v2353
        %2355 = vmatmul.f32.gmra.mxu0 %v1400
        %v2356 = vpop.f32.mrf.mxu0
        %v2357 = vadd.f32 %v2226, %v2356
        %2358 = vmatmul.f32.gmra.mxu0 %v1403
        %v2359 = vpop.f32.mrf.mxu0
        %v2360 = vadd.f32 %v2226, %v2359
        %2361 = vmatmul.f32.gmra.mxu0 %v1406
        %v2362 = vpop.f32.mrf.mxu0
        %v2363 = vadd.f32 %v2226, %v2362
        %2364 = vmatmul.f32.gmra.mxu0 %v1409
        %v2365 = vpop.f32.mrf.mxu0
        %v2366 = vadd.f32 %v2226, %v2365
        %2367 = vmatmul.f32.gmra.mxu0 %v1412
        %v2368 = vpop.f32.mrf.mxu0
        %v2369 = vadd.f32 %v2226, %v2368
        %2370 = vmatmul.f32.gmra.mxu0 %v1415
        %v2371 = vpop.f32.mrf.mxu0
        %v2372 = vadd.f32 %v2226, %v2371
        %2373 = vmatmul.f32.gmra.mxu0 %v1418
        %v2374 = vpop.f32.mrf.mxu0
        %v2375 = vadd.f32 %v2226, %v2374
        %2376 = vmatmul.f32.gmra.mxu0 %v1421
        %v2377 = vpop.f32.mrf.mxu0
        %v2378 = vadd.f32 %v2226, %v2377
        %2379 = vmatmul.f32.gmra.mxu0 %v1424
        %v2380 = vpop.f32.mrf.mxu0
        %v2381 = vadd.f32 %v2226, %v2380
        %2382 = vmatmul.f32.gmra.mxu0 %v1427
        %v2383 = vpop.f32.mrf.mxu0
        %v2384 = vadd.f32 %v2226, %v2383
        %2385 = vmatmul.f32.gmra.mxu0 %v1430
        %v2386 = vpop.f32.mrf.mxu0
        %v2387 = vadd.f32 %v2226, %v2386
        %2388 = vmatmul.f32.gmra.mxu0 %v1433
        %v2389 = vpop.f32.mrf.mxu0
        %v2390 = vadd.f32 %v2226, %v2389
        %2391 = vmatmul.f32.gmra.mxu0 %v1436
        %v2392 = vpop.f32.mrf.mxu0
        %v2393 = vadd.f32 %v2226, %v2392
        %2394 = vmatmul.f32.gmra.mxu0 %v1439
        %v2395 = vpop.f32.mrf.mxu0
        %v2396 = vadd.f32 %v2226, %v2395
        %2397 = vmatmul.f32.gmra.mxu0 %v1442
        %v2398 = vpop.f32.mrf.mxu0
        %v2399 = vadd.f32 %v2226, %v2398
        %2400 = vmatmul.f32.gmra.mxu0 %v1445
        %v2401 = vpop.f32.mrf.mxu0
        %v2402 = vadd.f32 %v2226, %v2401
        %2403 = vmatmul.f32.gmra.mxu0 %v1448
        %v2404 = vpop.f32.mrf.mxu0
        %v2405 = vadd.f32 %v2226, %v2404
        %2406 = vmatmul.f32.gmra.mxu0 %v1451
        %v2407 = vpop.f32.mrf.mxu0
        %v2408 = vadd.f32 %v2226, %v2407
        %2409 = vmatmul.f32.gmra.mxu0 %v1454
        %v2410 = vpop.f32.mrf.mxu0
        %v2411 = vadd.f32 %v2226, %v2410
        %2412 = vmatmul.f32.gmra.mxu0 %v1457
        %v2413 = vpop.f32.mrf.mxu0
        %v2414 = vadd.f32 %v2226, %v2413
        %2415 = vmatmul.f32.gmra.mxu0 %v1460
        %v2416 = vpop.f32.mrf.mxu0
        %v2417 = vadd.f32 %v2226, %v2416
        %2418 = vmatmul.f32.gmra.mxu0 %v1463
        %v2419 = vpop.f32.mrf.mxu0
        %v2420 = vadd.f32 %v2226, %v2419
        %2421 = vmatmul.f32.gmra.mxu0 %v1466
        %v2422 = vpop.f32.mrf.mxu0
        %v2423 = vadd.f32 %v2226, %v2422
        %2424 = vmatmul.f32.gmra.mxu0 %v1469
        %v2425 = vpop.f32.mrf.mxu0
        %v2426 = vadd.f32 %v2226, %v2425
        %2427 = vmatmul.f32.gmra.mxu0 %v1472
        %v2428 = vpop.f32.mrf.mxu0
        %v2429 = vadd.f32 %v2226, %v2428
        %2430 = vmatmul.f32.gmra.mxu0 %v1475
        %v2431 = vpop.f32.mrf.mxu0
        %v2432 = vadd.f32 %v2226, %v2431
        %2433 = vmatmul.f32.gmra.mxu0 %v1478
        %v2434 = vpop.f32.mrf.mxu0
        %v2435 = vadd.f32 %v2226, %v2434
        %2436 = vdwg.mxu0
        %v2437 = vtanh.pop %v2246
        %v2438 = vtanh.pop %v2249
        %v2439 = vtanh.pop %v2252
        %v2440 = vtanh.pop %v2255
        %v2441 = vtanh.pop %v2258
        %v2442 = vtanh.pop %v2261
        %v2443 = vtanh.pop %v2264
        %v2444 = vtanh.pop %v2267
        %v2445 = vtanh.pop %v2270
        %v2446 = vtanh.pop %v2273
        %v2447 = vtanh.pop %v2276
        %v2448 = vtanh.pop %v2279
        %v2449 = vtanh.pop %v2282
        %v2450 = vtanh.pop %v2285
        %v2451 = vtanh.pop %v2288
        %v2452 = vtanh.pop %v2291
        %v2453 = vtanh.pop %v2294
        %v2454 = vtanh.pop %v2297
        %v2455 = vtanh.pop %v2300
        %v2456 = vtanh.pop %v2303
        %v2457 = vtanh.pop %v2306
        %v2458 = vtanh.pop %v2309
        %v2459 = vtanh.pop %v2312
        %v2460 = vtanh.pop %v2315
        %v2461 = vtanh.pop %v2318
        %v2462 = vtanh.pop %v2321
        %v2463 = vtanh.pop %v2324
        %v2464 = vtanh.pop %v2327
        %v2465 = vtanh.pop %v2330
        %v2466 = vtanh.pop %v2333
        %v2467 = vtanh.pop %v2336
        %v2468 = vtanh.pop %v2339
        %v2469 = vtanh.pop %v2342
        %v2470 = vtanh.pop %v2345
        %v2471 = vtanh.pop %v2348
        %v2472 = vtanh.pop %v2351
        %v2473 = vtanh.pop %v2354
        %v2474 = vtanh.pop %v2357
        %v2475 = vtanh.pop %v2360
        %v2476 = vtanh.pop %v2363
        %v2477 = vtanh.pop %v2366
        %v2478 = vtanh.pop %v2369
        %v2479 = vtanh.pop %v2372
        %v2480 = vtanh.pop %v2375
        %v2481 = vtanh.pop %v2378
        %v2482 = vtanh.pop %v2381
        %v2483 = vtanh.pop %v2384
        %v2484 = vtanh.pop %v2387
        %v2485 = vtanh.pop %v2390
        %v2486 = vtanh.pop %v2393
        %v2487 = vtanh.pop %v2396
        %v2488 = vtanh.pop %v2399
        %v2489 = vtanh.pop %v2402
        %v2490 = vtanh.pop %v2405
        %v2491 = vtanh.pop %v2408
        %v2492 = vtanh.pop %v2411
        %v2493 = vtanh.pop %v2414
        %v2494 = vtanh.pop %v2417
        %v2495 = vtanh.pop %v2420
        %v2496 = vtanh.pop %v2423
        %v2497 = vtanh.pop %v2426
        %v2498 = vtanh.pop %v2429
        %v2499 = vtanh.pop %v2432
        %v2500 = vtanh.pop %v2435
        %v2501 = vld [vmem:[%s10] sm:$0xff]
        %v2502 = vld [vmem:[%s11] sm:$0x1]
        %v2504 = vperm.slane %v2502, 0
        %v2507 = vsel %vm1287, %v2437, 0
        %v2510 = vsel %vm1287, %v2438, 0
        %v2513 = vsel %vm1287, %v2439, 0
        %v2516 = vsel %vm1287, %v2440, 0
        %v2519 = vsel %vm1287, %v2441, 0
        %v2522 = vsel %vm1287, %v2442, 0
        %v2525 = vsel %vm1287, %v2443, 0
        %v2528 = vsel %vm1287, %v2444, 0
        %v2531 = vsel %vm1287, %v2445, 0
        %v2534 = vsel %vm1287, %v2446, 0
        %v2537 = vsel %vm1287, %v2447, 0
        %v2540 = vsel %vm1287, %v2448, 0
        %v2543 = vsel %vm1287, %v2449, 0
        %v2546 = vsel %vm1287, %v2450, 0
        %v2549 = vsel %vm1287, %v2451, 0
        %v2552 = vsel %vm1287, %v2452, 0
        %v2555 = vsel %vm1287, %v2453, 0
        %v2558 = vsel %vm1287, %v2454, 0
        %v2561 = vsel %vm1287, %v2455, 0
        %v2564 = vsel %vm1287, %v2456, 0
        %v2567 = vsel %vm1287, %v2457, 0
        %v2570 = vsel %vm1287, %v2458, 0
        %v2573 = vsel %vm1287, %v2459, 0
        %v2576 = vsel %vm1287, %v2460, 0
        %v2579 = vsel %vm1287, %v2461, 0
        %v2582 = vsel %vm1287, %v2462, 0
        %v2585 = vsel %vm1287, %v2463, 0
        %v2588 = vsel %vm1287, %v2464, 0
        %v2591 = vsel %vm1287, %v2465, 0
        %v2594 = vsel %vm1287, %v2466, 0
        %v2597 = vsel %vm1287, %v2467, 0
        %v2600 = vsel %vm1287, %v2468, 0
        %v2603 = vsel %vm1287, %v2469, 0
        %v2606 = vsel %vm1287, %v2470, 0
        %v2609 = vsel %vm1287, %v2471, 0
        %v2612 = vsel %vm1287, %v2472, 0
        %v2615 = vsel %vm1287, %v2473, 0
        %v2618 = vsel %vm1287, %v2474, 0
        %v2621 = vsel %vm1287, %v2475, 0
        %v2624 = vsel %vm1287, %v2476, 0
        %v2627 = vsel %vm1287, %v2477, 0
        %v2630 = vsel %vm1287, %v2478, 0
        %v2633 = vsel %vm1287, %v2479, 0
        %v2636 = vsel %vm1287, %v2480, 0
        %v2639 = vsel %vm1287, %v2481, 0
        %v2642 = vsel %vm1287, %v2482, 0
        %v2645 = vsel %vm1287, %v2483, 0
        %v2648 = vsel %vm1287, %v2484, 0
        %v2651 = vsel %vm1287, %v2485, 0
        %v2654 = vsel %vm1287, %v2486, 0
        %v2657 = vsel %vm1287, %v2487, 0
        %v2660 = vsel %vm1287, %v2488, 0
        %v2663 = vsel %vm1287, %v2489, 0
        %v2666 = vsel %vm1287, %v2490, 0
        %v2669 = vsel %vm1287, %v2491, 0
        %v2672 = vsel %vm1287, %v2492, 0
        %v2675 = vsel %vm1287, %v2493, 0
        %v2678 = vsel %vm1287, %v2494, 0
        %v2681 = vsel %vm1287, %v2495, 0
        %v2684 = vsel %vm1287, %v2496, 0
        %v2687 = vsel %vm1287, %v2497, 0
        %v2690 = vsel %vm1287, %v2498, 0
        %v2693 = vsel %vm1287, %v2499, 0
        %v2696 = vsel %vm1287, %v2500, 0
        %2698 = vmatpush.msra.mxu0 0.0
        %2699 = vmatpush.msra.mxu0 0.0
        %2700 = vmatpush.msra.mxu0 0.0
        %2701 = vmatpush.msra.mxu0 0.0
        %2702 = vmatpush.msra.mxu0 0.0
        %2703 = vmatpush.msra.mxu0 0.0
        %2704 = vmatpush.msra.mxu0 0.0
        %2705 = vmatpush.msra.mxu0 0.0
        %2706 = vmatpush.msra.mxu0 0.0
        %2707 = vmatpush.msra.mxu0 0.0
        %2708 = vmatpush.msra.mxu0 0.0
        %2709 = vmatpush.msra.mxu0 0.0
        %2710 = vmatpush.msra.mxu0 0.0
        %2711 = vmatpush.msra.mxu0 0.0
        %2712 = vmatpush.msra.mxu0 0.0
        %2713 = vmatpush.msra.mxu0 %v2501
        %2714 = vmatmul.f32.gmra.mxu0 %v2507
        %v2715 = vpop.f32.mrf.mxu0
        %v2716 = vadd.f32 %v2504, %v2715
        %2717 = vmatmul.f32.gmra.mxu0 %v2510
        %v2718 = vpop.f32.mrf.mxu0
        %v2719 = vadd.f32 %v2504, %v2718
        %2720 = vmatmul.f32.gmra.mxu0 %v2513
        %v2721 = vpop.f32.mrf.mxu0
        %v2722 = vadd.f32 %v2504, %v2721
        %2723 = vmatmul.f32.gmra.mxu0 %v2516
        %v2724 = vpop.f32.mrf.mxu0
        %v2725 = vadd.f32 %v2504, %v2724
        %2726 = vmatmul.f32.gmra.mxu0 %v2519
        %v2727 = vpop.f32.mrf.mxu0
        %v2728 = vadd.f32 %v2504, %v2727
        %2729 = vmatmul.f32.gmra.mxu0 %v2522
        %v2730 = vpop.f32.mrf.mxu0
        %v2731 = vadd.f32 %v2504, %v2730
        %2732 = vmatmul.f32.gmra.mxu0 %v2525
        %v2733 = vpop.f32.mrf.mxu0
        %v2734 = vadd.f32 %v2504, %v2733
        %2735 = vmatmul.f32.gmra.mxu0 %v2528
        %v2736 = vpop.f32.mrf.mxu0
        %v2737 = vadd.f32 %v2504, %v2736
        %2738 = vmatmul.f32.gmra.mxu0 %v2531
        %v2739 = vpop.f32.mrf.mxu0
        %v2740 = vadd.f32 %v2504, %v2739
        %2741 = vmatmul.f32.gmra.mxu0 %v2534
        %v2742 = vpop.f32.mrf.mxu0
        %v2743 = vadd.f32 %v2504, %v2742
        %2744 = vmatmul.f32.gmra.mxu0 %v2537
        %v2745 = vpop.f32.mrf.mxu0
        %v2746 = vadd.f32 %v2504, %v2745
        %2747 = vmatmul.f32.gmra.mxu0 %v2540
        %v2748 = vpop.f32.mrf.mxu0
        %v2749 = vadd.f32 %v2504, %v2748
        %2750 = vmatmul.f32.gmra.mxu0 %v2543
        %v2751 = vpop.f32.mrf.mxu0
        %v2752 = vadd.f32 %v2504, %v2751
        %2753 = vmatmul.f32.gmra.mxu0 %v2546
        %v2754 = vpop.f32.mrf.mxu0
        %v2755 = vadd.f32 %v2504, %v2754
        %2756 = vmatmul.f32.gmra.mxu0 %v2549
        %v2757 = vpop.f32.mrf.mxu0
        %v2758 = vadd.f32 %v2504, %v2757
        %2759 = vmatmul.f32.gmra.mxu0 %v2552
        %v2760 = vpop.f32.mrf.mxu0
        %v2761 = vadd.f32 %v2504, %v2760
        %2762 = vmatmul.f32.gmra.mxu0 %v2555
        %v2763 = vpop.f32.mrf.mxu0
        %v2764 = vadd.f32 %v2504, %v2763
        %2765 = vmatmul.f32.gmra.mxu0 %v2558
        %v2766 = vpop.f32.mrf.mxu0
        %v2767 = vadd.f32 %v2504, %v2766
        %2768 = vmatmul.f32.gmra.mxu0 %v2561
        %v2769 = vpop.f32.mrf.mxu0
        %v2770 = vadd.f32 %v2504, %v2769
        %2771 = vmatmul.f32.gmra.mxu0 %v2564
        %v2772 = vpop.f32.mrf.mxu0
        %v2773 = vadd.f32 %v2504, %v2772
        %2774 = vmatmul.f32.gmra.mxu0 %v2567
        %v2775 = vpop.f32.mrf.mxu0
        %v2776 = vadd.f32 %v2504, %v2775
        %2777 = vmatmul.f32.gmra.mxu0 %v2570
        %v2778 = vpop.f32.mrf.mxu0
        %v2779 = vadd.f32 %v2504, %v2778
        %2780 = vmatmul.f32.gmra.mxu0 %v2573
        %v2781 = vpop.f32.mrf.mxu0
        %v2782 = vadd.f32 %v2504, %v2781
        %2783 = vmatmul.f32.gmra.mxu0 %v2576
        %v2784 = vpop.f32.mrf.mxu0
        %v2785 = vadd.f32 %v2504, %v2784
        %2786 = vmatmul.f32.gmra.mxu0 %v2579
        %v2787 = vpop.f32.mrf.mxu0
        %v2788 = vadd.f32 %v2504, %v2787
        %2789 = vmatmul.f32.gmra.mxu0 %v2582
        %v2790 = vpop.f32.mrf.mxu0
        %v2791 = vadd.f32 %v2504, %v2790
        %2792 = vmatmul.f32.gmra.mxu0 %v2585
        %v2793 = vpop.f32.mrf.mxu0
        %v2794 = vadd.f32 %v2504, %v2793
        %2795 = vmatmul.f32.gmra.mxu0 %v2588
        %v2796 = vpop.f32.mrf.mxu0
        %v2797 = vadd.f32 %v2504, %v2796
        %2798 = vmatmul.f32.gmra.mxu0 %v2591
        %v2799 = vpop.f32.mrf.mxu0
        %v2800 = vadd.f32 %v2504, %v2799
        %2801 = vmatmul.f32.gmra.mxu0 %v2594
        %v2802 = vpop.f32.mrf.mxu0
        %v2803 = vadd.f32 %v2504, %v2802
        %2804 = vmatmul.f32.gmra.mxu0 %v2597
        %v2805 = vpop.f32.mrf.mxu0
        %v2806 = vadd.f32 %v2504, %v2805
        %2807 = vmatmul.f32.gmra.mxu0 %v2600
        %v2808 = vpop.f32.mrf.mxu0
        %v2809 = vadd.f32 %v2504, %v2808
        %2810 = vmatmul.f32.gmra.mxu0 %v2603
        %v2811 = vpop.f32.mrf.mxu0
        %v2812 = vadd.f32 %v2504, %v2811
        %2813 = vmatmul.f32.gmra.mxu0 %v2606
        %v2814 = vpop.f32.mrf.mxu0
        %v2815 = vadd.f32 %v2504, %v2814
        %2816 = vmatmul.f32.gmra.mxu0 %v2609
        %v2817 = vpop.f32.mrf.mxu0
        %v2818 = vadd.f32 %v2504, %v2817
        %2819 = vmatmul.f32.gmra.mxu0 %v2612
        %v2820 = vpop.f32.mrf.mxu0
        %v2821 = vadd.f32 %v2504, %v2820
        %2822 = vmatmul.f32.gmra.mxu0 %v2615
        %v2823 = vpop.f32.mrf.mxu0
        %v2824 = vadd.f32 %v2504, %v2823
        %2825 = vmatmul.f32.gmra.mxu0 %v2618
        %v2826 = vpop.f32.mrf.mxu0
        %v2827 = vadd.f32 %v2504, %v2826
        %2828 = vmatmul.f32.gmra.mxu0 %v2621
        %v2829 = vpop.f32.mrf.mxu0
        %v2830 = vadd.f32 %v2504, %v2829
        %2831 = vmatmul.f32.gmra.mxu0 %v2624
        %v2832 = vpop.f32.mrf.mxu0
        %v2833 = vadd.f32 %v2504, %v2832
        %2834 = vmatmul.f32.gmra.mxu0 %v2627
        %v2835 = vpop.f32.mrf.mxu0
        %v2836 = vadd.f32 %v2504, %v2835
        %2837 = vmatmul.f32.gmra.mxu0 %v2630
        %v2838 = vpop.f32.mrf.mxu0
        %v2839 = vadd.f32 %v2504, %v2838
        %2840 = vmatmul.f32.gmra.mxu0 %v2633
        %v2841 = vpop.f32.mrf.mxu0
        %v2842 = vadd.f32 %v2504, %v2841
        %2843 = vmatmul.f32.gmra.mxu0 %v2636
        %v2844 = vpop.f32.mrf.mxu0
        %v2845 = vadd.f32 %v2504, %v2844
        %2846 = vmatmul.f32.gmra.mxu0 %v2639
        %v2847 = vpop.f32.mrf.mxu0
        %v2848 = vadd.f32 %v2504, %v2847
        %2849 = vmatmul.f32.gmra.mxu0 %v2642
        %v2850 = vpop.f32.mrf.mxu0
        %v2851 = vadd.f32 %v2504, %v2850
        %2852 = vmatmul.f32.gmra.mxu0 %v2645
        %v2853 = vpop.f32.mrf.mxu0
        %v2854 = vadd.f32 %v2504, %v2853
        %2855 = vmatmul.f32.gmra.mxu0 %v2648
        %v2856 = vpop.f32.mrf.mxu0
        %v2857 = vadd.f32 %v2504, %v2856
        %2858 = vmatmul.f32.gmra.mxu0 %v2651
        %v2859 = vpop.f32.mrf.mxu0
        %v2860 = vadd.f32 %v2504, %v2859
        %2861 = vmatmul.f32.gmra.mxu0 %v2654
        %v2862 = vpop.f32.mrf.mxu0
        %v2863 = vadd.f32 %v2504, %v2862
        %2864 = vmatmul.f32.gmra.mxu0 %v2657
        %v2865 = vpop.f32.mrf.mxu0
        %v2866 = vadd.f32 %v2504, %v2865
        %2867 = vmatmul.f32.gmra.mxu0 %v2660
        %v2868 = vpop.f32.mrf.mxu0
        %v2869 = vadd.f32 %v2504, %v2868
        %2870 = vmatmul.f32.gmra.mxu0 %v2663
        %v2871 = vpop.f32.mrf.mxu0
        %v2872 = vadd.f32 %v2504, %v2871
        %2873 = vmatmul.f32.gmra.mxu0 %v2666
        %v2874 = vpop.f32.mrf.mxu0
        %v2875 = vadd.f32 %v2504, %v2874
        %2876 = vmatmul.f32.gmra.mxu0 %v2669
        %v2877 = vpop.f32.mrf.mxu0
        %v2878 = vadd.f32 %v2504, %v2877
        %2879 = vmatmul.f32.gmra.mxu0 %v2672
        %v2880 = vpop.f32.mrf.mxu0
        %v2881 = vadd.f32 %v2504, %v2880
        %2882 = vmatmul.f32.gmra.mxu0 %v2675
        %v2883 = vpop.f32.mrf.mxu0
        %v2884 = vadd.f32 %v2504, %v2883
        %2885 = vmatmul.f32.gmra.mxu0 %v2678
        %v2886 = vpop.f32.mrf.mxu0
        %v2887 = vadd.f32 %v2504, %v2886
        %2888 = vmatmul.f32.gmra.mxu0 %v2681
        %v2889 = vpop.f32.mrf.mxu0
        %v2890 = vadd.f32 %v2504, %v2889
        %2891 = vmatmul.f32.gmra.mxu0 %v2684
        %v2892 = vpop.f32.mrf.mxu0
        %v2893 = vadd.f32 %v2504, %v2892
        %2894 = vmatmul.f32.gmra.mxu0 %v2687
        %v2895 = vpop.f32.mrf.mxu0
        %v2896 = vadd.f32 %v2504, %v2895
        %2897 = vmatmul.f32.gmra.mxu0 %v2690
        %v2898 = vpop.f32.mrf.mxu0
        %v2899 = vadd.f32 %v2504, %v2898
        %2900 = vmatmul.f32.gmra.mxu0 %v2693
        %v2901 = vpop.f32.mrf.mxu0
        %v2902 = vadd.f32 %v2504, %v2901
        %2903 = vmatmul.f32.gmra.mxu0 %v2696
        %v2904 = vpop.f32.mrf.mxu0
        %v2905 = vadd.f32 %v2504, %v2904
        %2906 = vdwg.mxu0
        %v2907 = vxor.u32 %v2716, 2147483648
        %v2908 = vxor.u32 %v2719, 2147483648
        %v2909 = vxor.u32 %v2722, 2147483648
        %v2910 = vxor.u32 %v2725, 2147483648
        %v2911 = vxor.u32 %v2728, 2147483648
        %v2912 = vxor.u32 %v2731, 2147483648
        %v2913 = vxor.u32 %v2734, 2147483648
        %v2914 = vxor.u32 %v2737, 2147483648
        %v2915 = vxor.u32 %v2740, 2147483648
        %v2916 = vxor.u32 %v2743, 2147483648
        %v2917 = vxor.u32 %v2746, 2147483648
        %v2918 = vxor.u32 %v2749, 2147483648
        %v2919 = vxor.u32 %v2752, 2147483648
        %v2920 = vxor.u32 %v2755, 2147483648
        %v2921 = vxor.u32 %v2758, 2147483648
        %v2922 = vxor.u32 %v2761, 2147483648
        %v2923 = vxor.u32 %v2764, 2147483648
        %v2924 = vxor.u32 %v2767, 2147483648
        %v2925 = vxor.u32 %v2770, 2147483648
        %v2926 = vxor.u32 %v2773, 2147483648
        %v2927 = vxor.u32 %v2776, 2147483648
        %v2928 = vxor.u32 %v2779, 2147483648
        %v2929 = vxor.u32 %v2782, 2147483648
        %v2930 = vxor.u32 %v2785, 2147483648
        %v2931 = vxor.u32 %v2788, 2147483648
        %v2932 = vxor.u32 %v2791, 2147483648
        %v2933 = vxor.u32 %v2794, 2147483648
        %v2934 = vxor.u32 %v2797, 2147483648
        %v2935 = vxor.u32 %v2800, 2147483648
        %v2936 = vxor.u32 %v2803, 2147483648
        %v2937 = vxor.u32 %v2806, 2147483648
        %v2938 = vxor.u32 %v2809, 2147483648
        %v2939 = vxor.u32 %v2812, 2147483648
        %v2940 = vxor.u32 %v2815, 2147483648
        %v2941 = vxor.u32 %v2818, 2147483648
        %v2942 = vxor.u32 %v2821, 2147483648
        %v2943 = vxor.u32 %v2824, 2147483648
        %v2944 = vxor.u32 %v2827, 2147483648
        %v2945 = vxor.u32 %v2830, 2147483648
        %v2946 = vxor.u32 %v2833, 2147483648
        %v2947 = vxor.u32 %v2836, 2147483648
        %v2948 = vxor.u32 %v2839, 2147483648
        %v2949 = vxor.u32 %v2842, 2147483648
        %v2950 = vxor.u32 %v2845, 2147483648
        %v2951 = vxor.u32 %v2848, 2147483648
        %v2952 = vxor.u32 %v2851, 2147483648
        %v2953 = vxor.u32 %v2854, 2147483648
        %v2954 = vxor.u32 %v2857, 2147483648
        %v2955 = vxor.u32 %v2860, 2147483648
        %v2956 = vxor.u32 %v2863, 2147483648
        %v2957 = vxor.u32 %v2866, 2147483648
        %v2958 = vxor.u32 %v2869, 2147483648
        %v2959 = vxor.u32 %v2872, 2147483648
        %v2960 = vxor.u32 %v2875, 2147483648
        %v2961 = vxor.u32 %v2878, 2147483648
        %v2962 = vxor.u32 %v2881, 2147483648
        %v2963 = vxor.u32 %v2884, 2147483648
        %v2964 = vxor.u32 %v2887, 2147483648
        %v2965 = vxor.u32 %v2890, 2147483648
        %v2966 = vxor.u32 %v2893, 2147483648
        %v2967 = vxor.u32 %v2896, 2147483648
        %v2968 = vxor.u32 %v2899, 2147483648
        %v2969 = vxor.u32 %v2902, 2147483648
        %v2970 = vxor.u32 %v2905, 2147483648
        %v2971 = vmul.f32 %v2907, 1.442695
        %v2972 = vpow.pop %v2971
        %v2973 = vmul.f32 %v2908, 1.442695
        %v2974 = vpow.pop %v2973
        %v2975 = vmul.f32 %v2909, 1.442695
        %v2976 = vpow.pop %v2975
        %v2977 = vmul.f32 %v2910, 1.442695
        %v2978 = vpow.pop %v2977
        %v2979 = vmul.f32 %v2911, 1.442695
        %v2980 = vpow.pop %v2979
        %v2981 = vmul.f32 %v2912, 1.442695
        %v2982 = vpow.pop %v2981
        %v2983 = vmul.f32 %v2913, 1.442695
        %v2984 = vpow.pop %v2983
        %v2985 = vmul.f32 %v2914, 1.442695
        %v2986 = vpow.pop %v2985
        %v2987 = vmul.f32 %v2915, 1.442695
        %v2988 = vpow.pop %v2987
        %v2989 = vmul.f32 %v2916, 1.442695
        %v2990 = vpow.pop %v2989
        %v2991 = vmul.f32 %v2917, 1.442695
        %v2992 = vpow.pop %v2991
        %v2993 = vmul.f32 %v2918, 1.442695
        %v2994 = vpow.pop %v2993
        %v2995 = vmul.f32 %v2919, 1.442695
        %v2996 = vpow.pop %v2995
        %v2997 = vmul.f32 %v2920, 1.442695
        %v2998 = vpow.pop %v2997
        %v2999 = vmul.f32 %v2921, 1.442695
        %v3000 = vpow.pop %v2999
        %v3001 = vmul.f32 %v2922, 1.442695
        %v3002 = vpow.pop %v3001
        %v3003 = vmul.f32 %v2923, 1.442695
        %v3004 = vpow.pop %v3003
        %v3005 = vmul.f32 %v2924, 1.442695
        %v3006 = vpow.pop %v3005
        %v3007 = vmul.f32 %v2925, 1.442695
        %v3008 = vpow.pop %v3007
        %v3009 = vmul.f32 %v2926, 1.442695
        %v3010 = vpow.pop %v3009
        %v3011 = vmul.f32 %v2927, 1.442695
        %v3012 = vpow.pop %v3011
        %v3013 = vmul.f32 %v2928, 1.442695
        %v3014 = vpow.pop %v3013
        %v3015 = vmul.f32 %v2929, 1.442695
        %v3016 = vpow.pop %v3015
        %v3017 = vmul.f32 %v2930, 1.442695
        %v3018 = vpow.pop %v3017
        %v3019 = vmul.f32 %v2931, 1.442695
        %v3020 = vpow.pop %v3019
        %v3021 = vmul.f32 %v2932, 1.442695
        %v3022 = vpow.pop %v3021
        %v3023 = vmul.f32 %v2933, 1.442695
        %v3024 = vpow.pop %v3023
        %v3025 = vmul.f32 %v2934, 1.442695
        %v3026 = vpow.pop %v3025
        %v3027 = vmul.f32 %v2935, 1.442695
        %v3028 = vpow.pop %v3027
        %v3029 = vmul.f32 %v2936, 1.442695
        %v3030 = vpow.pop %v3029
        %v3031 = vmul.f32 %v2937, 1.442695
        %v3032 = vpow.pop %v3031
        %v3033 = vmul.f32 %v2938, 1.442695
        %v3034 = vpow.pop %v3033
        %v3035 = vmul.f32 %v2939, 1.442695
        %v3036 = vpow.pop %v3035
        %v3037 = vmul.f32 %v2940, 1.442695
        %v3038 = vpow.pop %v3037
        %v3039 = vmul.f32 %v2941, 1.442695
        %v3040 = vpow.pop %v3039
        %v3041 = vmul.f32 %v2942, 1.442695
        %v3042 = vpow.pop %v3041
        %v3043 = vmul.f32 %v2943, 1.442695
        %v3044 = vpow.pop %v3043
        %v3045 = vmul.f32 %v2944, 1.442695
        %v3046 = vpow.pop %v3045
        %v3047 = vmul.f32 %v2945, 1.442695
        %v3048 = vpow.pop %v3047
        %v3049 = vmul.f32 %v2946, 1.442695
        %v3050 = vpow.pop %v3049
        %v3051 = vmul.f32 %v2947, 1.442695
        %v3052 = vpow.pop %v3051
        %v3053 = vmul.f32 %v2948, 1.442695
        %v3054 = vpow.pop %v3053
        %v3055 = vmul.f32 %v2949, 1.442695
        %v3056 = vpow.pop %v3055
        %v3057 = vmul.f32 %v2950, 1.442695
        %v3058 = vpow.pop %v3057
        %v3059 = vmul.f32 %v2951, 1.442695
        %v3060 = vpow.pop %v3059
        %v3061 = vmul.f32 %v2952, 1.442695
        %v3062 = vpow.pop %v3061
        %v3063 = vmul.f32 %v2953, 1.442695
        %v3064 = vpow.pop %v3063
        %v3065 = vmul.f32 %v2954, 1.442695
        %v3066 = vpow.pop %v3065
        %v3067 = vmul.f32 %v2955, 1.442695
        %v3068 = vpow.pop %v3067
        %v3069 = vmul.f32 %v2956, 1.442695
        %v3070 = vpow.pop %v3069
        %v3071 = vmul.f32 %v2957, 1.442695
        %v3072 = vpow.pop %v3071
        %v3073 = vmul.f32 %v2958, 1.442695
        %v3074 = vpow.pop %v3073
        %v3075 = vmul.f32 %v2959, 1.442695
        %v3076 = vpow.pop %v3075
        %v3077 = vmul.f32 %v2960, 1.442695
        %v3078 = vpow.pop %v3077
        %v3079 = vmul.f32 %v2961, 1.442695
        %v3080 = vpow.pop %v3079
        %v3081 = vmul.f32 %v2962, 1.442695
        %v3082 = vpow.pop %v3081
        %v3083 = vmul.f32 %v2963, 1.442695
        %v3084 = vpow.pop %v3083
        %v3085 = vmul.f32 %v2964, 1.442695
        %v3086 = vpow.pop %v3085
        %v3087 = vmul.f32 %v2965, 1.442695
        %v3088 = vpow.pop %v3087
        %v3089 = vmul.f32 %v2966, 1.442695
        %v3090 = vpow.pop %v3089
        %v3091 = vmul.f32 %v2967, 1.442695
        %v3092 = vpow.pop %v3091
        %v3093 = vmul.f32 %v2968, 1.442695
        %v3094 = vpow.pop %v3093
        %v3095 = vmul.f32 %v2969, 1.442695
        %v3096 = vpow.pop %v3095
        %v3097 = vmul.f32 %v2970, 1.442695
        %v3098 = vpow.pop %v3097
        %v3099 = vadd.f32 %v2972, 1.0
        %v3100 = vadd.f32 %v2974, 1.0
        %v3101 = vadd.f32 %v2976, 1.0
        %v3102 = vadd.f32 %v2978, 1.0
        %v3103 = vadd.f32 %v2980, 1.0
        %v3104 = vadd.f32 %v2982, 1.0
        %v3105 = vadd.f32 %v2984, 1.0
        %v3106 = vadd.f32 %v2986, 1.0
        %v3107 = vadd.f32 %v2988, 1.0
        %v3108 = vadd.f32 %v2990, 1.0
        %v3109 = vadd.f32 %v2992, 1.0
        %v3110 = vadd.f32 %v2994, 1.0
        %v3111 = vadd.f32 %v2996, 1.0
        %v3112 = vadd.f32 %v2998, 1.0
        %v3113 = vadd.f32 %v3000, 1.0
        %v3114 = vadd.f32 %v3002, 1.0
        %v3115 = vadd.f32 %v3004, 1.0
        %v3116 = vadd.f32 %v3006, 1.0
        %v3117 = vadd.f32 %v3008, 1.0
        %v3118 = vadd.f32 %v3010, 1.0
        %v3119 = vadd.f32 %v3012, 1.0
        %v3120 = vadd.f32 %v3014, 1.0
        %v3121 = vadd.f32 %v3016, 1.0
        %v3122 = vadd.f32 %v3018, 1.0
        %v3123 = vadd.f32 %v3020, 1.0
        %v3124 = vadd.f32 %v3022, 1.0
        %v3125 = vadd.f32 %v3024, 1.0
        %v3126 = vadd.f32 %v3026, 1.0
        %v3127 = vadd.f32 %v3028, 1.0
        %v3128 = vadd.f32 %v3030, 1.0
        %v3129 = vadd.f32 %v3032, 1.0
        %v3130 = vadd.f32 %v3034, 1.0
        %v3131 = vadd.f32 %v3036, 1.0
        %v3132 = vadd.f32 %v3038, 1.0
        %v3133 = vadd.f32 %v3040, 1.0
        %v3134 = vadd.f32 %v3042, 1.0
        %v3135 = vadd.f32 %v3044, 1.0
        %v3136 = vadd.f32 %v3046, 1.0
        %v3137 = vadd.f32 %v3048, 1.0
        %v3138 = vadd.f32 %v3050, 1.0
        %v3139 = vadd.f32 %v3052, 1.0
        %v3140 = vadd.f32 %v3054, 1.0
        %v3141 = vadd.f32 %v3056, 1.0
        %v3142 = vadd.f32 %v3058, 1.0
        %v3143 = vadd.f32 %v3060, 1.0
        %v3144 = vadd.f32 %v3062, 1.0
        %v3145 = vadd.f32 %v3064, 1.0
        %v3146 = vadd.f32 %v3066, 1.0
        %v3147 = vadd.f32 %v3068, 1.0
        %v3148 = vadd.f32 %v3070, 1.0
        %v3149 = vadd.f32 %v3072, 1.0
        %v3150 = vadd.f32 %v3074, 1.0
        %v3151 = vadd.f32 %v3076, 1.0
        %v3152 = vadd.f32 %v3078, 1.0
        %v3153 = vadd.f32 %v3080, 1.0
        %v3154 = vadd.f32 %v3082, 1.0
        %v3155 = vadd.f32 %v3084, 1.0
        %v3156 = vadd.f32 %v3086, 1.0
        %v3157 = vadd.f32 %v3088, 1.0
        %v3158 = vadd.f32 %v3090, 1.0
        %v3159 = vadd.f32 %v3092, 1.0
        %v3160 = vadd.f32 %v3094, 1.0
        %v3161 = vadd.f32 %v3096, 1.0
        %v3162 = vadd.f32 %v3098, 1.0
        %v3163 = vrcp.pop %v3099
        %v3164 = vmul.f32 %v3099, %v3163
        %v3165 = vsub.f32 1.0, %v3164
        %v3166 = vmul.f32 %v3163, %v3165
        %v3167 = vadd.f32 %v3163, %v3166
        %vm3168 = vweird.f32 %v3099
        %vm3169 = vweird.f32 %v3163
        %vm3170 = vmor %vm3168, %vm3169
        %v3171 = vsel %vm3170, %v3163, %v3167
        %v3172 = vand.u32 2147483647, %v3099
        %vm3173 = vcmp.eq.f32.partialorder %v3172, 8.507059e+37
        %v3174 = vand.u32 %v3099, 2147483648
        %v3175 = vor.u32 1.1754944e-38, %v3174
        %v3176 = vsel %vm3173, %v3175, %v3171
        %v3177 = vmul.f32 1.0, %v3176
        %v3178 = vrcp.pop %v3100
        %v3179 = vmul.f32 %v3100, %v3178
        %v3180 = vsub.f32 1.0, %v3179
        %v3181 = vmul.f32 %v3178, %v3180
        %v3182 = vadd.f32 %v3178, %v3181
        %vm3183 = vweird.f32 %v3100
        %vm3184 = vweird.f32 %v3178
        %vm3185 = vmor %vm3183, %vm3184
        %v3186 = vsel %vm3185, %v3178, %v3182
        %v3187 = vand.u32 2147483647, %v3100
        %vm3188 = vcmp.eq.f32.partialorder %v3187, 8.507059e+37
        %v3189 = vand.u32 %v3100, 2147483648
        %v3190 = vor.u32 1.1754944e-38, %v3189
        %v3191 = vsel %vm3188, %v3190, %v3186
        %v3192 = vmul.f32 1.0, %v3191
        %v3193 = vrcp.pop %v3101
        %v3194 = vmul.f32 %v3101, %v3193
        %v3195 = vsub.f32 1.0, %v3194
        %v3196 = vmul.f32 %v3193, %v3195
        %v3197 = vadd.f32 %v3193, %v3196
        %vm3198 = vweird.f32 %v3101
        %vm3199 = vweird.f32 %v3193
        %vm3200 = vmor %vm3198, %vm3199
        %v3201 = vsel %vm3200, %v3193, %v3197
        %v3202 = vand.u32 2147483647, %v3101
        %vm3203 = vcmp.eq.f32.partialorder %v3202, 8.507059e+37
        %v3204 = vand.u32 %v3101, 2147483648
        %v3205 = vor.u32 1.1754944e-38, %v3204
        %v3206 = vsel %vm3203, %v3205, %v3201
        %v3207 = vmul.f32 1.0, %v3206
        %v3208 = vrcp.pop %v3102
        %v3209 = vmul.f32 %v3102, %v3208
        %v3210 = vsub.f32 1.0, %v3209
        %v3211 = vmul.f32 %v3208, %v3210
        %v3212 = vadd.f32 %v3208, %v3211
        %vm3213 = vweird.f32 %v3102
        %vm3214 = vweird.f32 %v3208
        %vm3215 = vmor %vm3213, %vm3214
        %v3216 = vsel %vm3215, %v3208, %v3212
        %v3217 = vand.u32 2147483647, %v3102
        %vm3218 = vcmp.eq.f32.partialorder %v3217, 8.507059e+37
        %v3219 = vand.u32 %v3102, 2147483648
        %v3220 = vor.u32 1.1754944e-38, %v3219
        %v3221 = vsel %vm3218, %v3220, %v3216
        %v3222 = vmul.f32 1.0, %v3221
        %v3223 = vrcp.pop %v3103
        %v3224 = vmul.f32 %v3103, %v3223
        %v3225 = vsub.f32 1.0, %v3224
        %v3226 = vmul.f32 %v3223, %v3225
        %v3227 = vadd.f32 %v3223, %v3226
        %vm3228 = vweird.f32 %v3103
        %vm3229 = vweird.f32 %v3223
        %vm3230 = vmor %vm3228, %vm3229
        %v3231 = vsel %vm3230, %v3223, %v3227
        %v3232 = vand.u32 2147483647, %v3103
        %vm3233 = vcmp.eq.f32.partialorder %v3232, 8.507059e+37
        %v3234 = vand.u32 %v3103, 2147483648
        %v3235 = vor.u32 1.1754944e-38, %v3234
        %v3236 = vsel %vm3233, %v3235, %v3231
        %v3237 = vmul.f32 1.0, %v3236
        %v3238 = vrcp.pop %v3104
        %v3239 = vmul.f32 %v3104, %v3238
        %v3240 = vsub.f32 1.0, %v3239
        %v3241 = vmul.f32 %v3238, %v3240
        %v3242 = vadd.f32 %v3238, %v3241
        %vm3243 = vweird.f32 %v3104
        %vm3244 = vweird.f32 %v3238
        %vm3245 = vmor %vm3243, %vm3244
        %v3246 = vsel %vm3245, %v3238, %v3242
        %v3247 = vand.u32 2147483647, %v3104
        %vm3248 = vcmp.eq.f32.partialorder %v3247, 8.507059e+37
        %v3249 = vand.u32 %v3104, 2147483648
        %v3250 = vor.u32 1.1754944e-38, %v3249
        %v3251 = vsel %vm3248, %v3250, %v3246
        %v3252 = vmul.f32 1.0, %v3251
        %v3253 = vrcp.pop %v3105
        %v3254 = vmul.f32 %v3105, %v3253
        %v3255 = vsub.f32 1.0, %v3254
        %v3256 = vmul.f32 %v3253, %v3255
        %v3257 = vadd.f32 %v3253, %v3256
        %vm3258 = vweird.f32 %v3105
        %vm3259 = vweird.f32 %v3253
        %vm3260 = vmor %vm3258, %vm3259
        %v3261 = vsel %vm3260, %v3253, %v3257
        %v3262 = vand.u32 2147483647, %v3105
        %vm3263 = vcmp.eq.f32.partialorder %v3262, 8.507059e+37
        %v3264 = vand.u32 %v3105, 2147483648
        %v3265 = vor.u32 1.1754944e-38, %v3264
        %v3266 = vsel %vm3263, %v3265, %v3261
        %v3267 = vmul.f32 1.0, %v3266
        %v3268 = vrcp.pop %v3106
        %v3269 = vmul.f32 %v3106, %v3268
        %v3270 = vsub.f32 1.0, %v3269
        %v3271 = vmul.f32 %v3268, %v3270
        %v3272 = vadd.f32 %v3268, %v3271
        %vm3273 = vweird.f32 %v3106
        %vm3274 = vweird.f32 %v3268
        %vm3275 = vmor %vm3273, %vm3274
        %v3276 = vsel %vm3275, %v3268, %v3272
        %v3277 = vand.u32 2147483647, %v3106
        %vm3278 = vcmp.eq.f32.partialorder %v3277, 8.507059e+37
        %v3279 = vand.u32 %v3106, 2147483648
        %v3280 = vor.u32 1.1754944e-38, %v3279
        %v3281 = vsel %vm3278, %v3280, %v3276
        %v3282 = vmul.f32 1.0, %v3281
        %v3283 = vrcp.pop %v3107
        %v3284 = vmul.f32 %v3107, %v3283
        %v3285 = vsub.f32 1.0, %v3284
        %v3286 = vmul.f32 %v3283, %v3285
        %v3287 = vadd.f32 %v3283, %v3286
        %vm3288 = vweird.f32 %v3107
        %vm3289 = vweird.f32 %v3283
        %vm3290 = vmor %vm3288, %vm3289
        %v3291 = vsel %vm3290, %v3283, %v3287
        %v3292 = vand.u32 2147483647, %v3107
        %vm3293 = vcmp.eq.f32.partialorder %v3292, 8.507059e+37
        %v3294 = vand.u32 %v3107, 2147483648
        %v3295 = vor.u32 1.1754944e-38, %v3294
        %v3296 = vsel %vm3293, %v3295, %v3291
        %v3297 = vmul.f32 1.0, %v3296
        %v3298 = vrcp.pop %v3108
        %v3299 = vmul.f32 %v3108, %v3298
        %v3300 = vsub.f32 1.0, %v3299
        %v3301 = vmul.f32 %v3298, %v3300
        %v3302 = vadd.f32 %v3298, %v3301
        %vm3303 = vweird.f32 %v3108
        %vm3304 = vweird.f32 %v3298
        %vm3305 = vmor %vm3303, %vm3304
        %v3306 = vsel %vm3305, %v3298, %v3302
        %v3307 = vand.u32 2147483647, %v3108
        %vm3308 = vcmp.eq.f32.partialorder %v3307, 8.507059e+37
        %v3309 = vand.u32 %v3108, 2147483648
        %v3310 = vor.u32 1.1754944e-38, %v3309
        %v3311 = vsel %vm3308, %v3310, %v3306
        %v3312 = vmul.f32 1.0, %v3311
        %v3313 = vrcp.pop %v3109
        %v3314 = vmul.f32 %v3109, %v3313
        %v3315 = vsub.f32 1.0, %v3314
        %v3316 = vmul.f32 %v3313, %v3315
        %v3317 = vadd.f32 %v3313, %v3316
        %vm3318 = vweird.f32 %v3109
        %vm3319 = vweird.f32 %v3313
        %vm3320 = vmor %vm3318, %vm3319
        %v3321 = vsel %vm3320, %v3313, %v3317
        %v3322 = vand.u32 2147483647, %v3109
        %vm3323 = vcmp.eq.f32.partialorder %v3322, 8.507059e+37
        %v3324 = vand.u32 %v3109, 2147483648
        %v3325 = vor.u32 1.1754944e-38, %v3324
        %v3326 = vsel %vm3323, %v3325, %v3321
        %v3327 = vmul.f32 1.0, %v3326
        %v3328 = vrcp.pop %v3110
        %v3329 = vmul.f32 %v3110, %v3328
        %v3330 = vsub.f32 1.0, %v3329
        %v3331 = vmul.f32 %v3328, %v3330
        %v3332 = vadd.f32 %v3328, %v3331
        %vm3333 = vweird.f32 %v3110
        %vm3334 = vweird.f32 %v3328
        %vm3335 = vmor %vm3333, %vm3334
        %v3336 = vsel %vm3335, %v3328, %v3332
        %v3337 = vand.u32 2147483647, %v3110
        %vm3338 = vcmp.eq.f32.partialorder %v3337, 8.507059e+37
        %v3339 = vand.u32 %v3110, 2147483648
        %v3340 = vor.u32 1.1754944e-38, %v3339
        %v3341 = vsel %vm3338, %v3340, %v3336
        %v3342 = vmul.f32 1.0, %v3341
        %v3343 = vrcp.pop %v3111
        %v3344 = vmul.f32 %v3111, %v3343
        %v3345 = vsub.f32 1.0, %v3344
        %v3346 = vmul.f32 %v3343, %v3345
        %v3347 = vadd.f32 %v3343, %v3346
        %vm3348 = vweird.f32 %v3111
        %vm3349 = vweird.f32 %v3343
        %vm3350 = vmor %vm3348, %vm3349
        %v3351 = vsel %vm3350, %v3343, %v3347
        %v3352 = vand.u32 2147483647, %v3111
        %vm3353 = vcmp.eq.f32.partialorder %v3352, 8.507059e+37
        %v3354 = vand.u32 %v3111, 2147483648
        %v3355 = vor.u32 1.1754944e-38, %v3354
        %v3356 = vsel %vm3353, %v3355, %v3351
        %v3357 = vmul.f32 1.0, %v3356
        %v3358 = vrcp.pop %v3112
        %v3359 = vmul.f32 %v3112, %v3358
        %v3360 = vsub.f32 1.0, %v3359
        %v3361 = vmul.f32 %v3358, %v3360
        %v3362 = vadd.f32 %v3358, %v3361
        %vm3363 = vweird.f32 %v3112
        %vm3364 = vweird.f32 %v3358
        %vm3365 = vmor %vm3363, %vm3364
        %v3366 = vsel %vm3365, %v3358, %v3362
        %v3367 = vand.u32 2147483647, %v3112
        %vm3368 = vcmp.eq.f32.partialorder %v3367, 8.507059e+37
        %v3369 = vand.u32 %v3112, 2147483648
        %v3370 = vor.u32 1.1754944e-38, %v3369
        %v3371 = vsel %vm3368, %v3370, %v3366
        %v3372 = vmul.f32 1.0, %v3371
        %v3373 = vrcp.pop %v3113
        %v3374 = vmul.f32 %v3113, %v3373
        %v3375 = vsub.f32 1.0, %v3374
        %v3376 = vmul.f32 %v3373, %v3375
        %v3377 = vadd.f32 %v3373, %v3376
        %vm3378 = vweird.f32 %v3113
        %vm3379 = vweird.f32 %v3373
        %vm3380 = vmor %vm3378, %vm3379
        %v3381 = vsel %vm3380, %v3373, %v3377
        %v3382 = vand.u32 2147483647, %v3113
        %vm3383 = vcmp.eq.f32.partialorder %v3382, 8.507059e+37
        %v3384 = vand.u32 %v3113, 2147483648
        %v3385 = vor.u32 1.1754944e-38, %v3384
        %v3386 = vsel %vm3383, %v3385, %v3381
        %v3387 = vmul.f32 1.0, %v3386
        %v3388 = vrcp.pop %v3114
        %v3389 = vmul.f32 %v3114, %v3388
        %v3390 = vsub.f32 1.0, %v3389
        %v3391 = vmul.f32 %v3388, %v3390
        %v3392 = vadd.f32 %v3388, %v3391
        %vm3393 = vweird.f32 %v3114
        %vm3394 = vweird.f32 %v3388
        %vm3395 = vmor %vm3393, %vm3394
        %v3396 = vsel %vm3395, %v3388, %v3392
        %v3397 = vand.u32 2147483647, %v3114
        %vm3398 = vcmp.eq.f32.partialorder %v3397, 8.507059e+37
        %v3399 = vand.u32 %v3114, 2147483648
        %v3400 = vor.u32 1.1754944e-38, %v3399
        %v3401 = vsel %vm3398, %v3400, %v3396
        %v3402 = vmul.f32 1.0, %v3401
        %v3403 = vrcp.pop %v3115
        %v3404 = vmul.f32 %v3115, %v3403
        %v3405 = vsub.f32 1.0, %v3404
        %v3406 = vmul.f32 %v3403, %v3405
        %v3407 = vadd.f32 %v3403, %v3406
        %vm3408 = vweird.f32 %v3115
        %vm3409 = vweird.f32 %v3403
        %vm3410 = vmor %vm3408, %vm3409
        %v3411 = vsel %vm3410, %v3403, %v3407
        %v3412 = vand.u32 2147483647, %v3115
        %vm3413 = vcmp.eq.f32.partialorder %v3412, 8.507059e+37
        %v3414 = vand.u32 %v3115, 2147483648
        %v3415 = vor.u32 1.1754944e-38, %v3414
        %v3416 = vsel %vm3413, %v3415, %v3411
        %v3417 = vmul.f32 1.0, %v3416
        %v3418 = vrcp.pop %v3116
        %v3419 = vmul.f32 %v3116, %v3418
        %v3420 = vsub.f32 1.0, %v3419
        %v3421 = vmul.f32 %v3418, %v3420
        %v3422 = vadd.f32 %v3418, %v3421
        %vm3423 = vweird.f32 %v3116
        %vm3424 = vweird.f32 %v3418
        %vm3425 = vmor %vm3423, %vm3424
        %v3426 = vsel %vm3425, %v3418, %v3422
        %v3427 = vand.u32 2147483647, %v3116
        %vm3428 = vcmp.eq.f32.partialorder %v3427, 8.507059e+37
        %v3429 = vand.u32 %v3116, 2147483648
        %v3430 = vor.u32 1.1754944e-38, %v3429
        %v3431 = vsel %vm3428, %v3430, %v3426
        %v3432 = vmul.f32 1.0, %v3431
        %v3433 = vrcp.pop %v3117
        %v3434 = vmul.f32 %v3117, %v3433
        %v3435 = vsub.f32 1.0, %v3434
        %v3436 = vmul.f32 %v3433, %v3435
        %v3437 = vadd.f32 %v3433, %v3436
        %vm3438 = vweird.f32 %v3117
        %vm3439 = vweird.f32 %v3433
        %vm3440 = vmor %vm3438, %vm3439
        %v3441 = vsel %vm3440, %v3433, %v3437
        %v3442 = vand.u32 2147483647, %v3117
        %vm3443 = vcmp.eq.f32.partialorder %v3442, 8.507059e+37
        %v3444 = vand.u32 %v3117, 2147483648
        %v3445 = vor.u32 1.1754944e-38, %v3444
        %v3446 = vsel %vm3443, %v3445, %v3441
        %v3447 = vmul.f32 1.0, %v3446
        %v3448 = vrcp.pop %v3118
        %v3449 = vmul.f32 %v3118, %v3448
        %v3450 = vsub.f32 1.0, %v3449
        %v3451 = vmul.f32 %v3448, %v3450
        %v3452 = vadd.f32 %v3448, %v3451
        %vm3453 = vweird.f32 %v3118
        %vm3454 = vweird.f32 %v3448
        %vm3455 = vmor %vm3453, %vm3454
        %v3456 = vsel %vm3455, %v3448, %v3452
        %v3457 = vand.u32 2147483647, %v3118
        %vm3458 = vcmp.eq.f32.partialorder %v3457, 8.507059e+37
        %v3459 = vand.u32 %v3118, 2147483648
        %v3460 = vor.u32 1.1754944e-38, %v3459
        %v3461 = vsel %vm3458, %v3460, %v3456
        %v3462 = vmul.f32 1.0, %v3461
        %v3463 = vrcp.pop %v3119
        %v3464 = vmul.f32 %v3119, %v3463
        %v3465 = vsub.f32 1.0, %v3464
        %v3466 = vmul.f32 %v3463, %v3465
        %v3467 = vadd.f32 %v3463, %v3466
        %vm3468 = vweird.f32 %v3119
        %vm3469 = vweird.f32 %v3463
        %vm3470 = vmor %vm3468, %vm3469
        %v3471 = vsel %vm3470, %v3463, %v3467
        %v3472 = vand.u32 2147483647, %v3119
        %vm3473 = vcmp.eq.f32.partialorder %v3472, 8.507059e+37
        %v3474 = vand.u32 %v3119, 2147483648
        %v3475 = vor.u32 1.1754944e-38, %v3474
        %v3476 = vsel %vm3473, %v3475, %v3471
        %v3477 = vmul.f32 1.0, %v3476
        %v3478 = vrcp.pop %v3120
        %v3479 = vmul.f32 %v3120, %v3478
        %v3480 = vsub.f32 1.0, %v3479
        %v3481 = vmul.f32 %v3478, %v3480
        %v3482 = vadd.f32 %v3478, %v3481
        %vm3483 = vweird.f32 %v3120
        %vm3484 = vweird.f32 %v3478
        %vm3485 = vmor %vm3483, %vm3484
        %v3486 = vsel %vm3485, %v3478, %v3482
        %v3487 = vand.u32 2147483647, %v3120
        %vm3488 = vcmp.eq.f32.partialorder %v3487, 8.507059e+37
        %v3489 = vand.u32 %v3120, 2147483648
        %v3490 = vor.u32 1.1754944e-38, %v3489
        %v3491 = vsel %vm3488, %v3490, %v3486
        %v3492 = vmul.f32 1.0, %v3491
        %v3493 = vrcp.pop %v3121
        %v3494 = vmul.f32 %v3121, %v3493
        %v3495 = vsub.f32 1.0, %v3494
        %v3496 = vmul.f32 %v3493, %v3495
        %v3497 = vadd.f32 %v3493, %v3496
        %vm3498 = vweird.f32 %v3121
        %vm3499 = vweird.f32 %v3493
        %vm3500 = vmor %vm3498, %vm3499
        %v3501 = vsel %vm3500, %v3493, %v3497
        %v3502 = vand.u32 2147483647, %v3121
        %vm3503 = vcmp.eq.f32.partialorder %v3502, 8.507059e+37
        %v3504 = vand.u32 %v3121, 2147483648
        %v3505 = vor.u32 1.1754944e-38, %v3504
        %v3506 = vsel %vm3503, %v3505, %v3501
        %v3507 = vmul.f32 1.0, %v3506
        %v3508 = vrcp.pop %v3122
        %v3509 = vmul.f32 %v3122, %v3508
        %v3510 = vsub.f32 1.0, %v3509
        %v3511 = vmul.f32 %v3508, %v3510
        %v3512 = vadd.f32 %v3508, %v3511
        %vm3513 = vweird.f32 %v3122
        %vm3514 = vweird.f32 %v3508
        %vm3515 = vmor %vm3513, %vm3514
        %v3516 = vsel %vm3515, %v3508, %v3512
        %v3517 = vand.u32 2147483647, %v3122
        %vm3518 = vcmp.eq.f32.partialorder %v3517, 8.507059e+37
        %v3519 = vand.u32 %v3122, 2147483648
        %v3520 = vor.u32 1.1754944e-38, %v3519
        %v3521 = vsel %vm3518, %v3520, %v3516
        %v3522 = vmul.f32 1.0, %v3521
        %v3523 = vrcp.pop %v3123
        %v3524 = vmul.f32 %v3123, %v3523
        %v3525 = vsub.f32 1.0, %v3524
        %v3526 = vmul.f32 %v3523, %v3525
        %v3527 = vadd.f32 %v3523, %v3526
        %vm3528 = vweird.f32 %v3123
        %vm3529 = vweird.f32 %v3523
        %vm3530 = vmor %vm3528, %vm3529
        %v3531 = vsel %vm3530, %v3523, %v3527
        %v3532 = vand.u32 2147483647, %v3123
        %vm3533 = vcmp.eq.f32.partialorder %v3532, 8.507059e+37
        %v3534 = vand.u32 %v3123, 2147483648
        %v3535 = vor.u32 1.1754944e-38, %v3534
        %v3536 = vsel %vm3533, %v3535, %v3531
        %v3537 = vmul.f32 1.0, %v3536
        %v3538 = vrcp.pop %v3124
        %v3539 = vmul.f32 %v3124, %v3538
        %v3540 = vsub.f32 1.0, %v3539
        %v3541 = vmul.f32 %v3538, %v3540
        %v3542 = vadd.f32 %v3538, %v3541
        %vm3543 = vweird.f32 %v3124
        %vm3544 = vweird.f32 %v3538
        %vm3545 = vmor %vm3543, %vm3544
        %v3546 = vsel %vm3545, %v3538, %v3542
        %v3547 = vand.u32 2147483647, %v3124
        %vm3548 = vcmp.eq.f32.partialorder %v3547, 8.507059e+37
        %v3549 = vand.u32 %v3124, 2147483648
        %v3550 = vor.u32 1.1754944e-38, %v3549
        %v3551 = vsel %vm3548, %v3550, %v3546
        %v3552 = vmul.f32 1.0, %v3551
        %v3553 = vrcp.pop %v3125
        %v3554 = vmul.f32 %v3125, %v3553
        %v3555 = vsub.f32 1.0, %v3554
        %v3556 = vmul.f32 %v3553, %v3555
        %v3557 = vadd.f32 %v3553, %v3556
        %vm3558 = vweird.f32 %v3125
        %vm3559 = vweird.f32 %v3553
        %vm3560 = vmor %vm3558, %vm3559
        %v3561 = vsel %vm3560, %v3553, %v3557
        %v3562 = vand.u32 2147483647, %v3125
        %vm3563 = vcmp.eq.f32.partialorder %v3562, 8.507059e+37
        %v3564 = vand.u32 %v3125, 2147483648
        %v3565 = vor.u32 1.1754944e-38, %v3564
        %v3566 = vsel %vm3563, %v3565, %v3561
        %v3567 = vmul.f32 1.0, %v3566
        %v3568 = vrcp.pop %v3126
        %v3569 = vmul.f32 %v3126, %v3568
        %v3570 = vsub.f32 1.0, %v3569
        %v3571 = vmul.f32 %v3568, %v3570
        %v3572 = vadd.f32 %v3568, %v3571
        %vm3573 = vweird.f32 %v3126
        %vm3574 = vweird.f32 %v3568
        %vm3575 = vmor %vm3573, %vm3574
        %v3576 = vsel %vm3575, %v3568, %v3572
        %v3577 = vand.u32 2147483647, %v3126
        %vm3578 = vcmp.eq.f32.partialorder %v3577, 8.507059e+37
        %v3579 = vand.u32 %v3126, 2147483648
        %v3580 = vor.u32 1.1754944e-38, %v3579
        %v3581 = vsel %vm3578, %v3580, %v3576
        %v3582 = vmul.f32 1.0, %v3581
        %v3583 = vrcp.pop %v3127
        %v3584 = vmul.f32 %v3127, %v3583
        %v3585 = vsub.f32 1.0, %v3584
        %v3586 = vmul.f32 %v3583, %v3585
        %v3587 = vadd.f32 %v3583, %v3586
        %vm3588 = vweird.f32 %v3127
        %vm3589 = vweird.f32 %v3583
        %vm3590 = vmor %vm3588, %vm3589
        %v3591 = vsel %vm3590, %v3583, %v3587
        %v3592 = vand.u32 2147483647, %v3127
        %vm3593 = vcmp.eq.f32.partialorder %v3592, 8.507059e+37
        %v3594 = vand.u32 %v3127, 2147483648
        %v3595 = vor.u32 1.1754944e-38, %v3594
        %v3596 = vsel %vm3593, %v3595, %v3591
        %v3597 = vmul.f32 1.0, %v3596
        %v3598 = vrcp.pop %v3128
        %v3599 = vmul.f32 %v3128, %v3598
        %v3600 = vsub.f32 1.0, %v3599
        %v3601 = vmul.f32 %v3598, %v3600
        %v3602 = vadd.f32 %v3598, %v3601
        %vm3603 = vweird.f32 %v3128
        %vm3604 = vweird.f32 %v3598
        %vm3605 = vmor %vm3603, %vm3604
        %v3606 = vsel %vm3605, %v3598, %v3602
        %v3607 = vand.u32 2147483647, %v3128
        %vm3608 = vcmp.eq.f32.partialorder %v3607, 8.507059e+37
        %v3609 = vand.u32 %v3128, 2147483648
        %v3610 = vor.u32 1.1754944e-38, %v3609
        %v3611 = vsel %vm3608, %v3610, %v3606
        %v3612 = vmul.f32 1.0, %v3611
        %v3613 = vrcp.pop %v3129
        %v3614 = vmul.f32 %v3129, %v3613
        %v3615 = vsub.f32 1.0, %v3614
        %v3616 = vmul.f32 %v3613, %v3615
        %v3617 = vadd.f32 %v3613, %v3616
        %vm3618 = vweird.f32 %v3129
        %vm3619 = vweird.f32 %v3613
        %vm3620 = vmor %vm3618, %vm3619
        %v3621 = vsel %vm3620, %v3613, %v3617
        %v3622 = vand.u32 2147483647, %v3129
        %vm3623 = vcmp.eq.f32.partialorder %v3622, 8.507059e+37
        %v3624 = vand.u32 %v3129, 2147483648
        %v3625 = vor.u32 1.1754944e-38, %v3624
        %v3626 = vsel %vm3623, %v3625, %v3621
        %v3627 = vmul.f32 1.0, %v3626
        %v3628 = vrcp.pop %v3130
        %v3629 = vmul.f32 %v3130, %v3628
        %v3630 = vsub.f32 1.0, %v3629
        %v3631 = vmul.f32 %v3628, %v3630
        %v3632 = vadd.f32 %v3628, %v3631
        %vm3633 = vweird.f32 %v3130
        %vm3634 = vweird.f32 %v3628
        %vm3635 = vmor %vm3633, %vm3634
        %v3636 = vsel %vm3635, %v3628, %v3632
        %v3637 = vand.u32 2147483647, %v3130
        %vm3638 = vcmp.eq.f32.partialorder %v3637, 8.507059e+37
        %v3639 = vand.u32 %v3130, 2147483648
        %v3640 = vor.u32 1.1754944e-38, %v3639
        %v3641 = vsel %vm3638, %v3640, %v3636
        %v3642 = vmul.f32 1.0, %v3641
        %v3643 = vrcp.pop %v3131
        %v3644 = vmul.f32 %v3131, %v3643
        %v3645 = vsub.f32 1.0, %v3644
        %v3646 = vmul.f32 %v3643, %v3645
        %v3647 = vadd.f32 %v3643, %v3646
        %vm3648 = vweird.f32 %v3131
        %vm3649 = vweird.f32 %v3643
        %vm3650 = vmor %vm3648, %vm3649
        %v3651 = vsel %vm3650, %v3643, %v3647
        %v3652 = vand.u32 2147483647, %v3131
        %vm3653 = vcmp.eq.f32.partialorder %v3652, 8.507059e+37
        %v3654 = vand.u32 %v3131, 2147483648
        %v3655 = vor.u32 1.1754944e-38, %v3654
        %v3656 = vsel %vm3653, %v3655, %v3651
        %v3657 = vmul.f32 1.0, %v3656
        %v3658 = vrcp.pop %v3132
        %v3659 = vmul.f32 %v3132, %v3658
        %v3660 = vsub.f32 1.0, %v3659
        %v3661 = vmul.f32 %v3658, %v3660
        %v3662 = vadd.f32 %v3658, %v3661
        %vm3663 = vweird.f32 %v3132
        %vm3664 = vweird.f32 %v3658
        %vm3665 = vmor %vm3663, %vm3664
        %v3666 = vsel %vm3665, %v3658, %v3662
        %v3667 = vand.u32 2147483647, %v3132
        %vm3668 = vcmp.eq.f32.partialorder %v3667, 8.507059e+37
        %v3669 = vand.u32 %v3132, 2147483648
        %v3670 = vor.u32 1.1754944e-38, %v3669
        %v3671 = vsel %vm3668, %v3670, %v3666
        %v3672 = vmul.f32 1.0, %v3671
        %v3673 = vrcp.pop %v3133
        %v3674 = vmul.f32 %v3133, %v3673
        %v3675 = vsub.f32 1.0, %v3674
        %v3676 = vmul.f32 %v3673, %v3675
        %v3677 = vadd.f32 %v3673, %v3676
        %vm3678 = vweird.f32 %v3133
        %vm3679 = vweird.f32 %v3673
        %vm3680 = vmor %vm3678, %vm3679
        %v3681 = vsel %vm3680, %v3673, %v3677
        %v3682 = vand.u32 2147483647, %v3133
        %vm3683 = vcmp.eq.f32.partialorder %v3682, 8.507059e+37
        %v3684 = vand.u32 %v3133, 2147483648
        %v3685 = vor.u32 1.1754944e-38, %v3684
        %v3686 = vsel %vm3683, %v3685, %v3681
        %v3687 = vmul.f32 1.0, %v3686
        %v3688 = vrcp.pop %v3134
        %v3689 = vmul.f32 %v3134, %v3688
        %v3690 = vsub.f32 1.0, %v3689
        %v3691 = vmul.f32 %v3688, %v3690
        %v3692 = vadd.f32 %v3688, %v3691
        %vm3693 = vweird.f32 %v3134
        %vm3694 = vweird.f32 %v3688
        %vm3695 = vmor %vm3693, %vm3694
        %v3696 = vsel %vm3695, %v3688, %v3692
        %v3697 = vand.u32 2147483647, %v3134
        %vm3698 = vcmp.eq.f32.partialorder %v3697, 8.507059e+37
        %v3699 = vand.u32 %v3134, 2147483648
        %v3700 = vor.u32 1.1754944e-38, %v3699
        %v3701 = vsel %vm3698, %v3700, %v3696
        %v3702 = vmul.f32 1.0, %v3701
        %v3703 = vrcp.pop %v3135
        %v3704 = vmul.f32 %v3135, %v3703
        %v3705 = vsub.f32 1.0, %v3704
        %v3706 = vmul.f32 %v3703, %v3705
        %v3707 = vadd.f32 %v3703, %v3706
        %vm3708 = vweird.f32 %v3135
        %vm3709 = vweird.f32 %v3703
        %vm3710 = vmor %vm3708, %vm3709
        %v3711 = vsel %vm3710, %v3703, %v3707
        %v3712 = vand.u32 2147483647, %v3135
        %vm3713 = vcmp.eq.f32.partialorder %v3712, 8.507059e+37
        %v3714 = vand.u32 %v3135, 2147483648
        %v3715 = vor.u32 1.1754944e-38, %v3714
        %v3716 = vsel %vm3713, %v3715, %v3711
        %v3717 = vmul.f32 1.0, %v3716
        %v3718 = vrcp.pop %v3136
        %v3719 = vmul.f32 %v3136, %v3718
        %v3720 = vsub.f32 1.0, %v3719
        %v3721 = vmul.f32 %v3718, %v3720
        %v3722 = vadd.f32 %v3718, %v3721
        %vm3723 = vweird.f32 %v3136
        %vm3724 = vweird.f32 %v3718
        %vm3725 = vmor %vm3723, %vm3724
        %v3726 = vsel %vm3725, %v3718, %v3722
        %v3727 = vand.u32 2147483647, %v3136
        %vm3728 = vcmp.eq.f32.partialorder %v3727, 8.507059e+37
        %v3729 = vand.u32 %v3136, 2147483648
        %v3730 = vor.u32 1.1754944e-38, %v3729
        %v3731 = vsel %vm3728, %v3730, %v3726
        %v3732 = vmul.f32 1.0, %v3731
        %v3733 = vrcp.pop %v3137
        %v3734 = vmul.f32 %v3137, %v3733
        %v3735 = vsub.f32 1.0, %v3734
        %v3736 = vmul.f32 %v3733, %v3735
        %v3737 = vadd.f32 %v3733, %v3736
        %vm3738 = vweird.f32 %v3137
        %vm3739 = vweird.f32 %v3733
        %vm3740 = vmor %vm3738, %vm3739
        %v3741 = vsel %vm3740, %v3733, %v3737
        %v3742 = vand.u32 2147483647, %v3137
        %vm3743 = vcmp.eq.f32.partialorder %v3742, 8.507059e+37
        %v3744 = vand.u32 %v3137, 2147483648
        %v3745 = vor.u32 1.1754944e-38, %v3744
        %v3746 = vsel %vm3743, %v3745, %v3741
        %v3747 = vmul.f32 1.0, %v3746
        %v3748 = vrcp.pop %v3138
        %v3749 = vmul.f32 %v3138, %v3748
        %v3750 = vsub.f32 1.0, %v3749
        %v3751 = vmul.f32 %v3748, %v3750
        %v3752 = vadd.f32 %v3748, %v3751
        %vm3753 = vweird.f32 %v3138
        %vm3754 = vweird.f32 %v3748
        %vm3755 = vmor %vm3753, %vm3754
        %v3756 = vsel %vm3755, %v3748, %v3752
        %v3757 = vand.u32 2147483647, %v3138
        %vm3758 = vcmp.eq.f32.partialorder %v3757, 8.507059e+37
        %v3759 = vand.u32 %v3138, 2147483648
        %v3760 = vor.u32 1.1754944e-38, %v3759
        %v3761 = vsel %vm3758, %v3760, %v3756
        %v3762 = vmul.f32 1.0, %v3761
        %v3763 = vrcp.pop %v3139
        %v3764 = vmul.f32 %v3139, %v3763
        %v3765 = vsub.f32 1.0, %v3764
        %v3766 = vmul.f32 %v3763, %v3765
        %v3767 = vadd.f32 %v3763, %v3766
        %vm3768 = vweird.f32 %v3139
        %vm3769 = vweird.f32 %v3763
        %vm3770 = vmor %vm3768, %vm3769
        %v3771 = vsel %vm3770, %v3763, %v3767
        %v3772 = vand.u32 2147483647, %v3139
        %vm3773 = vcmp.eq.f32.partialorder %v3772, 8.507059e+37
        %v3774 = vand.u32 %v3139, 2147483648
        %v3775 = vor.u32 1.1754944e-38, %v3774
        %v3776 = vsel %vm3773, %v3775, %v3771
        %v3777 = vmul.f32 1.0, %v3776
        %v3778 = vrcp.pop %v3140
        %v3779 = vmul.f32 %v3140, %v3778
        %v3780 = vsub.f32 1.0, %v3779
        %v3781 = vmul.f32 %v3778, %v3780
        %v3782 = vadd.f32 %v3778, %v3781
        %vm3783 = vweird.f32 %v3140
        %vm3784 = vweird.f32 %v3778
        %vm3785 = vmor %vm3783, %vm3784
        %v3786 = vsel %vm3785, %v3778, %v3782
        %v3787 = vand.u32 2147483647, %v3140
        %vm3788 = vcmp.eq.f32.partialorder %v3787, 8.507059e+37
        %v3789 = vand.u32 %v3140, 2147483648
        %v3790 = vor.u32 1.1754944e-38, %v3789
        %v3791 = vsel %vm3788, %v3790, %v3786
        %v3792 = vmul.f32 1.0, %v3791
        %v3793 = vrcp.pop %v3141
        %v3794 = vmul.f32 %v3141, %v3793
        %v3795 = vsub.f32 1.0, %v3794
        %v3796 = vmul.f32 %v3793, %v3795
        %v3797 = vadd.f32 %v3793, %v3796
        %vm3798 = vweird.f32 %v3141
        %vm3799 = vweird.f32 %v3793
        %vm3800 = vmor %vm3798, %vm3799
        %v3801 = vsel %vm3800, %v3793, %v3797
        %v3802 = vand.u32 2147483647, %v3141
        %vm3803 = vcmp.eq.f32.partialorder %v3802, 8.507059e+37
        %v3804 = vand.u32 %v3141, 2147483648
        %v3805 = vor.u32 1.1754944e-38, %v3804
        %v3806 = vsel %vm3803, %v3805, %v3801
        %v3807 = vmul.f32 1.0, %v3806
        %v3808 = vrcp.pop %v3142
        %v3809 = vmul.f32 %v3142, %v3808
        %v3810 = vsub.f32 1.0, %v3809
        %v3811 = vmul.f32 %v3808, %v3810
        %v3812 = vadd.f32 %v3808, %v3811
        %vm3813 = vweird.f32 %v3142
        %vm3814 = vweird.f32 %v3808
        %vm3815 = vmor %vm3813, %vm3814
        %v3816 = vsel %vm3815, %v3808, %v3812
        %v3817 = vand.u32 2147483647, %v3142
        %vm3818 = vcmp.eq.f32.partialorder %v3817, 8.507059e+37
        %v3819 = vand.u32 %v3142, 2147483648
        %v3820 = vor.u32 1.1754944e-38, %v3819
        %v3821 = vsel %vm3818, %v3820, %v3816
        %v3822 = vmul.f32 1.0, %v3821
        %v3823 = vrcp.pop %v3143
        %v3824 = vmul.f32 %v3143, %v3823
        %v3825 = vsub.f32 1.0, %v3824
        %v3826 = vmul.f32 %v3823, %v3825
        %v3827 = vadd.f32 %v3823, %v3826
        %vm3828 = vweird.f32 %v3143
        %vm3829 = vweird.f32 %v3823
        %vm3830 = vmor %vm3828, %vm3829
        %v3831 = vsel %vm3830, %v3823, %v3827
        %v3832 = vand.u32 2147483647, %v3143
        %vm3833 = vcmp.eq.f32.partialorder %v3832, 8.507059e+37
        %v3834 = vand.u32 %v3143, 2147483648
        %v3835 = vor.u32 1.1754944e-38, %v3834
        %v3836 = vsel %vm3833, %v3835, %v3831
        %v3837 = vmul.f32 1.0, %v3836
        %v3838 = vrcp.pop %v3144
        %v3839 = vmul.f32 %v3144, %v3838
        %v3840 = vsub.f32 1.0, %v3839
        %v3841 = vmul.f32 %v3838, %v3840
        %v3842 = vadd.f32 %v3838, %v3841
        %vm3843 = vweird.f32 %v3144
        %vm3844 = vweird.f32 %v3838
        %vm3845 = vmor %vm3843, %vm3844
        %v3846 = vsel %vm3845, %v3838, %v3842
        %v3847 = vand.u32 2147483647, %v3144
        %vm3848 = vcmp.eq.f32.partialorder %v3847, 8.507059e+37
        %v3849 = vand.u32 %v3144, 2147483648
        %v3850 = vor.u32 1.1754944e-38, %v3849
        %v3851 = vsel %vm3848, %v3850, %v3846
        %v3852 = vmul.f32 1.0, %v3851
        %v3853 = vrcp.pop %v3145
        %v3854 = vmul.f32 %v3145, %v3853
        %v3855 = vsub.f32 1.0, %v3854
        %v3856 = vmul.f32 %v3853, %v3855
        %v3857 = vadd.f32 %v3853, %v3856
        %vm3858 = vweird.f32 %v3145
        %vm3859 = vweird.f32 %v3853
        %vm3860 = vmor %vm3858, %vm3859
        %v3861 = vsel %vm3860, %v3853, %v3857
        %v3862 = vand.u32 2147483647, %v3145
        %vm3863 = vcmp.eq.f32.partialorder %v3862, 8.507059e+37
        %v3864 = vand.u32 %v3145, 2147483648
        %v3865 = vor.u32 1.1754944e-38, %v3864
        %v3866 = vsel %vm3863, %v3865, %v3861
        %v3867 = vmul.f32 1.0, %v3866
        %v3868 = vrcp.pop %v3146
        %v3869 = vmul.f32 %v3146, %v3868
        %v3870 = vsub.f32 1.0, %v3869
        %v3871 = vmul.f32 %v3868, %v3870
        %v3872 = vadd.f32 %v3868, %v3871
        %vm3873 = vweird.f32 %v3146
        %vm3874 = vweird.f32 %v3868
        %vm3875 = vmor %vm3873, %vm3874
        %v3876 = vsel %vm3875, %v3868, %v3872
        %v3877 = vand.u32 2147483647, %v3146
        %vm3878 = vcmp.eq.f32.partialorder %v3877, 8.507059e+37
        %v3879 = vand.u32 %v3146, 2147483648
        %v3880 = vor.u32 1.1754944e-38, %v3879
        %v3881 = vsel %vm3878, %v3880, %v3876
        %v3882 = vmul.f32 1.0, %v3881
        %v3883 = vrcp.pop %v3147
        %v3884 = vmul.f32 %v3147, %v3883
        %v3885 = vsub.f32 1.0, %v3884
        %v3886 = vmul.f32 %v3883, %v3885
        %v3887 = vadd.f32 %v3883, %v3886
        %vm3888 = vweird.f32 %v3147
        %vm3889 = vweird.f32 %v3883
        %vm3890 = vmor %vm3888, %vm3889
        %v3891 = vsel %vm3890, %v3883, %v3887
        %v3892 = vand.u32 2147483647, %v3147
        %vm3893 = vcmp.eq.f32.partialorder %v3892, 8.507059e+37
        %v3894 = vand.u32 %v3147, 2147483648
        %v3895 = vor.u32 1.1754944e-38, %v3894
        %v3896 = vsel %vm3893, %v3895, %v3891
        %v3897 = vmul.f32 1.0, %v3896
        %v3898 = vrcp.pop %v3148
        %v3899 = vmul.f32 %v3148, %v3898
        %v3900 = vsub.f32 1.0, %v3899
        %v3901 = vmul.f32 %v3898, %v3900
        %v3902 = vadd.f32 %v3898, %v3901
        %vm3903 = vweird.f32 %v3148
        %vm3904 = vweird.f32 %v3898
        %vm3905 = vmor %vm3903, %vm3904
        %v3906 = vsel %vm3905, %v3898, %v3902
        %v3907 = vand.u32 2147483647, %v3148
        %vm3908 = vcmp.eq.f32.partialorder %v3907, 8.507059e+37
        %v3909 = vand.u32 %v3148, 2147483648
        %v3910 = vor.u32 1.1754944e-38, %v3909
        %v3911 = vsel %vm3908, %v3910, %v3906
        %v3912 = vmul.f32 1.0, %v3911
        %v3913 = vrcp.pop %v3149
        %v3914 = vmul.f32 %v3149, %v3913
        %v3915 = vsub.f32 1.0, %v3914
        %v3916 = vmul.f32 %v3913, %v3915
        %v3917 = vadd.f32 %v3913, %v3916
        %vm3918 = vweird.f32 %v3149
        %vm3919 = vweird.f32 %v3913
        %vm3920 = vmor %vm3918, %vm3919
        %v3921 = vsel %vm3920, %v3913, %v3917
        %v3922 = vand.u32 2147483647, %v3149
        %vm3923 = vcmp.eq.f32.partialorder %v3922, 8.507059e+37
        %v3924 = vand.u32 %v3149, 2147483648
        %v3925 = vor.u32 1.1754944e-38, %v3924
        %v3926 = vsel %vm3923, %v3925, %v3921
        %v3927 = vmul.f32 1.0, %v3926
        %v3928 = vrcp.pop %v3150
        %v3929 = vmul.f32 %v3150, %v3928
        %v3930 = vsub.f32 1.0, %v3929
        %v3931 = vmul.f32 %v3928, %v3930
        %v3932 = vadd.f32 %v3928, %v3931
        %vm3933 = vweird.f32 %v3150
        %vm3934 = vweird.f32 %v3928
        %vm3935 = vmor %vm3933, %vm3934
        %v3936 = vsel %vm3935, %v3928, %v3932
        %v3937 = vand.u32 2147483647, %v3150
        %vm3938 = vcmp.eq.f32.partialorder %v3937, 8.507059e+37
        %v3939 = vand.u32 %v3150, 2147483648
        %v3940 = vor.u32 1.1754944e-38, %v3939
        %v3941 = vsel %vm3938, %v3940, %v3936
        %v3942 = vmul.f32 1.0, %v3941
        %v3943 = vrcp.pop %v3151
        %v3944 = vmul.f32 %v3151, %v3943
        %v3945 = vsub.f32 1.0, %v3944
        %v3946 = vmul.f32 %v3943, %v3945
        %v3947 = vadd.f32 %v3943, %v3946
        %vm3948 = vweird.f32 %v3151
        %vm3949 = vweird.f32 %v3943
        %vm3950 = vmor %vm3948, %vm3949
        %v3951 = vsel %vm3950, %v3943, %v3947
        %v3952 = vand.u32 2147483647, %v3151
        %vm3953 = vcmp.eq.f32.partialorder %v3952, 8.507059e+37
        %v3954 = vand.u32 %v3151, 2147483648
        %v3955 = vor.u32 1.1754944e-38, %v3954
        %v3956 = vsel %vm3953, %v3955, %v3951
        %v3957 = vmul.f32 1.0, %v3956
        %v3958 = vrcp.pop %v3152
        %v3959 = vmul.f32 %v3152, %v3958
        %v3960 = vsub.f32 1.0, %v3959
        %v3961 = vmul.f32 %v3958, %v3960
        %v3962 = vadd.f32 %v3958, %v3961
        %vm3963 = vweird.f32 %v3152
        %vm3964 = vweird.f32 %v3958
        %vm3965 = vmor %vm3963, %vm3964
        %v3966 = vsel %vm3965, %v3958, %v3962
        %v3967 = vand.u32 2147483647, %v3152
        %vm3968 = vcmp.eq.f32.partialorder %v3967, 8.507059e+37
        %v3969 = vand.u32 %v3152, 2147483648
        %v3970 = vor.u32 1.1754944e-38, %v3969
        %v3971 = vsel %vm3968, %v3970, %v3966
        %v3972 = vmul.f32 1.0, %v3971
        %v3973 = vrcp.pop %v3153
        %v3974 = vmul.f32 %v3153, %v3973
        %v3975 = vsub.f32 1.0, %v3974
        %v3976 = vmul.f32 %v3973, %v3975
        %v3977 = vadd.f32 %v3973, %v3976
        %vm3978 = vweird.f32 %v3153
        %vm3979 = vweird.f32 %v3973
        %vm3980 = vmor %vm3978, %vm3979
        %v3981 = vsel %vm3980, %v3973, %v3977
        %v3982 = vand.u32 2147483647, %v3153
        %vm3983 = vcmp.eq.f32.partialorder %v3982, 8.507059e+37
        %v3984 = vand.u32 %v3153, 2147483648
        %v3985 = vor.u32 1.1754944e-38, %v3984
        %v3986 = vsel %vm3983, %v3985, %v3981
        %v3987 = vmul.f32 1.0, %v3986
        %v3988 = vrcp.pop %v3154
        %v3989 = vmul.f32 %v3154, %v3988
        %v3990 = vsub.f32 1.0, %v3989
        %v3991 = vmul.f32 %v3988, %v3990
        %v3992 = vadd.f32 %v3988, %v3991
        %vm3993 = vweird.f32 %v3154
        %vm3994 = vweird.f32 %v3988
        %vm3995 = vmor %vm3993, %vm3994
        %v3996 = vsel %vm3995, %v3988, %v3992
        %v3997 = vand.u32 2147483647, %v3154
        %vm3998 = vcmp.eq.f32.partialorder %v3997, 8.507059e+37
        %v3999 = vand.u32 %v3154, 2147483648
        %v4000 = vor.u32 1.1754944e-38, %v3999
        %v4001 = vsel %vm3998, %v4000, %v3996
        %v4002 = vmul.f32 1.0, %v4001
        %v4003 = vrcp.pop %v3155
        %v4004 = vmul.f32 %v3155, %v4003
        %v4005 = vsub.f32 1.0, %v4004
        %v4006 = vmul.f32 %v4003, %v4005
        %v4007 = vadd.f32 %v4003, %v4006
        %vm4008 = vweird.f32 %v3155
        %vm4009 = vweird.f32 %v4003
        %vm4010 = vmor %vm4008, %vm4009
        %v4011 = vsel %vm4010, %v4003, %v4007
        %v4012 = vand.u32 2147483647, %v3155
        %vm4013 = vcmp.eq.f32.partialorder %v4012, 8.507059e+37
        %v4014 = vand.u32 %v3155, 2147483648
        %v4015 = vor.u32 1.1754944e-38, %v4014
        %v4016 = vsel %vm4013, %v4015, %v4011
        %v4017 = vmul.f32 1.0, %v4016
        %v4018 = vrcp.pop %v3156
        %v4019 = vmul.f32 %v3156, %v4018
        %v4020 = vsub.f32 1.0, %v4019
        %v4021 = vmul.f32 %v4018, %v4020
        %v4022 = vadd.f32 %v4018, %v4021
        %vm4023 = vweird.f32 %v3156
        %vm4024 = vweird.f32 %v4018
        %vm4025 = vmor %vm4023, %vm4024
        %v4026 = vsel %vm4025, %v4018, %v4022
        %v4027 = vand.u32 2147483647, %v3156
        %vm4028 = vcmp.eq.f32.partialorder %v4027, 8.507059e+37
        %v4029 = vand.u32 %v3156, 2147483648
        %v4030 = vor.u32 1.1754944e-38, %v4029
        %v4031 = vsel %vm4028, %v4030, %v4026
        %v4032 = vmul.f32 1.0, %v4031
        %v4033 = vrcp.pop %v3157
        %v4034 = vmul.f32 %v3157, %v4033
        %v4035 = vsub.f32 1.0, %v4034
        %v4036 = vmul.f32 %v4033, %v4035
        %v4037 = vadd.f32 %v4033, %v4036
        %vm4038 = vweird.f32 %v3157
        %vm4039 = vweird.f32 %v4033
        %vm4040 = vmor %vm4038, %vm4039
        %v4041 = vsel %vm4040, %v4033, %v4037
        %v4042 = vand.u32 2147483647, %v3157
        %vm4043 = vcmp.eq.f32.partialorder %v4042, 8.507059e+37
        %v4044 = vand.u32 %v3157, 2147483648
        %v4045 = vor.u32 1.1754944e-38, %v4044
        %v4046 = vsel %vm4043, %v4045, %v4041
        %v4047 = vmul.f32 1.0, %v4046
        %v4048 = vrcp.pop %v3158
        %v4049 = vmul.f32 %v3158, %v4048
        %v4050 = vsub.f32 1.0, %v4049
        %v4051 = vmul.f32 %v4048, %v4050
        %v4052 = vadd.f32 %v4048, %v4051
        %vm4053 = vweird.f32 %v3158
        %vm4054 = vweird.f32 %v4048
        %vm4055 = vmor %vm4053, %vm4054
        %v4056 = vsel %vm4055, %v4048, %v4052
        %v4057 = vand.u32 2147483647, %v3158
        %vm4058 = vcmp.eq.f32.partialorder %v4057, 8.507059e+37
        %v4059 = vand.u32 %v3158, 2147483648
        %v4060 = vor.u32 1.1754944e-38, %v4059
        %v4061 = vsel %vm4058, %v4060, %v4056
        %v4062 = vmul.f32 1.0, %v4061
        %v4063 = vrcp.pop %v3159
        %v4064 = vmul.f32 %v3159, %v4063
        %v4065 = vsub.f32 1.0, %v4064
        %v4066 = vmul.f32 %v4063, %v4065
        %v4067 = vadd.f32 %v4063, %v4066
        %vm4068 = vweird.f32 %v3159
        %vm4069 = vweird.f32 %v4063
        %vm4070 = vmor %vm4068, %vm4069
        %v4071 = vsel %vm4070, %v4063, %v4067
        %v4072 = vand.u32 2147483647, %v3159
        %vm4073 = vcmp.eq.f32.partialorder %v4072, 8.507059e+37
        %v4074 = vand.u32 %v3159, 2147483648
        %v4075 = vor.u32 1.1754944e-38, %v4074
        %v4076 = vsel %vm4073, %v4075, %v4071
        %v4077 = vmul.f32 1.0, %v4076
        %v4078 = vrcp.pop %v3160
        %v4079 = vmul.f32 %v3160, %v4078
        %v4080 = vsub.f32 1.0, %v4079
        %v4081 = vmul.f32 %v4078, %v4080
        %v4082 = vadd.f32 %v4078, %v4081
        %vm4083 = vweird.f32 %v3160
        %vm4084 = vweird.f32 %v4078
        %vm4085 = vmor %vm4083, %vm4084
        %v4086 = vsel %vm4085, %v4078, %v4082
        %v4087 = vand.u32 2147483647, %v3160
        %vm4088 = vcmp.eq.f32.partialorder %v4087, 8.507059e+37
        %v4089 = vand.u32 %v3160, 2147483648
        %v4090 = vor.u32 1.1754944e-38, %v4089
        %v4091 = vsel %vm4088, %v4090, %v4086
        %v4092 = vmul.f32 1.0, %v4091
        %v4093 = vrcp.pop %v3161
        %v4094 = vmul.f32 %v3161, %v4093
        %v4095 = vsub.f32 1.0, %v4094
        %v4096 = vmul.f32 %v4093, %v4095
        %v4097 = vadd.f32 %v4093, %v4096
        %vm4098 = vweird.f32 %v3161
        %vm4099 = vweird.f32 %v4093
        %vm4100 = vmor %vm4098, %vm4099
        %v4101 = vsel %vm4100, %v4093, %v4097
        %v4102 = vand.u32 2147483647, %v3161
        %vm4103 = vcmp.eq.f32.partialorder %v4102, 8.507059e+37
        %v4104 = vand.u32 %v3161, 2147483648
        %v4105 = vor.u32 1.1754944e-38, %v4104
        %v4106 = vsel %vm4103, %v4105, %v4101
        %v4107 = vmul.f32 1.0, %v4106
        %v4108 = vrcp.pop %v3162
        %v4109 = vmul.f32 %v3162, %v4108
        %v4110 = vsub.f32 1.0, %v4109
        %v4111 = vmul.f32 %v4108, %v4110
        %v4112 = vadd.f32 %v4108, %v4111
        %vm4113 = vweird.f32 %v3162
        %vm4114 = vweird.f32 %v4108
        %vm4115 = vmor %vm4113, %vm4114
        %v4116 = vsel %vm4115, %v4108, %v4112
        %v4117 = vand.u32 2147483647, %v3162
        %vm4118 = vcmp.eq.f32.partialorder %v4117, 8.507059e+37
        %v4119 = vand.u32 %v3162, 2147483648
        %v4120 = vor.u32 1.1754944e-38, %v4119
        %v4121 = vsel %vm4118, %v4120, %v4116
        %v4122 = vmul.f32 1.0, %v4121
        %v4124 = vsel %vm1287, %v1218, 0
        %v4127 = vsel %vm1287, %v1219, 0
        %v4130 = vsel %vm1287, %v1220, 0
        %v4133 = vsel %vm1287, %v1221, 0
        %v4136 = vsel %vm1287, %v1222, 0
        %v4139 = vsel %vm1287, %v1223, 0
        %v4142 = vsel %vm1287, %v1224, 0
        %v4145 = vsel %vm1287, %v1225, 0
        %v4148 = vsel %vm1287, %v1226, 0
        %v4151 = vsel %vm1287, %v1227, 0
        %v4154 = vsel %vm1287, %v1228, 0
        %v4157 = vsel %vm1287, %v1229, 0
        %v4160 = vsel %vm1287, %v1230, 0
        %v4163 = vsel %vm1287, %v1231, 0
        %v4166 = vsel %vm1287, %v1232, 0
        %v4169 = vsel %vm1287, %v1233, 0
        %v4172 = vsel %vm1287, %v1234, 0
        %v4175 = vsel %vm1287, %v1235, 0
        %v4178 = vsel %vm1287, %v1236, 0
        %v4181 = vsel %vm1287, %v1237, 0
        %v4184 = vsel %vm1287, %v1238, 0
        %v4187 = vsel %vm1287, %v1239, 0
        %v4190 = vsel %vm1287, %v1240, 0
        %v4193 = vsel %vm1287, %v1241, 0
        %v4196 = vsel %vm1287, %v1242, 0
        %v4199 = vsel %vm1287, %v1243, 0
        %v4202 = vsel %vm1287, %v1244, 0
        %v4205 = vsel %vm1287, %v1245, 0
        %v4208 = vsel %vm1287, %v1246, 0
        %v4211 = vsel %vm1287, %v1247, 0
        %v4214 = vsel %vm1287, %v1248, 0
        %v4217 = vsel %vm1287, %v1249, 0
        %v4220 = vsel %vm1287, %v1250, 0
        %v4223 = vsel %vm1287, %v1251, 0
        %v4226 = vsel %vm1287, %v1252, 0
        %v4229 = vsel %vm1287, %v1253, 0
        %v4232 = vsel %vm1287, %v1254, 0
        %v4235 = vsel %vm1287, %v1255, 0
        %v4238 = vsel %vm1287, %v1256, 0
        %v4241 = vsel %vm1287, %v1257, 0
        %v4244 = vsel %vm1287, %v1258, 0
        %v4247 = vsel %vm1287, %v1259, 0
        %v4250 = vsel %vm1287, %v1260, 0
        %v4253 = vsel %vm1287, %v1261, 0
        %v4256 = vsel %vm1287, %v1262, 0
        %v4259 = vsel %vm1287, %v1263, 0
        %v4262 = vsel %vm1287, %v1264, 0
        %v4265 = vsel %vm1287, %v1265, 0
        %v4268 = vsel %vm1287, %v1266, 0
        %v4271 = vsel %vm1287, %v1267, 0
        %v4274 = vsel %vm1287, %v1268, 0
        %v4277 = vsel %vm1287, %v1269, 0
        %v4280 = vsel %vm1287, %v1270, 0
        %v4283 = vsel %vm1287, %v1271, 0
        %v4286 = vsel %vm1287, %v1272, 0
        %v4289 = vsel %vm1287, %v1273, 0
        %v4292 = vsel %vm1287, %v1274, 0
        %v4295 = vsel %vm1287, %v1275, 0
        %v4298 = vsel %vm1287, %v1276, 0
        %v4301 = vsel %vm1287, %v1277, 0
        %v4304 = vsel %vm1287, %v1278, 0
        %v4307 = vsel %vm1287, %v1279, 0
        %v4310 = vsel %vm1287, %v1280, 0
        %v4313 = vsel %vm1287, %v1281, 0
        %4315 = vmatpush.msra.mxu0 0.0
        %4316 = vmatpush.msra.mxu0 0.0
        %4317 = vmatpush.msra.mxu0 0.0
        %4318 = vmatpush.msra.mxu0 0.0
        %4319 = vmatpush.msra.mxu0 0.0
        %4320 = vmatpush.msra.mxu0 0.0
        %4321 = vmatpush.msra.mxu0 0.0
        %4322 = vmatpush.msra.mxu0 0.0
        %4323 = vmatpush.msra.mxu0 0.0
        %4324 = vmatpush.msra.mxu0 0.0
        %4325 = vmatpush.msra.mxu0 0.0
        %4326 = vmatpush.msra.mxu0 0.0
        %4327 = vmatpush.msra.mxu0 0.0
        %4328 = vmatpush.msra.mxu0 0.0
        %4329 = vmatpush.msra.mxu0 0.0
        %4330 = vmatpush.msra.mxu0 %v1282
        %4331 = vmatmul.f32.gmra.mxu0 %v4124
        %v4332 = vpop.f32.mrf.mxu0
        %v4333 = vadd.f32 %v1285, %v4332
        %4334 = vmatmul.f32.gmra.mxu0 %v4127
        %v4335 = vpop.f32.mrf.mxu0
        %v4336 = vadd.f32 %v1285, %v4335
        %4337 = vmatmul.f32.gmra.mxu0 %v4130
        %v4338 = vpop.f32.mrf.mxu0
        %v4339 = vadd.f32 %v1285, %v4338
        %4340 = vmatmul.f32.gmra.mxu0 %v4133
        %v4341 = vpop.f32.mrf.mxu0
        %v4342 = vadd.f32 %v1285, %v4341
        %4343 = vmatmul.f32.gmra.mxu0 %v4136
        %v4344 = vpop.f32.mrf.mxu0
        %v4345 = vadd.f32 %v1285, %v4344
        %4346 = vmatmul.f32.gmra.mxu0 %v4139
        %v4347 = vpop.f32.mrf.mxu0
        %v4348 = vadd.f32 %v1285, %v4347
        %4349 = vmatmul.f32.gmra.mxu0 %v4142
        %v4350 = vpop.f32.mrf.mxu0
        %v4351 = vadd.f32 %v1285, %v4350
        %4352 = vmatmul.f32.gmra.mxu0 %v4145
        %v4353 = vpop.f32.mrf.mxu0
        %v4354 = vadd.f32 %v1285, %v4353
        %4355 = vmatmul.f32.gmra.mxu0 %v4148
        %v4356 = vpop.f32.mrf.mxu0
        %v4357 = vadd.f32 %v1285, %v4356
        %4358 = vmatmul.f32.gmra.mxu0 %v4151
        %v4359 = vpop.f32.mrf.mxu0
        %v4360 = vadd.f32 %v1285, %v4359
        %4361 = vmatmul.f32.gmra.mxu0 %v4154
        %v4362 = vpop.f32.mrf.mxu0
        %v4363 = vadd.f32 %v1285, %v4362
        %4364 = vmatmul.f32.gmra.mxu0 %v4157
        %v4365 = vpop.f32.mrf.mxu0
        %v4366 = vadd.f32 %v1285, %v4365
        %4367 = vmatmul.f32.gmra.mxu0 %v4160
        %v4368 = vpop.f32.mrf.mxu0
        %v4369 = vadd.f32 %v1285, %v4368
        %4370 = vmatmul.f32.gmra.mxu0 %v4163
        %v4371 = vpop.f32.mrf.mxu0
        %v4372 = vadd.f32 %v1285, %v4371
        %4373 = vmatmul.f32.gmra.mxu0 %v4166
        %v4374 = vpop.f32.mrf.mxu0
        %v4375 = vadd.f32 %v1285, %v4374
        %4376 = vmatmul.f32.gmra.mxu0 %v4169
        %v4377 = vpop.f32.mrf.mxu0
        %v4378 = vadd.f32 %v1285, %v4377
        %4379 = vmatmul.f32.gmra.mxu0 %v4172
        %v4380 = vpop.f32.mrf.mxu0
        %v4381 = vadd.f32 %v1285, %v4380
        %4382 = vmatmul.f32.gmra.mxu0 %v4175
        %v4383 = vpop.f32.mrf.mxu0
        %v4384 = vadd.f32 %v1285, %v4383
        %4385 = vmatmul.f32.gmra.mxu0 %v4178
        %v4386 = vpop.f32.mrf.mxu0
        %v4387 = vadd.f32 %v1285, %v4386
        %4388 = vmatmul.f32.gmra.mxu0 %v4181
        %v4389 = vpop.f32.mrf.mxu0
        %v4390 = vadd.f32 %v1285, %v4389
        %4391 = vmatmul.f32.gmra.mxu0 %v4184
        %v4392 = vpop.f32.mrf.mxu0
        %v4393 = vadd.f32 %v1285, %v4392
        %4394 = vmatmul.f32.gmra.mxu0 %v4187
        %v4395 = vpop.f32.mrf.mxu0
        %v4396 = vadd.f32 %v1285, %v4395
        %4397 = vmatmul.f32.gmra.mxu0 %v4190
        %v4398 = vpop.f32.mrf.mxu0
        %v4399 = vadd.f32 %v1285, %v4398
        %4400 = vmatmul.f32.gmra.mxu0 %v4193
        %v4401 = vpop.f32.mrf.mxu0
        %v4402 = vadd.f32 %v1285, %v4401
        %4403 = vmatmul.f32.gmra.mxu0 %v4196
        %v4404 = vpop.f32.mrf.mxu0
        %v4405 = vadd.f32 %v1285, %v4404
        %4406 = vmatmul.f32.gmra.mxu0 %v4199
        %v4407 = vpop.f32.mrf.mxu0
        %v4408 = vadd.f32 %v1285, %v4407
        %4409 = vmatmul.f32.gmra.mxu0 %v4202
        %v4410 = vpop.f32.mrf.mxu0
        %v4411 = vadd.f32 %v1285, %v4410
        %4412 = vmatmul.f32.gmra.mxu0 %v4205
        %v4413 = vpop.f32.mrf.mxu0
        %v4414 = vadd.f32 %v1285, %v4413
        %4415 = vmatmul.f32.gmra.mxu0 %v4208
        %v4416 = vpop.f32.mrf.mxu0
        %v4417 = vadd.f32 %v1285, %v4416
        %4418 = vmatmul.f32.gmra.mxu0 %v4211
        %v4419 = vpop.f32.mrf.mxu0
        %v4420 = vadd.f32 %v1285, %v4419
        %4421 = vmatmul.f32.gmra.mxu0 %v4214
        %v4422 = vpop.f32.mrf.mxu0
        %v4423 = vadd.f32 %v1285, %v4422
        %4424 = vmatmul.f32.gmra.mxu0 %v4217
        %v4425 = vpop.f32.mrf.mxu0
        %v4426 = vadd.f32 %v1285, %v4425
        %4427 = vmatmul.f32.gmra.mxu0 %v4220
        %v4428 = vpop.f32.mrf.mxu0
        %v4429 = vadd.f32 %v1285, %v4428
        %4430 = vmatmul.f32.gmra.mxu0 %v4223
        %v4431 = vpop.f32.mrf.mxu0
        %v4432 = vadd.f32 %v1285, %v4431
        %4433 = vmatmul.f32.gmra.mxu0 %v4226
        %v4434 = vpop.f32.mrf.mxu0
        %v4435 = vadd.f32 %v1285, %v4434
        %4436 = vmatmul.f32.gmra.mxu0 %v4229
        %v4437 = vpop.f32.mrf.mxu0
        %v4438 = vadd.f32 %v1285, %v4437
        %4439 = vmatmul.f32.gmra.mxu0 %v4232
        %v4440 = vpop.f32.mrf.mxu0
        %v4441 = vadd.f32 %v1285, %v4440
        %4442 = vmatmul.f32.gmra.mxu0 %v4235
        %v4443 = vpop.f32.mrf.mxu0
        %v4444 = vadd.f32 %v1285, %v4443
        %4445 = vmatmul.f32.gmra.mxu0 %v4238
        %v4446 = vpop.f32.mrf.mxu0
        %v4447 = vadd.f32 %v1285, %v4446
        %4448 = vmatmul.f32.gmra.mxu0 %v4241
        %v4449 = vpop.f32.mrf.mxu0
        %v4450 = vadd.f32 %v1285, %v4449
        %4451 = vmatmul.f32.gmra.mxu0 %v4244
        %v4452 = vpop.f32.mrf.mxu0
        %v4453 = vadd.f32 %v1285, %v4452
        %4454 = vmatmul.f32.gmra.mxu0 %v4247
        %v4455 = vpop.f32.mrf.mxu0
        %v4456 = vadd.f32 %v1285, %v4455
        %4457 = vmatmul.f32.gmra.mxu0 %v4250
        %v4458 = vpop.f32.mrf.mxu0
        %v4459 = vadd.f32 %v1285, %v4458
        %4460 = vmatmul.f32.gmra.mxu0 %v4253
        %v4461 = vpop.f32.mrf.mxu0
        %v4462 = vadd.f32 %v1285, %v4461
        %4463 = vmatmul.f32.gmra.mxu0 %v4256
        %v4464 = vpop.f32.mrf.mxu0
        %v4465 = vadd.f32 %v1285, %v4464
        %4466 = vmatmul.f32.gmra.mxu0 %v4259
        %v4467 = vpop.f32.mrf.mxu0
        %v4468 = vadd.f32 %v1285, %v4467
        %4469 = vmatmul.f32.gmra.mxu0 %v4262
        %v4470 = vpop.f32.mrf.mxu0
        %v4471 = vadd.f32 %v1285, %v4470
        %4472 = vmatmul.f32.gmra.mxu0 %v4265
        %v4473 = vpop.f32.mrf.mxu0
        %v4474 = vadd.f32 %v1285, %v4473
        %4475 = vmatmul.f32.gmra.mxu0 %v4268
        %v4476 = vpop.f32.mrf.mxu0
        %v4477 = vadd.f32 %v1285, %v4476
        %4478 = vmatmul.f32.gmra.mxu0 %v4271
        %v4479 = vpop.f32.mrf.mxu0
        %v4480 = vadd.f32 %v1285, %v4479
        %4481 = vmatmul.f32.gmra.mxu0 %v4274
        %v4482 = vpop.f32.mrf.mxu0
        %v4483 = vadd.f32 %v1285, %v4482
        %4484 = vmatmul.f32.gmra.mxu0 %v4277
        %v4485 = vpop.f32.mrf.mxu0
        %v4486 = vadd.f32 %v1285, %v4485
        %4487 = vmatmul.f32.gmra.mxu0 %v4280
        %v4488 = vpop.f32.mrf.mxu0
        %v4489 = vadd.f32 %v1285, %v4488
        %4490 = vmatmul.f32.gmra.mxu0 %v4283
        %v4491 = vpop.f32.mrf.mxu0
        %v4492 = vadd.f32 %v1285, %v4491
        %4493 = vmatmul.f32.gmra.mxu0 %v4286
        %v4494 = vpop.f32.mrf.mxu0
        %v4495 = vadd.f32 %v1285, %v4494
        %4496 = vmatmul.f32.gmra.mxu0 %v4289
        %v4497 = vpop.f32.mrf.mxu0
        %v4498 = vadd.f32 %v1285, %v4497
        %4499 = vmatmul.f32.gmra.mxu0 %v4292
        %v4500 = vpop.f32.mrf.mxu0
        %v4501 = vadd.f32 %v1285, %v4500
        %4502 = vmatmul.f32.gmra.mxu0 %v4295
        %v4503 = vpop.f32.mrf.mxu0
        %v4504 = vadd.f32 %v1285, %v4503
        %4505 = vmatmul.f32.gmra.mxu0 %v4298
        %v4506 = vpop.f32.mrf.mxu0
        %v4507 = vadd.f32 %v1285, %v4506
        %4508 = vmatmul.f32.gmra.mxu0 %v4301
        %v4509 = vpop.f32.mrf.mxu0
        %v4510 = vadd.f32 %v1285, %v4509
        %4511 = vmatmul.f32.gmra.mxu0 %v4304
        %v4512 = vpop.f32.mrf.mxu0
        %v4513 = vadd.f32 %v1285, %v4512
        %4514 = vmatmul.f32.gmra.mxu0 %v4307
        %v4515 = vpop.f32.mrf.mxu0
        %v4516 = vadd.f32 %v1285, %v4515
        %4517 = vmatmul.f32.gmra.mxu0 %v4310
        %v4518 = vpop.f32.mrf.mxu0
        %v4519 = vadd.f32 %v1285, %v4518
        %4520 = vmatmul.f32.gmra.mxu0 %v4313
        %v4521 = vpop.f32.mrf.mxu0
        %v4522 = vadd.f32 %v1285, %v4521
        %4523 = vdwg.mxu0
        %v4524 = vtanh.pop %v4333
        %v4525 = vtanh.pop %v4336
        %v4526 = vtanh.pop %v4339
        %v4527 = vtanh.pop %v4342
        %v4528 = vtanh.pop %v4345
        %v4529 = vtanh.pop %v4348
        %v4530 = vtanh.pop %v4351
        %v4531 = vtanh.pop %v4354
        %v4532 = vtanh.pop %v4357
        %v4533 = vtanh.pop %v4360
        %v4534 = vtanh.pop %v4363
        %v4535 = vtanh.pop %v4366
        %v4536 = vtanh.pop %v4369
        %v4537 = vtanh.pop %v4372
        %v4538 = vtanh.pop %v4375
        %v4539 = vtanh.pop %v4378
        %v4540 = vtanh.pop %v4381
        %v4541 = vtanh.pop %v4384
        %v4542 = vtanh.pop %v4387
        %v4543 = vtanh.pop %v4390
        %v4544 = vtanh.pop %v4393
        %v4545 = vtanh.pop %v4396
        %v4546 = vtanh.pop %v4399
        %v4547 = vtanh.pop %v4402
        %v4548 = vtanh.pop %v4405
        %v4549 = vtanh.pop %v4408
        %v4550 = vtanh.pop %v4411
        %v4551 = vtanh.pop %v4414
        %v4552 = vtanh.pop %v4417
        %v4553 = vtanh.pop %v4420
        %v4554 = vtanh.pop %v4423
        %v4555 = vtanh.pop %v4426
        %v4556 = vtanh.pop %v4429
        %v4557 = vtanh.pop %v4432
        %v4558 = vtanh.pop %v4435
        %v4559 = vtanh.pop %v4438
        %v4560 = vtanh.pop %v4441
        %v4561 = vtanh.pop %v4444
        %v4562 = vtanh.pop %v4447
        %v4563 = vtanh.pop %v4450
        %v4564 = vtanh.pop %v4453
        %v4565 = vtanh.pop %v4456
        %v4566 = vtanh.pop %v4459
        %v4567 = vtanh.pop %v4462
        %v4568 = vtanh.pop %v4465
        %v4569 = vtanh.pop %v4468
        %v4570 = vtanh.pop %v4471
        %v4571 = vtanh.pop %v4474
        %v4572 = vtanh.pop %v4477
        %v4573 = vtanh.pop %v4480
        %v4574 = vtanh.pop %v4483
        %v4575 = vtanh.pop %v4486
        %v4576 = vtanh.pop %v4489
        %v4577 = vtanh.pop %v4492
        %v4578 = vtanh.pop %v4495
        %v4579 = vtanh.pop %v4498
        %v4580 = vtanh.pop %v4501
        %v4581 = vtanh.pop %v4504
        %v4582 = vtanh.pop %v4507
        %v4583 = vtanh.pop %v4510
        %v4584 = vtanh.pop %v4513
        %v4585 = vtanh.pop %v4516
        %v4586 = vtanh.pop %v4519
        %v4587 = vtanh.pop %v4522
        %v4588 = vld [vmem:[%s8] sm:$0xff]
        %v4589 = vld [vmem:[%s9] sm:$0x1]
        %v4591 = vperm.slane %v4589, 0
        %v4594 = vsel %vm1287, %v4524, 0
        %v4597 = vsel %vm1287, %v4525, 0
        %v4600 = vsel %vm1287, %v4526, 0
        %v4603 = vsel %vm1287, %v4527, 0
        %v4606 = vsel %vm1287, %v4528, 0
        %v4609 = vsel %vm1287, %v4529, 0
        %v4612 = vsel %vm1287, %v4530, 0
        %v4615 = vsel %vm1287, %v4531, 0
        %v4618 = vsel %vm1287, %v4532, 0
        %v4621 = vsel %vm1287, %v4533, 0
        %v4624 = vsel %vm1287, %v4534, 0
        %v4627 = vsel %vm1287, %v4535, 0
        %v4630 = vsel %vm1287, %v4536, 0
        %v4633 = vsel %vm1287, %v4537, 0
        %v4636 = vsel %vm1287, %v4538, 0
        %v4639 = vsel %vm1287, %v4539, 0
        %v4642 = vsel %vm1287, %v4540, 0
        %v4645 = vsel %vm1287, %v4541, 0
        %v4648 = vsel %vm1287, %v4542, 0
        %v4651 = vsel %vm1287, %v4543, 0
        %v4654 = vsel %vm1287, %v4544, 0
        %v4657 = vsel %vm1287, %v4545, 0
        %v4660 = vsel %vm1287, %v4546, 0
        %v4663 = vsel %vm1287, %v4547, 0
        %v4666 = vsel %vm1287, %v4548, 0
        %v4669 = vsel %vm1287, %v4549, 0
        %v4672 = vsel %vm1287, %v4550, 0
        %v4675 = vsel %vm1287, %v4551, 0
        %v4678 = vsel %vm1287, %v4552, 0
        %v4681 = vsel %vm1287, %v4553, 0
        %v4684 = vsel %vm1287, %v4554, 0
        %v4687 = vsel %vm1287, %v4555, 0
        %v4690 = vsel %vm1287, %v4556, 0
        %v4693 = vsel %vm1287, %v4557, 0
        %v4696 = vsel %vm1287, %v4558, 0
        %v4699 = vsel %vm1287, %v4559, 0
        %v4702 = vsel %vm1287, %v4560, 0
        %v4705 = vsel %vm1287, %v4561, 0
        %v4708 = vsel %vm1287, %v4562, 0
        %v4711 = vsel %vm1287, %v4563, 0
        %v4714 = vsel %vm1287, %v4564, 0
        %v4717 = vsel %vm1287, %v4565, 0
        %v4720 = vsel %vm1287, %v4566, 0
        %v4723 = vsel %vm1287, %v4567, 0
        %v4726 = vsel %vm1287, %v4568, 0
        %v4729 = vsel %vm1287, %v4569, 0
        %v4732 = vsel %vm1287, %v4570, 0
        %v4735 = vsel %vm1287, %v4571, 0
        %v4738 = vsel %vm1287, %v4572, 0
        %v4741 = vsel %vm1287, %v4573, 0
        %v4744 = vsel %vm1287, %v4574, 0
        %v4747 = vsel %vm1287, %v4575, 0
        %v4750 = vsel %vm1287, %v4576, 0
        %v4753 = vsel %vm1287, %v4577, 0
        %v4756 = vsel %vm1287, %v4578, 0
        %v4759 = vsel %vm1287, %v4579, 0
        %v4762 = vsel %vm1287, %v4580, 0
        %v4765 = vsel %vm1287, %v4581, 0
        %v4768 = vsel %vm1287, %v4582, 0
        %v4771 = vsel %vm1287, %v4583, 0
        %v4774 = vsel %vm1287, %v4584, 0
        %v4777 = vsel %vm1287, %v4585, 0
        %v4780 = vsel %vm1287, %v4586, 0
        %v4783 = vsel %vm1287, %v4587, 0
        %4785 = vmatpush.msra.mxu0 0.0
        %4786 = vmatpush.msra.mxu0 0.0
        %4787 = vmatpush.msra.mxu0 0.0
        %4788 = vmatpush.msra.mxu0 0.0
        %4789 = vmatpush.msra.mxu0 0.0
        %4790 = vmatpush.msra.mxu0 0.0
        %4791 = vmatpush.msra.mxu0 0.0
        %4792 = vmatpush.msra.mxu0 0.0
        %4793 = vmatpush.msra.mxu0 0.0
        %4794 = vmatpush.msra.mxu0 0.0
        %4795 = vmatpush.msra.mxu0 0.0
        %4796 = vmatpush.msra.mxu0 0.0
        %4797 = vmatpush.msra.mxu0 0.0
        %4798 = vmatpush.msra.mxu0 0.0
        %4799 = vmatpush.msra.mxu0 0.0
        %4800 = vmatpush.msra.mxu0 %v4588
        %4801 = vmatmul.f32.gmra.mxu0 %v4594
        %v4802 = vpop.f32.mrf.mxu0
        %v4803 = vadd.f32 %v4591, %v4802
        %4804 = vmatmul.f32.gmra.mxu0 %v4597
        %v4805 = vpop.f32.mrf.mxu0
        %v4806 = vadd.f32 %v4591, %v4805
        %4807 = vmatmul.f32.gmra.mxu0 %v4600
        %v4808 = vpop.f32.mrf.mxu0
        %v4809 = vadd.f32 %v4591, %v4808
        %4810 = vmatmul.f32.gmra.mxu0 %v4603
        %v4811 = vpop.f32.mrf.mxu0
        %v4812 = vadd.f32 %v4591, %v4811
        %4813 = vmatmul.f32.gmra.mxu0 %v4606
        %v4814 = vpop.f32.mrf.mxu0
        %v4815 = vadd.f32 %v4591, %v4814
        %4816 = vmatmul.f32.gmra.mxu0 %v4609
        %v4817 = vpop.f32.mrf.mxu0
        %v4818 = vadd.f32 %v4591, %v4817
        %4819 = vmatmul.f32.gmra.mxu0 %v4612
        %v4820 = vpop.f32.mrf.mxu0
        %v4821 = vadd.f32 %v4591, %v4820
        %4822 = vmatmul.f32.gmra.mxu0 %v4615
        %v4823 = vpop.f32.mrf.mxu0
        %v4824 = vadd.f32 %v4591, %v4823
        %4825 = vmatmul.f32.gmra.mxu0 %v4618
        %v4826 = vpop.f32.mrf.mxu0
        %v4827 = vadd.f32 %v4591, %v4826
        %4828 = vmatmul.f32.gmra.mxu0 %v4621
        %v4829 = vpop.f32.mrf.mxu0
        %v4830 = vadd.f32 %v4591, %v4829
        %4831 = vmatmul.f32.gmra.mxu0 %v4624
        %v4832 = vpop.f32.mrf.mxu0
        %v4833 = vadd.f32 %v4591, %v4832
        %4834 = vmatmul.f32.gmra.mxu0 %v4627
        %v4835 = vpop.f32.mrf.mxu0
        %v4836 = vadd.f32 %v4591, %v4835
        %4837 = vmatmul.f32.gmra.mxu0 %v4630
        %v4838 = vpop.f32.mrf.mxu0
        %v4839 = vadd.f32 %v4591, %v4838
        %4840 = vmatmul.f32.gmra.mxu0 %v4633
        %v4841 = vpop.f32.mrf.mxu0
        %v4842 = vadd.f32 %v4591, %v4841
        %4843 = vmatmul.f32.gmra.mxu0 %v4636
        %v4844 = vpop.f32.mrf.mxu0
        %v4845 = vadd.f32 %v4591, %v4844
        %4846 = vmatmul.f32.gmra.mxu0 %v4639
        %v4847 = vpop.f32.mrf.mxu0
        %v4848 = vadd.f32 %v4591, %v4847
        %4849 = vmatmul.f32.gmra.mxu0 %v4642
        %v4850 = vpop.f32.mrf.mxu0
        %v4851 = vadd.f32 %v4591, %v4850
        %4852 = vmatmul.f32.gmra.mxu0 %v4645
        %v4853 = vpop.f32.mrf.mxu0
        %v4854 = vadd.f32 %v4591, %v4853
        %4855 = vmatmul.f32.gmra.mxu0 %v4648
        %v4856 = vpop.f32.mrf.mxu0
        %v4857 = vadd.f32 %v4591, %v4856
        %4858 = vmatmul.f32.gmra.mxu0 %v4651
        %v4859 = vpop.f32.mrf.mxu0
        %v4860 = vadd.f32 %v4591, %v4859
        %4861 = vmatmul.f32.gmra.mxu0 %v4654
        %v4862 = vpop.f32.mrf.mxu0
        %v4863 = vadd.f32 %v4591, %v4862
        %4864 = vmatmul.f32.gmra.mxu0 %v4657
        %v4865 = vpop.f32.mrf.mxu0
        %v4866 = vadd.f32 %v4591, %v4865
        %4867 = vmatmul.f32.gmra.mxu0 %v4660
        %v4868 = vpop.f32.mrf.mxu0
        %v4869 = vadd.f32 %v4591, %v4868
        %4870 = vmatmul.f32.gmra.mxu0 %v4663
        %v4871 = vpop.f32.mrf.mxu0
        %v4872 = vadd.f32 %v4591, %v4871
        %4873 = vmatmul.f32.gmra.mxu0 %v4666
        %v4874 = vpop.f32.mrf.mxu0
        %v4875 = vadd.f32 %v4591, %v4874
        %4876 = vmatmul.f32.gmra.mxu0 %v4669
        %v4877 = vpop.f32.mrf.mxu0
        %v4878 = vadd.f32 %v4591, %v4877
        %4879 = vmatmul.f32.gmra.mxu0 %v4672
        %v4880 = vpop.f32.mrf.mxu0
        %v4881 = vadd.f32 %v4591, %v4880
        %4882 = vmatmul.f32.gmra.mxu0 %v4675
        %v4883 = vpop.f32.mrf.mxu0
        %v4884 = vadd.f32 %v4591, %v4883
        %4885 = vmatmul.f32.gmra.mxu0 %v4678
        %v4886 = vpop.f32.mrf.mxu0
        %v4887 = vadd.f32 %v4591, %v4886
        %4888 = vmatmul.f32.gmra.mxu0 %v4681
        %v4889 = vpop.f32.mrf.mxu0
        %v4890 = vadd.f32 %v4591, %v4889
        %4891 = vmatmul.f32.gmra.mxu0 %v4684
        %v4892 = vpop.f32.mrf.mxu0
        %v4893 = vadd.f32 %v4591, %v4892
        %4894 = vmatmul.f32.gmra.mxu0 %v4687
        %v4895 = vpop.f32.mrf.mxu0
        %v4896 = vadd.f32 %v4591, %v4895
        %4897 = vmatmul.f32.gmra.mxu0 %v4690
        %v4898 = vpop.f32.mrf.mxu0
        %v4899 = vadd.f32 %v4591, %v4898
        %4900 = vmatmul.f32.gmra.mxu0 %v4693
        %v4901 = vpop.f32.mrf.mxu0
        %v4902 = vadd.f32 %v4591, %v4901
        %4903 = vmatmul.f32.gmra.mxu0 %v4696
        %v4904 = vpop.f32.mrf.mxu0
        %v4905 = vadd.f32 %v4591, %v4904
        %4906 = vmatmul.f32.gmra.mxu0 %v4699
        %v4907 = vpop.f32.mrf.mxu0
        %v4908 = vadd.f32 %v4591, %v4907
        %4909 = vmatmul.f32.gmra.mxu0 %v4702
        %v4910 = vpop.f32.mrf.mxu0
        %v4911 = vadd.f32 %v4591, %v4910
        %4912 = vmatmul.f32.gmra.mxu0 %v4705
        %v4913 = vpop.f32.mrf.mxu0
        %v4914 = vadd.f32 %v4591, %v4913
        %4915 = vmatmul.f32.gmra.mxu0 %v4708
        %v4916 = vpop.f32.mrf.mxu0
        %v4917 = vadd.f32 %v4591, %v4916
        %4918 = vmatmul.f32.gmra.mxu0 %v4711
        %v4919 = vpop.f32.mrf.mxu0
        %v4920 = vadd.f32 %v4591, %v4919
        %4921 = vmatmul.f32.gmra.mxu0 %v4714
        %v4922 = vpop.f32.mrf.mxu0
        %v4923 = vadd.f32 %v4591, %v4922
        %4924 = vmatmul.f32.gmra.mxu0 %v4717
        %v4925 = vpop.f32.mrf.mxu0
        %v4926 = vadd.f32 %v4591, %v4925
        %4927 = vmatmul.f32.gmra.mxu0 %v4720
        %v4928 = vpop.f32.mrf.mxu0
        %v4929 = vadd.f32 %v4591, %v4928
        %4930 = vmatmul.f32.gmra.mxu0 %v4723
        %v4931 = vpop.f32.mrf.mxu0
        %v4932 = vadd.f32 %v4591, %v4931
        %4933 = vmatmul.f32.gmra.mxu0 %v4726
        %v4934 = vpop.f32.mrf.mxu0
        %v4935 = vadd.f32 %v4591, %v4934
        %4936 = vmatmul.f32.gmra.mxu0 %v4729
        %v4937 = vpop.f32.mrf.mxu0
        %v4938 = vadd.f32 %v4591, %v4937
        %4939 = vmatmul.f32.gmra.mxu0 %v4732
        %v4940 = vpop.f32.mrf.mxu0
        %v4941 = vadd.f32 %v4591, %v4940
        %4942 = vmatmul.f32.gmra.mxu0 %v4735
        %v4943 = vpop.f32.mrf.mxu0
        %v4944 = vadd.f32 %v4591, %v4943
        %4945 = vmatmul.f32.gmra.mxu0 %v4738
        %v4946 = vpop.f32.mrf.mxu0
        %v4947 = vadd.f32 %v4591, %v4946
        %4948 = vmatmul.f32.gmra.mxu0 %v4741
        %v4949 = vpop.f32.mrf.mxu0
        %v4950 = vadd.f32 %v4591, %v4949
        %4951 = vmatmul.f32.gmra.mxu0 %v4744
        %v4952 = vpop.f32.mrf.mxu0
        %v4953 = vadd.f32 %v4591, %v4952
        %4954 = vmatmul.f32.gmra.mxu0 %v4747
        %v4955 = vpop.f32.mrf.mxu0
        %v4956 = vadd.f32 %v4591, %v4955
        %4957 = vmatmul.f32.gmra.mxu0 %v4750
        %v4958 = vpop.f32.mrf.mxu0
        %v4959 = vadd.f32 %v4591, %v4958
        %4960 = vmatmul.f32.gmra.mxu0 %v4753
        %v4961 = vpop.f32.mrf.mxu0
        %v4962 = vadd.f32 %v4591, %v4961
        %4963 = vmatmul.f32.gmra.mxu0 %v4756
        %v4964 = vpop.f32.mrf.mxu0
        %v4965 = vadd.f32 %v4591, %v4964
        %4966 = vmatmul.f32.gmra.mxu0 %v4759
        %v4967 = vpop.f32.mrf.mxu0
        %v4968 = vadd.f32 %v4591, %v4967
        %4969 = vmatmul.f32.gmra.mxu0 %v4762
        %v4970 = vpop.f32.mrf.mxu0
        %v4971 = vadd.f32 %v4591, %v4970
        %4972 = vmatmul.f32.gmra.mxu0 %v4765
        %v4973 = vpop.f32.mrf.mxu0
        %v4974 = vadd.f32 %v4591, %v4973
        %4975 = vmatmul.f32.gmra.mxu0 %v4768
        %v4976 = vpop.f32.mrf.mxu0
        %v4977 = vadd.f32 %v4591, %v4976
        %4978 = vmatmul.f32.gmra.mxu0 %v4771
        %v4979 = vpop.f32.mrf.mxu0
        %v4980 = vadd.f32 %v4591, %v4979
        %4981 = vmatmul.f32.gmra.mxu0 %v4774
        %v4982 = vpop.f32.mrf.mxu0
        %v4983 = vadd.f32 %v4591, %v4982
        %4984 = vmatmul.f32.gmra.mxu0 %v4777
        %v4985 = vpop.f32.mrf.mxu0
        %v4986 = vadd.f32 %v4591, %v4985
        %4987 = vmatmul.f32.gmra.mxu0 %v4780
        %v4988 = vpop.f32.mrf.mxu0
        %v4989 = vadd.f32 %v4591, %v4988
        %4990 = vmatmul.f32.gmra.mxu0 %v4783
        %v4991 = vpop.f32.mrf.mxu0
        %v4992 = vadd.f32 %v4591, %v4991
        %4993 = vdwg.mxu0
        %v4994 = vtanh.pop %v4803
        %v4995 = vtanh.pop %v4806
        %v4996 = vtanh.pop %v4809
        %v4997 = vtanh.pop %v4812
        %v4998 = vtanh.pop %v4815
        %v4999 = vtanh.pop %v4818
        %v5000 = vtanh.pop %v4821
        %v5001 = vtanh.pop %v4824
        %v5002 = vtanh.pop %v4827
        %v5003 = vtanh.pop %v4830
        %v5004 = vtanh.pop %v4833
        %v5005 = vtanh.pop %v4836
        %v5006 = vtanh.pop %v4839
        %v5007 = vtanh.pop %v4842
        %v5008 = vtanh.pop %v4845
        %v5009 = vtanh.pop %v4848
        %v5010 = vtanh.pop %v4851
        %v5011 = vtanh.pop %v4854
        %v5012 = vtanh.pop %v4857
        %v5013 = vtanh.pop %v4860
        %v5014 = vtanh.pop %v4863
        %v5015 = vtanh.pop %v4866
        %v5016 = vtanh.pop %v4869
        %v5017 = vtanh.pop %v4872
        %v5018 = vtanh.pop %v4875
        %v5019 = vtanh.pop %v4878
        %v5020 = vtanh.pop %v4881
        %v5021 = vtanh.pop %v4884
        %v5022 = vtanh.pop %v4887
        %v5023 = vtanh.pop %v4890
        %v5024 = vtanh.pop %v4893
        %v5025 = vtanh.pop %v4896
        %v5026 = vtanh.pop %v4899
        %v5027 = vtanh.pop %v4902
        %v5028 = vtanh.pop %v4905
        %v5029 = vtanh.pop %v4908
        %v5030 = vtanh.pop %v4911
        %v5031 = vtanh.pop %v4914
        %v5032 = vtanh.pop %v4917
        %v5033 = vtanh.pop %v4920
        %v5034 = vtanh.pop %v4923
        %v5035 = vtanh.pop %v4926
        %v5036 = vtanh.pop %v4929
        %v5037 = vtanh.pop %v4932
        %v5038 = vtanh.pop %v4935
        %v5039 = vtanh.pop %v4938
        %v5040 = vtanh.pop %v4941
        %v5041 = vtanh.pop %v4944
        %v5042 = vtanh.pop %v4947
        %v5043 = vtanh.pop %v4950
        %v5044 = vtanh.pop %v4953
        %v5045 = vtanh.pop %v4956
        %v5046 = vtanh.pop %v4959
        %v5047 = vtanh.pop %v4962
        %v5048 = vtanh.pop %v4965
        %v5049 = vtanh.pop %v4968
        %v5050 = vtanh.pop %v4971
        %v5051 = vtanh.pop %v4974
        %v5052 = vtanh.pop %v4977
        %v5053 = vtanh.pop %v4980
        %v5054 = vtanh.pop %v4983
        %v5055 = vtanh.pop %v4986
        %v5056 = vtanh.pop %v4989
        %v5057 = vtanh.pop %v4992
        %5058 = vmatpush.msra.mxu0 0.0
        %5059 = vmatpush.msra.mxu0 0.0
        %5060 = vmatpush.msra.mxu0 0.0
        %5061 = vmatpush.msra.mxu0 0.0
        %5062 = vmatpush.msra.mxu0 0.0
        %5063 = vmatpush.msra.mxu0 0.0
        %5064 = vmatpush.msra.mxu0 0.0
        %5065 = vmatpush.msra.mxu0 0.0
        %5066 = vmatpush.msra.mxu0 0.0
        %5067 = vmatpush.msra.mxu0 0.0
        %5068 = vmatpush.msra.mxu0 0.0
        %5069 = vmatpush.msra.mxu0 0.0
        %5070 = vmatpush.msra.mxu0 0.0
        %5071 = vmatpush.msra.mxu0 0.0
        %5072 = vmatpush.msra.mxu0 0.0
        %5073 = vmatpush.msra.mxu0 %v2223
        %5074 = vmatmul.f32.gmra.mxu0 %v4124
        %v5075 = vpop.f32.mrf.mxu0
        %v5076 = vadd.f32 %v2226, %v5075
        %5077 = vmatmul.f32.gmra.mxu0 %v4127
        %v5078 = vpop.f32.mrf.mxu0
        %v5079 = vadd.f32 %v2226, %v5078
        %5080 = vmatmul.f32.gmra.mxu0 %v4130
        %v5081 = vpop.f32.mrf.mxu0
        %v5082 = vadd.f32 %v2226, %v5081
        %5083 = vmatmul.f32.gmra.mxu0 %v4133
        %v5084 = vpop.f32.mrf.mxu0
        %v5085 = vadd.f32 %v2226, %v5084
        %5086 = vmatmul.f32.gmra.mxu0 %v4136
        %v5087 = vpop.f32.mrf.mxu0
        %v5088 = vadd.f32 %v2226, %v5087
        %5089 = vmatmul.f32.gmra.mxu0 %v4139
        %v5090 = vpop.f32.mrf.mxu0
        %v5091 = vadd.f32 %v2226, %v5090
        %5092 = vmatmul.f32.gmra.mxu0 %v4142
        %v5093 = vpop.f32.mrf.mxu0
        %v5094 = vadd.f32 %v2226, %v5093
        %5095 = vmatmul.f32.gmra.mxu0 %v4145
        %v5096 = vpop.f32.mrf.mxu0
        %v5097 = vadd.f32 %v2226, %v5096
        %5098 = vmatmul.f32.gmra.mxu0 %v4148
        %v5099 = vpop.f32.mrf.mxu0
        %v5100 = vadd.f32 %v2226, %v5099
        %5101 = vmatmul.f32.gmra.mxu0 %v4151
        %v5102 = vpop.f32.mrf.mxu0
        %v5103 = vadd.f32 %v2226, %v5102
        %5104 = vmatmul.f32.gmra.mxu0 %v4154
        %v5105 = vpop.f32.mrf.mxu0
        %v5106 = vadd.f32 %v2226, %v5105
        %5107 = vmatmul.f32.gmra.mxu0 %v4157
        %v5108 = vpop.f32.mrf.mxu0
        %v5109 = vadd.f32 %v2226, %v5108
        %5110 = vmatmul.f32.gmra.mxu0 %v4160
        %v5111 = vpop.f32.mrf.mxu0
        %v5112 = vadd.f32 %v2226, %v5111
        %5113 = vmatmul.f32.gmra.mxu0 %v4163
        %v5114 = vpop.f32.mrf.mxu0
        %v5115 = vadd.f32 %v2226, %v5114
        %5116 = vmatmul.f32.gmra.mxu0 %v4166
        %v5117 = vpop.f32.mrf.mxu0
        %v5118 = vadd.f32 %v2226, %v5117
        %5119 = vmatmul.f32.gmra.mxu0 %v4169
        %v5120 = vpop.f32.mrf.mxu0
        %v5121 = vadd.f32 %v2226, %v5120
        %5122 = vmatmul.f32.gmra.mxu0 %v4172
        %v5123 = vpop.f32.mrf.mxu0
        %v5124 = vadd.f32 %v2226, %v5123
        %5125 = vmatmul.f32.gmra.mxu0 %v4175
        %v5126 = vpop.f32.mrf.mxu0
        %v5127 = vadd.f32 %v2226, %v5126
        %5128 = vmatmul.f32.gmra.mxu0 %v4178
        %v5129 = vpop.f32.mrf.mxu0
        %v5130 = vadd.f32 %v2226, %v5129
        %5131 = vmatmul.f32.gmra.mxu0 %v4181
        %v5132 = vpop.f32.mrf.mxu0
        %v5133 = vadd.f32 %v2226, %v5132
        %5134 = vmatmul.f32.gmra.mxu0 %v4184
        %v5135 = vpop.f32.mrf.mxu0
        %v5136 = vadd.f32 %v2226, %v5135
        %5137 = vmatmul.f32.gmra.mxu0 %v4187
        %v5138 = vpop.f32.mrf.mxu0
        %v5139 = vadd.f32 %v2226, %v5138
        %5140 = vmatmul.f32.gmra.mxu0 %v4190
        %v5141 = vpop.f32.mrf.mxu0
        %v5142 = vadd.f32 %v2226, %v5141
        %5143 = vmatmul.f32.gmra.mxu0 %v4193
        %v5144 = vpop.f32.mrf.mxu0
        %v5145 = vadd.f32 %v2226, %v5144
        %5146 = vmatmul.f32.gmra.mxu0 %v4196
        %v5147 = vpop.f32.mrf.mxu0
        %v5148 = vadd.f32 %v2226, %v5147
        %5149 = vmatmul.f32.gmra.mxu0 %v4199
        %v5150 = vpop.f32.mrf.mxu0
        %v5151 = vadd.f32 %v2226, %v5150
        %5152 = vmatmul.f32.gmra.mxu0 %v4202
        %v5153 = vpop.f32.mrf.mxu0
        %v5154 = vadd.f32 %v2226, %v5153
        %5155 = vmatmul.f32.gmra.mxu0 %v4205
        %v5156 = vpop.f32.mrf.mxu0
        %v5157 = vadd.f32 %v2226, %v5156
        %5158 = vmatmul.f32.gmra.mxu0 %v4208
        %v5159 = vpop.f32.mrf.mxu0
        %v5160 = vadd.f32 %v2226, %v5159
        %5161 = vmatmul.f32.gmra.mxu0 %v4211
        %v5162 = vpop.f32.mrf.mxu0
        %v5163 = vadd.f32 %v2226, %v5162
        %5164 = vmatmul.f32.gmra.mxu0 %v4214
        %v5165 = vpop.f32.mrf.mxu0
        %v5166 = vadd.f32 %v2226, %v5165
        %5167 = vmatmul.f32.gmra.mxu0 %v4217
        %v5168 = vpop.f32.mrf.mxu0
        %v5169 = vadd.f32 %v2226, %v5168
        %5170 = vmatmul.f32.gmra.mxu0 %v4220
        %v5171 = vpop.f32.mrf.mxu0
        %v5172 = vadd.f32 %v2226, %v5171
        %5173 = vmatmul.f32.gmra.mxu0 %v4223
        %v5174 = vpop.f32.mrf.mxu0
        %v5175 = vadd.f32 %v2226, %v5174
        %5176 = vmatmul.f32.gmra.mxu0 %v4226
        %v5177 = vpop.f32.mrf.mxu0
        %v5178 = vadd.f32 %v2226, %v5177
        %5179 = vmatmul.f32.gmra.mxu0 %v4229
        %v5180 = vpop.f32.mrf.mxu0
        %v5181 = vadd.f32 %v2226, %v5180
        %5182 = vmatmul.f32.gmra.mxu0 %v4232
        %v5183 = vpop.f32.mrf.mxu0
        %v5184 = vadd.f32 %v2226, %v5183
        %5185 = vmatmul.f32.gmra.mxu0 %v4235
        %v5186 = vpop.f32.mrf.mxu0
        %v5187 = vadd.f32 %v2226, %v5186
        %5188 = vmatmul.f32.gmra.mxu0 %v4238
        %v5189 = vpop.f32.mrf.mxu0
        %v5190 = vadd.f32 %v2226, %v5189
        %5191 = vmatmul.f32.gmra.mxu0 %v4241
        %v5192 = vpop.f32.mrf.mxu0
        %v5193 = vadd.f32 %v2226, %v5192
        %5194 = vmatmul.f32.gmra.mxu0 %v4244
        %v5195 = vpop.f32.mrf.mxu0
        %v5196 = vadd.f32 %v2226, %v5195
        %5197 = vmatmul.f32.gmra.mxu0 %v4247
        %v5198 = vpop.f32.mrf.mxu0
        %v5199 = vadd.f32 %v2226, %v5198
        %5200 = vmatmul.f32.gmra.mxu0 %v4250
        %v5201 = vpop.f32.mrf.mxu0
        %v5202 = vadd.f32 %v2226, %v5201
        %5203 = vmatmul.f32.gmra.mxu0 %v4253
        %v5204 = vpop.f32.mrf.mxu0
        %v5205 = vadd.f32 %v2226, %v5204
        %5206 = vmatmul.f32.gmra.mxu0 %v4256
        %v5207 = vpop.f32.mrf.mxu0
        %v5208 = vadd.f32 %v2226, %v5207
        %5209 = vmatmul.f32.gmra.mxu0 %v4259
        %v5210 = vpop.f32.mrf.mxu0
        %v5211 = vadd.f32 %v2226, %v5210
        %5212 = vmatmul.f32.gmra.mxu0 %v4262
        %v5213 = vpop.f32.mrf.mxu0
        %v5214 = vadd.f32 %v2226, %v5213
        %5215 = vmatmul.f32.gmra.mxu0 %v4265
        %v5216 = vpop.f32.mrf.mxu0
        %v5217 = vadd.f32 %v2226, %v5216
        %5218 = vmatmul.f32.gmra.mxu0 %v4268
        %v5219 = vpop.f32.mrf.mxu0
        %v5220 = vadd.f32 %v2226, %v5219
        %5221 = vmatmul.f32.gmra.mxu0 %v4271
        %v5222 = vpop.f32.mrf.mxu0
        %v5223 = vadd.f32 %v2226, %v5222
        %5224 = vmatmul.f32.gmra.mxu0 %v4274
        %v5225 = vpop.f32.mrf.mxu0
        %v5226 = vadd.f32 %v2226, %v5225
        %5227 = vmatmul.f32.gmra.mxu0 %v4277
        %v5228 = vpop.f32.mrf.mxu0
        %v5229 = vadd.f32 %v2226, %v5228
        %5230 = vmatmul.f32.gmra.mxu0 %v4280
        %v5231 = vpop.f32.mrf.mxu0
        %v5232 = vadd.f32 %v2226, %v5231
        %5233 = vmatmul.f32.gmra.mxu0 %v4283
        %v5234 = vpop.f32.mrf.mxu0
        %v5235 = vadd.f32 %v2226, %v5234
        %5236 = vmatmul.f32.gmra.mxu0 %v4286
        %v5237 = vpop.f32.mrf.mxu0
        %v5238 = vadd.f32 %v2226, %v5237
        %5239 = vmatmul.f32.gmra.mxu0 %v4289
        %v5240 = vpop.f32.mrf.mxu0
        %v5241 = vadd.f32 %v2226, %v5240
        %5242 = vmatmul.f32.gmra.mxu0 %v4292
        %v5243 = vpop.f32.mrf.mxu0
        %v5244 = vadd.f32 %v2226, %v5243
        %5245 = vmatmul.f32.gmra.mxu0 %v4295
        %v5246 = vpop.f32.mrf.mxu0
        %v5247 = vadd.f32 %v2226, %v5246
        %5248 = vmatmul.f32.gmra.mxu0 %v4298
        %v5249 = vpop.f32.mrf.mxu0
        %v5250 = vadd.f32 %v2226, %v5249
        %5251 = vmatmul.f32.gmra.mxu0 %v4301
        %v5252 = vpop.f32.mrf.mxu0
        %v5253 = vadd.f32 %v2226, %v5252
        %5254 = vmatmul.f32.gmra.mxu0 %v4304
        %v5255 = vpop.f32.mrf.mxu0
        %v5256 = vadd.f32 %v2226, %v5255
        %5257 = vmatmul.f32.gmra.mxu0 %v4307
        %v5258 = vpop.f32.mrf.mxu0
        %v5259 = vadd.f32 %v2226, %v5258
        %5260 = vmatmul.f32.gmra.mxu0 %v4310
        %v5261 = vpop.f32.mrf.mxu0
        %v5262 = vadd.f32 %v2226, %v5261
        %5263 = vmatmul.f32.gmra.mxu0 %v4313
        %v5264 = vpop.f32.mrf.mxu0
        %v5265 = vadd.f32 %v2226, %v5264
        %5266 = vdwg.mxu0
        %v5267 = vtanh.pop %v5076
        %v5268 = vtanh.pop %v5079
        %v5269 = vtanh.pop %v5082
        %v5270 = vtanh.pop %v5085
        %v5271 = vtanh.pop %v5088
        %v5272 = vtanh.pop %v5091
        %v5273 = vtanh.pop %v5094
        %v5274 = vtanh.pop %v5097
        %v5275 = vtanh.pop %v5100
        %v5276 = vtanh.pop %v5103
        %v5277 = vtanh.pop %v5106
        %v5278 = vtanh.pop %v5109
        %v5279 = vtanh.pop %v5112
        %v5280 = vtanh.pop %v5115
        %v5281 = vtanh.pop %v5118
        %v5282 = vtanh.pop %v5121
        %v5283 = vtanh.pop %v5124
        %v5284 = vtanh.pop %v5127
        %v5285 = vtanh.pop %v5130
        %v5286 = vtanh.pop %v5133
        %v5287 = vtanh.pop %v5136
        %v5288 = vtanh.pop %v5139
        %v5289 = vtanh.pop %v5142
        %v5290 = vtanh.pop %v5145
        %v5291 = vtanh.pop %v5148
        %v5292 = vtanh.pop %v5151
        %v5293 = vtanh.pop %v5154
        %v5294 = vtanh.pop %v5157
        %v5295 = vtanh.pop %v5160
        %v5296 = vtanh.pop %v5163
        %v5297 = vtanh.pop %v5166
        %v5298 = vtanh.pop %v5169
        %v5299 = vtanh.pop %v5172
        %v5300 = vtanh.pop %v5175
        %v5301 = vtanh.pop %v5178
        %v5302 = vtanh.pop %v5181
        %v5303 = vtanh.pop %v5184
        %v5304 = vtanh.pop %v5187
        %v5305 = vtanh.pop %v5190
        %v5306 = vtanh.pop %v5193
        %v5307 = vtanh.pop %v5196
        %v5308 = vtanh.pop %v5199
        %v5309 = vtanh.pop %v5202
        %v5310 = vtanh.pop %v5205
        %v5311 = vtanh.pop %v5208
        %v5312 = vtanh.pop %v5211
        %v5313 = vtanh.pop %v5214
        %v5314 = vtanh.pop %v5217
        %v5315 = vtanh.pop %v5220
        %v5316 = vtanh.pop %v5223
        %v5317 = vtanh.pop %v5226
        %v5318 = vtanh.pop %v5229
        %v5319 = vtanh.pop %v5232
        %v5320 = vtanh.pop %v5235
        %v5321 = vtanh.pop %v5238
        %v5322 = vtanh.pop %v5241
        %v5323 = vtanh.pop %v5244
        %v5324 = vtanh.pop %v5247
        %v5325 = vtanh.pop %v5250
        %v5326 = vtanh.pop %v5253
        %v5327 = vtanh.pop %v5256
        %v5328 = vtanh.pop %v5259
        %v5329 = vtanh.pop %v5262
        %v5330 = vtanh.pop %v5265
        %v5331 = vld [vmem:[%s12] sm:$0xff]
        %v5332 = vld [vmem:[%s13] sm:$0x1]
        %v5334 = vperm.slane %v5332, 0
        %v5337 = vsel %vm1287, %v5267, 0
        %v5340 = vsel %vm1287, %v5268, 0
        %v5343 = vsel %vm1287, %v5269, 0
        %v5346 = vsel %vm1287, %v5270, 0
        %v5349 = vsel %vm1287, %v5271, 0
        %v5352 = vsel %vm1287, %v5272, 0
        %v5355 = vsel %vm1287, %v5273, 0
        %v5358 = vsel %vm1287, %v5274, 0
        %v5361 = vsel %vm1287, %v5275, 0
        %v5364 = vsel %vm1287, %v5276, 0
        %v5367 = vsel %vm1287, %v5277, 0
        %v5370 = vsel %vm1287, %v5278, 0
        %v5373 = vsel %vm1287, %v5279, 0
        %v5376 = vsel %vm1287, %v5280, 0
        %v5379 = vsel %vm1287, %v5281, 0
        %v5382 = vsel %vm1287, %v5282, 0
        %v5385 = vsel %vm1287, %v5283, 0
        %v5388 = vsel %vm1287, %v5284, 0
        %v5391 = vsel %vm1287, %v5285, 0
        %v5394 = vsel %vm1287, %v5286, 0
        %v5397 = vsel %vm1287, %v5287, 0
        %v5400 = vsel %vm1287, %v5288, 0
        %v5403 = vsel %vm1287, %v5289, 0
        %v5406 = vsel %vm1287, %v5290, 0
        %v5409 = vsel %vm1287, %v5291, 0
        %v5412 = vsel %vm1287, %v5292, 0
        %v5415 = vsel %vm1287, %v5293, 0
        %v5418 = vsel %vm1287, %v5294, 0
        %v5421 = vsel %vm1287, %v5295, 0
        %v5424 = vsel %vm1287, %v5296, 0
        %v5427 = vsel %vm1287, %v5297, 0
        %v5430 = vsel %vm1287, %v5298, 0
        %v5433 = vsel %vm1287, %v5299, 0
        %v5436 = vsel %vm1287, %v5300, 0
        %v5439 = vsel %vm1287, %v5301, 0
        %v5442 = vsel %vm1287, %v5302, 0
        %v5445 = vsel %vm1287, %v5303, 0
        %v5448 = vsel %vm1287, %v5304, 0
        %v5451 = vsel %vm1287, %v5305, 0
        %v5454 = vsel %vm1287, %v5306, 0
        %v5457 = vsel %vm1287, %v5307, 0
        %v5460 = vsel %vm1287, %v5308, 0
        %v5463 = vsel %vm1287, %v5309, 0
        %v5466 = vsel %vm1287, %v5310, 0
        %v5469 = vsel %vm1287, %v5311, 0
        %v5472 = vsel %vm1287, %v5312, 0
        %v5475 = vsel %vm1287, %v5313, 0
        %v5478 = vsel %vm1287, %v5314, 0
        %v5481 = vsel %vm1287, %v5315, 0
        %v5484 = vsel %vm1287, %v5316, 0
        %v5487 = vsel %vm1287, %v5317, 0
        %v5490 = vsel %vm1287, %v5318, 0
        %v5493 = vsel %vm1287, %v5319, 0
        %v5496 = vsel %vm1287, %v5320, 0
        %v5499 = vsel %vm1287, %v5321, 0
        %v5502 = vsel %vm1287, %v5322, 0
        %v5505 = vsel %vm1287, %v5323, 0
        %v5508 = vsel %vm1287, %v5324, 0
        %v5511 = vsel %vm1287, %v5325, 0
        %v5514 = vsel %vm1287, %v5326, 0
        %v5517 = vsel %vm1287, %v5327, 0
        %v5520 = vsel %vm1287, %v5328, 0
        %v5523 = vsel %vm1287, %v5329, 0
        %v5526 = vsel %vm1287, %v5330, 0
        %5528 = vmatpush.msra.mxu0 0.0
        %5529 = vmatpush.msra.mxu0 0.0
        %5530 = vmatpush.msra.mxu0 0.0
        %5531 = vmatpush.msra.mxu0 0.0
        %5532 = vmatpush.msra.mxu0 0.0
        %5533 = vmatpush.msra.mxu0 0.0
        %5534 = vmatpush.msra.mxu0 0.0
        %5535 = vmatpush.msra.mxu0 0.0
        %5536 = vmatpush.msra.mxu0 0.0
        %5537 = vmatpush.msra.mxu0 0.0
        %5538 = vmatpush.msra.mxu0 0.0
        %5539 = vmatpush.msra.mxu0 0.0
        %5540 = vmatpush.msra.mxu0 0.0
        %5541 = vmatpush.msra.mxu0 0.0
        %5542 = vmatpush.msra.mxu0 0.0
        %5543 = vmatpush.msra.mxu0 %v5331
        %5544 = vmatmul.f32.gmra.mxu0 %v5337
        %v5545 = vpop.f32.mrf.mxu0
        %v5546 = vadd.f32 %v5334, %v5545
        %5547 = vmatmul.f32.gmra.mxu0 %v5340
        %v5548 = vpop.f32.mrf.mxu0
        %v5549 = vadd.f32 %v5334, %v5548
        %5550 = vmatmul.f32.gmra.mxu0 %v5343
        %v5551 = vpop.f32.mrf.mxu0
        %v5552 = vadd.f32 %v5334, %v5551
        %5553 = vmatmul.f32.gmra.mxu0 %v5346
        %v5554 = vpop.f32.mrf.mxu0
        %v5555 = vadd.f32 %v5334, %v5554
        %5556 = vmatmul.f32.gmra.mxu0 %v5349
        %v5557 = vpop.f32.mrf.mxu0
        %v5558 = vadd.f32 %v5334, %v5557
        %5559 = vmatmul.f32.gmra.mxu0 %v5352
        %v5560 = vpop.f32.mrf.mxu0
        %v5561 = vadd.f32 %v5334, %v5560
        %5562 = vmatmul.f32.gmra.mxu0 %v5355
        %v5563 = vpop.f32.mrf.mxu0
        %v5564 = vadd.f32 %v5334, %v5563
        %5565 = vmatmul.f32.gmra.mxu0 %v5358
        %v5566 = vpop.f32.mrf.mxu0
        %v5567 = vadd.f32 %v5334, %v5566
        %5568 = vmatmul.f32.gmra.mxu0 %v5361
        %v5569 = vpop.f32.mrf.mxu0
        %v5570 = vadd.f32 %v5334, %v5569
        %5571 = vmatmul.f32.gmra.mxu0 %v5364
        %v5572 = vpop.f32.mrf.mxu0
        %v5573 = vadd.f32 %v5334, %v5572
        %5574 = vmatmul.f32.gmra.mxu0 %v5367
        %v5575 = vpop.f32.mrf.mxu0
        %v5576 = vadd.f32 %v5334, %v5575
        %5577 = vmatmul.f32.gmra.mxu0 %v5370
        %v5578 = vpop.f32.mrf.mxu0
        %v5579 = vadd.f32 %v5334, %v5578
        %5580 = vmatmul.f32.gmra.mxu0 %v5373
        %v5581 = vpop.f32.mrf.mxu0
        %v5582 = vadd.f32 %v5334, %v5581
        %5583 = vmatmul.f32.gmra.mxu0 %v5376
        %v5584 = vpop.f32.mrf.mxu0
        %v5585 = vadd.f32 %v5334, %v5584
        %5586 = vmatmul.f32.gmra.mxu0 %v5379
        %v5587 = vpop.f32.mrf.mxu0
        %v5588 = vadd.f32 %v5334, %v5587
        %5589 = vmatmul.f32.gmra.mxu0 %v5382
        %v5590 = vpop.f32.mrf.mxu0
        %v5591 = vadd.f32 %v5334, %v5590
        %5592 = vmatmul.f32.gmra.mxu0 %v5385
        %v5593 = vpop.f32.mrf.mxu0
        %v5594 = vadd.f32 %v5334, %v5593
        %5595 = vmatmul.f32.gmra.mxu0 %v5388
        %v5596 = vpop.f32.mrf.mxu0
        %v5597 = vadd.f32 %v5334, %v5596
        %5598 = vmatmul.f32.gmra.mxu0 %v5391
        %v5599 = vpop.f32.mrf.mxu0
        %v5600 = vadd.f32 %v5334, %v5599
        %5601 = vmatmul.f32.gmra.mxu0 %v5394
        %v5602 = vpop.f32.mrf.mxu0
        %v5603 = vadd.f32 %v5334, %v5602
        %5604 = vmatmul.f32.gmra.mxu0 %v5397
        %v5605 = vpop.f32.mrf.mxu0
        %v5606 = vadd.f32 %v5334, %v5605
        %5607 = vmatmul.f32.gmra.mxu0 %v5400
        %v5608 = vpop.f32.mrf.mxu0
        %v5609 = vadd.f32 %v5334, %v5608
        %5610 = vmatmul.f32.gmra.mxu0 %v5403
        %v5611 = vpop.f32.mrf.mxu0
        %v5612 = vadd.f32 %v5334, %v5611
        %5613 = vmatmul.f32.gmra.mxu0 %v5406
        %v5614 = vpop.f32.mrf.mxu0
        %v5615 = vadd.f32 %v5334, %v5614
        %5616 = vmatmul.f32.gmra.mxu0 %v5409
        %v5617 = vpop.f32.mrf.mxu0
        %v5618 = vadd.f32 %v5334, %v5617
        %5619 = vmatmul.f32.gmra.mxu0 %v5412
        %v5620 = vpop.f32.mrf.mxu0
        %v5621 = vadd.f32 %v5334, %v5620
        %5622 = vmatmul.f32.gmra.mxu0 %v5415
        %v5623 = vpop.f32.mrf.mxu0
        %v5624 = vadd.f32 %v5334, %v5623
        %5625 = vmatmul.f32.gmra.mxu0 %v5418
        %v5626 = vpop.f32.mrf.mxu0
        %v5627 = vadd.f32 %v5334, %v5626
        %5628 = vmatmul.f32.gmra.mxu0 %v5421
        %v5629 = vpop.f32.mrf.mxu0
        %v5630 = vadd.f32 %v5334, %v5629
        %5631 = vmatmul.f32.gmra.mxu0 %v5424
        %v5632 = vpop.f32.mrf.mxu0
        %v5633 = vadd.f32 %v5334, %v5632
        %5634 = vmatmul.f32.gmra.mxu0 %v5427
        %v5635 = vpop.f32.mrf.mxu0
        %v5636 = vadd.f32 %v5334, %v5635
        %5637 = vmatmul.f32.gmra.mxu0 %v5430
        %v5638 = vpop.f32.mrf.mxu0
        %v5639 = vadd.f32 %v5334, %v5638
        %5640 = vmatmul.f32.gmra.mxu0 %v5433
        %v5641 = vpop.f32.mrf.mxu0
        %v5642 = vadd.f32 %v5334, %v5641
        %5643 = vmatmul.f32.gmra.mxu0 %v5436
        %v5644 = vpop.f32.mrf.mxu0
        %v5645 = vadd.f32 %v5334, %v5644
        %5646 = vmatmul.f32.gmra.mxu0 %v5439
        %v5647 = vpop.f32.mrf.mxu0
        %v5648 = vadd.f32 %v5334, %v5647
        %5649 = vmatmul.f32.gmra.mxu0 %v5442
        %v5650 = vpop.f32.mrf.mxu0
        %v5651 = vadd.f32 %v5334, %v5650
        %5652 = vmatmul.f32.gmra.mxu0 %v5445
        %v5653 = vpop.f32.mrf.mxu0
        %v5654 = vadd.f32 %v5334, %v5653
        %5655 = vmatmul.f32.gmra.mxu0 %v5448
        %v5656 = vpop.f32.mrf.mxu0
        %v5657 = vadd.f32 %v5334, %v5656
        %5658 = vmatmul.f32.gmra.mxu0 %v5451
        %v5659 = vpop.f32.mrf.mxu0
        %v5660 = vadd.f32 %v5334, %v5659
        %5661 = vmatmul.f32.gmra.mxu0 %v5454
        %v5662 = vpop.f32.mrf.mxu0
        %v5663 = vadd.f32 %v5334, %v5662
        %5664 = vmatmul.f32.gmra.mxu0 %v5457
        %v5665 = vpop.f32.mrf.mxu0
        %v5666 = vadd.f32 %v5334, %v5665
        %5667 = vmatmul.f32.gmra.mxu0 %v5460
        %v5668 = vpop.f32.mrf.mxu0
        %v5669 = vadd.f32 %v5334, %v5668
        %5670 = vmatmul.f32.gmra.mxu0 %v5463
        %v5671 = vpop.f32.mrf.mxu0
        %v5672 = vadd.f32 %v5334, %v5671
        %5673 = vmatmul.f32.gmra.mxu0 %v5466
        %v5674 = vpop.f32.mrf.mxu0
        %v5675 = vadd.f32 %v5334, %v5674
        %5676 = vmatmul.f32.gmra.mxu0 %v5469
        %v5677 = vpop.f32.mrf.mxu0
        %v5678 = vadd.f32 %v5334, %v5677
        %5679 = vmatmul.f32.gmra.mxu0 %v5472
        %v5680 = vpop.f32.mrf.mxu0
        %v5681 = vadd.f32 %v5334, %v5680
        %5682 = vmatmul.f32.gmra.mxu0 %v5475
        %v5683 = vpop.f32.mrf.mxu0
        %v5684 = vadd.f32 %v5334, %v5683
        %5685 = vmatmul.f32.gmra.mxu0 %v5478
        %v5686 = vpop.f32.mrf.mxu0
        %v5687 = vadd.f32 %v5334, %v5686
        %5688 = vmatmul.f32.gmra.mxu0 %v5481
        %v5689 = vpop.f32.mrf.mxu0
        %v5690 = vadd.f32 %v5334, %v5689
        %5691 = vmatmul.f32.gmra.mxu0 %v5484
        %v5692 = vpop.f32.mrf.mxu0
        %v5693 = vadd.f32 %v5334, %v5692
        %5694 = vmatmul.f32.gmra.mxu0 %v5487
        %v5695 = vpop.f32.mrf.mxu0
        %v5696 = vadd.f32 %v5334, %v5695
        %5697 = vmatmul.f32.gmra.mxu0 %v5490
        %v5698 = vpop.f32.mrf.mxu0
        %v5699 = vadd.f32 %v5334, %v5698
        %5700 = vmatmul.f32.gmra.mxu0 %v5493
        %v5701 = vpop.f32.mrf.mxu0
        %v5702 = vadd.f32 %v5334, %v5701
        %5703 = vmatmul.f32.gmra.mxu0 %v5496
        %v5704 = vpop.f32.mrf.mxu0
        %v5705 = vadd.f32 %v5334, %v5704
        %5706 = vmatmul.f32.gmra.mxu0 %v5499
        %v5707 = vpop.f32.mrf.mxu0
        %v5708 = vadd.f32 %v5334, %v5707
        %5709 = vmatmul.f32.gmra.mxu0 %v5502
        %v5710 = vpop.f32.mrf.mxu0
        %v5711 = vadd.f32 %v5334, %v5710
        %5712 = vmatmul.f32.gmra.mxu0 %v5505
        %v5713 = vpop.f32.mrf.mxu0
        %v5714 = vadd.f32 %v5334, %v5713
        %5715 = vmatmul.f32.gmra.mxu0 %v5508
        %v5716 = vpop.f32.mrf.mxu0
        %v5717 = vadd.f32 %v5334, %v5716
        %5718 = vmatmul.f32.gmra.mxu0 %v5511
        %v5719 = vpop.f32.mrf.mxu0
        %v5720 = vadd.f32 %v5334, %v5719
        %5721 = vmatmul.f32.gmra.mxu0 %v5514
        %v5722 = vpop.f32.mrf.mxu0
        %v5723 = vadd.f32 %v5334, %v5722
        %5724 = vmatmul.f32.gmra.mxu0 %v5517
        %v5725 = vpop.f32.mrf.mxu0
        %v5726 = vadd.f32 %v5334, %v5725
        %5727 = vmatmul.f32.gmra.mxu0 %v5520
        %v5728 = vpop.f32.mrf.mxu0
        %v5729 = vadd.f32 %v5334, %v5728
        %5730 = vmatmul.f32.gmra.mxu0 %v5523
        %v5731 = vpop.f32.mrf.mxu0
        %v5732 = vadd.f32 %v5334, %v5731
        %5733 = vmatmul.f32.gmra.mxu0 %v5526
        %v5734 = vpop.f32.mrf.mxu0
        %v5735 = vadd.f32 %v5334, %v5734
        %5736 = vdwg.mxu0
        %v5737 = vxor.u32 %v5546, 2147483648
        %v5738 = vxor.u32 %v5549, 2147483648
        %v5739 = vxor.u32 %v5552, 2147483648
        %v5740 = vxor.u32 %v5555, 2147483648
        %v5741 = vxor.u32 %v5558, 2147483648
        %v5742 = vxor.u32 %v5561, 2147483648
        %v5743 = vxor.u32 %v5564, 2147483648
        %v5744 = vxor.u32 %v5567, 2147483648
        %v5745 = vxor.u32 %v5570, 2147483648
        %v5746 = vxor.u32 %v5573, 2147483648
        %v5747 = vxor.u32 %v5576, 2147483648
        %v5748 = vxor.u32 %v5579, 2147483648
        %v5749 = vxor.u32 %v5582, 2147483648
        %v5750 = vxor.u32 %v5585, 2147483648
        %v5751 = vxor.u32 %v5588, 2147483648
        %v5752 = vxor.u32 %v5591, 2147483648
        %v5753 = vxor.u32 %v5594, 2147483648
        %v5754 = vxor.u32 %v5597, 2147483648
        %v5755 = vxor.u32 %v5600, 2147483648
        %v5756 = vxor.u32 %v5603, 2147483648
        %v5757 = vxor.u32 %v5606, 2147483648
        %v5758 = vxor.u32 %v5609, 2147483648
        %v5759 = vxor.u32 %v5612, 2147483648
        %v5760 = vxor.u32 %v5615, 2147483648
        %v5761 = vxor.u32 %v5618, 2147483648
        %v5762 = vxor.u32 %v5621, 2147483648
        %v5763 = vxor.u32 %v5624, 2147483648
        %v5764 = vxor.u32 %v5627, 2147483648
        %v5765 = vxor.u32 %v5630, 2147483648
        %v5766 = vxor.u32 %v5633, 2147483648
        %v5767 = vxor.u32 %v5636, 2147483648
        %v5768 = vxor.u32 %v5639, 2147483648
        %v5769 = vxor.u32 %v5642, 2147483648
        %v5770 = vxor.u32 %v5645, 2147483648
        %v5771 = vxor.u32 %v5648, 2147483648
        %v5772 = vxor.u32 %v5651, 2147483648
        %v5773 = vxor.u32 %v5654, 2147483648
        %v5774 = vxor.u32 %v5657, 2147483648
        %v5775 = vxor.u32 %v5660, 2147483648
        %v5776 = vxor.u32 %v5663, 2147483648
        %v5777 = vxor.u32 %v5666, 2147483648
        %v5778 = vxor.u32 %v5669, 2147483648
        %v5779 = vxor.u32 %v5672, 2147483648
        %v5780 = vxor.u32 %v5675, 2147483648
        %v5781 = vxor.u32 %v5678, 2147483648
        %v5782 = vxor.u32 %v5681, 2147483648
        %v5783 = vxor.u32 %v5684, 2147483648
        %v5784 = vxor.u32 %v5687, 2147483648
        %v5785 = vxor.u32 %v5690, 2147483648
        %v5786 = vxor.u32 %v5693, 2147483648
        %v5787 = vxor.u32 %v5696, 2147483648
        %v5788 = vxor.u32 %v5699, 2147483648
        %v5789 = vxor.u32 %v5702, 2147483648
        %v5790 = vxor.u32 %v5705, 2147483648
        %v5791 = vxor.u32 %v5708, 2147483648
        %v5792 = vxor.u32 %v5711, 2147483648
        %v5793 = vxor.u32 %v5714, 2147483648
        %v5794 = vxor.u32 %v5717, 2147483648
        %v5795 = vxor.u32 %v5720, 2147483648
        %v5796 = vxor.u32 %v5723, 2147483648
        %v5797 = vxor.u32 %v5726, 2147483648
        %v5798 = vxor.u32 %v5729, 2147483648
        %v5799 = vxor.u32 %v5732, 2147483648
        %v5800 = vxor.u32 %v5735, 2147483648
        %v5801 = vmul.f32 %v5737, 1.442695
        %v5802 = vpow.pop %v5801
        %v5803 = vmul.f32 %v5738, 1.442695
        %v5804 = vpow.pop %v5803
        %v5805 = vmul.f32 %v5739, 1.442695
        %v5806 = vpow.pop %v5805
        %v5807 = vmul.f32 %v5740, 1.442695
        %v5808 = vpow.pop %v5807
        %v5809 = vmul.f32 %v5741, 1.442695
        %v5810 = vpow.pop %v5809
        %v5811 = vmul.f32 %v5742, 1.442695
        %v5812 = vpow.pop %v5811
        %v5813 = vmul.f32 %v5743, 1.442695
        %v5814 = vpow.pop %v5813
        %v5815 = vmul.f32 %v5744, 1.442695
        %v5816 = vpow.pop %v5815
        %v5817 = vmul.f32 %v5745, 1.442695
        %v5818 = vpow.pop %v5817
        %v5819 = vmul.f32 %v5746, 1.442695
        %v5820 = vpow.pop %v5819
        %v5821 = vmul.f32 %v5747, 1.442695
        %v5822 = vpow.pop %v5821
        %v5823 = vmul.f32 %v5748, 1.442695
        %v5824 = vpow.pop %v5823
        %v5825 = vmul.f32 %v5749, 1.442695
        %v5826 = vpow.pop %v5825
        %v5827 = vmul.f32 %v5750, 1.442695
        %v5828 = vpow.pop %v5827
        %v5829 = vmul.f32 %v5751, 1.442695
        %v5830 = vpow.pop %v5829
        %v5831 = vmul.f32 %v5752, 1.442695
        %v5832 = vpow.pop %v5831
        %v5833 = vmul.f32 %v5753, 1.442695
        %v5834 = vpow.pop %v5833
        %v5835 = vmul.f32 %v5754, 1.442695
        %v5836 = vpow.pop %v5835
        %v5837 = vmul.f32 %v5755, 1.442695
        %v5838 = vpow.pop %v5837
        %v5839 = vmul.f32 %v5756, 1.442695
        %v5840 = vpow.pop %v5839
        %v5841 = vmul.f32 %v5757, 1.442695
        %v5842 = vpow.pop %v5841
        %v5843 = vmul.f32 %v5758, 1.442695
        %v5844 = vpow.pop %v5843
        %v5845 = vmul.f32 %v5759, 1.442695
        %v5846 = vpow.pop %v5845
        %v5847 = vmul.f32 %v5760, 1.442695
        %v5848 = vpow.pop %v5847
        %v5849 = vmul.f32 %v5761, 1.442695
        %v5850 = vpow.pop %v5849
        %v5851 = vmul.f32 %v5762, 1.442695
        %v5852 = vpow.pop %v5851
        %v5853 = vmul.f32 %v5763, 1.442695
        %v5854 = vpow.pop %v5853
        %v5855 = vmul.f32 %v5764, 1.442695
        %v5856 = vpow.pop %v5855
        %v5857 = vmul.f32 %v5765, 1.442695
        %v5858 = vpow.pop %v5857
        %v5859 = vmul.f32 %v5766, 1.442695
        %v5860 = vpow.pop %v5859
        %v5861 = vmul.f32 %v5767, 1.442695
        %v5862 = vpow.pop %v5861
        %v5863 = vmul.f32 %v5768, 1.442695
        %v5864 = vpow.pop %v5863
        %v5865 = vmul.f32 %v5769, 1.442695
        %v5866 = vpow.pop %v5865
        %v5867 = vmul.f32 %v5770, 1.442695
        %v5868 = vpow.pop %v5867
        %v5869 = vmul.f32 %v5771, 1.442695
        %v5870 = vpow.pop %v5869
        %v5871 = vmul.f32 %v5772, 1.442695
        %v5872 = vpow.pop %v5871
        %v5873 = vmul.f32 %v5773, 1.442695
        %v5874 = vpow.pop %v5873
        %v5875 = vmul.f32 %v5774, 1.442695
        %v5876 = vpow.pop %v5875
        %v5877 = vmul.f32 %v5775, 1.442695
        %v5878 = vpow.pop %v5877
        %v5879 = vmul.f32 %v5776, 1.442695
        %v5880 = vpow.pop %v5879
        %v5881 = vmul.f32 %v5777, 1.442695
        %v5882 = vpow.pop %v5881
        %v5883 = vmul.f32 %v5778, 1.442695
        %v5884 = vpow.pop %v5883
        %v5885 = vmul.f32 %v5779, 1.442695
        %v5886 = vpow.pop %v5885
        %v5887 = vmul.f32 %v5780, 1.442695
        %v5888 = vpow.pop %v5887
        %v5889 = vmul.f32 %v5781, 1.442695
        %v5890 = vpow.pop %v5889
        %v5891 = vmul.f32 %v5782, 1.442695
        %v5892 = vpow.pop %v5891
        %v5893 = vmul.f32 %v5783, 1.442695
        %v5894 = vpow.pop %v5893
        %v5895 = vmul.f32 %v5784, 1.442695
        %v5896 = vpow.pop %v5895
        %v5897 = vmul.f32 %v5785, 1.442695
        %v5898 = vpow.pop %v5897
        %v5899 = vmul.f32 %v5786, 1.442695
        %v5900 = vpow.pop %v5899
        %v5901 = vmul.f32 %v5787, 1.442695
        %v5902 = vpow.pop %v5901
        %v5903 = vmul.f32 %v5788, 1.442695
        %v5904 = vpow.pop %v5903
        %v5905 = vmul.f32 %v5789, 1.442695
        %v5906 = vpow.pop %v5905
        %v5907 = vmul.f32 %v5790, 1.442695
        %v5908 = vpow.pop %v5907
        %v5909 = vmul.f32 %v5791, 1.442695
        %v5910 = vpow.pop %v5909
        %v5911 = vmul.f32 %v5792, 1.442695
        %v5912 = vpow.pop %v5911
        %v5913 = vmul.f32 %v5793, 1.442695
        %v5914 = vpow.pop %v5913
        %v5915 = vmul.f32 %v5794, 1.442695
        %v5916 = vpow.pop %v5915
        %v5917 = vmul.f32 %v5795, 1.442695
        %v5918 = vpow.pop %v5917
        %v5919 = vmul.f32 %v5796, 1.442695
        %v5920 = vpow.pop %v5919
        %v5921 = vmul.f32 %v5797, 1.442695
        %v5922 = vpow.pop %v5921
        %v5923 = vmul.f32 %v5798, 1.442695
        %v5924 = vpow.pop %v5923
        %v5925 = vmul.f32 %v5799, 1.442695
        %v5926 = vpow.pop %v5925
        %v5927 = vmul.f32 %v5800, 1.442695
        %v5928 = vpow.pop %v5927
        %v5929 = vadd.f32 %v5802, 1.0
        %v5930 = vadd.f32 %v5804, 1.0
        %v5931 = vadd.f32 %v5806, 1.0
        %v5932 = vadd.f32 %v5808, 1.0
        %v5933 = vadd.f32 %v5810, 1.0
        %v5934 = vadd.f32 %v5812, 1.0
        %v5935 = vadd.f32 %v5814, 1.0
        %v5936 = vadd.f32 %v5816, 1.0
        %v5937 = vadd.f32 %v5818, 1.0
        %v5938 = vadd.f32 %v5820, 1.0
        %v5939 = vadd.f32 %v5822, 1.0
        %v5940 = vadd.f32 %v5824, 1.0
        %v5941 = vadd.f32 %v5826, 1.0
        %v5942 = vadd.f32 %v5828, 1.0
        %v5943 = vadd.f32 %v5830, 1.0
        %v5944 = vadd.f32 %v5832, 1.0
        %v5945 = vadd.f32 %v5834, 1.0
        %v5946 = vadd.f32 %v5836, 1.0
        %v5947 = vadd.f32 %v5838, 1.0
        %v5948 = vadd.f32 %v5840, 1.0
        %v5949 = vadd.f32 %v5842, 1.0
        %v5950 = vadd.f32 %v5844, 1.0
        %v5951 = vadd.f32 %v5846, 1.0
        %v5952 = vadd.f32 %v5848, 1.0
        %v5953 = vadd.f32 %v5850, 1.0
        %v5954 = vadd.f32 %v5852, 1.0
        %v5955 = vadd.f32 %v5854, 1.0
        %v5956 = vadd.f32 %v5856, 1.0
        %v5957 = vadd.f32 %v5858, 1.0
        %v5958 = vadd.f32 %v5860, 1.0
        %v5959 = vadd.f32 %v5862, 1.0
        %v5960 = vadd.f32 %v5864, 1.0
        %v5961 = vadd.f32 %v5866, 1.0
        %v5962 = vadd.f32 %v5868, 1.0
        %v5963 = vadd.f32 %v5870, 1.0
        %v5964 = vadd.f32 %v5872, 1.0
        %v5965 = vadd.f32 %v5874, 1.0
        %v5966 = vadd.f32 %v5876, 1.0
        %v5967 = vadd.f32 %v5878, 1.0
        %v5968 = vadd.f32 %v5880, 1.0
        %v5969 = vadd.f32 %v5882, 1.0
        %v5970 = vadd.f32 %v5884, 1.0
        %v5971 = vadd.f32 %v5886, 1.0
        %v5972 = vadd.f32 %v5888, 1.0
        %v5973 = vadd.f32 %v5890, 1.0
        %v5974 = vadd.f32 %v5892, 1.0
        %v5975 = vadd.f32 %v5894, 1.0
        %v5976 = vadd.f32 %v5896, 1.0
        %v5977 = vadd.f32 %v5898, 1.0
        %v5978 = vadd.f32 %v5900, 1.0
        %v5979 = vadd.f32 %v5902, 1.0
        %v5980 = vadd.f32 %v5904, 1.0
        %v5981 = vadd.f32 %v5906, 1.0
        %v5982 = vadd.f32 %v5908, 1.0
        %v5983 = vadd.f32 %v5910, 1.0
        %v5984 = vadd.f32 %v5912, 1.0
        %v5985 = vadd.f32 %v5914, 1.0
        %v5986 = vadd.f32 %v5916, 1.0
        %v5987 = vadd.f32 %v5918, 1.0
        %v5988 = vadd.f32 %v5920, 1.0
        %v5989 = vadd.f32 %v5922, 1.0
        %v5990 = vadd.f32 %v5924, 1.0
        %v5991 = vadd.f32 %v5926, 1.0
        %v5992 = vadd.f32 %v5928, 1.0
        %v5993 = vrcp.pop %v5929
        %v5994 = vmul.f32 %v5929, %v5993
        %v5995 = vsub.f32 1.0, %v5994
        %v5996 = vmul.f32 %v5993, %v5995
        %v5997 = vadd.f32 %v5993, %v5996
        %vm5998 = vweird.f32 %v5929
        %vm5999 = vweird.f32 %v5993
        %vm6000 = vmor %vm5998, %vm5999
        %v6001 = vsel %vm6000, %v5993, %v5997
        %v6002 = vand.u32 2147483647, %v5929
        %vm6003 = vcmp.eq.f32.partialorder %v6002, 8.507059e+37
        %v6004 = vand.u32 %v5929, 2147483648
        %v6005 = vor.u32 1.1754944e-38, %v6004
        %v6006 = vsel %vm6003, %v6005, %v6001
        %v6007 = vmul.f32 1.0, %v6006
        %v6008 = vrcp.pop %v5930
        %v6009 = vmul.f32 %v5930, %v6008
        %v6010 = vsub.f32 1.0, %v6009
        %v6011 = vmul.f32 %v6008, %v6010
        %v6012 = vadd.f32 %v6008, %v6011
        %vm6013 = vweird.f32 %v5930
        %vm6014 = vweird.f32 %v6008
        %vm6015 = vmor %vm6013, %vm6014
        %v6016 = vsel %vm6015, %v6008, %v6012
        %v6017 = vand.u32 2147483647, %v5930
        %vm6018 = vcmp.eq.f32.partialorder %v6017, 8.507059e+37
        %v6019 = vand.u32 %v5930, 2147483648
        %v6020 = vor.u32 1.1754944e-38, %v6019
        %v6021 = vsel %vm6018, %v6020, %v6016
        %v6022 = vmul.f32 1.0, %v6021
        %v6023 = vrcp.pop %v5931
        %v6024 = vmul.f32 %v5931, %v6023
        %v6025 = vsub.f32 1.0, %v6024
        %v6026 = vmul.f32 %v6023, %v6025
        %v6027 = vadd.f32 %v6023, %v6026
        %vm6028 = vweird.f32 %v5931
        %vm6029 = vweird.f32 %v6023
        %vm6030 = vmor %vm6028, %vm6029
        %v6031 = vsel %vm6030, %v6023, %v6027
        %v6032 = vand.u32 2147483647, %v5931
        %vm6033 = vcmp.eq.f32.partialorder %v6032, 8.507059e+37
        %v6034 = vand.u32 %v5931, 2147483648
        %v6035 = vor.u32 1.1754944e-38, %v6034
        %v6036 = vsel %vm6033, %v6035, %v6031
        %v6037 = vmul.f32 1.0, %v6036
        %v6038 = vrcp.pop %v5932
        %v6039 = vmul.f32 %v5932, %v6038
        %v6040 = vsub.f32 1.0, %v6039
        %v6041 = vmul.f32 %v6038, %v6040
        %v6042 = vadd.f32 %v6038, %v6041
        %vm6043 = vweird.f32 %v5932
        %vm6044 = vweird.f32 %v6038
        %vm6045 = vmor %vm6043, %vm6044
        %v6046 = vsel %vm6045, %v6038, %v6042
        %v6047 = vand.u32 2147483647, %v5932
        %vm6048 = vcmp.eq.f32.partialorder %v6047, 8.507059e+37
        %v6049 = vand.u32 %v5932, 2147483648
        %v6050 = vor.u32 1.1754944e-38, %v6049
        %v6051 = vsel %vm6048, %v6050, %v6046
        %v6052 = vmul.f32 1.0, %v6051
        %v6053 = vrcp.pop %v5933
        %v6054 = vmul.f32 %v5933, %v6053
        %v6055 = vsub.f32 1.0, %v6054
        %v6056 = vmul.f32 %v6053, %v6055
        %v6057 = vadd.f32 %v6053, %v6056
        %vm6058 = vweird.f32 %v5933
        %vm6059 = vweird.f32 %v6053
        %vm6060 = vmor %vm6058, %vm6059
        %v6061 = vsel %vm6060, %v6053, %v6057
        %v6062 = vand.u32 2147483647, %v5933
        %vm6063 = vcmp.eq.f32.partialorder %v6062, 8.507059e+37
        %v6064 = vand.u32 %v5933, 2147483648
        %v6065 = vor.u32 1.1754944e-38, %v6064
        %v6066 = vsel %vm6063, %v6065, %v6061
        %v6067 = vmul.f32 1.0, %v6066
        %v6068 = vrcp.pop %v5934
        %v6069 = vmul.f32 %v5934, %v6068
        %v6070 = vsub.f32 1.0, %v6069
        %v6071 = vmul.f32 %v6068, %v6070
        %v6072 = vadd.f32 %v6068, %v6071
        %vm6073 = vweird.f32 %v5934
        %vm6074 = vweird.f32 %v6068
        %vm6075 = vmor %vm6073, %vm6074
        %v6076 = vsel %vm6075, %v6068, %v6072
        %v6077 = vand.u32 2147483647, %v5934
        %vm6078 = vcmp.eq.f32.partialorder %v6077, 8.507059e+37
        %v6079 = vand.u32 %v5934, 2147483648
        %v6080 = vor.u32 1.1754944e-38, %v6079
        %v6081 = vsel %vm6078, %v6080, %v6076
        %v6082 = vmul.f32 1.0, %v6081
        %v6083 = vrcp.pop %v5935
        %v6084 = vmul.f32 %v5935, %v6083
        %v6085 = vsub.f32 1.0, %v6084
        %v6086 = vmul.f32 %v6083, %v6085
        %v6087 = vadd.f32 %v6083, %v6086
        %vm6088 = vweird.f32 %v5935
        %vm6089 = vweird.f32 %v6083
        %vm6090 = vmor %vm6088, %vm6089
        %v6091 = vsel %vm6090, %v6083, %v6087
        %v6092 = vand.u32 2147483647, %v5935
        %vm6093 = vcmp.eq.f32.partialorder %v6092, 8.507059e+37
        %v6094 = vand.u32 %v5935, 2147483648
        %v6095 = vor.u32 1.1754944e-38, %v6094
        %v6096 = vsel %vm6093, %v6095, %v6091
        %v6097 = vmul.f32 1.0, %v6096
        %v6098 = vrcp.pop %v5936
        %v6099 = vmul.f32 %v5936, %v6098
        %v6100 = vsub.f32 1.0, %v6099
        %v6101 = vmul.f32 %v6098, %v6100
        %v6102 = vadd.f32 %v6098, %v6101
        %vm6103 = vweird.f32 %v5936
        %vm6104 = vweird.f32 %v6098
        %vm6105 = vmor %vm6103, %vm6104
        %v6106 = vsel %vm6105, %v6098, %v6102
        %v6107 = vand.u32 2147483647, %v5936
        %vm6108 = vcmp.eq.f32.partialorder %v6107, 8.507059e+37
        %v6109 = vand.u32 %v5936, 2147483648
        %v6110 = vor.u32 1.1754944e-38, %v6109
        %v6111 = vsel %vm6108, %v6110, %v6106
        %v6112 = vmul.f32 1.0, %v6111
        %v6113 = vrcp.pop %v5937
        %v6114 = vmul.f32 %v5937, %v6113
        %v6115 = vsub.f32 1.0, %v6114
        %v6116 = vmul.f32 %v6113, %v6115
        %v6117 = vadd.f32 %v6113, %v6116
        %vm6118 = vweird.f32 %v5937
        %vm6119 = vweird.f32 %v6113
        %vm6120 = vmor %vm6118, %vm6119
        %v6121 = vsel %vm6120, %v6113, %v6117
        %v6122 = vand.u32 2147483647, %v5937
        %vm6123 = vcmp.eq.f32.partialorder %v6122, 8.507059e+37
        %v6124 = vand.u32 %v5937, 2147483648
        %v6125 = vor.u32 1.1754944e-38, %v6124
        %v6126 = vsel %vm6123, %v6125, %v6121
        %v6127 = vmul.f32 1.0, %v6126
        %v6128 = vrcp.pop %v5938
        %v6129 = vmul.f32 %v5938, %v6128
        %v6130 = vsub.f32 1.0, %v6129
        %v6131 = vmul.f32 %v6128, %v6130
        %v6132 = vadd.f32 %v6128, %v6131
        %vm6133 = vweird.f32 %v5938
        %vm6134 = vweird.f32 %v6128
        %vm6135 = vmor %vm6133, %vm6134
        %v6136 = vsel %vm6135, %v6128, %v6132
        %v6137 = vand.u32 2147483647, %v5938
        %vm6138 = vcmp.eq.f32.partialorder %v6137, 8.507059e+37
        %v6139 = vand.u32 %v5938, 2147483648
        %v6140 = vor.u32 1.1754944e-38, %v6139
        %v6141 = vsel %vm6138, %v6140, %v6136
        %v6142 = vmul.f32 1.0, %v6141
        %v6143 = vrcp.pop %v5939
        %v6144 = vmul.f32 %v5939, %v6143
        %v6145 = vsub.f32 1.0, %v6144
        %v6146 = vmul.f32 %v6143, %v6145
        %v6147 = vadd.f32 %v6143, %v6146
        %vm6148 = vweird.f32 %v5939
        %vm6149 = vweird.f32 %v6143
        %vm6150 = vmor %vm6148, %vm6149
        %v6151 = vsel %vm6150, %v6143, %v6147
        %v6152 = vand.u32 2147483647, %v5939
        %vm6153 = vcmp.eq.f32.partialorder %v6152, 8.507059e+37
        %v6154 = vand.u32 %v5939, 2147483648
        %v6155 = vor.u32 1.1754944e-38, %v6154
        %v6156 = vsel %vm6153, %v6155, %v6151
        %v6157 = vmul.f32 1.0, %v6156
        %v6158 = vrcp.pop %v5940
        %v6159 = vmul.f32 %v5940, %v6158
        %v6160 = vsub.f32 1.0, %v6159
        %v6161 = vmul.f32 %v6158, %v6160
        %v6162 = vadd.f32 %v6158, %v6161
        %vm6163 = vweird.f32 %v5940
        %vm6164 = vweird.f32 %v6158
        %vm6165 = vmor %vm6163, %vm6164
        %v6166 = vsel %vm6165, %v6158, %v6162
        %v6167 = vand.u32 2147483647, %v5940
        %vm6168 = vcmp.eq.f32.partialorder %v6167, 8.507059e+37
        %v6169 = vand.u32 %v5940, 2147483648
        %v6170 = vor.u32 1.1754944e-38, %v6169
        %v6171 = vsel %vm6168, %v6170, %v6166
        %v6172 = vmul.f32 1.0, %v6171
        %v6173 = vrcp.pop %v5941
        %v6174 = vmul.f32 %v5941, %v6173
        %v6175 = vsub.f32 1.0, %v6174
        %v6176 = vmul.f32 %v6173, %v6175
        %v6177 = vadd.f32 %v6173, %v6176
        %vm6178 = vweird.f32 %v5941
        %vm6179 = vweird.f32 %v6173
        %vm6180 = vmor %vm6178, %vm6179
        %v6181 = vsel %vm6180, %v6173, %v6177
        %v6182 = vand.u32 2147483647, %v5941
        %vm6183 = vcmp.eq.f32.partialorder %v6182, 8.507059e+37
        %v6184 = vand.u32 %v5941, 2147483648
        %v6185 = vor.u32 1.1754944e-38, %v6184
        %v6186 = vsel %vm6183, %v6185, %v6181
        %v6187 = vmul.f32 1.0, %v6186
        %v6188 = vrcp.pop %v5942
        %v6189 = vmul.f32 %v5942, %v6188
        %v6190 = vsub.f32 1.0, %v6189
        %v6191 = vmul.f32 %v6188, %v6190
        %v6192 = vadd.f32 %v6188, %v6191
        %vm6193 = vweird.f32 %v5942
        %vm6194 = vweird.f32 %v6188
        %vm6195 = vmor %vm6193, %vm6194
        %v6196 = vsel %vm6195, %v6188, %v6192
        %v6197 = vand.u32 2147483647, %v5942
        %vm6198 = vcmp.eq.f32.partialorder %v6197, 8.507059e+37
        %v6199 = vand.u32 %v5942, 2147483648
        %v6200 = vor.u32 1.1754944e-38, %v6199
        %v6201 = vsel %vm6198, %v6200, %v6196
        %v6202 = vmul.f32 1.0, %v6201
        %v6203 = vrcp.pop %v5943
        %v6204 = vmul.f32 %v5943, %v6203
        %v6205 = vsub.f32 1.0, %v6204
        %v6206 = vmul.f32 %v6203, %v6205
        %v6207 = vadd.f32 %v6203, %v6206
        %vm6208 = vweird.f32 %v5943
        %vm6209 = vweird.f32 %v6203
        %vm6210 = vmor %vm6208, %vm6209
        %v6211 = vsel %vm6210, %v6203, %v6207
        %v6212 = vand.u32 2147483647, %v5943
        %vm6213 = vcmp.eq.f32.partialorder %v6212, 8.507059e+37
        %v6214 = vand.u32 %v5943, 2147483648
        %v6215 = vor.u32 1.1754944e-38, %v6214
        %v6216 = vsel %vm6213, %v6215, %v6211
        %v6217 = vmul.f32 1.0, %v6216
        %v6218 = vrcp.pop %v5944
        %v6219 = vmul.f32 %v5944, %v6218
        %v6220 = vsub.f32 1.0, %v6219
        %v6221 = vmul.f32 %v6218, %v6220
        %v6222 = vadd.f32 %v6218, %v6221
        %vm6223 = vweird.f32 %v5944
        %vm6224 = vweird.f32 %v6218
        %vm6225 = vmor %vm6223, %vm6224
        %v6226 = vsel %vm6225, %v6218, %v6222
        %v6227 = vand.u32 2147483647, %v5944
        %vm6228 = vcmp.eq.f32.partialorder %v6227, 8.507059e+37
        %v6229 = vand.u32 %v5944, 2147483648
        %v6230 = vor.u32 1.1754944e-38, %v6229
        %v6231 = vsel %vm6228, %v6230, %v6226
        %v6232 = vmul.f32 1.0, %v6231
        %v6233 = vrcp.pop %v5945
        %v6234 = vmul.f32 %v5945, %v6233
        %v6235 = vsub.f32 1.0, %v6234
        %v6236 = vmul.f32 %v6233, %v6235
        %v6237 = vadd.f32 %v6233, %v6236
        %vm6238 = vweird.f32 %v5945
        %vm6239 = vweird.f32 %v6233
        %vm6240 = vmor %vm6238, %vm6239
        %v6241 = vsel %vm6240, %v6233, %v6237
        %v6242 = vand.u32 2147483647, %v5945
        %vm6243 = vcmp.eq.f32.partialorder %v6242, 8.507059e+37
        %v6244 = vand.u32 %v5945, 2147483648
        %v6245 = vor.u32 1.1754944e-38, %v6244
        %v6246 = vsel %vm6243, %v6245, %v6241
        %v6247 = vmul.f32 1.0, %v6246
        %v6248 = vrcp.pop %v5946
        %v6249 = vmul.f32 %v5946, %v6248
        %v6250 = vsub.f32 1.0, %v6249
        %v6251 = vmul.f32 %v6248, %v6250
        %v6252 = vadd.f32 %v6248, %v6251
        %vm6253 = vweird.f32 %v5946
        %vm6254 = vweird.f32 %v6248
        %vm6255 = vmor %vm6253, %vm6254
        %v6256 = vsel %vm6255, %v6248, %v6252
        %v6257 = vand.u32 2147483647, %v5946
        %vm6258 = vcmp.eq.f32.partialorder %v6257, 8.507059e+37
        %v6259 = vand.u32 %v5946, 2147483648
        %v6260 = vor.u32 1.1754944e-38, %v6259
        %v6261 = vsel %vm6258, %v6260, %v6256
        %v6262 = vmul.f32 1.0, %v6261
        %v6263 = vrcp.pop %v5947
        %v6264 = vmul.f32 %v5947, %v6263
        %v6265 = vsub.f32 1.0, %v6264
        %v6266 = vmul.f32 %v6263, %v6265
        %v6267 = vadd.f32 %v6263, %v6266
        %vm6268 = vweird.f32 %v5947
        %vm6269 = vweird.f32 %v6263
        %vm6270 = vmor %vm6268, %vm6269
        %v6271 = vsel %vm6270, %v6263, %v6267
        %v6272 = vand.u32 2147483647, %v5947
        %vm6273 = vcmp.eq.f32.partialorder %v6272, 8.507059e+37
        %v6274 = vand.u32 %v5947, 2147483648
        %v6275 = vor.u32 1.1754944e-38, %v6274
        %v6276 = vsel %vm6273, %v6275, %v6271
        %v6277 = vmul.f32 1.0, %v6276
        %v6278 = vrcp.pop %v5948
        %v6279 = vmul.f32 %v5948, %v6278
        %v6280 = vsub.f32 1.0, %v6279
        %v6281 = vmul.f32 %v6278, %v6280
        %v6282 = vadd.f32 %v6278, %v6281
        %vm6283 = vweird.f32 %v5948
        %vm6284 = vweird.f32 %v6278
        %vm6285 = vmor %vm6283, %vm6284
        %v6286 = vsel %vm6285, %v6278, %v6282
        %v6287 = vand.u32 2147483647, %v5948
        %vm6288 = vcmp.eq.f32.partialorder %v6287, 8.507059e+37
        %v6289 = vand.u32 %v5948, 2147483648
        %v6290 = vor.u32 1.1754944e-38, %v6289
        %v6291 = vsel %vm6288, %v6290, %v6286
        %v6292 = vmul.f32 1.0, %v6291
        %v6293 = vrcp.pop %v5949
        %v6294 = vmul.f32 %v5949, %v6293
        %v6295 = vsub.f32 1.0, %v6294
        %v6296 = vmul.f32 %v6293, %v6295
        %v6297 = vadd.f32 %v6293, %v6296
        %vm6298 = vweird.f32 %v5949
        %vm6299 = vweird.f32 %v6293
        %vm6300 = vmor %vm6298, %vm6299
        %v6301 = vsel %vm6300, %v6293, %v6297
        %v6302 = vand.u32 2147483647, %v5949
        %vm6303 = vcmp.eq.f32.partialorder %v6302, 8.507059e+37
        %v6304 = vand.u32 %v5949, 2147483648
        %v6305 = vor.u32 1.1754944e-38, %v6304
        %v6306 = vsel %vm6303, %v6305, %v6301
        %v6307 = vmul.f32 1.0, %v6306
        %v6308 = vrcp.pop %v5950
        %v6309 = vmul.f32 %v5950, %v6308
        %v6310 = vsub.f32 1.0, %v6309
        %v6311 = vmul.f32 %v6308, %v6310
        %v6312 = vadd.f32 %v6308, %v6311
        %vm6313 = vweird.f32 %v5950
        %vm6314 = vweird.f32 %v6308
        %vm6315 = vmor %vm6313, %vm6314
        %v6316 = vsel %vm6315, %v6308, %v6312
        %v6317 = vand.u32 2147483647, %v5950
        %vm6318 = vcmp.eq.f32.partialorder %v6317, 8.507059e+37
        %v6319 = vand.u32 %v5950, 2147483648
        %v6320 = vor.u32 1.1754944e-38, %v6319
        %v6321 = vsel %vm6318, %v6320, %v6316
        %v6322 = vmul.f32 1.0, %v6321
        %v6323 = vrcp.pop %v5951
        %v6324 = vmul.f32 %v5951, %v6323
        %v6325 = vsub.f32 1.0, %v6324
        %v6326 = vmul.f32 %v6323, %v6325
        %v6327 = vadd.f32 %v6323, %v6326
        %vm6328 = vweird.f32 %v5951
        %vm6329 = vweird.f32 %v6323
        %vm6330 = vmor %vm6328, %vm6329
        %v6331 = vsel %vm6330, %v6323, %v6327
        %v6332 = vand.u32 2147483647, %v5951
        %vm6333 = vcmp.eq.f32.partialorder %v6332, 8.507059e+37
        %v6334 = vand.u32 %v5951, 2147483648
        %v6335 = vor.u32 1.1754944e-38, %v6334
        %v6336 = vsel %vm6333, %v6335, %v6331
        %v6337 = vmul.f32 1.0, %v6336
        %v6338 = vrcp.pop %v5952
        %v6339 = vmul.f32 %v5952, %v6338
        %v6340 = vsub.f32 1.0, %v6339
        %v6341 = vmul.f32 %v6338, %v6340
        %v6342 = vadd.f32 %v6338, %v6341
        %vm6343 = vweird.f32 %v5952
        %vm6344 = vweird.f32 %v6338
        %vm6345 = vmor %vm6343, %vm6344
        %v6346 = vsel %vm6345, %v6338, %v6342
        %v6347 = vand.u32 2147483647, %v5952
        %vm6348 = vcmp.eq.f32.partialorder %v6347, 8.507059e+37
        %v6349 = vand.u32 %v5952, 2147483648
        %v6350 = vor.u32 1.1754944e-38, %v6349
        %v6351 = vsel %vm6348, %v6350, %v6346
        %v6352 = vmul.f32 1.0, %v6351
        %v6353 = vrcp.pop %v5953
        %v6354 = vmul.f32 %v5953, %v6353
        %v6355 = vsub.f32 1.0, %v6354
        %v6356 = vmul.f32 %v6353, %v6355
        %v6357 = vadd.f32 %v6353, %v6356
        %vm6358 = vweird.f32 %v5953
        %vm6359 = vweird.f32 %v6353
        %vm6360 = vmor %vm6358, %vm6359
        %v6361 = vsel %vm6360, %v6353, %v6357
        %v6362 = vand.u32 2147483647, %v5953
        %vm6363 = vcmp.eq.f32.partialorder %v6362, 8.507059e+37
        %v6364 = vand.u32 %v5953, 2147483648
        %v6365 = vor.u32 1.1754944e-38, %v6364
        %v6366 = vsel %vm6363, %v6365, %v6361
        %v6367 = vmul.f32 1.0, %v6366
        %v6368 = vrcp.pop %v5954
        %v6369 = vmul.f32 %v5954, %v6368
        %v6370 = vsub.f32 1.0, %v6369
        %v6371 = vmul.f32 %v6368, %v6370
        %v6372 = vadd.f32 %v6368, %v6371
        %vm6373 = vweird.f32 %v5954
        %vm6374 = vweird.f32 %v6368
        %vm6375 = vmor %vm6373, %vm6374
        %v6376 = vsel %vm6375, %v6368, %v6372
        %v6377 = vand.u32 2147483647, %v5954
        %vm6378 = vcmp.eq.f32.partialorder %v6377, 8.507059e+37
        %v6379 = vand.u32 %v5954, 2147483648
        %v6380 = vor.u32 1.1754944e-38, %v6379
        %v6381 = vsel %vm6378, %v6380, %v6376
        %v6382 = vmul.f32 1.0, %v6381
        %v6383 = vrcp.pop %v5955
        %v6384 = vmul.f32 %v5955, %v6383
        %v6385 = vsub.f32 1.0, %v6384
        %v6386 = vmul.f32 %v6383, %v6385
        %v6387 = vadd.f32 %v6383, %v6386
        %vm6388 = vweird.f32 %v5955
        %vm6389 = vweird.f32 %v6383
        %vm6390 = vmor %vm6388, %vm6389
        %v6391 = vsel %vm6390, %v6383, %v6387
        %v6392 = vand.u32 2147483647, %v5955
        %vm6393 = vcmp.eq.f32.partialorder %v6392, 8.507059e+37
        %v6394 = vand.u32 %v5955, 2147483648
        %v6395 = vor.u32 1.1754944e-38, %v6394
        %v6396 = vsel %vm6393, %v6395, %v6391
        %v6397 = vmul.f32 1.0, %v6396
        %v6398 = vrcp.pop %v5956
        %v6399 = vmul.f32 %v5956, %v6398
        %v6400 = vsub.f32 1.0, %v6399
        %v6401 = vmul.f32 %v6398, %v6400
        %v6402 = vadd.f32 %v6398, %v6401
        %vm6403 = vweird.f32 %v5956
        %vm6404 = vweird.f32 %v6398
        %vm6405 = vmor %vm6403, %vm6404
        %v6406 = vsel %vm6405, %v6398, %v6402
        %v6407 = vand.u32 2147483647, %v5956
        %vm6408 = vcmp.eq.f32.partialorder %v6407, 8.507059e+37
        %v6409 = vand.u32 %v5956, 2147483648
        %v6410 = vor.u32 1.1754944e-38, %v6409
        %v6411 = vsel %vm6408, %v6410, %v6406
        %v6412 = vmul.f32 1.0, %v6411
        %v6413 = vrcp.pop %v5957
        %v6414 = vmul.f32 %v5957, %v6413
        %v6415 = vsub.f32 1.0, %v6414
        %v6416 = vmul.f32 %v6413, %v6415
        %v6417 = vadd.f32 %v6413, %v6416
        %vm6418 = vweird.f32 %v5957
        %vm6419 = vweird.f32 %v6413
        %vm6420 = vmor %vm6418, %vm6419
        %v6421 = vsel %vm6420, %v6413, %v6417
        %v6422 = vand.u32 2147483647, %v5957
        %vm6423 = vcmp.eq.f32.partialorder %v6422, 8.507059e+37
        %v6424 = vand.u32 %v5957, 2147483648
        %v6425 = vor.u32 1.1754944e-38, %v6424
        %v6426 = vsel %vm6423, %v6425, %v6421
        %v6427 = vmul.f32 1.0, %v6426
        %v6428 = vrcp.pop %v5958
        %v6429 = vmul.f32 %v5958, %v6428
        %v6430 = vsub.f32 1.0, %v6429
        %v6431 = vmul.f32 %v6428, %v6430
        %v6432 = vadd.f32 %v6428, %v6431
        %vm6433 = vweird.f32 %v5958
        %vm6434 = vweird.f32 %v6428
        %vm6435 = vmor %vm6433, %vm6434
        %v6436 = vsel %vm6435, %v6428, %v6432
        %v6437 = vand.u32 2147483647, %v5958
        %vm6438 = vcmp.eq.f32.partialorder %v6437, 8.507059e+37
        %v6439 = vand.u32 %v5958, 2147483648
        %v6440 = vor.u32 1.1754944e-38, %v6439
        %v6441 = vsel %vm6438, %v6440, %v6436
        %v6442 = vmul.f32 1.0, %v6441
        %v6443 = vrcp.pop %v5959
        %v6444 = vmul.f32 %v5959, %v6443
        %v6445 = vsub.f32 1.0, %v6444
        %v6446 = vmul.f32 %v6443, %v6445
        %v6447 = vadd.f32 %v6443, %v6446
        %vm6448 = vweird.f32 %v5959
        %vm6449 = vweird.f32 %v6443
        %vm6450 = vmor %vm6448, %vm6449
        %v6451 = vsel %vm6450, %v6443, %v6447
        %v6452 = vand.u32 2147483647, %v5959
        %vm6453 = vcmp.eq.f32.partialorder %v6452, 8.507059e+37
        %v6454 = vand.u32 %v5959, 2147483648
        %v6455 = vor.u32 1.1754944e-38, %v6454
        %v6456 = vsel %vm6453, %v6455, %v6451
        %v6457 = vmul.f32 1.0, %v6456
        %v6458 = vrcp.pop %v5960
        %v6459 = vmul.f32 %v5960, %v6458
        %v6460 = vsub.f32 1.0, %v6459
        %v6461 = vmul.f32 %v6458, %v6460
        %v6462 = vadd.f32 %v6458, %v6461
        %vm6463 = vweird.f32 %v5960
        %vm6464 = vweird.f32 %v6458
        %vm6465 = vmor %vm6463, %vm6464
        %v6466 = vsel %vm6465, %v6458, %v6462
        %v6467 = vand.u32 2147483647, %v5960
        %vm6468 = vcmp.eq.f32.partialorder %v6467, 8.507059e+37
        %v6469 = vand.u32 %v5960, 2147483648
        %v6470 = vor.u32 1.1754944e-38, %v6469
        %v6471 = vsel %vm6468, %v6470, %v6466
        %v6472 = vmul.f32 1.0, %v6471
        %v6473 = vrcp.pop %v5961
        %v6474 = vmul.f32 %v5961, %v6473
        %v6475 = vsub.f32 1.0, %v6474
        %v6476 = vmul.f32 %v6473, %v6475
        %v6477 = vadd.f32 %v6473, %v6476
        %vm6478 = vweird.f32 %v5961
        %vm6479 = vweird.f32 %v6473
        %vm6480 = vmor %vm6478, %vm6479
        %v6481 = vsel %vm6480, %v6473, %v6477
        %v6482 = vand.u32 2147483647, %v5961
        %vm6483 = vcmp.eq.f32.partialorder %v6482, 8.507059e+37
        %v6484 = vand.u32 %v5961, 2147483648
        %v6485 = vor.u32 1.1754944e-38, %v6484
        %v6486 = vsel %vm6483, %v6485, %v6481
        %v6487 = vmul.f32 1.0, %v6486
        %v6488 = vrcp.pop %v5962
        %v6489 = vmul.f32 %v5962, %v6488
        %v6490 = vsub.f32 1.0, %v6489
        %v6491 = vmul.f32 %v6488, %v6490
        %v6492 = vadd.f32 %v6488, %v6491
        %vm6493 = vweird.f32 %v5962
        %vm6494 = vweird.f32 %v6488
        %vm6495 = vmor %vm6493, %vm6494
        %v6496 = vsel %vm6495, %v6488, %v6492
        %v6497 = vand.u32 2147483647, %v5962
        %vm6498 = vcmp.eq.f32.partialorder %v6497, 8.507059e+37
        %v6499 = vand.u32 %v5962, 2147483648
        %v6500 = vor.u32 1.1754944e-38, %v6499
        %v6501 = vsel %vm6498, %v6500, %v6496
        %v6502 = vmul.f32 1.0, %v6501
        %v6503 = vrcp.pop %v5963
        %v6504 = vmul.f32 %v5963, %v6503
        %v6505 = vsub.f32 1.0, %v6504
        %v6506 = vmul.f32 %v6503, %v6505
        %v6507 = vadd.f32 %v6503, %v6506
        %vm6508 = vweird.f32 %v5963
        %vm6509 = vweird.f32 %v6503
        %vm6510 = vmor %vm6508, %vm6509
        %v6511 = vsel %vm6510, %v6503, %v6507
        %v6512 = vand.u32 2147483647, %v5963
        %vm6513 = vcmp.eq.f32.partialorder %v6512, 8.507059e+37
        %v6514 = vand.u32 %v5963, 2147483648
        %v6515 = vor.u32 1.1754944e-38, %v6514
        %v6516 = vsel %vm6513, %v6515, %v6511
        %v6517 = vmul.f32 1.0, %v6516
        %v6518 = vrcp.pop %v5964
        %v6519 = vmul.f32 %v5964, %v6518
        %v6520 = vsub.f32 1.0, %v6519
        %v6521 = vmul.f32 %v6518, %v6520
        %v6522 = vadd.f32 %v6518, %v6521
        %vm6523 = vweird.f32 %v5964
        %vm6524 = vweird.f32 %v6518
        %vm6525 = vmor %vm6523, %vm6524
        %v6526 = vsel %vm6525, %v6518, %v6522
        %v6527 = vand.u32 2147483647, %v5964
        %vm6528 = vcmp.eq.f32.partialorder %v6527, 8.507059e+37
        %v6529 = vand.u32 %v5964, 2147483648
        %v6530 = vor.u32 1.1754944e-38, %v6529
        %v6531 = vsel %vm6528, %v6530, %v6526
        %v6532 = vmul.f32 1.0, %v6531
        %v6533 = vrcp.pop %v5965
        %v6534 = vmul.f32 %v5965, %v6533
        %v6535 = vsub.f32 1.0, %v6534
        %v6536 = vmul.f32 %v6533, %v6535
        %v6537 = vadd.f32 %v6533, %v6536
        %vm6538 = vweird.f32 %v5965
        %vm6539 = vweird.f32 %v6533
        %vm6540 = vmor %vm6538, %vm6539
        %v6541 = vsel %vm6540, %v6533, %v6537
        %v6542 = vand.u32 2147483647, %v5965
        %vm6543 = vcmp.eq.f32.partialorder %v6542, 8.507059e+37
        %v6544 = vand.u32 %v5965, 2147483648
        %v6545 = vor.u32 1.1754944e-38, %v6544
        %v6546 = vsel %vm6543, %v6545, %v6541
        %v6547 = vmul.f32 1.0, %v6546
        %v6548 = vrcp.pop %v5966
        %v6549 = vmul.f32 %v5966, %v6548
        %v6550 = vsub.f32 1.0, %v6549
        %v6551 = vmul.f32 %v6548, %v6550
        %v6552 = vadd.f32 %v6548, %v6551
        %vm6553 = vweird.f32 %v5966
        %vm6554 = vweird.f32 %v6548
        %vm6555 = vmor %vm6553, %vm6554
        %v6556 = vsel %vm6555, %v6548, %v6552
        %v6557 = vand.u32 2147483647, %v5966
        %vm6558 = vcmp.eq.f32.partialorder %v6557, 8.507059e+37
        %v6559 = vand.u32 %v5966, 2147483648
        %v6560 = vor.u32 1.1754944e-38, %v6559
        %v6561 = vsel %vm6558, %v6560, %v6556
        %v6562 = vmul.f32 1.0, %v6561
        %v6563 = vrcp.pop %v5967
        %v6564 = vmul.f32 %v5967, %v6563
        %v6565 = vsub.f32 1.0, %v6564
        %v6566 = vmul.f32 %v6563, %v6565
        %v6567 = vadd.f32 %v6563, %v6566
        %vm6568 = vweird.f32 %v5967
        %vm6569 = vweird.f32 %v6563
        %vm6570 = vmor %vm6568, %vm6569
        %v6571 = vsel %vm6570, %v6563, %v6567
        %v6572 = vand.u32 2147483647, %v5967
        %vm6573 = vcmp.eq.f32.partialorder %v6572, 8.507059e+37
        %v6574 = vand.u32 %v5967, 2147483648
        %v6575 = vor.u32 1.1754944e-38, %v6574
        %v6576 = vsel %vm6573, %v6575, %v6571
        %v6577 = vmul.f32 1.0, %v6576
        %v6578 = vrcp.pop %v5968
        %v6579 = vmul.f32 %v5968, %v6578
        %v6580 = vsub.f32 1.0, %v6579
        %v6581 = vmul.f32 %v6578, %v6580
        %v6582 = vadd.f32 %v6578, %v6581
        %vm6583 = vweird.f32 %v5968
        %vm6584 = vweird.f32 %v6578
        %vm6585 = vmor %vm6583, %vm6584
        %v6586 = vsel %vm6585, %v6578, %v6582
        %v6587 = vand.u32 2147483647, %v5968
        %vm6588 = vcmp.eq.f32.partialorder %v6587, 8.507059e+37
        %v6589 = vand.u32 %v5968, 2147483648
        %v6590 = vor.u32 1.1754944e-38, %v6589
        %v6591 = vsel %vm6588, %v6590, %v6586
        %v6592 = vmul.f32 1.0, %v6591
        %v6593 = vrcp.pop %v5969
        %v6594 = vmul.f32 %v5969, %v6593
        %v6595 = vsub.f32 1.0, %v6594
        %v6596 = vmul.f32 %v6593, %v6595
        %v6597 = vadd.f32 %v6593, %v6596
        %vm6598 = vweird.f32 %v5969
        %vm6599 = vweird.f32 %v6593
        %vm6600 = vmor %vm6598, %vm6599
        %v6601 = vsel %vm6600, %v6593, %v6597
        %v6602 = vand.u32 2147483647, %v5969
        %vm6603 = vcmp.eq.f32.partialorder %v6602, 8.507059e+37
        %v6604 = vand.u32 %v5969, 2147483648
        %v6605 = vor.u32 1.1754944e-38, %v6604
        %v6606 = vsel %vm6603, %v6605, %v6601
        %v6607 = vmul.f32 1.0, %v6606
        %v6608 = vrcp.pop %v5970
        %v6609 = vmul.f32 %v5970, %v6608
        %v6610 = vsub.f32 1.0, %v6609
        %v6611 = vmul.f32 %v6608, %v6610
        %v6612 = vadd.f32 %v6608, %v6611
        %vm6613 = vweird.f32 %v5970
        %vm6614 = vweird.f32 %v6608
        %vm6615 = vmor %vm6613, %vm6614
        %v6616 = vsel %vm6615, %v6608, %v6612
        %v6617 = vand.u32 2147483647, %v5970
        %vm6618 = vcmp.eq.f32.partialorder %v6617, 8.507059e+37
        %v6619 = vand.u32 %v5970, 2147483648
        %v6620 = vor.u32 1.1754944e-38, %v6619
        %v6621 = vsel %vm6618, %v6620, %v6616
        %v6622 = vmul.f32 1.0, %v6621
        %v6623 = vrcp.pop %v5971
        %v6624 = vmul.f32 %v5971, %v6623
        %v6625 = vsub.f32 1.0, %v6624
        %v6626 = vmul.f32 %v6623, %v6625
        %v6627 = vadd.f32 %v6623, %v6626
        %vm6628 = vweird.f32 %v5971
        %vm6629 = vweird.f32 %v6623
        %vm6630 = vmor %vm6628, %vm6629
        %v6631 = vsel %vm6630, %v6623, %v6627
        %v6632 = vand.u32 2147483647, %v5971
        %vm6633 = vcmp.eq.f32.partialorder %v6632, 8.507059e+37
        %v6634 = vand.u32 %v5971, 2147483648
        %v6635 = vor.u32 1.1754944e-38, %v6634
        %v6636 = vsel %vm6633, %v6635, %v6631
        %v6637 = vmul.f32 1.0, %v6636
        %v6638 = vrcp.pop %v5972
        %v6639 = vmul.f32 %v5972, %v6638
        %v6640 = vsub.f32 1.0, %v6639
        %v6641 = vmul.f32 %v6638, %v6640
        %v6642 = vadd.f32 %v6638, %v6641
        %vm6643 = vweird.f32 %v5972
        %vm6644 = vweird.f32 %v6638
        %vm6645 = vmor %vm6643, %vm6644
        %v6646 = vsel %vm6645, %v6638, %v6642
        %v6647 = vand.u32 2147483647, %v5972
        %vm6648 = vcmp.eq.f32.partialorder %v6647, 8.507059e+37
        %v6649 = vand.u32 %v5972, 2147483648
        %v6650 = vor.u32 1.1754944e-38, %v6649
        %v6651 = vsel %vm6648, %v6650, %v6646
        %v6652 = vmul.f32 1.0, %v6651
        %v6653 = vrcp.pop %v5973
        %v6654 = vmul.f32 %v5973, %v6653
        %v6655 = vsub.f32 1.0, %v6654
        %v6656 = vmul.f32 %v6653, %v6655
        %v6657 = vadd.f32 %v6653, %v6656
        %vm6658 = vweird.f32 %v5973
        %vm6659 = vweird.f32 %v6653
        %vm6660 = vmor %vm6658, %vm6659
        %v6661 = vsel %vm6660, %v6653, %v6657
        %v6662 = vand.u32 2147483647, %v5973
        %vm6663 = vcmp.eq.f32.partialorder %v6662, 8.507059e+37
        %v6664 = vand.u32 %v5973, 2147483648
        %v6665 = vor.u32 1.1754944e-38, %v6664
        %v6666 = vsel %vm6663, %v6665, %v6661
        %v6667 = vmul.f32 1.0, %v6666
        %v6668 = vrcp.pop %v5974
        %v6669 = vmul.f32 %v5974, %v6668
        %v6670 = vsub.f32 1.0, %v6669
        %v6671 = vmul.f32 %v6668, %v6670
        %v6672 = vadd.f32 %v6668, %v6671
        %vm6673 = vweird.f32 %v5974
        %vm6674 = vweird.f32 %v6668
        %vm6675 = vmor %vm6673, %vm6674
        %v6676 = vsel %vm6675, %v6668, %v6672
        %v6677 = vand.u32 2147483647, %v5974
        %vm6678 = vcmp.eq.f32.partialorder %v6677, 8.507059e+37
        %v6679 = vand.u32 %v5974, 2147483648
        %v6680 = vor.u32 1.1754944e-38, %v6679
        %v6681 = vsel %vm6678, %v6680, %v6676
        %v6682 = vmul.f32 1.0, %v6681
        %v6683 = vrcp.pop %v5975
        %v6684 = vmul.f32 %v5975, %v6683
        %v6685 = vsub.f32 1.0, %v6684
        %v6686 = vmul.f32 %v6683, %v6685
        %v6687 = vadd.f32 %v6683, %v6686
        %vm6688 = vweird.f32 %v5975
        %vm6689 = vweird.f32 %v6683
        %vm6690 = vmor %vm6688, %vm6689
        %v6691 = vsel %vm6690, %v6683, %v6687
        %v6692 = vand.u32 2147483647, %v5975
        %vm6693 = vcmp.eq.f32.partialorder %v6692, 8.507059e+37
        %v6694 = vand.u32 %v5975, 2147483648
        %v6695 = vor.u32 1.1754944e-38, %v6694
        %v6696 = vsel %vm6693, %v6695, %v6691
        %v6697 = vmul.f32 1.0, %v6696
        %v6698 = vrcp.pop %v5976
        %v6699 = vmul.f32 %v5976, %v6698
        %v6700 = vsub.f32 1.0, %v6699
        %v6701 = vmul.f32 %v6698, %v6700
        %v6702 = vadd.f32 %v6698, %v6701
        %vm6703 = vweird.f32 %v5976
        %vm6704 = vweird.f32 %v6698
        %vm6705 = vmor %vm6703, %vm6704
        %v6706 = vsel %vm6705, %v6698, %v6702
        %v6707 = vand.u32 2147483647, %v5976
        %vm6708 = vcmp.eq.f32.partialorder %v6707, 8.507059e+37
        %v6709 = vand.u32 %v5976, 2147483648
        %v6710 = vor.u32 1.1754944e-38, %v6709
        %v6711 = vsel %vm6708, %v6710, %v6706
        %v6712 = vmul.f32 1.0, %v6711
        %v6713 = vrcp.pop %v5977
        %v6714 = vmul.f32 %v5977, %v6713
        %v6715 = vsub.f32 1.0, %v6714
        %v6716 = vmul.f32 %v6713, %v6715
        %v6717 = vadd.f32 %v6713, %v6716
        %vm6718 = vweird.f32 %v5977
        %vm6719 = vweird.f32 %v6713
        %vm6720 = vmor %vm6718, %vm6719
        %v6721 = vsel %vm6720, %v6713, %v6717
        %v6722 = vand.u32 2147483647, %v5977
        %vm6723 = vcmp.eq.f32.partialorder %v6722, 8.507059e+37
        %v6724 = vand.u32 %v5977, 2147483648
        %v6725 = vor.u32 1.1754944e-38, %v6724
        %v6726 = vsel %vm6723, %v6725, %v6721
        %v6727 = vmul.f32 1.0, %v6726
        %v6728 = vrcp.pop %v5978
        %v6729 = vmul.f32 %v5978, %v6728
        %v6730 = vsub.f32 1.0, %v6729
        %v6731 = vmul.f32 %v6728, %v6730
        %v6732 = vadd.f32 %v6728, %v6731
        %vm6733 = vweird.f32 %v5978
        %vm6734 = vweird.f32 %v6728
        %vm6735 = vmor %vm6733, %vm6734
        %v6736 = vsel %vm6735, %v6728, %v6732
        %v6737 = vand.u32 2147483647, %v5978
        %vm6738 = vcmp.eq.f32.partialorder %v6737, 8.507059e+37
        %v6739 = vand.u32 %v5978, 2147483648
        %v6740 = vor.u32 1.1754944e-38, %v6739
        %v6741 = vsel %vm6738, %v6740, %v6736
        %v6742 = vmul.f32 1.0, %v6741
        %v6743 = vrcp.pop %v5979
        %v6744 = vmul.f32 %v5979, %v6743
        %v6745 = vsub.f32 1.0, %v6744
        %v6746 = vmul.f32 %v6743, %v6745
        %v6747 = vadd.f32 %v6743, %v6746
        %vm6748 = vweird.f32 %v5979
        %vm6749 = vweird.f32 %v6743
        %vm6750 = vmor %vm6748, %vm6749
        %v6751 = vsel %vm6750, %v6743, %v6747
        %v6752 = vand.u32 2147483647, %v5979
        %vm6753 = vcmp.eq.f32.partialorder %v6752, 8.507059e+37
        %v6754 = vand.u32 %v5979, 2147483648
        %v6755 = vor.u32 1.1754944e-38, %v6754
        %v6756 = vsel %vm6753, %v6755, %v6751
        %v6757 = vmul.f32 1.0, %v6756
        %v6758 = vrcp.pop %v5980
        %v6759 = vmul.f32 %v5980, %v6758
        %v6760 = vsub.f32 1.0, %v6759
        %v6761 = vmul.f32 %v6758, %v6760
        %v6762 = vadd.f32 %v6758, %v6761
        %vm6763 = vweird.f32 %v5980
        %vm6764 = vweird.f32 %v6758
        %vm6765 = vmor %vm6763, %vm6764
        %v6766 = vsel %vm6765, %v6758, %v6762
        %v6767 = vand.u32 2147483647, %v5980
        %vm6768 = vcmp.eq.f32.partialorder %v6767, 8.507059e+37
        %v6769 = vand.u32 %v5980, 2147483648
        %v6770 = vor.u32 1.1754944e-38, %v6769
        %v6771 = vsel %vm6768, %v6770, %v6766
        %v6772 = vmul.f32 1.0, %v6771
        %v6773 = vrcp.pop %v5981
        %v6774 = vmul.f32 %v5981, %v6773
        %v6775 = vsub.f32 1.0, %v6774
        %v6776 = vmul.f32 %v6773, %v6775
        %v6777 = vadd.f32 %v6773, %v6776
        %vm6778 = vweird.f32 %v5981
        %vm6779 = vweird.f32 %v6773
        %vm6780 = vmor %vm6778, %vm6779
        %v6781 = vsel %vm6780, %v6773, %v6777
        %v6782 = vand.u32 2147483647, %v5981
        %vm6783 = vcmp.eq.f32.partialorder %v6782, 8.507059e+37
        %v6784 = vand.u32 %v5981, 2147483648
        %v6785 = vor.u32 1.1754944e-38, %v6784
        %v6786 = vsel %vm6783, %v6785, %v6781
        %v6787 = vmul.f32 1.0, %v6786
        %v6788 = vrcp.pop %v5982
        %v6789 = vmul.f32 %v5982, %v6788
        %v6790 = vsub.f32 1.0, %v6789
        %v6791 = vmul.f32 %v6788, %v6790
        %v6792 = vadd.f32 %v6788, %v6791
        %vm6793 = vweird.f32 %v5982
        %vm6794 = vweird.f32 %v6788
        %vm6795 = vmor %vm6793, %vm6794
        %v6796 = vsel %vm6795, %v6788, %v6792
        %v6797 = vand.u32 2147483647, %v5982
        %vm6798 = vcmp.eq.f32.partialorder %v6797, 8.507059e+37
        %v6799 = vand.u32 %v5982, 2147483648
        %v6800 = vor.u32 1.1754944e-38, %v6799
        %v6801 = vsel %vm6798, %v6800, %v6796
        %v6802 = vmul.f32 1.0, %v6801
        %v6803 = vrcp.pop %v5983
        %v6804 = vmul.f32 %v5983, %v6803
        %v6805 = vsub.f32 1.0, %v6804
        %v6806 = vmul.f32 %v6803, %v6805
        %v6807 = vadd.f32 %v6803, %v6806
        %vm6808 = vweird.f32 %v5983
        %vm6809 = vweird.f32 %v6803
        %vm6810 = vmor %vm6808, %vm6809
        %v6811 = vsel %vm6810, %v6803, %v6807
        %v6812 = vand.u32 2147483647, %v5983
        %vm6813 = vcmp.eq.f32.partialorder %v6812, 8.507059e+37
        %v6814 = vand.u32 %v5983, 2147483648
        %v6815 = vor.u32 1.1754944e-38, %v6814
        %v6816 = vsel %vm6813, %v6815, %v6811
        %v6817 = vmul.f32 1.0, %v6816
        %v6818 = vrcp.pop %v5984
        %v6819 = vmul.f32 %v5984, %v6818
        %v6820 = vsub.f32 1.0, %v6819
        %v6821 = vmul.f32 %v6818, %v6820
        %v6822 = vadd.f32 %v6818, %v6821
        %vm6823 = vweird.f32 %v5984
        %vm6824 = vweird.f32 %v6818
        %vm6825 = vmor %vm6823, %vm6824
        %v6826 = vsel %vm6825, %v6818, %v6822
        %v6827 = vand.u32 2147483647, %v5984
        %vm6828 = vcmp.eq.f32.partialorder %v6827, 8.507059e+37
        %v6829 = vand.u32 %v5984, 2147483648
        %v6830 = vor.u32 1.1754944e-38, %v6829
        %v6831 = vsel %vm6828, %v6830, %v6826
        %v6832 = vmul.f32 1.0, %v6831
        %v6833 = vrcp.pop %v5985
        %v6834 = vmul.f32 %v5985, %v6833
        %v6835 = vsub.f32 1.0, %v6834
        %v6836 = vmul.f32 %v6833, %v6835
        %v6837 = vadd.f32 %v6833, %v6836
        %vm6838 = vweird.f32 %v5985
        %vm6839 = vweird.f32 %v6833
        %vm6840 = vmor %vm6838, %vm6839
        %v6841 = vsel %vm6840, %v6833, %v6837
        %v6842 = vand.u32 2147483647, %v5985
        %vm6843 = vcmp.eq.f32.partialorder %v6842, 8.507059e+37
        %v6844 = vand.u32 %v5985, 2147483648
        %v6845 = vor.u32 1.1754944e-38, %v6844
        %v6846 = vsel %vm6843, %v6845, %v6841
        %v6847 = vmul.f32 1.0, %v6846
        %v6848 = vrcp.pop %v5986
        %v6849 = vmul.f32 %v5986, %v6848
        %v6850 = vsub.f32 1.0, %v6849
        %v6851 = vmul.f32 %v6848, %v6850
        %v6852 = vadd.f32 %v6848, %v6851
        %vm6853 = vweird.f32 %v5986
        %vm6854 = vweird.f32 %v6848
        %vm6855 = vmor %vm6853, %vm6854
        %v6856 = vsel %vm6855, %v6848, %v6852
        %v6857 = vand.u32 2147483647, %v5986
        %vm6858 = vcmp.eq.f32.partialorder %v6857, 8.507059e+37
        %v6859 = vand.u32 %v5986, 2147483648
        %v6860 = vor.u32 1.1754944e-38, %v6859
        %v6861 = vsel %vm6858, %v6860, %v6856
        %v6862 = vmul.f32 1.0, %v6861
        %v6863 = vrcp.pop %v5987
        %v6864 = vmul.f32 %v5987, %v6863
        %v6865 = vsub.f32 1.0, %v6864
        %v6866 = vmul.f32 %v6863, %v6865
        %v6867 = vadd.f32 %v6863, %v6866
        %vm6868 = vweird.f32 %v5987
        %vm6869 = vweird.f32 %v6863
        %vm6870 = vmor %vm6868, %vm6869
        %v6871 = vsel %vm6870, %v6863, %v6867
        %v6872 = vand.u32 2147483647, %v5987
        %vm6873 = vcmp.eq.f32.partialorder %v6872, 8.507059e+37
        %v6874 = vand.u32 %v5987, 2147483648
        %v6875 = vor.u32 1.1754944e-38, %v6874
        %v6876 = vsel %vm6873, %v6875, %v6871
        %v6877 = vmul.f32 1.0, %v6876
        %v6878 = vrcp.pop %v5988
        %v6879 = vmul.f32 %v5988, %v6878
        %v6880 = vsub.f32 1.0, %v6879
        %v6881 = vmul.f32 %v6878, %v6880
        %v6882 = vadd.f32 %v6878, %v6881
        %vm6883 = vweird.f32 %v5988
        %vm6884 = vweird.f32 %v6878
        %vm6885 = vmor %vm6883, %vm6884
        %v6886 = vsel %vm6885, %v6878, %v6882
        %v6887 = vand.u32 2147483647, %v5988
        %vm6888 = vcmp.eq.f32.partialorder %v6887, 8.507059e+37
        %v6889 = vand.u32 %v5988, 2147483648
        %v6890 = vor.u32 1.1754944e-38, %v6889
        %v6891 = vsel %vm6888, %v6890, %v6886
        %v6892 = vmul.f32 1.0, %v6891
        %v6893 = vrcp.pop %v5989
        %v6894 = vmul.f32 %v5989, %v6893
        %v6895 = vsub.f32 1.0, %v6894
        %v6896 = vmul.f32 %v6893, %v6895
        %v6897 = vadd.f32 %v6893, %v6896
        %vm6898 = vweird.f32 %v5989
        %vm6899 = vweird.f32 %v6893
        %vm6900 = vmor %vm6898, %vm6899
        %v6901 = vsel %vm6900, %v6893, %v6897
        %v6902 = vand.u32 2147483647, %v5989
        %vm6903 = vcmp.eq.f32.partialorder %v6902, 8.507059e+37
        %v6904 = vand.u32 %v5989, 2147483648
        %v6905 = vor.u32 1.1754944e-38, %v6904
        %v6906 = vsel %vm6903, %v6905, %v6901
        %v6907 = vmul.f32 1.0, %v6906
        %v6908 = vrcp.pop %v5990
        %v6909 = vmul.f32 %v5990, %v6908
        %v6910 = vsub.f32 1.0, %v6909
        %v6911 = vmul.f32 %v6908, %v6910
        %v6912 = vadd.f32 %v6908, %v6911
        %vm6913 = vweird.f32 %v5990
        %vm6914 = vweird.f32 %v6908
        %vm6915 = vmor %vm6913, %vm6914
        %v6916 = vsel %vm6915, %v6908, %v6912
        %v6917 = vand.u32 2147483647, %v5990
        %vm6918 = vcmp.eq.f32.partialorder %v6917, 8.507059e+37
        %v6919 = vand.u32 %v5990, 2147483648
        %v6920 = vor.u32 1.1754944e-38, %v6919
        %v6921 = vsel %vm6918, %v6920, %v6916
        %v6922 = vmul.f32 1.0, %v6921
        %v6923 = vrcp.pop %v5991
        %v6924 = vmul.f32 %v5991, %v6923
        %v6925 = vsub.f32 1.0, %v6924
        %v6926 = vmul.f32 %v6923, %v6925
        %v6927 = vadd.f32 %v6923, %v6926
        %vm6928 = vweird.f32 %v5991
        %vm6929 = vweird.f32 %v6923
        %vm6930 = vmor %vm6928, %vm6929
        %v6931 = vsel %vm6930, %v6923, %v6927
        %v6932 = vand.u32 2147483647, %v5991
        %vm6933 = vcmp.eq.f32.partialorder %v6932, 8.507059e+37
        %v6934 = vand.u32 %v5991, 2147483648
        %v6935 = vor.u32 1.1754944e-38, %v6934
        %v6936 = vsel %vm6933, %v6935, %v6931
        %v6937 = vmul.f32 1.0, %v6936
        %v6938 = vrcp.pop %v5992
        %v6939 = vmul.f32 %v5992, %v6938
        %v6940 = vsub.f32 1.0, %v6939
        %v6941 = vmul.f32 %v6938, %v6940
        %v6942 = vadd.f32 %v6938, %v6941
        %vm6943 = vweird.f32 %v5992
        %vm6944 = vweird.f32 %v6938
        %vm6945 = vmor %vm6943, %vm6944
        %v6946 = vsel %vm6945, %v6938, %v6942
        %v6947 = vand.u32 2147483647, %v5992
        %vm6948 = vcmp.eq.f32.partialorder %v6947, 8.507059e+37
        %v6949 = vand.u32 %v5992, 2147483648
        %v6950 = vor.u32 1.1754944e-38, %v6949
        %v6951 = vsel %vm6948, %v6950, %v6946
        %v6952 = vmul.f32 1.0, %v6951
        %v6953 = vld [vmem:[#allocation2] sm:$0xff]
        %v6954 = vld [vmem:[#allocation2 + $0x8] sm:$0xff]
        %v6955 = vld [vmem:[#allocation2 + $0x10] sm:$0xff]
        %v6956 = vld [vmem:[#allocation2 + $0x18] sm:$0xff]
        %v6957 = vld [vmem:[#allocation2 + $0x20] sm:$0xff]
        %v6958 = vld [vmem:[#allocation2 + $0x28] sm:$0xff]
        %v6959 = vld [vmem:[#allocation2 + $0x30] sm:$0xff]
        %v6960 = vld [vmem:[#allocation2 + $0x38] sm:$0xff]
        %v6961 = vld [vmem:[#allocation3] sm:$0xff]
        %v6962 = vld [vmem:[#allocation3 + $0x8] sm:$0xff]
        %v6963 = vld [vmem:[#allocation3 + $0x10] sm:$0xff]
        %v6964 = vld [vmem:[#allocation3 + $0x18] sm:$0xff]
        %v6965 = vld [vmem:[#allocation3 + $0x20] sm:$0xff]
        %v6966 = vld [vmem:[#allocation3 + $0x28] sm:$0xff]
        %v6967 = vld [vmem:[#allocation3 + $0x30] sm:$0xff]
        %v6968 = vld [vmem:[#allocation3 + $0x38] sm:$0xff]
        %v6969 = vmul.f32 %v3177, %v6953
        %v6970 = vmul.f32 %v3192, %v6954
        %v6971 = vmul.f32 %v3207, %v6955
        %v6972 = vmul.f32 %v3222, %v6956
        %v6973 = vmul.f32 %v3237, %v6957
        %v6974 = vmul.f32 %v3252, %v6958
        %v6975 = vmul.f32 %v3267, %v6959
        %v6976 = vmul.f32 %v3282, %v6960
        %v6977 = vsub.f32 1.0, %v3177
        %v6978 = vsub.f32 1.0, %v3192
        %v6979 = vsub.f32 1.0, %v3207
        %v6980 = vsub.f32 1.0, %v3222
        %v6981 = vsub.f32 1.0, %v3237
        %v6982 = vsub.f32 1.0, %v3252
        %v6983 = vsub.f32 1.0, %v3267
        %v6984 = vsub.f32 1.0, %v3282
        %v6985 = vmul.f32 %v6977, %v2159
        %v6986 = vmul.f32 %v6978, %v2160
        %v6987 = vmul.f32 %v6979, %v2161
        %v6988 = vmul.f32 %v6980, %v2162
        %v6989 = vmul.f32 %v6981, %v2163
        %v6990 = vmul.f32 %v6982, %v2164
        %v6991 = vmul.f32 %v6983, %v2165
        %v6992 = vmul.f32 %v6984, %v2166
        %v6993 = vadd.f32 %v6969, %v6985
        %v6994 = vadd.f32 %v6970, %v6986
        %v6995 = vadd.f32 %v6971, %v6987
        %v6996 = vadd.f32 %v6972, %v6988
        %v6997 = vadd.f32 %v6973, %v6989
        %v6998 = vadd.f32 %v6974, %v6990
        %v6999 = vadd.f32 %v6975, %v6991
        %v7000 = vadd.f32 %v6976, %v6992
        %v7001 = vmul.f32 %v6847, %v6961
        %v7002 = vmul.f32 %v6862, %v6962
        %v7003 = vmul.f32 %v6877, %v6963
        %v7004 = vmul.f32 %v6892, %v6964
        %v7005 = vmul.f32 %v6907, %v6965
        %v7006 = vmul.f32 %v6922, %v6966
        %v7007 = vmul.f32 %v6937, %v6967
        %v7008 = vmul.f32 %v6952, %v6968
        %v7009 = vsub.f32 1.0, %v6847
        %v7010 = vsub.f32 1.0, %v6862
        %v7011 = vsub.f32 1.0, %v6877
        %v7012 = vsub.f32 1.0, %v6892
        %v7013 = vsub.f32 1.0, %v6907
        %v7014 = vsub.f32 1.0, %v6922
        %v7015 = vsub.f32 1.0, %v6937
        %v7016 = vsub.f32 1.0, %v6952
        %v7017 = vmul.f32 %v7009, %v5050
        %v7018 = vmul.f32 %v7010, %v5051
        %v7019 = vmul.f32 %v7011, %v5052
        %v7020 = vmul.f32 %v7012, %v5053
        %v7021 = vmul.f32 %v7013, %v5054
        %v7022 = vmul.f32 %v7014, %v5055
        %v7023 = vmul.f32 %v7015, %v5056
        %v7024 = vmul.f32 %v7016, %v5057
        %v7025 = vadd.f32 %v7001, %v7017
        %v7026 = vadd.f32 %v7002, %v7018
        %v7027 = vadd.f32 %v7003, %v7019
        %v7028 = vadd.f32 %v7004, %v7020
        %v7029 = vadd.f32 %v7005, %v7021
        %v7030 = vadd.f32 %v7006, %v7022
        %v7031 = vadd.f32 %v7007, %v7023
        %v7032 = vadd.f32 %v7008, %v7024
        %vm7033 = vcmask 31744
        %7034 = vst.msk [vmem:[%s1116] sm:$0xff] %vm7033, %v6993
        %7035 = vst.msk [vmem:[%s1116 + $0x8] sm:$0xff] %vm7033, %v6994
        %7036 = vst.msk [vmem:[%s1116 + $0x10] sm:$0xff] %vm7033, %v6995
        %7037 = vst.msk [vmem:[%s1116 + $0x18] sm:$0xff] %vm7033, %v6996
        %7038 = vst.msk [vmem:[%s1116 + $0x20] sm:$0xff] %vm7033, %v6997
        %7039 = vst.msk [vmem:[%s1116 + $0x28] sm:$0xff] %vm7033, %v6998
        %7040 = vst.msk [vmem:[%s1116 + $0x30] sm:$0xff] %vm7033, %v6999
        %7041 = vst.msk [vmem:[%s1116 + $0x38] sm:$0xff] %vm7033, %v7000
        %s7042 = scalar_lea.vmem %s1122, 448 [#allocation7]
        %7043 = vst.msk [vmem:[%s7042] sm:$0xff] %vm7033, %v7025
        %7044 = vst.msk [vmem:[%s7042 + $0x8] sm:$0xff] %vm7033, %v7026
        %7045 = vst.msk [vmem:[%s7042 + $0x10] sm:$0xff] %vm7033, %v7027
        %7046 = vst.msk [vmem:[%s7042 + $0x18] sm:$0xff] %vm7033, %v7028
        %7047 = vst.msk [vmem:[%s7042 + $0x20] sm:$0xff] %vm7033, %v7029
        %7048 = vst.msk [vmem:[%s7042 + $0x28] sm:$0xff] %vm7033, %v7030
        %7049 = vst.msk [vmem:[%s7042 + $0x30] sm:$0xff] %vm7033, %v7031
        %7050 = vst.msk [vmem:[%s7042 + $0x38] sm:$0xff] %vm7033, %v7032
        %v7051 = vmul.f32 %v3297, %v6993
        %v7052 = vmul.f32 %v3312, %v6994
        %v7053 = vmul.f32 %v3327, %v6995
        %v7054 = vmul.f32 %v3342, %v6996
        %v7055 = vmul.f32 %v3357, %v6997
        %v7056 = vmul.f32 %v3372, %v6998
        %v7057 = vmul.f32 %v3387, %v6999
        %v7058 = vmul.f32 %v3402, %v7000
        %v7059 = vsub.f32 1.0, %v3297
        %v7060 = vsub.f32 1.0, %v3312
        %v7061 = vsub.f32 1.0, %v3327
        %v7062 = vsub.f32 1.0, %v3342
        %v7063 = vsub.f32 1.0, %v3357
        %v7064 = vsub.f32 1.0, %v3372
        %v7065 = vsub.f32 1.0, %v3387
        %v7066 = vsub.f32 1.0, %v3402
        %v7067 = vmul.f32 %v7059, %v2167
        %v7068 = vmul.f32 %v7060, %v2168
        %v7069 = vmul.f32 %v7061, %v2169
        %v7070 = vmul.f32 %v7062, %v2170
        %v7071 = vmul.f32 %v7063, %v2171
        %v7072 = vmul.f32 %v7064, %v2172
        %v7073 = vmul.f32 %v7065, %v2173
        %v7074 = vmul.f32 %v7066, %v2174
        %v7075 = vadd.f32 %v7051, %v7067
        %v7076 = vadd.f32 %v7052, %v7068
        %v7077 = vadd.f32 %v7053, %v7069
        %v7078 = vadd.f32 %v7054, %v7070
        %v7079 = vadd.f32 %v7055, %v7071
        %v7080 = vadd.f32 %v7056, %v7072
        %v7081 = vadd.f32 %v7057, %v7073
        %v7082 = vadd.f32 %v7058, %v7074
        %v7083 = vmul.f32 %v6727, %v7025
        %v7084 = vmul.f32 %v6742, %v7026
        %v7085 = vmul.f32 %v6757, %v7027
        %v7086 = vmul.f32 %v6772, %v7028
        %v7087 = vmul.f32 %v6787, %v7029
        %v7088 = vmul.f32 %v6802, %v7030
        %v7089 = vmul.f32 %v6817, %v7031
        %v7090 = vmul.f32 %v6832, %v7032
        %v7091 = vsub.f32 1.0, %v6727
        %v7092 = vsub.f32 1.0, %v6742
        %v7093 = vsub.f32 1.0, %v6757
        %v7094 = vsub.f32 1.0, %v6772
        %v7095 = vsub.f32 1.0, %v6787
        %v7096 = vsub.f32 1.0, %v6802
        %v7097 = vsub.f32 1.0, %v6817
        %v7098 = vsub.f32 1.0, %v6832
        %v7099 = vmul.f32 %v7091, %v5042
        %v7100 = vmul.f32 %v7092, %v5043
        %v7101 = vmul.f32 %v7093, %v5044
        %v7102 = vmul.f32 %v7094, %v5045
        %v7103 = vmul.f32 %v7095, %v5046
        %v7104 = vmul.f32 %v7096, %v5047
        %v7105 = vmul.f32 %v7097, %v5048
        %v7106 = vmul.f32 %v7098, %v5049
        %v7107 = vadd.f32 %v7083, %v7099
        %v7108 = vadd.f32 %v7084, %v7100
        %v7109 = vadd.f32 %v7085, %v7101
        %v7110 = vadd.f32 %v7086, %v7102
        %v7111 = vadd.f32 %v7087, %v7103
        %v7112 = vadd.f32 %v7088, %v7104
        %v7113 = vadd.f32 %v7089, %v7105
        %v7114 = vadd.f32 %v7090, %v7106
        %s7115 = scalar_lea.vmem %s1116, 64 [#allocation6]
        %7116 = vst.msk [vmem:[%s7115] sm:$0xff] %vm7033, %v7075
        %7117 = vst.msk [vmem:[%s7115 + $0x8] sm:$0xff] %vm7033, %v7076
        %7118 = vst.msk [vmem:[%s7115 + $0x10] sm:$0xff] %vm7033, %v7077
        %7119 = vst.msk [vmem:[%s7115 + $0x18] sm:$0xff] %vm7033, %v7078
        %7120 = vst.msk [vmem:[%s7115 + $0x20] sm:$0xff] %vm7033, %v7079
        %7121 = vst.msk [vmem:[%s7115 + $0x28] sm:$0xff] %vm7033, %v7080
        %7122 = vst.msk [vmem:[%s7115 + $0x30] sm:$0xff] %vm7033, %v7081
        %7123 = vst.msk [vmem:[%s7115 + $0x38] sm:$0xff] %vm7033, %v7082
        %s7124 = scalar_lea.vmem %s1122, 384 [#allocation7]
        %7125 = vst.msk [vmem:[%s7124] sm:$0xff] %vm7033, %v7107
        %7126 = vst.msk [vmem:[%s7124 + $0x8] sm:$0xff] %vm7033, %v7108
        %7127 = vst.msk [vmem:[%s7124 + $0x10] sm:$0xff] %vm7033, %v7109
        %7128 = vst.msk [vmem:[%s7124 + $0x18] sm:$0xff] %vm7033, %v7110
        %7129 = vst.msk [vmem:[%s7124 + $0x20] sm:$0xff] %vm7033, %v7111
        %7130 = vst.msk [vmem:[%s7124 + $0x28] sm:$0xff] %vm7033, %v7112
        %7131 = vst.msk [vmem:[%s7124 + $0x30] sm:$0xff] %vm7033, %v7113
        %7132 = vst.msk [vmem:[%s7124 + $0x38] sm:$0xff] %vm7033, %v7114
        %v7133 = vmul.f32 %v3417, %v7075
        %v7134 = vmul.f32 %v3432, %v7076
        %v7135 = vmul.f32 %v3447, %v7077
        %v7136 = vmul.f32 %v3462, %v7078
        %v7137 = vmul.f32 %v3477, %v7079
        %v7138 = vmul.f32 %v3492, %v7080
        %v7139 = vmul.f32 %v3507, %v7081
        %v7140 = vmul.f32 %v3522, %v7082
        %v7141 = vsub.f32 1.0, %v3417
        %v7142 = vsub.f32 1.0, %v3432
        %v7143 = vsub.f32 1.0, %v3447
        %v7144 = vsub.f32 1.0, %v3462
        %v7145 = vsub.f32 1.0, %v3477
        %v7146 = vsub.f32 1.0, %v3492
        %v7147 = vsub.f32 1.0, %v3507
        %v7148 = vsub.f32 1.0, %v3522
        %v7149 = vmul.f32 %v7141, %v2175
        %v7150 = vmul.f32 %v7142, %v2176
        %v7151 = vmul.f32 %v7143, %v2177
        %v7152 = vmul.f32 %v7144, %v2178
        %v7153 = vmul.f32 %v7145, %v2179
        %v7154 = vmul.f32 %v7146, %v2180
        %v7155 = vmul.f32 %v7147, %v2181
        %v7156 = vmul.f32 %v7148, %v2182
        %v7157 = vadd.f32 %v7133, %v7149
        %v7158 = vadd.f32 %v7134, %v7150
        %v7159 = vadd.f32 %v7135, %v7151
        %v7160 = vadd.f32 %v7136, %v7152
        %v7161 = vadd.f32 %v7137, %v7153
        %v7162 = vadd.f32 %v7138, %v7154
        %v7163 = vadd.f32 %v7139, %v7155
        %v7164 = vadd.f32 %v7140, %v7156
        %v7165 = vmul.f32 %v6607, %v7107
        %v7166 = vmul.f32 %v6622, %v7108
        %v7167 = vmul.f32 %v6637, %v7109
        %v7168 = vmul.f32 %v6652, %v7110
        %v7169 = vmul.f32 %v6667, %v7111
        %v7170 = vmul.f32 %v6682, %v7112
        %v7171 = vmul.f32 %v6697, %v7113
        %v7172 = vmul.f32 %v6712, %v7114
        %v7173 = vsub.f32 1.0, %v6607
        %v7174 = vsub.f32 1.0, %v6622
        %v7175 = vsub.f32 1.0, %v6637
        %v7176 = vsub.f32 1.0, %v6652
        %v7177 = vsub.f32 1.0, %v6667
        %v7178 = vsub.f32 1.0, %v6682
        %v7179 = vsub.f32 1.0, %v6697
        %v7180 = vsub.f32 1.0, %v6712
        %v7181 = vmul.f32 %v7173, %v5034
        %v7182 = vmul.f32 %v7174, %v5035
        %v7183 = vmul.f32 %v7175, %v5036
        %v7184 = vmul.f32 %v7176, %v5037
        %v7185 = vmul.f32 %v7177, %v5038
        %v7186 = vmul.f32 %v7178, %v5039
        %v7187 = vmul.f32 %v7179, %v5040
        %v7188 = vmul.f32 %v7180, %v5041
        %v7189 = vadd.f32 %v7165, %v7181
        %v7190 = vadd.f32 %v7166, %v7182
        %v7191 = vadd.f32 %v7167, %v7183
        %v7192 = vadd.f32 %v7168, %v7184
        %v7193 = vadd.f32 %v7169, %v7185
        %v7194 = vadd.f32 %v7170, %v7186
        %v7195 = vadd.f32 %v7171, %v7187
        %v7196 = vadd.f32 %v7172, %v7188
        %s7197 = scalar_lea.vmem %s1116, 128 [#allocation6]
        %7198 = vst.msk [vmem:[%s7197] sm:$0xff] %vm7033, %v7157
        %7199 = vst.msk [vmem:[%s7197 + $0x8] sm:$0xff] %vm7033, %v7158
        %7200 = vst.msk [vmem:[%s7197 + $0x10] sm:$0xff] %vm7033, %v7159
        %7201 = vst.msk [vmem:[%s7197 + $0x18] sm:$0xff] %vm7033, %v7160
        %7202 = vst.msk [vmem:[%s7197 + $0x20] sm:$0xff] %vm7033, %v7161
        %7203 = vst.msk [vmem:[%s7197 + $0x28] sm:$0xff] %vm7033, %v7162
        %7204 = vst.msk [vmem:[%s7197 + $0x30] sm:$0xff] %vm7033, %v7163
        %7205 = vst.msk [vmem:[%s7197 + $0x38] sm:$0xff] %vm7033, %v7164
        %s7206 = scalar_lea.vmem %s1122, 320 [#allocation7]
        %7207 = vst.msk [vmem:[%s7206] sm:$0xff] %vm7033, %v7189
        %7208 = vst.msk [vmem:[%s7206 + $0x8] sm:$0xff] %vm7033, %v7190
        %7209 = vst.msk [vmem:[%s7206 + $0x10] sm:$0xff] %vm7033, %v7191
        %7210 = vst.msk [vmem:[%s7206 + $0x18] sm:$0xff] %vm7033, %v7192
        %7211 = vst.msk [vmem:[%s7206 + $0x20] sm:$0xff] %vm7033, %v7193
        %7212 = vst.msk [vmem:[%s7206 + $0x28] sm:$0xff] %vm7033, %v7194
        %7213 = vst.msk [vmem:[%s7206 + $0x30] sm:$0xff] %vm7033, %v7195
        %7214 = vst.msk [vmem:[%s7206 + $0x38] sm:$0xff] %vm7033, %v7196
        %v7215 = vmul.f32 %v3537, %v7157
        %v7216 = vmul.f32 %v3552, %v7158
        %v7217 = vmul.f32 %v3567, %v7159
        %v7218 = vmul.f32 %v3582, %v7160
        %v7219 = vmul.f32 %v3597, %v7161
        %v7220 = vmul.f32 %v3612, %v7162
        %v7221 = vmul.f32 %v3627, %v7163
        %v7222 = vmul.f32 %v3642, %v7164
        %v7223 = vsub.f32 1.0, %v3537
        %v7224 = vsub.f32 1.0, %v3552
        %v7225 = vsub.f32 1.0, %v3567
        %v7226 = vsub.f32 1.0, %v3582
        %v7227 = vsub.f32 1.0, %v3597
        %v7228 = vsub.f32 1.0, %v3612
        %v7229 = vsub.f32 1.0, %v3627
        %v7230 = vsub.f32 1.0, %v3642
        %v7231 = vmul.f32 %v7223, %v2183
        %v7232 = vmul.f32 %v7224, %v2184
        %v7233 = vmul.f32 %v7225, %v2185
        %v7234 = vmul.f32 %v7226, %v2186
        %v7235 = vmul.f32 %v7227, %v2187
        %v7236 = vmul.f32 %v7228, %v2188
        %v7237 = vmul.f32 %v7229, %v2189
        %v7238 = vmul.f32 %v7230, %v2190
        %v7239 = vadd.f32 %v7215, %v7231
        %v7240 = vadd.f32 %v7216, %v7232
        %v7241 = vadd.f32 %v7217, %v7233
        %v7242 = vadd.f32 %v7218, %v7234
        %v7243 = vadd.f32 %v7219, %v7235
        %v7244 = vadd.f32 %v7220, %v7236
        %v7245 = vadd.f32 %v7221, %v7237
        %v7246 = vadd.f32 %v7222, %v7238
        %v7247 = vmul.f32 %v6487, %v7189
        %v7248 = vmul.f32 %v6502, %v7190
        %v7249 = vmul.f32 %v6517, %v7191
        %v7250 = vmul.f32 %v6532, %v7192
        %v7251 = vmul.f32 %v6547, %v7193
        %v7252 = vmul.f32 %v6562, %v7194
        %v7253 = vmul.f32 %v6577, %v7195
        %v7254 = vmul.f32 %v6592, %v7196
        %v7255 = vsub.f32 1.0, %v6487
        %v7256 = vsub.f32 1.0, %v6502
        %v7257 = vsub.f32 1.0, %v6517
        %v7258 = vsub.f32 1.0, %v6532
        %v7259 = vsub.f32 1.0, %v6547
        %v7260 = vsub.f32 1.0, %v6562
        %v7261 = vsub.f32 1.0, %v6577
        %v7262 = vsub.f32 1.0, %v6592
        %v7263 = vmul.f32 %v7255, %v5026
        %v7264 = vmul.f32 %v7256, %v5027
        %v7265 = vmul.f32 %v7257, %v5028
        %v7266 = vmul.f32 %v7258, %v5029
        %v7267 = vmul.f32 %v7259, %v5030
        %v7268 = vmul.f32 %v7260, %v5031
        %v7269 = vmul.f32 %v7261, %v5032
        %v7270 = vmul.f32 %v7262, %v5033
        %v7271 = vadd.f32 %v7247, %v7263
        %v7272 = vadd.f32 %v7248, %v7264
        %v7273 = vadd.f32 %v7249, %v7265
        %v7274 = vadd.f32 %v7250, %v7266
        %v7275 = vadd.f32 %v7251, %v7267
        %v7276 = vadd.f32 %v7252, %v7268
        %v7277 = vadd.f32 %v7253, %v7269
        %v7278 = vadd.f32 %v7254, %v7270
        %s7279 = scalar_lea.vmem %s1116, 192 [#allocation6]
        %7280 = vst.msk [vmem:[%s7279] sm:$0xff] %vm7033, %v7239
        %7281 = vst.msk [vmem:[%s7279 + $0x8] sm:$0xff] %vm7033, %v7240
        %7282 = vst.msk [vmem:[%s7279 + $0x10] sm:$0xff] %vm7033, %v7241
        %7283 = vst.msk [vmem:[%s7279 + $0x18] sm:$0xff] %vm7033, %v7242
        %7284 = vst.msk [vmem:[%s7279 + $0x20] sm:$0xff] %vm7033, %v7243
        %7285 = vst.msk [vmem:[%s7279 + $0x28] sm:$0xff] %vm7033, %v7244
        %7286 = vst.msk [vmem:[%s7279 + $0x30] sm:$0xff] %vm7033, %v7245
        %7287 = vst.msk [vmem:[%s7279 + $0x38] sm:$0xff] %vm7033, %v7246
        %s7288 = scalar_lea.vmem %s1122, 256 [#allocation7]
        %7289 = vst.msk [vmem:[%s7288] sm:$0xff] %vm7033, %v7271
        %7290 = vst.msk [vmem:[%s7288 + $0x8] sm:$0xff] %vm7033, %v7272
        %7291 = vst.msk [vmem:[%s7288 + $0x10] sm:$0xff] %vm7033, %v7273
        %7292 = vst.msk [vmem:[%s7288 + $0x18] sm:$0xff] %vm7033, %v7274
        %7293 = vst.msk [vmem:[%s7288 + $0x20] sm:$0xff] %vm7033, %v7275
        %7294 = vst.msk [vmem:[%s7288 + $0x28] sm:$0xff] %vm7033, %v7276
        %7295 = vst.msk [vmem:[%s7288 + $0x30] sm:$0xff] %vm7033, %v7277
        %7296 = vst.msk [vmem:[%s7288 + $0x38] sm:$0xff] %vm7033, %v7278
        %v7297 = vmul.f32 %v3657, %v7239
        %v7298 = vmul.f32 %v3672, %v7240
        %v7299 = vmul.f32 %v3687, %v7241
        %v7300 = vmul.f32 %v3702, %v7242
        %v7301 = vmul.f32 %v3717, %v7243
        %v7302 = vmul.f32 %v3732, %v7244
        %v7303 = vmul.f32 %v3747, %v7245
        %v7304 = vmul.f32 %v3762, %v7246
        %v7305 = vsub.f32 1.0, %v3657
        %v7306 = vsub.f32 1.0, %v3672
        %v7307 = vsub.f32 1.0, %v3687
        %v7308 = vsub.f32 1.0, %v3702
        %v7309 = vsub.f32 1.0, %v3717
        %v7310 = vsub.f32 1.0, %v3732
        %v7311 = vsub.f32 1.0, %v3747
        %v7312 = vsub.f32 1.0, %v3762
        %v7313 = vmul.f32 %v7305, %v2191
        %v7314 = vmul.f32 %v7306, %v2192
        %v7315 = vmul.f32 %v7307, %v2193
        %v7316 = vmul.f32 %v7308, %v2194
        %v7317 = vmul.f32 %v7309, %v2195
        %v7318 = vmul.f32 %v7310, %v2196
        %v7319 = vmul.f32 %v7311, %v2197
        %v7320 = vmul.f32 %v7312, %v2198
        %v7321 = vadd.f32 %v7297, %v7313
        %v7322 = vadd.f32 %v7298, %v7314
        %v7323 = vadd.f32 %v7299, %v7315
        %v7324 = vadd.f32 %v7300, %v7316
        %v7325 = vadd.f32 %v7301, %v7317
        %v7326 = vadd.f32 %v7302, %v7318
        %v7327 = vadd.f32 %v7303, %v7319
        %v7328 = vadd.f32 %v7304, %v7320
        %v7329 = vmul.f32 %v6367, %v7271
        %v7330 = vmul.f32 %v6382, %v7272
        %v7331 = vmul.f32 %v6397, %v7273
        %v7332 = vmul.f32 %v6412, %v7274
        %v7333 = vmul.f32 %v6427, %v7275
        %v7334 = vmul.f32 %v6442, %v7276
        %v7335 = vmul.f32 %v6457, %v7277
        %v7336 = vmul.f32 %v6472, %v7278
        %v7337 = vsub.f32 1.0, %v6367
        %v7338 = vsub.f32 1.0, %v6382
        %v7339 = vsub.f32 1.0, %v6397
        %v7340 = vsub.f32 1.0, %v6412
        %v7341 = vsub.f32 1.0, %v6427
        %v7342 = vsub.f32 1.0, %v6442
        %v7343 = vsub.f32 1.0, %v6457
        %v7344 = vsub.f32 1.0, %v6472
        %v7345 = vmul.f32 %v7337, %v5018
        %v7346 = vmul.f32 %v7338, %v5019
        %v7347 = vmul.f32 %v7339, %v5020
        %v7348 = vmul.f32 %v7340, %v5021
        %v7349 = vmul.f32 %v7341, %v5022
        %v7350 = vmul.f32 %v7342, %v5023
        %v7351 = vmul.f32 %v7343, %v5024
        %v7352 = vmul.f32 %v7344, %v5025
        %v7353 = vadd.f32 %v7329, %v7345
        %v7354 = vadd.f32 %v7330, %v7346
        %v7355 = vadd.f32 %v7331, %v7347
        %v7356 = vadd.f32 %v7332, %v7348
        %v7357 = vadd.f32 %v7333, %v7349
        %v7358 = vadd.f32 %v7334, %v7350
        %v7359 = vadd.f32 %v7335, %v7351
        %v7360 = vadd.f32 %v7336, %v7352
        %s7361 = scalar_lea.vmem %s1116, 256 [#allocation6]
        %7362 = vst.msk [vmem:[%s7361] sm:$0xff] %vm7033, %v7321
        %7363 = vst.msk [vmem:[%s7361 + $0x8] sm:$0xff] %vm7033, %v7322
        %7364 = vst.msk [vmem:[%s7361 + $0x10] sm:$0xff] %vm7033, %v7323
        %7365 = vst.msk [vmem:[%s7361 + $0x18] sm:$0xff] %vm7033, %v7324
        %7366 = vst.msk [vmem:[%s7361 + $0x20] sm:$0xff] %vm7033, %v7325
        %7367 = vst.msk [vmem:[%s7361 + $0x28] sm:$0xff] %vm7033, %v7326
        %7368 = vst.msk [vmem:[%s7361 + $0x30] sm:$0xff] %vm7033, %v7327
        %7369 = vst.msk [vmem:[%s7361 + $0x38] sm:$0xff] %vm7033, %v7328
        %s7370 = scalar_lea.vmem %s1122, 192 [#allocation7]
        %7371 = vst.msk [vmem:[%s7370] sm:$0xff] %vm7033, %v7353
        %7372 = vst.msk [vmem:[%s7370 + $0x8] sm:$0xff] %vm7033, %v7354
        %7373 = vst.msk [vmem:[%s7370 + $0x10] sm:$0xff] %vm7033, %v7355
        %7374 = vst.msk [vmem:[%s7370 + $0x18] sm:$0xff] %vm7033, %v7356
        %7375 = vst.msk [vmem:[%s7370 + $0x20] sm:$0xff] %vm7033, %v7357
        %7376 = vst.msk [vmem:[%s7370 + $0x28] sm:$0xff] %vm7033, %v7358
        %7377 = vst.msk [vmem:[%s7370 + $0x30] sm:$0xff] %vm7033, %v7359
        %7378 = vst.msk [vmem:[%s7370 + $0x38] sm:$0xff] %vm7033, %v7360
        %v7379 = vmul.f32 %v3777, %v7321
        %v7380 = vmul.f32 %v3792, %v7322
        %v7381 = vmul.f32 %v3807, %v7323
        %v7382 = vmul.f32 %v3822, %v7324
        %v7383 = vmul.f32 %v3837, %v7325
        %v7384 = vmul.f32 %v3852, %v7326
        %v7385 = vmul.f32 %v3867, %v7327
        %v7386 = vmul.f32 %v3882, %v7328
        %v7387 = vsub.f32 1.0, %v3777
        %v7388 = vsub.f32 1.0, %v3792
        %v7389 = vsub.f32 1.0, %v3807
        %v7390 = vsub.f32 1.0, %v3822
        %v7391 = vsub.f32 1.0, %v3837
        %v7392 = vsub.f32 1.0, %v3852
        %v7393 = vsub.f32 1.0, %v3867
        %v7394 = vsub.f32 1.0, %v3882
        %v7395 = vmul.f32 %v7387, %v2199
        %v7396 = vmul.f32 %v7388, %v2200
        %v7397 = vmul.f32 %v7389, %v2201
        %v7398 = vmul.f32 %v7390, %v2202
        %v7399 = vmul.f32 %v7391, %v2203
        %v7400 = vmul.f32 %v7392, %v2204
        %v7401 = vmul.f32 %v7393, %v2205
        %v7402 = vmul.f32 %v7394, %v2206
        %v7403 = vadd.f32 %v7379, %v7395
        %v7404 = vadd.f32 %v7380, %v7396
        %v7405 = vadd.f32 %v7381, %v7397
        %v7406 = vadd.f32 %v7382, %v7398
        %v7407 = vadd.f32 %v7383, %v7399
        %v7408 = vadd.f32 %v7384, %v7400
        %v7409 = vadd.f32 %v7385, %v7401
        %v7410 = vadd.f32 %v7386, %v7402
        %v7411 = vmul.f32 %v6247, %v7353
        %v7412 = vmul.f32 %v6262, %v7354
        %v7413 = vmul.f32 %v6277, %v7355
        %v7414 = vmul.f32 %v6292, %v7356
        %v7415 = vmul.f32 %v6307, %v7357
        %v7416 = vmul.f32 %v6322, %v7358
        %v7417 = vmul.f32 %v6337, %v7359
        %v7418 = vmul.f32 %v6352, %v7360
        %v7419 = vsub.f32 1.0, %v6247
        %v7420 = vsub.f32 1.0, %v6262
        %v7421 = vsub.f32 1.0, %v6277
        %v7422 = vsub.f32 1.0, %v6292
        %v7423 = vsub.f32 1.0, %v6307
        %v7424 = vsub.f32 1.0, %v6322
        %v7425 = vsub.f32 1.0, %v6337
        %v7426 = vsub.f32 1.0, %v6352
        %v7427 = vmul.f32 %v7419, %v5010
        %v7428 = vmul.f32 %v7420, %v5011
        %v7429 = vmul.f32 %v7421, %v5012
        %v7430 = vmul.f32 %v7422, %v5013
        %v7431 = vmul.f32 %v7423, %v5014
        %v7432 = vmul.f32 %v7424, %v5015
        %v7433 = vmul.f32 %v7425, %v5016
        %v7434 = vmul.f32 %v7426, %v5017
        %v7435 = vadd.f32 %v7411, %v7427
        %v7436 = vadd.f32 %v7412, %v7428
        %v7437 = vadd.f32 %v7413, %v7429
        %v7438 = vadd.f32 %v7414, %v7430
        %v7439 = vadd.f32 %v7415, %v7431
        %v7440 = vadd.f32 %v7416, %v7432
        %v7441 = vadd.f32 %v7417, %v7433
        %v7442 = vadd.f32 %v7418, %v7434
        %s7443 = scalar_lea.vmem %s1116, 320 [#allocation6]
        %7444 = vst.msk [vmem:[%s7443] sm:$0xff] %vm7033, %v7403
        %7445 = vst.msk [vmem:[%s7443 + $0x8] sm:$0xff] %vm7033, %v7404
        %7446 = vst.msk [vmem:[%s7443 + $0x10] sm:$0xff] %vm7033, %v7405
        %7447 = vst.msk [vmem:[%s7443 + $0x18] sm:$0xff] %vm7033, %v7406
        %7448 = vst.msk [vmem:[%s7443 + $0x20] sm:$0xff] %vm7033, %v7407
        %7449 = vst.msk [vmem:[%s7443 + $0x28] sm:$0xff] %vm7033, %v7408
        %7450 = vst.msk [vmem:[%s7443 + $0x30] sm:$0xff] %vm7033, %v7409
        %7451 = vst.msk [vmem:[%s7443 + $0x38] sm:$0xff] %vm7033, %v7410
        %s7452 = scalar_lea.vmem %s1122, 128 [#allocation7]
        %7453 = vst.msk [vmem:[%s7452] sm:$0xff] %vm7033, %v7435
        %7454 = vst.msk [vmem:[%s7452 + $0x8] sm:$0xff] %vm7033, %v7436
        %7455 = vst.msk [vmem:[%s7452 + $0x10] sm:$0xff] %vm7033, %v7437
        %7456 = vst.msk [vmem:[%s7452 + $0x18] sm:$0xff] %vm7033, %v7438
        %7457 = vst.msk [vmem:[%s7452 + $0x20] sm:$0xff] %vm7033, %v7439
        %7458 = vst.msk [vmem:[%s7452 + $0x28] sm:$0xff] %vm7033, %v7440
        %7459 = vst.msk [vmem:[%s7452 + $0x30] sm:$0xff] %vm7033, %v7441
        %7460 = vst.msk [vmem:[%s7452 + $0x38] sm:$0xff] %vm7033, %v7442
        %v7461 = vmul.f32 %v3897, %v7403
        %v7462 = vmul.f32 %v3912, %v7404
        %v7463 = vmul.f32 %v3927, %v7405
        %v7464 = vmul.f32 %v3942, %v7406
        %v7465 = vmul.f32 %v3957, %v7407
        %v7466 = vmul.f32 %v3972, %v7408
        %v7467 = vmul.f32 %v3987, %v7409
        %v7468 = vmul.f32 %v4002, %v7410
        %v7469 = vsub.f32 1.0, %v3897
        %v7470 = vsub.f32 1.0, %v3912
        %v7471 = vsub.f32 1.0, %v3927
        %v7472 = vsub.f32 1.0, %v3942
        %v7473 = vsub.f32 1.0, %v3957
        %v7474 = vsub.f32 1.0, %v3972
        %v7475 = vsub.f32 1.0, %v3987
        %v7476 = vsub.f32 1.0, %v4002
        %v7477 = vmul.f32 %v7469, %v2207
        %v7478 = vmul.f32 %v7470, %v2208
        %v7479 = vmul.f32 %v7471, %v2209
        %v7480 = vmul.f32 %v7472, %v2210
        %v7481 = vmul.f32 %v7473, %v2211
        %v7482 = vmul.f32 %v7474, %v2212
        %v7483 = vmul.f32 %v7475, %v2213
        %v7484 = vmul.f32 %v7476, %v2214
        %v7485 = vadd.f32 %v7461, %v7477
        %v7486 = vadd.f32 %v7462, %v7478
        %v7487 = vadd.f32 %v7463, %v7479
        %v7488 = vadd.f32 %v7464, %v7480
        %v7489 = vadd.f32 %v7465, %v7481
        %v7490 = vadd.f32 %v7466, %v7482
        %v7491 = vadd.f32 %v7467, %v7483
        %v7492 = vadd.f32 %v7468, %v7484
        %v7493 = vmul.f32 %v6127, %v7435
        %v7494 = vmul.f32 %v6142, %v7436
        %v7495 = vmul.f32 %v6157, %v7437
        %v7496 = vmul.f32 %v6172, %v7438
        %v7497 = vmul.f32 %v6187, %v7439
        %v7498 = vmul.f32 %v6202, %v7440
        %v7499 = vmul.f32 %v6217, %v7441
        %v7500 = vmul.f32 %v6232, %v7442
        %v7501 = vsub.f32 1.0, %v6127
        %v7502 = vsub.f32 1.0, %v6142
        %v7503 = vsub.f32 1.0, %v6157
        %v7504 = vsub.f32 1.0, %v6172
        %v7505 = vsub.f32 1.0, %v6187
        %v7506 = vsub.f32 1.0, %v6202
        %v7507 = vsub.f32 1.0, %v6217
        %v7508 = vsub.f32 1.0, %v6232
        %v7509 = vmul.f32 %v7501, %v5002
        %v7510 = vmul.f32 %v7502, %v5003
        %v7511 = vmul.f32 %v7503, %v5004
        %v7512 = vmul.f32 %v7504, %v5005
        %v7513 = vmul.f32 %v7505, %v5006
        %v7514 = vmul.f32 %v7506, %v5007
        %v7515 = vmul.f32 %v7507, %v5008
        %v7516 = vmul.f32 %v7508, %v5009
        %v7517 = vadd.f32 %v7493, %v7509
        %v7518 = vadd.f32 %v7494, %v7510
        %v7519 = vadd.f32 %v7495, %v7511
        %v7520 = vadd.f32 %v7496, %v7512
        %v7521 = vadd.f32 %v7497, %v7513
        %v7522 = vadd.f32 %v7498, %v7514
        %v7523 = vadd.f32 %v7499, %v7515
        %v7524 = vadd.f32 %v7500, %v7516
        %s7525 = scalar_lea.vmem %s1116, 384 [#allocation6]
        %7526 = vst.msk [vmem:[%s7525] sm:$0xff] %vm7033, %v7485
        %7527 = vst.msk [vmem:[%s7525 + $0x8] sm:$0xff] %vm7033, %v7486
        %7528 = vst.msk [vmem:[%s7525 + $0x10] sm:$0xff] %vm7033, %v7487
        %7529 = vst.msk [vmem:[%s7525 + $0x18] sm:$0xff] %vm7033, %v7488
        %7530 = vst.msk [vmem:[%s7525 + $0x20] sm:$0xff] %vm7033, %v7489
        %7531 = vst.msk [vmem:[%s7525 + $0x28] sm:$0xff] %vm7033, %v7490
        %7532 = vst.msk [vmem:[%s7525 + $0x30] sm:$0xff] %vm7033, %v7491
        %7533 = vst.msk [vmem:[%s7525 + $0x38] sm:$0xff] %vm7033, %v7492
        %s7534 = scalar_lea.vmem %s1122, 64 [#allocation7]
        %7535 = vst.msk [vmem:[%s7534] sm:$0xff] %vm7033, %v7517
        %7536 = vst.msk [vmem:[%s7534 + $0x8] sm:$0xff] %vm7033, %v7518
        %7537 = vst.msk [vmem:[%s7534 + $0x10] sm:$0xff] %vm7033, %v7519
        %7538 = vst.msk [vmem:[%s7534 + $0x18] sm:$0xff] %vm7033, %v7520
        %7539 = vst.msk [vmem:[%s7534 + $0x20] sm:$0xff] %vm7033, %v7521
        %7540 = vst.msk [vmem:[%s7534 + $0x28] sm:$0xff] %vm7033, %v7522
        %7541 = vst.msk [vmem:[%s7534 + $0x30] sm:$0xff] %vm7033, %v7523
        %7542 = vst.msk [vmem:[%s7534 + $0x38] sm:$0xff] %vm7033, %v7524
        %v7543 = vmul.f32 %v4017, %v7485
        %v7544 = vmul.f32 %v4032, %v7486
        %v7545 = vmul.f32 %v4047, %v7487
        %v7546 = vmul.f32 %v4062, %v7488
        %v7547 = vmul.f32 %v4077, %v7489
        %v7548 = vmul.f32 %v4092, %v7490
        %v7549 = vmul.f32 %v4107, %v7491
        %v7550 = vmul.f32 %v4122, %v7492
        %v7551 = vsub.f32 1.0, %v4017
        %v7552 = vsub.f32 1.0, %v4032
        %v7553 = vsub.f32 1.0, %v4047
        %v7554 = vsub.f32 1.0, %v4062
        %v7555 = vsub.f32 1.0, %v4077
        %v7556 = vsub.f32 1.0, %v4092
        %v7557 = vsub.f32 1.0, %v4107
        %v7558 = vsub.f32 1.0, %v4122
        %v7559 = vmul.f32 %v7551, %v2215
        %v7560 = vmul.f32 %v7552, %v2216
        %v7561 = vmul.f32 %v7553, %v2217
        %v7562 = vmul.f32 %v7554, %v2218
        %v7563 = vmul.f32 %v7555, %v2219
        %v7564 = vmul.f32 %v7556, %v2220
        %v7565 = vmul.f32 %v7557, %v2221
        %v7566 = vmul.f32 %v7558, %v2222
        %v7567 = vadd.f32 %v7543, %v7559
        %v7568 = vadd.f32 %v7544, %v7560
        %v7569 = vadd.f32 %v7545, %v7561
        %v7570 = vadd.f32 %v7546, %v7562
        %v7571 = vadd.f32 %v7547, %v7563
        %v7572 = vadd.f32 %v7548, %v7564
        %v7573 = vadd.f32 %v7549, %v7565
        %v7574 = vadd.f32 %v7550, %v7566
        %v7575 = vmul.f32 %v6007, %v7517
        %v7576 = vmul.f32 %v6022, %v7518
        %v7577 = vmul.f32 %v6037, %v7519
        %v7578 = vmul.f32 %v6052, %v7520
        %v7579 = vmul.f32 %v6067, %v7521
        %v7580 = vmul.f32 %v6082, %v7522
        %v7581 = vmul.f32 %v6097, %v7523
        %v7582 = vmul.f32 %v6112, %v7524
        %v7583 = vsub.f32 1.0, %v6007
        %v7584 = vsub.f32 1.0, %v6022
        %v7585 = vsub.f32 1.0, %v6037
        %v7586 = vsub.f32 1.0, %v6052
        %v7587 = vsub.f32 1.0, %v6067
        %v7588 = vsub.f32 1.0, %v6082
        %v7589 = vsub.f32 1.0, %v6097
        %v7590 = vsub.f32 1.0, %v6112
        %v7591 = vmul.f32 %v7583, %v4994
        %v7592 = vmul.f32 %v7584, %v4995
        %v7593 = vmul.f32 %v7585, %v4996
        %v7594 = vmul.f32 %v7586, %v4997
        %v7595 = vmul.f32 %v7587, %v4998
        %v7596 = vmul.f32 %v7588, %v4999
        %v7597 = vmul.f32 %v7589, %v5000
        %v7598 = vmul.f32 %v7590, %v5001
        %v7599 = vadd.f32 %v7575, %v7591
        %v7600 = vadd.f32 %v7576, %v7592
        %v7601 = vadd.f32 %v7577, %v7593
        %v7602 = vadd.f32 %v7578, %v7594
        %v7603 = vadd.f32 %v7579, %v7595
        %v7604 = vadd.f32 %v7580, %v7596
        %v7605 = vadd.f32 %v7581, %v7597
        %v7606 = vadd.f32 %v7582, %v7598
        %s7607 = scalar_lea.vmem %s1116, 448 [#allocation6]
        %7608 = vst.msk [vmem:[%s7607] sm:$0xff] %vm7033, %v7567
        %7609 = vst.msk [vmem:[%s7607 + $0x8] sm:$0xff] %vm7033, %v7568
        %7610 = vst.msk [vmem:[%s7607 + $0x10] sm:$0xff] %vm7033, %v7569
        %7611 = vst.msk [vmem:[%s7607 + $0x18] sm:$0xff] %vm7033, %v7570
        %7612 = vst.msk [vmem:[%s7607 + $0x20] sm:$0xff] %vm7033, %v7571
        %7613 = vst.msk [vmem:[%s7607 + $0x28] sm:$0xff] %vm7033, %v7572
        %7614 = vst.msk [vmem:[%s7607 + $0x30] sm:$0xff] %vm7033, %v7573
        %7615 = vst.msk [vmem:[%s7607 + $0x38] sm:$0xff] %vm7033, %v7574
        %7616 = vst.msk [vmem:[%s1122] sm:$0xff] %vm7033, %v7599
        %7617 = vst.msk [vmem:[%s1122 + $0x8] sm:$0xff] %vm7033, %v7600
        %7618 = vst.msk [vmem:[%s1122 + $0x10] sm:$0xff] %vm7033, %v7601
        %7619 = vst.msk [vmem:[%s1122 + $0x18] sm:$0xff] %vm7033, %v7602
        %7620 = vst.msk [vmem:[%s1122 + $0x20] sm:$0xff] %vm7033, %v7603
        %7621 = vst.msk [vmem:[%s1122 + $0x28] sm:$0xff] %vm7033, %v7604
        %7622 = vst.msk [vmem:[%s1122 + $0x30] sm:$0xff] %vm7033, %v7605
        %7623 = vst.msk [vmem:[%s1122 + $0x38] sm:$0xff] %vm7033, %v7606
        %7624 = vst.msk [vmem:[#allocation2] sm:$0xff] %vm7033, %v7567
        %7625 = vst.msk [vmem:[#allocation2 + $0x8] sm:$0xff] %vm7033, %v7568
        %7626 = vst.msk [vmem:[#allocation2 + $0x10] sm:$0xff] %vm7033, %v7569
        %7627 = vst.msk [vmem:[#allocation2 + $0x18] sm:$0xff] %vm7033, %v7570
        %7628 = vst.msk [vmem:[#allocation2 + $0x20] sm:$0xff] %vm7033, %v7571
        %7629 = vst.msk [vmem:[#allocation2 + $0x28] sm:$0xff] %vm7033, %v7572
        %7630 = vst.msk [vmem:[#allocation2 + $0x30] sm:$0xff] %vm7033, %v7573
        %7631 = vst.msk [vmem:[#allocation2 + $0x38] sm:$0xff] %vm7033, %v7574
        %7632 = vst.msk [vmem:[#allocation3] sm:$0xff] %vm7033, %v7599
        %7633 = vst.msk [vmem:[#allocation3 + $0x8] sm:$0xff] %vm7033, %v7600
        %7634 = vst.msk [vmem:[#allocation3 + $0x10] sm:$0xff] %vm7033, %v7601
        %7635 = vst.msk [vmem:[#allocation3 + $0x18] sm:$0xff] %vm7033, %v7602
        %7636 = vst.msk [vmem:[#allocation3 + $0x20] sm:$0xff] %vm7033, %v7603
        %7637 = vst.msk [vmem:[#allocation3 + $0x28] sm:$0xff] %vm7033, %v7604
        %7638 = vst.msk [vmem:[#allocation3 + $0x30] sm:$0xff] %vm7033, %v7605
        %7639 = vst.msk [vmem:[#allocation3 + $0x38] sm:$0xff] %vm7033, %v7606
        %s7640 = sand.u32 %s359, 1
        %s7641 = sand.u32 %s359, 1
        %s7642 = smul.addr %s7641, 512
        %s7643 = scalar_lea.vmem [#allocation6], %s7642
        %s7644 = sand.u32 %s389, 1
        %s7645 = sand.u32 %s389, 1
        %s7646 = smul.addr %s7645, 512
        %s7647 = scalar_lea.vmem [#allocation7], %s7646
        // Predicated region
        $region157: #{tpu_custom_call.1} parent=143 // pred_check
          %p7648 = pneg %p369
        $region158: #{tpu_custom_call.1} parent=143 // pred_check_branch
          %7650 = sbr.rel (%p7648) target = $region160
        $region159: #{tpu_custom_call.1} parent=143 // pred_region
          %s7651 = smul.u32 8, %s32
          %s7652 = smul.u32 8, %s31
          %s7653 = smul.addr %s7651, 16
          %s7654 = sadd.s32 %s7652, %s7653
          %s7655 = smul.addr %s7654, 8
          %s7656 = scalar_lea.vmem %s14, %s7655
          // Predicated region
          $region161: #{tpu_custom_call.1} parent=159 // pred_check
            _
          $region162: #{tpu_custom_call.1} parent=159 // pred_check_branch
            %7658 = sbr.rel (0) target = $region164
          $region163: #{tpu_custom_call.1} parent=159 // pred_region
            // Predicated region
            $region165: #{tpu_custom_call.1} parent=163 // pred_check
              _
            $region166: #{tpu_custom_call.1} parent=163 // pred_check_branch
              %7660 = sbr.rel (0) target = $region168
            $region167: #{tpu_custom_call.1} parent=163 // pred_region
              // Predicated region
              $region180: #{tpu_custom_call.1} parent=167 // pred_check
                _
              $region181: #{tpu_custom_call.1} parent=167 // pred_check_branch
                %7802 = sbr.rel (0) target = $region183
              $region182: #{tpu_custom_call.1} parent=167 // pred_region
                loop: start=0, step=1, limit=1
                $region184: #{tpu_custom_call.1} parent=182 // loop_pre_header
                  _
                $region185: #{tpu_custom_call.1} parent=182 // loop_header
                  %s7804 = sphi 0, %s7808
                  %p7805 = scmp.ge.s32.totalorder %s7804, 1
                  %s7809 = sphi %s7643, %s7643
                  %s7810 = sphi %s7656, %s7656
                $region186: #{tpu_custom_call.1} parent=182 // loop_header_branch
                  %7807 = sbr.rel (%p7805) target = $region190
                $region187: #{tpu_custom_call.1} parent=182 // loop_body
                  %v7811 = vld [vmem:[%s7809] sm:$0xff]
                  %7812 = vst [vmem:[%s7810] sm:$0xff] %v7811
                  %v7813 = vld [vmem:[%s7809 + $0x8] sm:$0xff]
                  %7814 = vst [vmem:[%s7810 + $0x8] sm:$0xff] %v7813
                  %v7815 = vld [vmem:[%s7809 + $0x10] sm:$0xff]
                  %7816 = vst [vmem:[%s7810 + $0x10] sm:$0xff] %v7815
                  %v7817 = vld [vmem:[%s7809 + $0x18] sm:$0xff]
                  %7818 = vst [vmem:[%s7810 + $0x18] sm:$0xff] %v7817
                  %v7819 = vld [vmem:[%s7809 + $0x20] sm:$0xff]
                  %7820 = vst [vmem:[%s7810 + $0x20] sm:$0xff] %v7819
                  %v7821 = vld [vmem:[%s7809 + $0x28] sm:$0xff]
                  %7822 = vst [vmem:[%s7810 + $0x28] sm:$0xff] %v7821
                  %v7823 = vld [vmem:[%s7809 + $0x30] sm:$0xff]
                  %7824 = vst [vmem:[%s7810 + $0x30] sm:$0xff] %v7823
                  %v7825 = vld [vmem:[%s7809 + $0x38] sm:$0xff]
                  %7826 = vst [vmem:[%s7810 + $0x38] sm:$0xff] %v7825
                  %v7827 = vld [vmem:[%s7809 + $0x40] sm:$0xff]
                  %7828 = vst [vmem:[%s7810 + $0x80] sm:$0xff] %v7827
                  %v7829 = vld [vmem:[%s7809 + $0x48] sm:$0xff]
                  %7830 = vst [vmem:[%s7810 + $0x88] sm:$0xff] %v7829
                  %v7831 = vld [vmem:[%s7809 + $0x50] sm:$0xff]
                  %7832 = vst [vmem:[%s7810 + $0x90] sm:$0xff] %v7831
                  %v7833 = vld [vmem:[%s7809 + $0x58] sm:$0xff]
                  %7834 = vst [vmem:[%s7810 + $0x98] sm:$0xff] %v7833
                  %v7835 = vld [vmem:[%s7809 + $0x60] sm:$0xff]
                  %7836 = vst [vmem:[%s7810 + $0xa0] sm:$0xff] %v7835
                  %v7837 = vld [vmem:[%s7809 + $0x68] sm:$0xff]
                  %7838 = vst [vmem:[%s7810 + $0xa8] sm:$0xff] %v7837
                  %v7839 = vld [vmem:[%s7809 + $0x70] sm:$0xff]
                  %7840 = vst [vmem:[%s7810 + $0xb0] sm:$0xff] %v7839
                  %v7841 = vld [vmem:[%s7809 + $0x78] sm:$0xff]
                  %7842 = vst [vmem:[%s7810 + $0xb8] sm:$0xff] %v7841
                  %v7843 = vld [vmem:[%s7809 + $0x80] sm:$0xff]
                  %7844 = vst [vmem:[%s7810 + $0x100] sm:$0xff] %v7843
                  %v7845 = vld [vmem:[%s7809 + $0x88] sm:$0xff]
                  %7846 = vst [vmem:[%s7810 + $0x108] sm:$0xff] %v7845
                  %v7847 = vld [vmem:[%s7809 + $0x90] sm:$0xff]
                  %7848 = vst [vmem:[%s7810 + $0x110] sm:$0xff] %v7847
                  %v7849 = vld [vmem:[%s7809 + $0x98] sm:$0xff]
                  %7850 = vst [vmem:[%s7810 + $0x118] sm:$0xff] %v7849
                  %v7851 = vld [vmem:[%s7809 + $0xa0] sm:$0xff]
                  %7852 = vst [vmem:[%s7810 + $0x120] sm:$0xff] %v7851
                  %v7853 = vld [vmem:[%s7809 + $0xa8] sm:$0xff]
                  %7854 = vst [vmem:[%s7810 + $0x128] sm:$0xff] %v7853
                  %v7855 = vld [vmem:[%s7809 + $0xb0] sm:$0xff]
                  %7856 = vst [vmem:[%s7810 + $0x130] sm:$0xff] %v7855
                  %v7857 = vld [vmem:[%s7809 + $0xb8] sm:$0xff]
                  %7858 = vst [vmem:[%s7810 + $0x138] sm:$0xff] %v7857
                  %v7859 = vld [vmem:[%s7809 + $0xc0] sm:$0xff]
                  %7860 = vst [vmem:[%s7810 + $0x180] sm:$0xff] %v7859
                  %v7861 = vld [vmem:[%s7809 + $0xc8] sm:$0xff]
                  %7862 = vst [vmem:[%s7810 + $0x188] sm:$0xff] %v7861
                  %v7863 = vld [vmem:[%s7809 + $0xd0] sm:$0xff]
                  %7864 = vst [vmem:[%s7810 + $0x190] sm:$0xff] %v7863
                  %v7865 = vld [vmem:[%s7809 + $0xd8] sm:$0xff]
                  %7866 = vst [vmem:[%s7810 + $0x198] sm:$0xff] %v7865
                  %v7867 = vld [vmem:[%s7809 + $0xe0] sm:$0xff]
                  %7868 = vst [vmem:[%s7810 + $0x1a0] sm:$0xff] %v7867
                  %v7869 = vld [vmem:[%s7809 + $0xe8] sm:$0xff]
                  %7870 = vst [vmem:[%s7810 + $0x1a8] sm:$0xff] %v7869
                  %v7871 = vld [vmem:[%s7809 + $0xf0] sm:$0xff]
                  %7872 = vst [vmem:[%s7810 + $0x1b0] sm:$0xff] %v7871
                  %v7873 = vld [vmem:[%s7809 + $0xf8] sm:$0xff]
                  %7874 = vst [vmem:[%s7810 + $0x1b8] sm:$0xff] %v7873
                  %v7875 = vld [vmem:[%s7809 + $0x100] sm:$0xff]
                  %7876 = vst [vmem:[%s7810 + $0x200] sm:$0xff] %v7875
                  %v7877 = vld [vmem:[%s7809 + $0x108] sm:$0xff]
                  %7878 = vst [vmem:[%s7810 + $0x208] sm:$0xff] %v7877
                  %v7879 = vld [vmem:[%s7809 + $0x110] sm:$0xff]
                  %7880 = vst [vmem:[%s7810 + $0x210] sm:$0xff] %v7879
                  %v7881 = vld [vmem:[%s7809 + $0x118] sm:$0xff]
                  %7882 = vst [vmem:[%s7810 + $0x218] sm:$0xff] %v7881
                  %v7883 = vld [vmem:[%s7809 + $0x120] sm:$0xff]
                  %7884 = vst [vmem:[%s7810 + $0x220] sm:$0xff] %v7883
                  %v7885 = vld [vmem:[%s7809 + $0x128] sm:$0xff]
                  %7886 = vst [vmem:[%s7810 + $0x228] sm:$0xff] %v7885
                  %v7887 = vld [vmem:[%s7809 + $0x130] sm:$0xff]
                  %7888 = vst [vmem:[%s7810 + $0x230] sm:$0xff] %v7887
                  %v7889 = vld [vmem:[%s7809 + $0x138] sm:$0xff]
                  %7890 = vst [vmem:[%s7810 + $0x238] sm:$0xff] %v7889
                  %v7891 = vld [vmem:[%s7809 + $0x140] sm:$0xff]
                  %7892 = vst [vmem:[%s7810 + $0x280] sm:$0xff] %v7891
                  %v7893 = vld [vmem:[%s7809 + $0x148] sm:$0xff]
                  %7894 = vst [vmem:[%s7810 + $0x288] sm:$0xff] %v7893
                  %v7895 = vld [vmem:[%s7809 + $0x150] sm:$0xff]
                  %7896 = vst [vmem:[%s7810 + $0x290] sm:$0xff] %v7895
                  %v7897 = vld [vmem:[%s7809 + $0x158] sm:$0xff]
                  %7898 = vst [vmem:[%s7810 + $0x298] sm:$0xff] %v7897
                  %v7899 = vld [vmem:[%s7809 + $0x160] sm:$0xff]
                  %7900 = vst [vmem:[%s7810 + $0x2a0] sm:$0xff] %v7899
                  %v7901 = vld [vmem:[%s7809 + $0x168] sm:$0xff]
                  %7902 = vst [vmem:[%s7810 + $0x2a8] sm:$0xff] %v7901
                  %v7903 = vld [vmem:[%s7809 + $0x170] sm:$0xff]
                  %7904 = vst [vmem:[%s7810 + $0x2b0] sm:$0xff] %v7903
                  %v7905 = vld [vmem:[%s7809 + $0x178] sm:$0xff]
                  %7906 = vst [vmem:[%s7810 + $0x2b8] sm:$0xff] %v7905
                  %v7907 = vld [vmem:[%s7809 + $0x180] sm:$0xff]
                  %7908 = vst [vmem:[%s7810 + $0x300] sm:$0xff] %v7907
                  %v7909 = vld [vmem:[%s7809 + $0x188] sm:$0xff]
                  %7910 = vst [vmem:[%s7810 + $0x308] sm:$0xff] %v7909
                  %v7911 = vld [vmem:[%s7809 + $0x190] sm:$0xff]
                  %7912 = vst [vmem:[%s7810 + $0x310] sm:$0xff] %v7911
                  %v7913 = vld [vmem:[%s7809 + $0x198] sm:$0xff]
                  %7914 = vst [vmem:[%s7810 + $0x318] sm:$0xff] %v7913
                  %v7915 = vld [vmem:[%s7809 + $0x1a0] sm:$0xff]
                  %7916 = vst [vmem:[%s7810 + $0x320] sm:$0xff] %v7915
                  %v7917 = vld [vmem:[%s7809 + $0x1a8] sm:$0xff]
                  %7918 = vst [vmem:[%s7810 + $0x328] sm:$0xff] %v7917
                  %v7919 = vld [vmem:[%s7809 + $0x1b0] sm:$0xff]
                  %7920 = vst [vmem:[%s7810 + $0x330] sm:$0xff] %v7919
                  %v7921 = vld [vmem:[%s7809 + $0x1b8] sm:$0xff]
                  %7922 = vst [vmem:[%s7810 + $0x338] sm:$0xff] %v7921
                  %v7923 = vld [vmem:[%s7809 + $0x1c0] sm:$0xff]
                  %7924 = vst [vmem:[%s7810 + $0x380] sm:$0xff] %v7923
                  %v7925 = vld [vmem:[%s7809 + $0x1c8] sm:$0xff]
                  %7926 = vst [vmem:[%s7810 + $0x388] sm:$0xff] %v7925
                  %v7927 = vld [vmem:[%s7809 + $0x1d0] sm:$0xff]
                  %7928 = vst [vmem:[%s7810 + $0x390] sm:$0xff] %v7927
                  %v7929 = vld [vmem:[%s7809 + $0x1d8] sm:$0xff]
                  %7930 = vst [vmem:[%s7810 + $0x398] sm:$0xff] %v7929
                  %v7931 = vld [vmem:[%s7809 + $0x1e0] sm:$0xff]
                  %7932 = vst [vmem:[%s7810 + $0x3a0] sm:$0xff] %v7931
                  %v7933 = vld [vmem:[%s7809 + $0x1e8] sm:$0xff]
                  %7934 = vst [vmem:[%s7810 + $0x3a8] sm:$0xff] %v7933
                  %v7935 = vld [vmem:[%s7809 + $0x1f0] sm:$0xff]
                  %7936 = vst [vmem:[%s7810 + $0x3b0] sm:$0xff] %v7935
                  %v7937 = vld [vmem:[%s7809 + $0x1f8] sm:$0xff]
                  %7938 = vst [vmem:[%s7810 + $0x3b8] sm:$0xff] %v7937
                $region188: #{tpu_custom_call.1} parent=182 // loop_footer
                  %s7808 = sadd.s32 1, %s7804
                $region189: #{tpu_custom_call.1} parent=182 // loop_footer_branch
                  %7803 = sbr.rel target = $region185
                $region190: #{tpu_custom_call.1} parent=182 // loop_exit
                  _
              $region183: #{tpu_custom_call.1} parent=167 // pred_fallthru
                _
              // Predicated region
              $region191: #{tpu_custom_call.1} parent=167 // pred_check
                _
              $region192: #{tpu_custom_call.1} parent=167 // pred_check_branch
                %7940 = sbr.rel target = $region194
              $region193: #{tpu_custom_call.1} parent=167 // pred_region
                _
              $region194: #{tpu_custom_call.1} parent=167 // pred_fallthru
                _
            $region168: #{tpu_custom_call.1} parent=163 // pred_fallthru
              _
            // Predicated region
            $region169: #{tpu_custom_call.1} parent=163 // pred_check
              _
            $region170: #{tpu_custom_call.1} parent=163 // pred_check_branch
              %7662 = sbr.rel target = $region172
            $region171: #{tpu_custom_call.1} parent=163 // pred_region
              %s7664 = ssub.s32 256, 1
              loop: start=0, step=1, limit=1
              $region173: #{tpu_custom_call.1} parent=171 // loop_pre_header
                _
              $region174: #{tpu_custom_call.1} parent=171 // loop_header
                %s7666 = sphi 0, %s7670
                %p7667 = scmp.ge.s32.totalorder %s7666, 1
                %s7671 = sphi %s7643, %s7643
                %s7672 = sphi %s7656, %s7656
              $region175: #{tpu_custom_call.1} parent=171 // loop_header_branch
                %7669 = sbr.rel (%p7667) target = $region179
              $region176: #{tpu_custom_call.1} parent=171 // loop_body
                %v7673 = vld [vmem:[%s7671] sm:%s7664]
                %7674 = vst [vmem:[%s7672] sm:%s7664] %v7673
                %v7675 = vld [vmem:[%s7671 + $0x8] sm:%s7664]
                %7676 = vst [vmem:[%s7672 + $0x8] sm:%s7664] %v7675
                %v7677 = vld [vmem:[%s7671 + $0x10] sm:%s7664]
                %7678 = vst [vmem:[%s7672 + $0x10] sm:%s7664] %v7677
                %v7679 = vld [vmem:[%s7671 + $0x18] sm:%s7664]
                %7680 = vst [vmem:[%s7672 + $0x18] sm:%s7664] %v7679
                %v7681 = vld [vmem:[%s7671 + $0x20] sm:%s7664]
                %7682 = vst [vmem:[%s7672 + $0x20] sm:%s7664] %v7681
                %v7683 = vld [vmem:[%s7671 + $0x28] sm:%s7664]
                %7684 = vst [vmem:[%s7672 + $0x28] sm:%s7664] %v7683
                %v7685 = vld [vmem:[%s7671 + $0x30] sm:%s7664]
                %7686 = vst [vmem:[%s7672 + $0x30] sm:%s7664] %v7685
                %v7687 = vld [vmem:[%s7671 + $0x38] sm:%s7664]
                %7688 = vst [vmem:[%s7672 + $0x38] sm:%s7664] %v7687
                %v7689 = vld [vmem:[%s7671 + $0x40] sm:%s7664]
                %7690 = vst [vmem:[%s7672 + $0x80] sm:%s7664] %v7689
                %v7691 = vld [vmem:[%s7671 + $0x48] sm:%s7664]
                %7692 = vst [vmem:[%s7672 + $0x88] sm:%s7664] %v7691
                %v7693 = vld [vmem:[%s7671 + $0x50] sm:%s7664]
                %7694 = vst [vmem:[%s7672 + $0x90] sm:%s7664] %v7693
                %v7695 = vld [vmem:[%s7671 + $0x58] sm:%s7664]
                %7696 = vst [vmem:[%s7672 + $0x98] sm:%s7664] %v7695
                %v7697 = vld [vmem:[%s7671 + $0x60] sm:%s7664]
                %7698 = vst [vmem:[%s7672 + $0xa0] sm:%s7664] %v7697
                %v7699 = vld [vmem:[%s7671 + $0x68] sm:%s7664]
                %7700 = vst [vmem:[%s7672 + $0xa8] sm:%s7664] %v7699
                %v7701 = vld [vmem:[%s7671 + $0x70] sm:%s7664]
                %7702 = vst [vmem:[%s7672 + $0xb0] sm:%s7664] %v7701
                %v7703 = vld [vmem:[%s7671 + $0x78] sm:%s7664]
                %7704 = vst [vmem:[%s7672 + $0xb8] sm:%s7664] %v7703
                %v7705 = vld [vmem:[%s7671 + $0x80] sm:%s7664]
                %7706 = vst [vmem:[%s7672 + $0x100] sm:%s7664] %v7705
                %v7707 = vld [vmem:[%s7671 + $0x88] sm:%s7664]
                %7708 = vst [vmem:[%s7672 + $0x108] sm:%s7664] %v7707
                %v7709 = vld [vmem:[%s7671 + $0x90] sm:%s7664]
                %7710 = vst [vmem:[%s7672 + $0x110] sm:%s7664] %v7709
                %v7711 = vld [vmem:[%s7671 + $0x98] sm:%s7664]
                %7712 = vst [vmem:[%s7672 + $0x118] sm:%s7664] %v7711
                %v7713 = vld [vmem:[%s7671 + $0xa0] sm:%s7664]
                %7714 = vst [vmem:[%s7672 + $0x120] sm:%s7664] %v7713
                %v7715 = vld [vmem:[%s7671 + $0xa8] sm:%s7664]
                %7716 = vst [vmem:[%s7672 + $0x128] sm:%s7664] %v7715
                %v7717 = vld [vmem:[%s7671 + $0xb0] sm:%s7664]
                %7718 = vst [vmem:[%s7672 + $0x130] sm:%s7664] %v7717
                %v7719 = vld [vmem:[%s7671 + $0xb8] sm:%s7664]
                %7720 = vst [vmem:[%s7672 + $0x138] sm:%s7664] %v7719
                %v7721 = vld [vmem:[%s7671 + $0xc0] sm:%s7664]
                %7722 = vst [vmem:[%s7672 + $0x180] sm:%s7664] %v7721
                %v7723 = vld [vmem:[%s7671 + $0xc8] sm:%s7664]
                %7724 = vst [vmem:[%s7672 + $0x188] sm:%s7664] %v7723
                %v7725 = vld [vmem:[%s7671 + $0xd0] sm:%s7664]
                %7726 = vst [vmem:[%s7672 + $0x190] sm:%s7664] %v7725
                %v7727 = vld [vmem:[%s7671 + $0xd8] sm:%s7664]
                %7728 = vst [vmem:[%s7672 + $0x198] sm:%s7664] %v7727
                %v7729 = vld [vmem:[%s7671 + $0xe0] sm:%s7664]
                %7730 = vst [vmem:[%s7672 + $0x1a0] sm:%s7664] %v7729
                %v7731 = vld [vmem:[%s7671 + $0xe8] sm:%s7664]
                %7732 = vst [vmem:[%s7672 + $0x1a8] sm:%s7664] %v7731
                %v7733 = vld [vmem:[%s7671 + $0xf0] sm:%s7664]
                %7734 = vst [vmem:[%s7672 + $0x1b0] sm:%s7664] %v7733
                %v7735 = vld [vmem:[%s7671 + $0xf8] sm:%s7664]
                %7736 = vst [vmem:[%s7672 + $0x1b8] sm:%s7664] %v7735
                %v7737 = vld [vmem:[%s7671 + $0x100] sm:%s7664]
                %7738 = vst [vmem:[%s7672 + $0x200] sm:%s7664] %v7737
                %v7739 = vld [vmem:[%s7671 + $0x108] sm:%s7664]
                %7740 = vst [vmem:[%s7672 + $0x208] sm:%s7664] %v7739
                %v7741 = vld [vmem:[%s7671 + $0x110] sm:%s7664]
                %7742 = vst [vmem:[%s7672 + $0x210] sm:%s7664] %v7741
                %v7743 = vld [vmem:[%s7671 + $0x118] sm:%s7664]
                %7744 = vst [vmem:[%s7672 + $0x218] sm:%s7664] %v7743
                %v7745 = vld [vmem:[%s7671 + $0x120] sm:%s7664]
                %7746 = vst [vmem:[%s7672 + $0x220] sm:%s7664] %v7745
                %v7747 = vld [vmem:[%s7671 + $0x128] sm:%s7664]
                %7748 = vst [vmem:[%s7672 + $0x228] sm:%s7664] %v7747
                %v7749 = vld [vmem:[%s7671 + $0x130] sm:%s7664]
                %7750 = vst [vmem:[%s7672 + $0x230] sm:%s7664] %v7749
                %v7751 = vld [vmem:[%s7671 + $0x138] sm:%s7664]
                %7752 = vst [vmem:[%s7672 + $0x238] sm:%s7664] %v7751
                %v7753 = vld [vmem:[%s7671 + $0x140] sm:%s7664]
                %7754 = vst [vmem:[%s7672 + $0x280] sm:%s7664] %v7753
                %v7755 = vld [vmem:[%s7671 + $0x148] sm:%s7664]
                %7756 = vst [vmem:[%s7672 + $0x288] sm:%s7664] %v7755
                %v7757 = vld [vmem:[%s7671 + $0x150] sm:%s7664]
                %7758 = vst [vmem:[%s7672 + $0x290] sm:%s7664] %v7757
                %v7759 = vld [vmem:[%s7671 + $0x158] sm:%s7664]
                %7760 = vst [vmem:[%s7672 + $0x298] sm:%s7664] %v7759
                %v7761 = vld [vmem:[%s7671 + $0x160] sm:%s7664]
                %7762 = vst [vmem:[%s7672 + $0x2a0] sm:%s7664] %v7761
                %v7763 = vld [vmem:[%s7671 + $0x168] sm:%s7664]
                %7764 = vst [vmem:[%s7672 + $0x2a8] sm:%s7664] %v7763
                %v7765 = vld [vmem:[%s7671 + $0x170] sm:%s7664]
                %7766 = vst [vmem:[%s7672 + $0x2b0] sm:%s7664] %v7765
                %v7767 = vld [vmem:[%s7671 + $0x178] sm:%s7664]
                %7768 = vst [vmem:[%s7672 + $0x2b8] sm:%s7664] %v7767
                %v7769 = vld [vmem:[%s7671 + $0x180] sm:%s7664]
                %7770 = vst [vmem:[%s7672 + $0x300] sm:%s7664] %v7769
                %v7771 = vld [vmem:[%s7671 + $0x188] sm:%s7664]
                %7772 = vst [vmem:[%s7672 + $0x308] sm:%s7664] %v7771
                %v7773 = vld [vmem:[%s7671 + $0x190] sm:%s7664]
                %7774 = vst [vmem:[%s7672 + $0x310] sm:%s7664] %v7773
                %v7775 = vld [vmem:[%s7671 + $0x198] sm:%s7664]
                %7776 = vst [vmem:[%s7672 + $0x318] sm:%s7664] %v7775
                %v7777 = vld [vmem:[%s7671 + $0x1a0] sm:%s7664]
                %7778 = vst [vmem:[%s7672 + $0x320] sm:%s7664] %v7777
                %v7779 = vld [vmem:[%s7671 + $0x1a8] sm:%s7664]
                %7780 = vst [vmem:[%s7672 + $0x328] sm:%s7664] %v7779
                %v7781 = vld [vmem:[%s7671 + $0x1b0] sm:%s7664]
                %7782 = vst [vmem:[%s7672 + $0x330] sm:%s7664] %v7781
                %v7783 = vld [vmem:[%s7671 + $0x1b8] sm:%s7664]
                %7784 = vst [vmem:[%s7672 + $0x338] sm:%s7664] %v7783
                %v7785 = vld [vmem:[%s7671 + $0x1c0] sm:%s7664]
                %7786 = vst [vmem:[%s7672 + $0x380] sm:%s7664] %v7785
                %v7787 = vld [vmem:[%s7671 + $0x1c8] sm:%s7664]
                %7788 = vst [vmem:[%s7672 + $0x388] sm:%s7664] %v7787
                %v7789 = vld [vmem:[%s7671 + $0x1d0] sm:%s7664]
                %7790 = vst [vmem:[%s7672 + $0x390] sm:%s7664] %v7789
                %v7791 = vld [vmem:[%s7671 + $0x1d8] sm:%s7664]
                %7792 = vst [vmem:[%s7672 + $0x398] sm:%s7664] %v7791
                %v7793 = vld [vmem:[%s7671 + $0x1e0] sm:%s7664]
                %7794 = vst [vmem:[%s7672 + $0x3a0] sm:%s7664] %v7793
                %v7795 = vld [vmem:[%s7671 + $0x1e8] sm:%s7664]
                %7796 = vst [vmem:[%s7672 + $0x3a8] sm:%s7664] %v7795
                %v7797 = vld [vmem:[%s7671 + $0x1f0] sm:%s7664]
                %7798 = vst [vmem:[%s7672 + $0x3b0] sm:%s7664] %v7797
                %v7799 = vld [vmem:[%s7671 + $0x1f8] sm:%s7664]
                %7800 = vst [vmem:[%s7672 + $0x3b8] sm:%s7664] %v7799
              $region177: #{tpu_custom_call.1} parent=171 // loop_footer
                %s7670 = sadd.s32 1, %s7666
              $region178: #{tpu_custom_call.1} parent=171 // loop_footer_branch
                %7665 = sbr.rel target = $region174
              $region179: #{tpu_custom_call.1} parent=171 // loop_exit
                _
            $region172: #{tpu_custom_call.1} parent=163 // pred_fallthru
              _
          $region164: #{tpu_custom_call.1} parent=159 // pred_fallthru
            _
          %7941 = vnop
        $region160: #{tpu_custom_call.1} parent=143 // pred_fallthru
          _
        // Predicated region
        $region195: #{tpu_custom_call.1} parent=143 // pred_check
          %p7942 = pneg %p399
        $region196: #{tpu_custom_call.1} parent=143 // pred_check_branch
          %7944 = sbr.rel (%p7942) target = $region198
        $region197: #{tpu_custom_call.1} parent=143 // pred_region
          %s7945 = ssub.s32 1, %s32
          %s7946 = smul.u32 8, %s7945
          %s7947 = smul.u32 8, %s31
          %s7948 = smul.addr %s7946, 16
          %s7949 = sadd.s32 %s7947, %s7948
          %s7950 = smul.addr %s7949, 8
          %s7951 = scalar_lea.vmem %s15, %s7950
          // Predicated region
          $region199: #{tpu_custom_call.1} parent=197 // pred_check
            _
          $region200: #{tpu_custom_call.1} parent=197 // pred_check_branch
            %7953 = sbr.rel (0) target = $region202
          $region201: #{tpu_custom_call.1} parent=197 // pred_region
            // Predicated region
            $region203: #{tpu_custom_call.1} parent=201 // pred_check
              _
            $region204: #{tpu_custom_call.1} parent=201 // pred_check_branch
              %7955 = sbr.rel (0) target = $region206
            $region205: #{tpu_custom_call.1} parent=201 // pred_region
              // Predicated region
              $region218: #{tpu_custom_call.1} parent=205 // pred_check
                _
              $region219: #{tpu_custom_call.1} parent=205 // pred_check_branch
                %8097 = sbr.rel (0) target = $region221
              $region220: #{tpu_custom_call.1} parent=205 // pred_region
                loop: start=0, step=1, limit=1
                $region222: #{tpu_custom_call.1} parent=220 // loop_pre_header
                  _
                $region223: #{tpu_custom_call.1} parent=220 // loop_header
                  %s8099 = sphi 0, %s8103
                  %p8100 = scmp.ge.s32.totalorder %s8099, 1
                  %s8104 = sphi %s7647, %s7647
                  %s8105 = sphi %s7951, %s7951
                $region224: #{tpu_custom_call.1} parent=220 // loop_header_branch
                  %8102 = sbr.rel (%p8100) target = $region228
                $region225: #{tpu_custom_call.1} parent=220 // loop_body
                  %v8106 = vld [vmem:[%s8104] sm:$0xff]
                  %8107 = vst [vmem:[%s8105] sm:$0xff] %v8106
                  %v8108 = vld [vmem:[%s8104 + $0x8] sm:$0xff]
                  %8109 = vst [vmem:[%s8105 + $0x8] sm:$0xff] %v8108
                  %v8110 = vld [vmem:[%s8104 + $0x10] sm:$0xff]
                  %8111 = vst [vmem:[%s8105 + $0x10] sm:$0xff] %v8110
                  %v8112 = vld [vmem:[%s8104 + $0x18] sm:$0xff]
                  %8113 = vst [vmem:[%s8105 + $0x18] sm:$0xff] %v8112
                  %v8114 = vld [vmem:[%s8104 + $0x20] sm:$0xff]
                  %8115 = vst [vmem:[%s8105 + $0x20] sm:$0xff] %v8114
                  %v8116 = vld [vmem:[%s8104 + $0x28] sm:$0xff]
                  %8117 = vst [vmem:[%s8105 + $0x28] sm:$0xff] %v8116
                  %v8118 = vld [vmem:[%s8104 + $0x30] sm:$0xff]
                  %8119 = vst [vmem:[%s8105 + $0x30] sm:$0xff] %v8118
                  %v8120 = vld [vmem:[%s8104 + $0x38] sm:$0xff]
                  %8121 = vst [vmem:[%s8105 + $0x38] sm:$0xff] %v8120
                  %v8122 = vld [vmem:[%s8104 + $0x40] sm:$0xff]
                  %8123 = vst [vmem:[%s8105 + $0x80] sm:$0xff] %v8122
                  %v8124 = vld [vmem:[%s8104 + $0x48] sm:$0xff]
                  %8125 = vst [vmem:[%s8105 + $0x88] sm:$0xff] %v8124
                  %v8126 = vld [vmem:[%s8104 + $0x50] sm:$0xff]
                  %8127 = vst [vmem:[%s8105 + $0x90] sm:$0xff] %v8126
                  %v8128 = vld [vmem:[%s8104 + $0x58] sm:$0xff]
                  %8129 = vst [vmem:[%s8105 + $0x98] sm:$0xff] %v8128
                  %v8130 = vld [vmem:[%s8104 + $0x60] sm:$0xff]
                  %8131 = vst [vmem:[%s8105 + $0xa0] sm:$0xff] %v8130
                  %v8132 = vld [vmem:[%s8104 + $0x68] sm:$0xff]
                  %8133 = vst [vmem:[%s8105 + $0xa8] sm:$0xff] %v8132
                  %v8134 = vld [vmem:[%s8104 + $0x70] sm:$0xff]
                  %8135 = vst [vmem:[%s8105 + $0xb0] sm:$0xff] %v8134
                  %v8136 = vld [vmem:[%s8104 + $0x78] sm:$0xff]
                  %8137 = vst [vmem:[%s8105 + $0xb8] sm:$0xff] %v8136
                  %v8138 = vld [vmem:[%s8104 + $0x80] sm:$0xff]
                  %8139 = vst [vmem:[%s8105 + $0x100] sm:$0xff] %v8138
                  %v8140 = vld [vmem:[%s8104 + $0x88] sm:$0xff]
                  %8141 = vst [vmem:[%s8105 + $0x108] sm:$0xff] %v8140
                  %v8142 = vld [vmem:[%s8104 + $0x90] sm:$0xff]
                  %8143 = vst [vmem:[%s8105 + $0x110] sm:$0xff] %v8142
                  %v8144 = vld [vmem:[%s8104 + $0x98] sm:$0xff]
                  %8145 = vst [vmem:[%s8105 + $0x118] sm:$0xff] %v8144
                  %v8146 = vld [vmem:[%s8104 + $0xa0] sm:$0xff]
                  %8147 = vst [vmem:[%s8105 + $0x120] sm:$0xff] %v8146
                  %v8148 = vld [vmem:[%s8104 + $0xa8] sm:$0xff]
                  %8149 = vst [vmem:[%s8105 + $0x128] sm:$0xff] %v8148
                  %v8150 = vld [vmem:[%s8104 + $0xb0] sm:$0xff]
                  %8151 = vst [vmem:[%s8105 + $0x130] sm:$0xff] %v8150
                  %v8152 = vld [vmem:[%s8104 + $0xb8] sm:$0xff]
                  %8153 = vst [vmem:[%s8105 + $0x138] sm:$0xff] %v8152
                  %v8154 = vld [vmem:[%s8104 + $0xc0] sm:$0xff]
                  %8155 = vst [vmem:[%s8105 + $0x180] sm:$0xff] %v8154
                  %v8156 = vld [vmem:[%s8104 + $0xc8] sm:$0xff]
                  %8157 = vst [vmem:[%s8105 + $0x188] sm:$0xff] %v8156
                  %v8158 = vld [vmem:[%s8104 + $0xd0] sm:$0xff]
                  %8159 = vst [vmem:[%s8105 + $0x190] sm:$0xff] %v8158
                  %v8160 = vld [vmem:[%s8104 + $0xd8] sm:$0xff]
                  %8161 = vst [vmem:[%s8105 + $0x198] sm:$0xff] %v8160
                  %v8162 = vld [vmem:[%s8104 + $0xe0] sm:$0xff]
                  %8163 = vst [vmem:[%s8105 + $0x1a0] sm:$0xff] %v8162
                  %v8164 = vld [vmem:[%s8104 + $0xe8] sm:$0xff]
                  %8165 = vst [vmem:[%s8105 + $0x1a8] sm:$0xff] %v8164
                  %v8166 = vld [vmem:[%s8104 + $0xf0] sm:$0xff]
                  %8167 = vst [vmem:[%s8105 + $0x1b0] sm:$0xff] %v8166
                  %v8168 = vld [vmem:[%s8104 + $0xf8] sm:$0xff]
                  %8169 = vst [vmem:[%s8105 + $0x1b8] sm:$0xff] %v8168
                  %v8170 = vld [vmem:[%s8104 + $0x100] sm:$0xff]
                  %8171 = vst [vmem:[%s8105 + $0x200] sm:$0xff] %v8170
                  %v8172 = vld [vmem:[%s8104 + $0x108] sm:$0xff]
                  %8173 = vst [vmem:[%s8105 + $0x208] sm:$0xff] %v8172
                  %v8174 = vld [vmem:[%s8104 + $0x110] sm:$0xff]
                  %8175 = vst [vmem:[%s8105 + $0x210] sm:$0xff] %v8174
                  %v8176 = vld [vmem:[%s8104 + $0x118] sm:$0xff]
                  %8177 = vst [vmem:[%s8105 + $0x218] sm:$0xff] %v8176
                  %v8178 = vld [vmem:[%s8104 + $0x120] sm:$0xff]
                  %8179 = vst [vmem:[%s8105 + $0x220] sm:$0xff] %v8178
                  %v8180 = vld [vmem:[%s8104 + $0x128] sm:$0xff]
                  %8181 = vst [vmem:[%s8105 + $0x228] sm:$0xff] %v8180
                  %v8182 = vld [vmem:[%s8104 + $0x130] sm:$0xff]
                  %8183 = vst [vmem:[%s8105 + $0x230] sm:$0xff] %v8182
                  %v8184 = vld [vmem:[%s8104 + $0x138] sm:$0xff]
                  %8185 = vst [vmem:[%s8105 + $0x238] sm:$0xff] %v8184
                  %v8186 = vld [vmem:[%s8104 + $0x140] sm:$0xff]
                  %8187 = vst [vmem:[%s8105 + $0x280] sm:$0xff] %v8186
                  %v8188 = vld [vmem:[%s8104 + $0x148] sm:$0xff]
                  %8189 = vst [vmem:[%s8105 + $0x288] sm:$0xff] %v8188
                  %v8190 = vld [vmem:[%s8104 + $0x150] sm:$0xff]
                  %8191 = vst [vmem:[%s8105 + $0x290] sm:$0xff] %v8190
                  %v8192 = vld [vmem:[%s8104 + $0x158] sm:$0xff]
                  %8193 = vst [vmem:[%s8105 + $0x298] sm:$0xff] %v8192
                  %v8194 = vld [vmem:[%s8104 + $0x160] sm:$0xff]
                  %8195 = vst [vmem:[%s8105 + $0x2a0] sm:$0xff] %v8194
                  %v8196 = vld [vmem:[%s8104 + $0x168] sm:$0xff]
                  %8197 = vst [vmem:[%s8105 + $0x2a8] sm:$0xff] %v8196
                  %v8198 = vld [vmem:[%s8104 + $0x170] sm:$0xff]
                  %8199 = vst [vmem:[%s8105 + $0x2b0] sm:$0xff] %v8198
                  %v8200 = vld [vmem:[%s8104 + $0x178] sm:$0xff]
                  %8201 = vst [vmem:[%s8105 + $0x2b8] sm:$0xff] %v8200
                  %v8202 = vld [vmem:[%s8104 + $0x180] sm:$0xff]
                  %8203 = vst [vmem:[%s8105 + $0x300] sm:$0xff] %v8202
                  %v8204 = vld [vmem:[%s8104 + $0x188] sm:$0xff]
                  %8205 = vst [vmem:[%s8105 + $0x308] sm:$0xff] %v8204
                  %v8206 = vld [vmem:[%s8104 + $0x190] sm:$0xff]
                  %8207 = vst [vmem:[%s8105 + $0x310] sm:$0xff] %v8206
                  %v8208 = vld [vmem:[%s8104 + $0x198] sm:$0xff]
                  %8209 = vst [vmem:[%s8105 + $0x318] sm:$0xff] %v8208
                  %v8210 = vld [vmem:[%s8104 + $0x1a0] sm:$0xff]
                  %8211 = vst [vmem:[%s8105 + $0x320] sm:$0xff] %v8210
                  %v8212 = vld [vmem:[%s8104 + $0x1a8] sm:$0xff]
                  %8213 = vst [vmem:[%s8105 + $0x328] sm:$0xff] %v8212
                  %v8214 = vld [vmem:[%s8104 + $0x1b0] sm:$0xff]
                  %8215 = vst [vmem:[%s8105 + $0x330] sm:$0xff] %v8214
                  %v8216 = vld [vmem:[%s8104 + $0x1b8] sm:$0xff]
                  %8217 = vst [vmem:[%s8105 + $0x338] sm:$0xff] %v8216
                  %v8218 = vld [vmem:[%s8104 + $0x1c0] sm:$0xff]
                  %8219 = vst [vmem:[%s8105 + $0x380] sm:$0xff] %v8218
                  %v8220 = vld [vmem:[%s8104 + $0x1c8] sm:$0xff]
                  %8221 = vst [vmem:[%s8105 + $0x388] sm:$0xff] %v8220
                  %v8222 = vld [vmem:[%s8104 + $0x1d0] sm:$0xff]
                  %8223 = vst [vmem:[%s8105 + $0x390] sm:$0xff] %v8222
                  %v8224 = vld [vmem:[%s8104 + $0x1d8] sm:$0xff]
                  %8225 = vst [vmem:[%s8105 + $0x398] sm:$0xff] %v8224
                  %v8226 = vld [vmem:[%s8104 + $0x1e0] sm:$0xff]
                  %8227 = vst [vmem:[%s8105 + $0x3a0] sm:$0xff] %v8226
                  %v8228 = vld [vmem:[%s8104 + $0x1e8] sm:$0xff]
                  %8229 = vst [vmem:[%s8105 + $0x3a8] sm:$0xff] %v8228
                  %v8230 = vld [vmem:[%s8104 + $0x1f0] sm:$0xff]
                  %8231 = vst [vmem:[%s8105 + $0x3b0] sm:$0xff] %v8230
                  %v8232 = vld [vmem:[%s8104 + $0x1f8] sm:$0xff]
                  %8233 = vst [vmem:[%s8105 + $0x3b8] sm:$0xff] %v8232
                $region226: #{tpu_custom_call.1} parent=220 // loop_footer
                  %s8103 = sadd.s32 1, %s8099
                $region227: #{tpu_custom_call.1} parent=220 // loop_footer_branch
                  %8098 = sbr.rel target = $region223
                $region228: #{tpu_custom_call.1} parent=220 // loop_exit
                  _
              $region221: #{tpu_custom_call.1} parent=205 // pred_fallthru
                _
              // Predicated region
              $region229: #{tpu_custom_call.1} parent=205 // pred_check
                _
              $region230: #{tpu_custom_call.1} parent=205 // pred_check_branch
                %8235 = sbr.rel target = $region232
              $region231: #{tpu_custom_call.1} parent=205 // pred_region
                _
              $region232: #{tpu_custom_call.1} parent=205 // pred_fallthru
                _
            $region206: #{tpu_custom_call.1} parent=201 // pred_fallthru
              _
            // Predicated region
            $region207: #{tpu_custom_call.1} parent=201 // pred_check
              _
            $region208: #{tpu_custom_call.1} parent=201 // pred_check_branch
              %7957 = sbr.rel target = $region210
            $region209: #{tpu_custom_call.1} parent=201 // pred_region
              %s7959 = ssub.s32 256, 1
              loop: start=0, step=1, limit=1
              $region211: #{tpu_custom_call.1} parent=209 // loop_pre_header
                _
              $region212: #{tpu_custom_call.1} parent=209 // loop_header
                %s7961 = sphi 0, %s7965
                %p7962 = scmp.ge.s32.totalorder %s7961, 1
                %s7966 = sphi %s7647, %s7647
                %s7967 = sphi %s7951, %s7951
              $region213: #{tpu_custom_call.1} parent=209 // loop_header_branch
                %7964 = sbr.rel (%p7962) target = $region217
              $region214: #{tpu_custom_call.1} parent=209 // loop_body
                %v7968 = vld [vmem:[%s7966] sm:%s7959]
                %7969 = vst [vmem:[%s7967] sm:%s7959] %v7968
                %v7970 = vld [vmem:[%s7966 + $0x8] sm:%s7959]
                %7971 = vst [vmem:[%s7967 + $0x8] sm:%s7959] %v7970
                %v7972 = vld [vmem:[%s7966 + $0x10] sm:%s7959]
                %7973 = vst [vmem:[%s7967 + $0x10] sm:%s7959] %v7972
                %v7974 = vld [vmem:[%s7966 + $0x18] sm:%s7959]
                %7975 = vst [vmem:[%s7967 + $0x18] sm:%s7959] %v7974
                %v7976 = vld [vmem:[%s7966 + $0x20] sm:%s7959]
                %7977 = vst [vmem:[%s7967 + $0x20] sm:%s7959] %v7976
                %v7978 = vld [vmem:[%s7966 + $0x28] sm:%s7959]
                %7979 = vst [vmem:[%s7967 + $0x28] sm:%s7959] %v7978
                %v7980 = vld [vmem:[%s7966 + $0x30] sm:%s7959]
                %7981 = vst [vmem:[%s7967 + $0x30] sm:%s7959] %v7980
                %v7982 = vld [vmem:[%s7966 + $0x38] sm:%s7959]
                %7983 = vst [vmem:[%s7967 + $0x38] sm:%s7959] %v7982
                %v7984 = vld [vmem:[%s7966 + $0x40] sm:%s7959]
                %7985 = vst [vmem:[%s7967 + $0x80] sm:%s7959] %v7984
                %v7986 = vld [vmem:[%s7966 + $0x48] sm:%s7959]
                %7987 = vst [vmem:[%s7967 + $0x88] sm:%s7959] %v7986
                %v7988 = vld [vmem:[%s7966 + $0x50] sm:%s7959]
                %7989 = vst [vmem:[%s7967 + $0x90] sm:%s7959] %v7988
                %v7990 = vld [vmem:[%s7966 + $0x58] sm:%s7959]
                %7991 = vst [vmem:[%s7967 + $0x98] sm:%s7959] %v7990
                %v7992 = vld [vmem:[%s7966 + $0x60] sm:%s7959]
                %7993 = vst [vmem:[%s7967 + $0xa0] sm:%s7959] %v7992
                %v7994 = vld [vmem:[%s7966 + $0x68] sm:%s7959]
                %7995 = vst [vmem:[%s7967 + $0xa8] sm:%s7959] %v7994
                %v7996 = vld [vmem:[%s7966 + $0x70] sm:%s7959]
                %7997 = vst [vmem:[%s7967 + $0xb0] sm:%s7959] %v7996
                %v7998 = vld [vmem:[%s7966 + $0x78] sm:%s7959]
                %7999 = vst [vmem:[%s7967 + $0xb8] sm:%s7959] %v7998
                %v8000 = vld [vmem:[%s7966 + $0x80] sm:%s7959]
                %8001 = vst [vmem:[%s7967 + $0x100] sm:%s7959] %v8000
                %v8002 = vld [vmem:[%s7966 + $0x88] sm:%s7959]
                %8003 = vst [vmem:[%s7967 + $0x108] sm:%s7959] %v8002
                %v8004 = vld [vmem:[%s7966 + $0x90] sm:%s7959]
                %8005 = vst [vmem:[%s7967 + $0x110] sm:%s7959] %v8004
                %v8006 = vld [vmem:[%s7966 + $0x98] sm:%s7959]
                %8007 = vst [vmem:[%s7967 + $0x118] sm:%s7959] %v8006
                %v8008 = vld [vmem:[%s7966 + $0xa0] sm:%s7959]
                %8009 = vst [vmem:[%s7967 + $0x120] sm:%s7959] %v8008
                %v8010 = vld [vmem:[%s7966 + $0xa8] sm:%s7959]
                %8011 = vst [vmem:[%s7967 + $0x128] sm:%s7959] %v8010
                %v8012 = vld [vmem:[%s7966 + $0xb0] sm:%s7959]
                %8013 = vst [vmem:[%s7967 + $0x130] sm:%s7959] %v8012
                %v8014 = vld [vmem:[%s7966 + $0xb8] sm:%s7959]
                %8015 = vst [vmem:[%s7967 + $0x138] sm:%s7959] %v8014
                %v8016 = vld [vmem:[%s7966 + $0xc0] sm:%s7959]
                %8017 = vst [vmem:[%s7967 + $0x180] sm:%s7959] %v8016
                %v8018 = vld [vmem:[%s7966 + $0xc8] sm:%s7959]
                %8019 = vst [vmem:[%s7967 + $0x188] sm:%s7959] %v8018
                %v8020 = vld [vmem:[%s7966 + $0xd0] sm:%s7959]
                %8021 = vst [vmem:[%s7967 + $0x190] sm:%s7959] %v8020
                %v8022 = vld [vmem:[%s7966 + $0xd8] sm:%s7959]
                %8023 = vst [vmem:[%s7967 + $0x198] sm:%s7959] %v8022
                %v8024 = vld [vmem:[%s7966 + $0xe0] sm:%s7959]
                %8025 = vst [vmem:[%s7967 + $0x1a0] sm:%s7959] %v8024
                %v8026 = vld [vmem:[%s7966 + $0xe8] sm:%s7959]
                %8027 = vst [vmem:[%s7967 + $0x1a8] sm:%s7959] %v8026
                %v8028 = vld [vmem:[%s7966 + $0xf0] sm:%s7959]
                %8029 = vst [vmem:[%s7967 + $0x1b0] sm:%s7959] %v8028
                %v8030 = vld [vmem:[%s7966 + $0xf8] sm:%s7959]
                %8031 = vst [vmem:[%s7967 + $0x1b8] sm:%s7959] %v8030
                %v8032 = vld [vmem:[%s7966 + $0x100] sm:%s7959]
                %8033 = vst [vmem:[%s7967 + $0x200] sm:%s7959] %v8032
                %v8034 = vld [vmem:[%s7966 + $0x108] sm:%s7959]
                %8035 = vst [vmem:[%s7967 + $0x208] sm:%s7959] %v8034
                %v8036 = vld [vmem:[%s7966 + $0x110] sm:%s7959]
                %8037 = vst [vmem:[%s7967 + $0x210] sm:%s7959] %v8036
                %v8038 = vld [vmem:[%s7966 + $0x118] sm:%s7959]
                %8039 = vst [vmem:[%s7967 + $0x218] sm:%s7959] %v8038
                %v8040 = vld [vmem:[%s7966 + $0x120] sm:%s7959]
                %8041 = vst [vmem:[%s7967 + $0x220] sm:%s7959] %v8040
                %v8042 = vld [vmem:[%s7966 + $0x128] sm:%s7959]
                %8043 = vst [vmem:[%s7967 + $0x228] sm:%s7959] %v8042
                %v8044 = vld [vmem:[%s7966 + $0x130] sm:%s7959]
                %8045 = vst [vmem:[%s7967 + $0x230] sm:%s7959] %v8044
                %v8046 = vld [vmem:[%s7966 + $0x138] sm:%s7959]
                %8047 = vst [vmem:[%s7967 + $0x238] sm:%s7959] %v8046
                %v8048 = vld [vmem:[%s7966 + $0x140] sm:%s7959]
                %8049 = vst [vmem:[%s7967 + $0x280] sm:%s7959] %v8048
                %v8050 = vld [vmem:[%s7966 + $0x148] sm:%s7959]
                %8051 = vst [vmem:[%s7967 + $0x288] sm:%s7959] %v8050
                %v8052 = vld [vmem:[%s7966 + $0x150] sm:%s7959]
                %8053 = vst [vmem:[%s7967 + $0x290] sm:%s7959] %v8052
                %v8054 = vld [vmem:[%s7966 + $0x158] sm:%s7959]
                %8055 = vst [vmem:[%s7967 + $0x298] sm:%s7959] %v8054
                %v8056 = vld [vmem:[%s7966 + $0x160] sm:%s7959]
                %8057 = vst [vmem:[%s7967 + $0x2a0] sm:%s7959] %v8056
                %v8058 = vld [vmem:[%s7966 + $0x168] sm:%s7959]
                %8059 = vst [vmem:[%s7967 + $0x2a8] sm:%s7959] %v8058
                %v8060 = vld [vmem:[%s7966 + $0x170] sm:%s7959]
                %8061 = vst [vmem:[%s7967 + $0x2b0] sm:%s7959] %v8060
                %v8062 = vld [vmem:[%s7966 + $0x178] sm:%s7959]
                %8063 = vst [vmem:[%s7967 + $0x2b8] sm:%s7959] %v8062
                %v8064 = vld [vmem:[%s7966 + $0x180] sm:%s7959]
                %8065 = vst [vmem:[%s7967 + $0x300] sm:%s7959] %v8064
                %v8066 = vld [vmem:[%s7966 + $0x188] sm:%s7959]
                %8067 = vst [vmem:[%s7967 + $0x308] sm:%s7959] %v8066
                %v8068 = vld [vmem:[%s7966 + $0x190] sm:%s7959]
                %8069 = vst [vmem:[%s7967 + $0x310] sm:%s7959] %v8068
                %v8070 = vld [vmem:[%s7966 + $0x198] sm:%s7959]
                %8071 = vst [vmem:[%s7967 + $0x318] sm:%s7959] %v8070
                %v8072 = vld [vmem:[%s7966 + $0x1a0] sm:%s7959]
                %8073 = vst [vmem:[%s7967 + $0x320] sm:%s7959] %v8072
                %v8074 = vld [vmem:[%s7966 + $0x1a8] sm:%s7959]
                %8075 = vst [vmem:[%s7967 + $0x328] sm:%s7959] %v8074
                %v8076 = vld [vmem:[%s7966 + $0x1b0] sm:%s7959]
                %8077 = vst [vmem:[%s7967 + $0x330] sm:%s7959] %v8076
                %v8078 = vld [vmem:[%s7966 + $0x1b8] sm:%s7959]
                %8079 = vst [vmem:[%s7967 + $0x338] sm:%s7959] %v8078
                %v8080 = vld [vmem:[%s7966 + $0x1c0] sm:%s7959]
                %8081 = vst [vmem:[%s7967 + $0x380] sm:%s7959] %v8080
                %v8082 = vld [vmem:[%s7966 + $0x1c8] sm:%s7959]
                %8083 = vst [vmem:[%s7967 + $0x388] sm:%s7959] %v8082
                %v8084 = vld [vmem:[%s7966 + $0x1d0] sm:%s7959]
                %8085 = vst [vmem:[%s7967 + $0x390] sm:%s7959] %v8084
                %v8086 = vld [vmem:[%s7966 + $0x1d8] sm:%s7959]
                %8087 = vst [vmem:[%s7967 + $0x398] sm:%s7959] %v8086
                %v8088 = vld [vmem:[%s7966 + $0x1e0] sm:%s7959]
                %8089 = vst [vmem:[%s7967 + $0x3a0] sm:%s7959] %v8088
                %v8090 = vld [vmem:[%s7966 + $0x1e8] sm:%s7959]
                %8091 = vst [vmem:[%s7967 + $0x3a8] sm:%s7959] %v8090
                %v8092 = vld [vmem:[%s7966 + $0x1f0] sm:%s7959]
                %8093 = vst [vmem:[%s7967 + $0x3b0] sm:%s7959] %v8092
                %v8094 = vld [vmem:[%s7966 + $0x1f8] sm:%s7959]
                %8095 = vst [vmem:[%s7967 + $0x3b8] sm:%s7959] %v8094
              $region215: #{tpu_custom_call.1} parent=209 // loop_footer
                %s7965 = sadd.s32 1, %s7961
              $region216: #{tpu_custom_call.1} parent=209 // loop_footer_branch
                %7960 = sbr.rel target = $region212
              $region217: #{tpu_custom_call.1} parent=209 // loop_exit
                _
            $region210: #{tpu_custom_call.1} parent=201 // pred_fallthru
              _
          $region202: #{tpu_custom_call.1} parent=197 // pred_fallthru
            _
          %8236 = vnop
        $region198: #{tpu_custom_call.1} parent=143 // pred_fallthru
          _
      $region144: #{tpu_custom_call.1} parent=5 // pred_fallthru
        _
      %p8237 = scmp.le.s32.totalorder 2, %s22
      // Predicated region
      $region233: #{tpu_custom_call.1} parent=5 // pred_check
        %p8238 = pneg %p8237
      $region234: #{tpu_custom_call.1} parent=5 // pred_check_branch
        %8240 = sbr.rel (%p8238) target = $region236
      $region235: #{tpu_custom_call.1} parent=5 // pred_region
        %s8241 = ssub.s32 %s22, 2
        // Predicated region
        $region237: #{tpu_custom_call.1} parent=235 // pred_check
          %p8242 = pneg %p375
        $region238: #{tpu_custom_call.1} parent=235 // pred_check_branch
          %8244 = sbr.rel (%p8242) target = $region240
        $region239: #{tpu_custom_call.1} parent=235 // pred_region
          %s8245 = sand.u32 %s360, 1
          %s8246 = sand.u32 %s360, 1
          %s8247 = smul.addr %s8246, 512
          %s8248 = scalar_lea.vmem [#allocation6], %s8247
        $region240: #{tpu_custom_call.1} parent=235 // pred_fallthru
          _
        // Predicated region
        $region241: #{tpu_custom_call.1} parent=235 // pred_check
          %p8249 = pneg %p405
        $region242: #{tpu_custom_call.1} parent=235 // pred_check_branch
          %8251 = sbr.rel (%p8249) target = $region244
        $region243: #{tpu_custom_call.1} parent=235 // pred_region
          %s8252 = sand.u32 %s390, 1
          %s8253 = sand.u32 %s390, 1
          %s8254 = smul.addr %s8253, 512
          %s8255 = scalar_lea.vmem [#allocation7], %s8254
        $region244: #{tpu_custom_call.1} parent=235 // pred_fallthru
          _
      $region236: #{tpu_custom_call.1} parent=5 // pred_fallthru
        _
    $region6: #{tpu_custom_call.1} parent=1 // loop_footer
      %s26 = sadd.s32 1, %s22
    $region7: #{tpu_custom_call.1} parent=1 // loop_footer_branch
      %21 = sbr.rel target = $region3
    $region8: #{tpu_custom_call.1} parent=1 // loop_exit
      _

</llo_original>
